<compile_context>
chip_gen: v6e
topology: v6e:2x2x1
jax: 0.10.0
libtpu: 0.0.40
codegen_flags: <defaults>
</compile_context>

<pallas_src>
import jax
import jax.numpy as jnp
import numpy as np
from jax.experimental import pallas as pl
from jax.experimental.pallas import tpu as pltpu

EPS = 1e-5  # BatchNorm3d / SyncBN default eps

# Tap visit order used by BOTH the kernel im2col and the host-side weight
# packing: dw outermost (one lane rotation per dw), dd innermost.
TAP_ORDER = tuple((dd, dh, dw) for dw in (-1, 0, 1)
                               for dh in (-1, 0, 1)
                               for dd in (-1, 0, 1))
# Only 9 (dh, dw) masks are needed; the lane halo handles dd boundaries.
MASK_ORDER = tuple((dh, dw) for dh in (-1, 0, 1) for dw in (-1, 0, 1))
MIDX = {p: i for i, p in enumerate(MASK_ORDER)}


def _tap_packing(C):
    """How many taps are packed per 8-sublane-aligned im2col block."""
    if C <= 8 and 8 % C == 0:
        tpb = 8 // C               # e.g. C=4 -> 2 taps per 8-row block
        block_rows = 8
    else:
        tpb = 1
        block_rows = ((C + 7) // 8) * 8
    nb = -(-27 // tpb)             # ceil(27 / tpb)
    return tpb, block_rows, nb, nb * block_rows


def _make_sort_kernel(N, C, D, H, W):
    """Fused conv->BN->ReLU x2 -> x1*x2+x kernel (all shapes static)."""
    S, HW = D * H * W, H * W
    pad = ((HW + W + 1 + 127) // 128) * 128      # lane halo, vreg aligned
    wtot = S + 2 * pad
    tpb, block_rows, nb, K = _tap_packing(C)
    inv_cnt = 1.0 / float(N * S)

    def kernel(x_ref, w2_ref, mask_ref, gamma_ref, beta_ref, o_ref, a2_ref):
        xall = x_ref[...]                        # (C, N*S): single full load
        w2 = w2_ref[...]                         # (C, K) im2col-packed weight
        gamma = gamma_ref[...]                   # (C, 1)
        beta = beta_ref[...]                     # (C, 1)
        halo = jnp.zeros((C, pad), jnp.float32)

        def flush(stage, blk, n):
            """Full block_rows-sublane store of up to `tpb` packed taps."""
            fill = block_rows - len(stage) * C
            parts = stage if fill == 0 else (
                stage + [jnp.zeros((fill, S), jnp.float32)])
            blockv = parts[0] if len(parts) == 1 else jnp.concatenate(
                parts, axis=0)
            a2_ref[blk * block_rows:(blk + 1) * block_rows,
                   n * S:(n + 1) * S] = blockv

        def im2col(src):
            """Pack shifted*masked taps of src (C, N*S) into a2_ref (K, N*S)."""
            for n in range(N):
                # vreg-aligned halo concat (pad % 128 == 0): no memset scratch.
                xp = jnp.concatenate(
                    [halo, src[:, n * S:(n + 1) * S], halo], axis=1)
                blk, stage = 0, []
                for dw in (-1, 0, 1):
                    # one lane rotation per (n, dw) instead of one per tap
                    xr = xp if dw == 0 else pltpu.roll(xp, (-dw) % wtot, axis=1)
                    for dh in (-1, 0, 1):
                        mi = MIDX[(dh, dw)]
                        # (1,S)->(C,S) broadcast hoisted out of the dd loop
                        m = jnp.broadcast_to(mask_ref[mi:mi + 1, :], (C, S))
                        for dd in (-1, 0, 1):
                            off = pad + dd * HW + dh * W    # 8-lane multiple
                            stage.append(xr[:, off:off + S] * m)
                            if len(stage) == tpb:
                                flush(stage, blk, n)
                                blk, stage = blk + 1, []
                if stage:                         # 27 taps is odd for tpb=2
                    flush(stage, blk, n)

        def conv_bn_relu(src):
            im2col(src)
            # one MXU matmul per conv
            conv = jnp.dot(w2, a2_ref[...],
                           preferred_element_type=jnp.float32)   # (C, N*S)
            # single-pass batch statistics (sum / sum of squares)
            s1 = jnp.sum(conv, axis=1, keepdims=True)
            s2 = jnp.sum(conv * conv, axis=1, keepdims=True)
            mean = s1 * inv_cnt
            var = s2 * inv_cnt - mean * mean
            scale = gamma * jax.lax.rsqrt(var + EPS)
            bias = beta - mean * scale
            return jnp.maximum(conv * scale + bias, 0.0)

        x1 = conv_bn_relu(xall)
        x2 = conv_bn_relu(x1)
        o_ref[...] = x1 * x2 + xall               # single lane-dense store

    return kernel


def sort_forward(x_ncdhw, w_torch, gamma, beta):
    """x_ncdhw: [N,C,D,H,W]; w_torch: [Cout,Cin,3,3,3]; gamma/beta: [C]."""
    N, C, D, H, W = x_ncdhw.shape
    S = D * H * W
    tpb, block_rows, nb, K = _tap_packing(C)

    # (N,C,D,H,W) -> (C, N*S): layout plumbing so every kernel load/store is
    # lane-dense on the large N*S axis.
    x = jnp.transpose(x_ncdhw.reshape(N, C, S).astype(jnp.float32),
                      (1, 0, 2)).reshape(C, N * S)

    # Conv weight -> tap-packed im2col layout matching the kernel's blocks.
    perm = jnp.array([(dd + 1) * 9 + (dh + 1) * 3 + (dw + 1)
                      for (dd, dh, dw) in TAP_ORDER], jnp.int32)
    w_t = jnp.transpose(w_torch.astype(jnp.float32),
                        (0, 2, 3, 4, 1)).reshape(C, 27, C)[:, perm, :]
    w_t = jnp.pad(w_t, ((0, 0), (0, nb * tpb - 27), (0, 0)))
    w_t = w_t.reshape(C, nb, tpb * C)
    w2 = jnp.pad(w_t, ((0, 0), (0, 0),
                       (0, block_rows - tpb * C))).reshape(C, K)

    # 9 (dh, dw) validity masks, taps in sublanes (padded to 16 rows).
    p = np.arange(S)
    h, w = (p // W) % H, p % W
    masks = np.zeros((16, S), np.float32)
    for (dh, dw), i in MIDX.items():
        masks[i] = ((h + dh >= 0) & (h + dh < H) &
                    (w + dw >= 0) & (w + dw < W))

    vmem = pl.BlockSpec(memory_space=pltpu.MemorySpace.VMEM)
    out = pl.pallas_call(
        _make_sort_kernel(N, C, D, H, W),
        out_shape=jax.ShapeDtypeStruct((C, N * S), jnp.float32),
        in_specs=[vmem] * 5,
        out_specs=vmem,
        scratch_shapes=[pltpu.VMEM((K, N * S), jnp.float32)],  # im2col matrix
    )(x, w2, jnp.asarray(masks),
      gamma.reshape(C, 1).astype(jnp.float32),
      beta.reshape(C, 1).astype(jnp.float32))

    return jnp.transpose(out.reshape(C, N, S),
                         (1, 0, 2)).reshape(N, C, D, H, W)


def _reference_forward(x_ncdhw, w_torch, gamma, beta):
    """Pure-JAX (XLA) reference, full-precision conv for a tight check."""
    def conv(v):
        return jax.lax.conv_general_dilated(
            v, w_torch, window_strides=(1, 1, 1), padding="SAME",
            dimension_numbers=("NCDHW", "OIDHW", "NCDHW"),
            precision=jax.lax.Precision.HIGHEST)

    def bn_relu(y):
        mean = jnp.mean(y, axis=(0, 2, 3, 4), keepdims=True)
        var = jnp.mean((y - mean) ** 2, axis=(0, 2, 3, 4), keepdims=True)
        yn = (y - mean) * jax.lax.rsqrt(var + EPS)
        yn = yn * gamma.reshape(1, -1, 1, 1, 1) + beta.reshape(1, -1, 1, 1, 1)
        return jnp.maximum(yn, 0.0)

    x1 = bn_relu(conv(x_ncdhw))
    x2 = bn_relu(conv(x1))
    return x1 * x2 + x_ncdhw


if __name__ == "__main__":
    N, C, D, H, W = 2, 4, 8, 8, 8

    key = jax.random.PRNGKey(0)
    kx, kw = jax.random.split(key)

    x = jax.random.normal(kx, (N, C, D, H, W), dtype=jnp.float32)

    # Deterministic parameter init (nn.Conv3d(C, C, 3, bias=False) + BN defaults).
    fan_in = C * 3 * 3 * 3
    bound = 1.0 / (fan_in ** 0.5)
    w_torch = jax.random.uniform(kw, (C, C, 3, 3, 3), jnp.float32, -bound, bound)
    gamma = jnp.ones((C,), jnp.float32)   # BN weight init
    beta = jnp.zeros((C,), jnp.float32)   # BN bias init

    out = jax.block_until_ready(sort_forward(x, w_torch, gamma, beta))
    ref = jax.block_until_ready(_reference_forward(x, w_torch, gamma, beta))

    assert out.shape == (N, C, D, H, W)
    max_diff = float(jnp.max(jnp.abs(out - ref)))
    assert jnp.allclose(out, ref, atol=2e-3, rtol=2e-3), (
        "mismatch vs. reference, max|diff|=%e" % max_diff)

    print("KERNEL_OK")
</pallas_src>

<mosaic_0001>
module attributes {stable_mosaic.version = 11 : i64} {
  func.func @kernel(%arg0: memref<4x1024xf32, #tpu.memory_space<vmem>>, %arg1: memref<4x112xf32, #tpu.memory_space<vmem>>, %arg2: memref<16x512xf32, #tpu.memory_space<vmem>>, %arg3: memref<4x1xf32, #tpu.memory_space<vmem>>, %arg4: memref<4x1xf32, #tpu.memory_space<vmem>>, %arg5: memref<4x1024xf32, #tpu.memory_space<vmem>>, %arg6: memref<112x1024xf32, #tpu.memory_space<vmem>>) attributes {dimension_semantics = [], scalar_prefetch = 0 : i64, scratch_operands = 1 : i64, tpu.core_type = #tpu.core_type<tc>} {
    %c0 = arith.constant 0 : index
    %c0_0 = arith.constant 0 : index
    %0 = vector.load %arg0[%c0, %c0_0] : memref<4x1024xf32, #tpu.memory_space<vmem>>, vector<4x1024xf32>
    %c0_1 = arith.constant 0 : index
    %c0_2 = arith.constant 0 : index
    %1 = vector.load %arg1[%c0_1, %c0_2] : memref<4x112xf32, #tpu.memory_space<vmem>>, vector<4x112xf32>
    %c0_3 = arith.constant 0 : index
    %c0_4 = arith.constant 0 : index
    %2 = vector.load %arg3[%c0_3, %c0_4] : memref<4x1xf32, #tpu.memory_space<vmem>>, vector<4x1xf32>
    %c0_5 = arith.constant 0 : index
    %c0_6 = arith.constant 0 : index
    %3 = vector.load %arg4[%c0_5, %c0_6] : memref<4x1xf32, #tpu.memory_space<vmem>>, vector<4x1xf32>
    %cst = arith.constant 0.000000e+00 : f32
    %4 = vector.broadcast %cst : f32 to vector<4x128xf32>
    %5 = vector.extract_strided_slice %0 {offsets = [0, 0], sizes = [4, 512], strides = [1, 1]} : vector<4x1024xf32> to vector<4x512xf32>
    %6 = tpu.concatenate %4, %5, %4 in 1 : vector<4x128xf32>, vector<4x512xf32>, vector<4x128xf32> -> vector<4x768xf32>
    %c1_i32 = arith.constant 1 : i32
    %7 = tpu.dynamic_rotate %6 by %c1_i32 dim 1 : vector<4x768xf32>, i32 -> vector<4x768xf32>
    %c0_7 = arith.constant 0 : index
    %c0_8 = arith.constant 0 : index
    %8 = vector.load %arg2[%c0_7, %c0_8] : memref<16x512xf32, #tpu.memory_space<vmem>>, vector<1x512xf32>
    %9 = vector.shape_cast %8 : vector<1x512xf32> to vector<1x512xf32>
    %10 = vector.broadcast %9 : vector<1x512xf32> to vector<4x512xf32>
    %11 = vector.extract_strided_slice %7 {offsets = [0, 56], sizes = [4, 512], strides = [1, 1]} : vector<4x768xf32> to vector<4x512xf32>
    %12 = arith.mulf %11, %10 : vector<4x512xf32>
    %13 = vector.extract_strided_slice %7 {offsets = [0, 120], sizes = [4, 512], strides = [1, 1]} : vector<4x768xf32> to vector<4x512xf32>
    %14 = arith.mulf %13, %10 : vector<4x512xf32>
    %15 = tpu.concatenate %12, %14 in 0 : vector<4x512xf32>, vector<4x512xf32> -> vector<8x512xf32>
    %c0_9 = arith.constant 0 : index
    %c0_10 = arith.constant 0 : index
    %16 = vector.load %arg6[%c0_9, %c0_10] : memref<112x1024xf32, #tpu.memory_space<vmem>>, vector<8x512xf32>
    tpu.vector_store %arg6[%c0_9, %c0_10], %15 {strides = array<i32>} : memref<112x1024xf32, #tpu.memory_space<vmem>>, vector<8x512xf32>,
    %17 = vector.extract_strided_slice %7 {offsets = [0, 184], sizes = [4, 512], strides = [1, 1]} : vector<4x768xf32> to vector<4x512xf32>
    %18 = arith.mulf %17, %10 : vector<4x512xf32>
    %c3 = arith.constant 3 : index
    %c0_11 = arith.constant 0 : index
    %19 = vector.load %arg2[%c3, %c0_11] : memref<16x512xf32, #tpu.memory_space<vmem>>, vector<1x512xf32>
    %20 = vector.shape_cast %19 : vector<1x512xf32> to vector<1x512xf32>
    %21 = vector.broadcast %20 : vector<1x512xf32> to vector<4x512xf32>
    %22 = vector.extract_strided_slice %7 {offsets = [0, 64], sizes = [4, 512], strides = [1, 1]} : vector<4x768xf32> to vector<4x512xf32>
    %23 = arith.mulf %22, %21 : vector<4x512xf32>
    %24 = tpu.concatenate %18, %23 in 0 : vector<4x512xf32>, vector<4x512xf32> -> vector<8x512xf32>
    %c8 = arith.constant 8 : index
    %c0_12 = arith.constant 0 : index
    %25 = vector.load %arg6[%c8, %c0_12] : memref<112x1024xf32, #tpu.memory_space<vmem>>, vector<8x512xf32>
    tpu.vector_store %arg6[%c8, %c0_12], %24 {strides = array<i32>} : memref<112x1024xf32, #tpu.memory_space<vmem>>, vector<8x512xf32>,
    %26 = vector.extract_strided_slice %7 {offsets = [0, 128], sizes = [4, 512], strides = [1, 1]} : vector<4x768xf32> to vector<4x512xf32>
    %27 = arith.mulf %26, %21 : vector<4x512xf32>
    %28 = vector.extract_strided_slice %7 {offsets = [0, 192], sizes = [4, 512], strides = [1, 1]} : vector<4x768xf32> to vector<4x512xf32>
    %29 = arith.mulf %28, %21 : vector<4x512xf32>
    %30 = tpu.concatenate %27, %29 in 0 : vector<4x512xf32>, vector<4x512xf32> -> vector<8x512xf32>
    %c16 = arith.constant 16 : index
    %c0_13 = arith.constant 0 : index
    %31 = vector.load %arg6[%c16, %c0_13] : memref<112x1024xf32, #tpu.memory_space<vmem>>, vector<8x512xf32>
    tpu.vector_store %arg6[%c16, %c0_13], %30 {strides = array<i32>} : memref<112x1024xf32, #tpu.memory_space<vmem>>, vector<8x512xf32>,
    %c6 = arith.constant 6 : index
    %c0_14 = arith.constant 0 : index
    %32 = vector.load %arg2[%c6, %c0_14] : memref<16x512xf32, #tpu.memory_space<vmem>>, vector<1x512xf32>
    %33 = vector.shape_cast %32 : vector<1x512xf32> to vector<1x512xf32>
    %34 = vector.broadcast %33 : vector<1x512xf32> to vector<4x512xf32>
    %35 = vector.extract_strided_slice %7 {offsets = [0, 72], sizes = [4, 512], strides = [1, 1]} : vector<4x768xf32> to vector<4x512xf32>
    %36 = arith.mulf %35, %34 : vector<4x512xf32>
    %37 = vector.extract_strided_slice %7 {offsets = [0, 136], sizes = [4, 512], strides = [1, 1]} : vector<4x768xf32> to vector<4x512xf32>
    %38 = arith.mulf %37, %34 : vector<4x512xf32>
    %39 = tpu.concatenate %36, %38 in 0 : vector<4x512xf32>, vector<4x512xf32> -> vector<8x512xf32>
    %c24 = arith.constant 24 : index
    %c0_15 = arith.constant 0 : index
    %40 = vector.load %arg6[%c24, %c0_15] : memref<112x1024xf32, #tpu.memory_space<vmem>>, vector<8x512xf32>
    tpu.vector_store %arg6[%c24, %c0_15], %39 {strides = array<i32>} : memref<112x1024xf32, #tpu.memory_space<vmem>>, vector<8x512xf32>,
    %41 = vector.extract_strided_slice %7 {offsets = [0, 200], sizes = [4, 512], strides = [1, 1]} : vector<4x768xf32> to vector<4x512xf32>
    %42 = arith.mulf %41, %34 : vector<4x512xf32>
    %c1 = arith.constant 1 : index
    %c0_16 = arith.constant 0 : index
    %43 = vector.load %arg2[%c1, %c0_16] : memref<16x512xf32, #tpu.memory_space<vmem>>, vector<1x512xf32>
    %44 = vector.shape_cast %43 : vector<1x512xf32> to vector<1x512xf32>
    %45 = vector.broadcast %44 : vector<1x512xf32> to vector<4x512xf32>
    %46 = vector.extract_strided_slice %6 {offsets = [0, 56], sizes = [4, 512], strides = [1, 1]} : vector<4x768xf32> to vector<4x512xf32>
    %47 = arith.mulf %46, %45 : vector<4x512xf32>
    %48 = tpu.concatenate %42, %47 in 0 : vector<4x512xf32>, vector<4x512xf32> -> vector<8x512xf32>
    %c32 = arith.constant 32 : index
    %c0_17 = arith.constant 0 : index
    %49 = vector.load %arg6[%c32, %c0_17] : memref<112x1024xf32, #tpu.memory_space<vmem>>, vector<8x512xf32>
    tpu.vector_store %arg6[%c32, %c0_17], %48 {strides = array<i32>} : memref<112x1024xf32, #tpu.memory_space<vmem>>, vector<8x512xf32>,
    %50 = vector.extract_strided_slice %6 {offsets = [0, 120], sizes = [4, 512], strides = [1, 1]} : vector<4x768xf32> to vector<4x512xf32>
    %51 = arith.mulf %50, %45 : vector<4x512xf32>
    %52 = vector.extract_strided_slice %6 {offsets = [0, 184], sizes = [4, 512], strides = [1, 1]} : vector<4x768xf32> to vector<4x512xf32>
    %53 = arith.mulf %52, %45 : vector<4x512xf32>
    %54 = tpu.concatenate %51, %53 in 0 : vector<4x512xf32>, vector<4x512xf32> -> vector<8x512xf32>
    %c40 = arith.constant 40 : index
    %c0_18 = arith.constant 0 : index
    %55 = vector.load %arg6[%c40, %c0_18] : memref<112x1024xf32, #tpu.memory_space<vmem>>, vector<8x512xf32>
    tpu.vector_store %arg6[%c40, %c0_18], %54 {strides = array<i32>} : memref<112x1024xf32, #tpu.memory_space<vmem>>, vector<8x512xf32>,
    %c4 = arith.constant 4 : index
    %c0_19 = arith.constant 0 : index
    %56 = vector.load %arg2[%c4, %c0_19] : memref<16x512xf32, #tpu.memory_space<vmem>>, vector<1x512xf32>
    %57 = vector.shape_cast %56 : vector<1x512xf32> to vector<1x512xf32>
    %58 = vector.broadcast %57 : vector<1x512xf32> to vector<4x512xf32>
    %59 = vector.extract_strided_slice %6 {offsets = [0, 64], sizes = [4, 512], strides = [1, 1]} : vector<4x768xf32> to vector<4x512xf32>
    %60 = arith.mulf %59, %58 : vector<4x512xf32>
    %61 = vector.extract_strided_slice %6 {offsets = [0, 128], sizes = [4, 512], strides = [1, 1]} : vector<4x768xf32> to vector<4x512xf32>
    %62 = arith.mulf %61, %58 : vector<4x512xf32>
    %63 = tpu.concatenate %60, %62 in 0 : vector<4x512xf32>, vector<4x512xf32> -> vector<8x512xf32>
    %c48 = arith.constant 48 : index
    %c0_20 = arith.constant 0 : index
    %64 = vector.load %arg6[%c48, %c0_20] : memref<112x1024xf32, #tpu.memory_space<vmem>>, vector<8x512xf32>
    tpu.vector_store %arg6[%c48, %c0_20], %63 {strides = array<i32>} : memref<112x1024xf32, #tpu.memory_space<vmem>>, vector<8x512xf32>,
    %65 = vector.extract_strided_slice %6 {offsets = [0, 192], sizes = [4, 512], strides = [1, 1]} : vector<4x768xf32> to vector<4x512xf32>
    %66 = arith.mulf %65, %58 : vector<4x512xf32>
    %c7 = arith.constant 7 : index
    %c0_21 = arith.constant 0 : index
    %67 = vector.load %arg2[%c7, %c0_21] : memref<16x512xf32, #tpu.memory_space<vmem>>, vector<1x512xf32>
    %68 = vector.shape_cast %67 : vector<1x512xf32> to vector<1x512xf32>
    %69 = vector.broadcast %68 : vector<1x512xf32> to vector<4x512xf32>
    %70 = vector.extract_strided_slice %6 {offsets = [0, 72], sizes = [4, 512], strides = [1, 1]} : vector<4x768xf32> to vector<4x512xf32>
    %71 = arith.mulf %70, %69 : vector<4x512xf32>
    %72 = tpu.concatenate %66, %71 in 0 : vector<4x512xf32>, vector<4x512xf32> -> vector<8x512xf32>
    %c56 = arith.constant 56 : index
    %c0_22 = arith.constant 0 : index
    %73 = vector.load %arg6[%c56, %c0_22] : memref<112x1024xf32, #tpu.memory_space<vmem>>, vector<8x512xf32>
    tpu.vector_store %arg6[%c56, %c0_22], %72 {strides = array<i32>} : memref<112x1024xf32, #tpu.memory_space<vmem>>, vector<8x512xf32>,
    %74 = vector.extract_strided_slice %6 {offsets = [0, 136], sizes = [4, 512], strides = [1, 1]} : vector<4x768xf32> to vector<4x512xf32>
    %75 = arith.mulf %74, %69 : vector<4x512xf32>
    %76 = vector.extract_strided_slice %6 {offsets = [0, 200], sizes = [4, 512], strides = [1, 1]} : vector<4x768xf32> to vector<4x512xf32>
    %77 = arith.mulf %76, %69 : vector<4x512xf32>
    %78 = tpu.concatenate %75, %77 in 0 : vector<4x512xf32>, vector<4x512xf32> -> vector<8x512xf32>
    %c64 = arith.constant 64 : index
    %c0_23 = arith.constant 0 : index
    %79 = vector.load %arg6[%c64, %c0_23] : memref<112x1024xf32, #tpu.memory_space<vmem>>, vector<8x512xf32>
    tpu.vector_store %arg6[%c64, %c0_23], %78 {strides = array<i32>} : memref<112x1024xf32, #tpu.memory_space<vmem>>, vector<8x512xf32>,
    %c767_i32 = arith.constant 767 : i32
    %80 = tpu.dynamic_rotate %6 by %c767_i32 dim 1 : vector<4x768xf32>, i32 -> vector<4x768xf32>
    %c2 = arith.constant 2 : index
    %c0_24 = arith.constant 0 : index
    %81 = vector.load %arg2[%c2, %c0_24] : memref<16x512xf32, #tpu.memory_space<vmem>>, vector<1x512xf32>
    %82 = vector.shape_cast %81 : vector<1x512xf32> to vector<1x512xf32>
    %83 = vector.broadcast %82 : vector<1x512xf32> to vector<4x512xf32>
    %84 = vector.extract_strided_slice %80 {offsets = [0, 56], sizes = [4, 512], strides = [1, 1]} : vector<4x768xf32> to vector<4x512xf32>
    %85 = arith.mulf %84, %83 : vector<4x512xf32>
    %86 = vector.extract_strided_slice %80 {offsets = [0, 120], sizes = [4, 512], strides = [1, 1]} : vector<4x768xf32> to vector<4x512xf32>
    %87 = arith.mulf %86, %83 : vector<4x512xf32>
    %88 = tpu.concatenate %85, %87 in 0 : vector<4x512xf32>, vector<4x512xf32> -> vector<8x512xf32>
    %c72 = arith.constant 72 : index
    %c0_25 = arith.constant 0 : index
    %89 = vector.load %arg6[%c72, %c0_25] : memref<112x1024xf32, #tpu.memory_space<vmem>>, vector<8x512xf32>
    tpu.vector_store %arg6[%c72, %c0_25], %88 {strides = array<i32>} : memref<112x1024xf32, #tpu.memory_space<vmem>>, vector<8x512xf32>,
    %90 = vector.extract_strided_slice %80 {offsets = [0, 184], sizes = [4, 512], strides = [1, 1]} : vector<4x768xf32> to vector<4x512xf32>
    %91 = arith.mulf %90, %83 : vector<4x512xf32>
    %c5 = arith.constant 5 : index
    %c0_26 = arith.constant 0 : index
    %92 = vector.load %arg2[%c5, %c0_26] : memref<16x512xf32, #tpu.memory_space<vmem>>, vector<1x512xf32>
    %93 = vector.shape_cast %92 : vector<1x512xf32> to vector<1x512xf32>
    %94 = vector.broadcast %93 : vector<1x512xf32> to vector<4x512xf32>
    %95 = vector.extract_strided_slice %80 {offsets = [0, 64], sizes = [4, 512], strides = [1, 1]} : vector<4x768xf32> to vector<4x512xf32>
    %96 = arith.mulf %95, %94 : vector<4x512xf32>
    %97 = tpu.concatenate %91, %96 in 0 : vector<4x512xf32>, vector<4x512xf32> -> vector<8x512xf32>
    %c80 = arith.constant 80 : index
    %c0_27 = arith.constant 0 : index
    %98 = vector.load %arg6[%c80, %c0_27] : memref<112x1024xf32, #tpu.memory_space<vmem>>, vector<8x512xf32>
    tpu.vector_store %arg6[%c80, %c0_27], %97 {strides = array<i32>} : memref<112x1024xf32, #tpu.memory_space<vmem>>, vector<8x512xf32>,
    %99 = vector.extract_strided_slice %80 {offsets = [0, 128], sizes = [4, 512], strides = [1, 1]} : vector<4x768xf32> to vector<4x512xf32>
    %100 = arith.mulf %99, %94 : vector<4x512xf32>
    %101 = vector.extract_strided_slice %80 {offsets = [0, 192], sizes = [4, 512], strides = [1, 1]} : vector<4x768xf32> to vector<4x512xf32>
    %102 = arith.mulf %101, %94 : vector<4x512xf32>
    %103 = tpu.concatenate %100, %102 in 0 : vector<4x512xf32>, vector<4x512xf32> -> vector<8x512xf32>
    %c88 = arith.constant 88 : index
    %c0_28 = arith.constant 0 : index
    %104 = vector.load %arg6[%c88, %c0_28] : memref<112x1024xf32, #tpu.memory_space<vmem>>, vector<8x512xf32>
    tpu.vector_store %arg6[%c88, %c0_28], %103 {strides = array<i32>} : memref<112x1024xf32, #tpu.memory_space<vmem>>, vector<8x512xf32>,
    %c8_29 = arith.constant 8 : index
    %c0_30 = arith.constant 0 : index
    %105 = vector.load %arg2[%c8_29, %c0_30] : memref<16x512xf32, #tpu.memory_space<vmem>>, vector<1x512xf32>
    %106 = vector.shape_cast %105 : vector<1x512xf32> to vector<1x512xf32>
    %107 = vector.broadcast %106 : vector<1x512xf32> to vector<4x512xf32>
    %108 = vector.extract_strided_slice %80 {offsets = [0, 72], sizes = [4, 512], strides = [1, 1]} : vector<4x768xf32> to vector<4x512xf32>
    %109 = arith.mulf %108, %107 : vector<4x512xf32>
    %110 = vector.extract_strided_slice %80 {offsets = [0, 136], sizes = [4, 512], strides = [1, 1]} : vector<4x768xf32> to vector<4x512xf32>
    %111 = arith.mulf %110, %107 : vector<4x512xf32>
    %112 = tpu.concatenate %109, %111 in 0 : vector<4x512xf32>, vector<4x512xf32> -> vector<8x512xf32>
    %c96 = arith.constant 96 : index
    %c0_31 = arith.constant 0 : index
    %113 = vector.load %arg6[%c96, %c0_31] : memref<112x1024xf32, #tpu.memory_space<vmem>>, vector<8x512xf32>
    tpu.vector_store %arg6[%c96, %c0_31], %112 {strides = array<i32>} : memref<112x1024xf32, #tpu.memory_space<vmem>>, vector<8x512xf32>,
    %114 = vector.extract_strided_slice %80 {offsets = [0, 200], sizes = [4, 512], strides = [1, 1]} : vector<4x768xf32> to vector<4x512xf32>
    %115 = arith.mulf %114, %107 : vector<4x512xf32>
    %cst_32 = arith.constant 0.000000e+00 : f32
    %116 = vector.broadcast %cst_32 : f32 to vector<4x512xf32>
    %117 = tpu.concatenate %115, %116 in 0 : vector<4x512xf32>, vector<4x512xf32> -> vector<8x512xf32>
    %c104 = arith.constant 104 : index
    %c0_33 = arith.constant 0 : index
    %118 = vector.load %arg6[%c104, %c0_33] : memref<112x1024xf32, #tpu.memory_space<vmem>>, vector<8x512xf32>
    tpu.vector_store %arg6[%c104, %c0_33], %117 {strides = array<i32>} : memref<112x1024xf32, #tpu.memory_space<vmem>>, vector<8x512xf32>,
    %119 = vector.extract_strided_slice %0 {offsets = [0, 512], sizes = [4, 512], strides = [1, 1]} : vector<4x1024xf32> to vector<4x512xf32>
    %120 = tpu.concatenate %4, %119, %4 in 1 : vector<4x128xf32>, vector<4x512xf32>, vector<4x128xf32> -> vector<4x768xf32>
    %c1_i32_34 = arith.constant 1 : i32
    %121 = tpu.dynamic_rotate %120 by %c1_i32_34 dim 1 : vector<4x768xf32>, i32 -> vector<4x768xf32>
    %c0_35 = arith.constant 0 : index
    %c0_36 = arith.constant 0 : index
    %122 = vector.load %arg2[%c0_35, %c0_36] : memref<16x512xf32, #tpu.memory_space<vmem>>, vector<1x512xf32>
    %123 = vector.shape_cast %122 : vector<1x512xf32> to vector<1x512xf32>
    %124 = vector.broadcast %123 : vector<1x512xf32> to vector<4x512xf32>
    %125 = vector.extract_strided_slice %121 {offsets = [0, 56], sizes = [4, 512], strides = [1, 1]} : vector<4x768xf32> to vector<4x512xf32>
    %126 = arith.mulf %125, %124 : vector<4x512xf32>
    %127 = vector.extract_strided_slice %121 {offsets = [0, 120], sizes = [4, 512], strides = [1, 1]} : vector<4x768xf32> to vector<4x512xf32>
    %128 = arith.mulf %127, %124 : vector<4x512xf32>
    %129 = tpu.concatenate %126, %128 in 0 : vector<4x512xf32>, vector<4x512xf32> -> vector<8x512xf32>
    %c0_37 = arith.constant 0 : index
    %c512 = arith.constant 512 : index
    %130 = vector.load %arg6[%c0_37, %c512] : memref<112x1024xf32, #tpu.memory_space<vmem>>, vector<8x512xf32>
    tpu.vector_store %arg6[%c0_37, %c512], %129 {strides = array<i32>} : memref<112x1024xf32, #tpu.memory_space<vmem>>, vector<8x512xf32>,
    %131 = vector.extract_strided_slice %121 {offsets = [0, 184], sizes = [4, 512], strides = [1, 1]} : vector<4x768xf32> to vector<4x512xf32>
    %132 = arith.mulf %131, %124 : vector<4x512xf32>
    %c3_38 = arith.constant 3 : index
    %c0_39 = arith.constant 0 : index
    %133 = vector.load %arg2[%c3_38, %c0_39] : memref<16x512xf32, #tpu.memory_space<vmem>>, vector<1x512xf32>
    %134 = vector.shape_cast %133 : vector<1x512xf32> to vector<1x512xf32>
    %135 = vector.broadcast %134 : vector<1x512xf32> to vector<4x512xf32>
    %136 = vector.extract_strided_slice %121 {offsets = [0, 64], sizes = [4, 512], strides = [1, 1]} : vector<4x768xf32> to vector<4x512xf32>
    %137 = arith.mulf %136, %135 : vector<4x512xf32>
    %138 = tpu.concatenate %132, %137 in 0 : vector<4x512xf32>, vector<4x512xf32> -> vector<8x512xf32>
    %c8_40 = arith.constant 8 : index
    %c512_41 = arith.constant 512 : index
    %139 = vector.load %arg6[%c8_40, %c512_41] : memref<112x1024xf32, #tpu.memory_space<vmem>>, vector<8x512xf32>
    tpu.vector_store %arg6[%c8_40, %c512_41], %138 {strides = array<i32>} : memref<112x1024xf32, #tpu.memory_space<vmem>>, vector<8x512xf32>,
    %140 = vector.extract_strided_slice %121 {offsets = [0, 128], sizes = [4, 512], strides = [1, 1]} : vector<4x768xf32> to vector<4x512xf32>
    %141 = arith.mulf %140, %135 : vector<4x512xf32>
    %142 = vector.extract_strided_slice %121 {offsets = [0, 192], sizes = [4, 512], strides = [1, 1]} : vector<4x768xf32> to vector<4x512xf32>
    %143 = arith.mulf %142, %135 : vector<4x512xf32>
    %144 = tpu.concatenate %141, %143 in 0 : vector<4x512xf32>, vector<4x512xf32> -> vector<8x512xf32>
    %c16_42 = arith.constant 16 : index
    %c512_43 = arith.constant 512 : index
    %145 = vector.load %arg6[%c16_42, %c512_43] : memref<112x1024xf32, #tpu.memory_space<vmem>>, vector<8x512xf32>
    tpu.vector_store %arg6[%c16_42, %c512_43], %144 {strides = array<i32>} : memref<112x1024xf32, #tpu.memory_space<vmem>>, vector<8x512xf32>,
    %c6_44 = arith.constant 6 : index
    %c0_45 = arith.constant 0 : index
    %146 = vector.load %arg2[%c6_44, %c0_45] : memref<16x512xf32, #tpu.memory_space<vmem>>, vector<1x512xf32>
    %147 = vector.shape_cast %146 : vector<1x512xf32> to vector<1x512xf32>
    %148 = vector.broadcast %147 : vector<1x512xf32> to vector<4x512xf32>
    %149 = vector.extract_strided_slice %121 {offsets = [0, 72], sizes = [4, 512], strides = [1, 1]} : vector<4x768xf32> to vector<4x512xf32>
    %150 = arith.mulf %149, %148 : vector<4x512xf32>
    %151 = vector.extract_strided_slice %121 {offsets = [0, 136], sizes = [4, 512], strides = [1, 1]} : vector<4x768xf32> to vector<4x512xf32>
    %152 = arith.mulf %151, %148 : vector<4x512xf32>
    %153 = tpu.concatenate %150, %152 in 0 : vector<4x512xf32>, vector<4x512xf32> -> vector<8x512xf32>
    %c24_46 = arith.constant 24 : index
    %c512_47 = arith.constant 512 : index
    %154 = vector.load %arg6[%c24_46, %c512_47] : memref<112x1024xf32, #tpu.memory_space<vmem>>, vector<8x512xf32>
    tpu.vector_store %arg6[%c24_46, %c512_47], %153 {strides = array<i32>} : memref<112x1024xf32, #tpu.memory_space<vmem>>, vector<8x512xf32>,
    %155 = vector.extract_strided_slice %121 {offsets = [0, 200], sizes = [4, 512], strides = [1, 1]} : vector<4x768xf32> to vector<4x512xf32>
    %156 = arith.mulf %155, %148 : vector<4x512xf32>
    %c1_48 = arith.constant 1 : index
    %c0_49 = arith.constant 0 : index
    %157 = vector.load %arg2[%c1_48, %c0_49] : memref<16x512xf32, #tpu.memory_space<vmem>>, vector<1x512xf32>
    %158 = vector.shape_cast %157 : vector<1x512xf32> to vector<1x512xf32>
    %159 = vector.broadcast %158 : vector<1x512xf32> to vector<4x512xf32>
    %160 = vector.extract_strided_slice %120 {offsets = [0, 56], sizes = [4, 512], strides = [1, 1]} : vector<4x768xf32> to vector<4x512xf32>
    %161 = arith.mulf %160, %159 : vector<4x512xf32>
    %162 = tpu.concatenate %156, %161 in 0 : vector<4x512xf32>, vector<4x512xf32> -> vector<8x512xf32>
    %c32_50 = arith.constant 32 : index
    %c512_51 = arith.constant 512 : index
    %163 = vector.load %arg6[%c32_50, %c512_51] : memref<112x1024xf32, #tpu.memory_space<vmem>>, vector<8x512xf32>
    tpu.vector_store %arg6[%c32_50, %c512_51], %162 {strides = array<i32>} : memref<112x1024xf32, #tpu.memory_space<vmem>>, vector<8x512xf32>,
    %164 = vector.extract_strided_slice %120 {offsets = [0, 120], sizes = [4, 512], strides = [1, 1]} : vector<4x768xf32> to vector<4x512xf32>
    %165 = arith.mulf %164, %159 : vector<4x512xf32>
    %166 = vector.extract_strided_slice %120 {offsets = [0, 184], sizes = [4, 512], strides = [1, 1]} : vector<4x768xf32> to vector<4x512xf32>
    %167 = arith.mulf %166, %159 : vector<4x512xf32>
    %168 = tpu.concatenate %165, %167 in 0 : vector<4x512xf32>, vector<4x512xf32> -> vector<8x512xf32>
    %c40_52 = arith.constant 40 : index
    %c512_53 = arith.constant 512 : index
    %169 = vector.load %arg6[%c40_52, %c512_53] : memref<112x1024xf32, #tpu.memory_space<vmem>>, vector<8x512xf32>
    tpu.vector_store %arg6[%c40_52, %c512_53], %168 {strides = array<i32>} : memref<112x1024xf32, #tpu.memory_space<vmem>>, vector<8x512xf32>,
    %c4_54 = arith.constant 4 : index
    %c0_55 = arith.constant 0 : index
    %170 = vector.load %arg2[%c4_54, %c0_55] : memref<16x512xf32, #tpu.memory_space<vmem>>, vector<1x512xf32>
    %171 = vector.shape_cast %170 : vector<1x512xf32> to vector<1x512xf32>
    %172 = vector.broadcast %171 : vector<1x512xf32> to vector<4x512xf32>
    %173 = vector.extract_strided_slice %120 {offsets = [0, 64], sizes = [4, 512], strides = [1, 1]} : vector<4x768xf32> to vector<4x512xf32>
    %174 = arith.mulf %173, %172 : vector<4x512xf32>
    %175 = vector.extract_strided_slice %120 {offsets = [0, 128], sizes = [4, 512], strides = [1, 1]} : vector<4x768xf32> to vector<4x512xf32>
    %176 = arith.mulf %175, %172 : vector<4x512xf32>
    %177 = tpu.concatenate %174, %176 in 0 : vector<4x512xf32>, vector<4x512xf32> -> vector<8x512xf32>
    %c48_56 = arith.constant 48 : index
    %c512_57 = arith.constant 512 : index
    %178 = vector.load %arg6[%c48_56, %c512_57] : memref<112x1024xf32, #tpu.memory_space<vmem>>, vector<8x512xf32>
    tpu.vector_store %arg6[%c48_56, %c512_57], %177 {strides = array<i32>} : memref<112x1024xf32, #tpu.memory_space<vmem>>, vector<8x512xf32>,
    %179 = vector.extract_strided_slice %120 {offsets = [0, 192], sizes = [4, 512], strides = [1, 1]} : vector<4x768xf32> to vector<4x512xf32>
    %180 = arith.mulf %179, %172 : vector<4x512xf32>
    %c7_58 = arith.constant 7 : index
    %c0_59 = arith.constant 0 : index
    %181 = vector.load %arg2[%c7_58, %c0_59] : memref<16x512xf32, #tpu.memory_space<vmem>>, vector<1x512xf32>
    %182 = vector.shape_cast %181 : vector<1x512xf32> to vector<1x512xf32>
    %183 = vector.broadcast %182 : vector<1x512xf32> to vector<4x512xf32>
    %184 = vector.extract_strided_slice %120 {offsets = [0, 72], sizes = [4, 512], strides = [1, 1]} : vector<4x768xf32> to vector<4x512xf32>
    %185 = arith.mulf %184, %183 : vector<4x512xf32>
    %186 = tpu.concatenate %180, %185 in 0 : vector<4x512xf32>, vector<4x512xf32> -> vector<8x512xf32>
    %c56_60 = arith.constant 56 : index
    %c512_61 = arith.constant 512 : index
    %187 = vector.load %arg6[%c56_60, %c512_61] : memref<112x1024xf32, #tpu.memory_space<vmem>>, vector<8x512xf32>
    tpu.vector_store %arg6[%c56_60, %c512_61], %186 {strides = array<i32>} : memref<112x1024xf32, #tpu.memory_space<vmem>>, vector<8x512xf32>,
    %188 = vector.extract_strided_slice %120 {offsets = [0, 136], sizes = [4, 512], strides = [1, 1]} : vector<4x768xf32> to vector<4x512xf32>
    %189 = arith.mulf %188, %183 : vector<4x512xf32>
    %190 = vector.extract_strided_slice %120 {offsets = [0, 200], sizes = [4, 512], strides = [1, 1]} : vector<4x768xf32> to vector<4x512xf32>
    %191 = arith.mulf %190, %183 : vector<4x512xf32>
    %192 = tpu.concatenate %189, %191 in 0 : vector<4x512xf32>, vector<4x512xf32> -> vector<8x512xf32>
    %c64_62 = arith.constant 64 : index
    %c512_63 = arith.constant 512 : index
    %193 = vector.load %arg6[%c64_62, %c512_63] : memref<112x1024xf32, #tpu.memory_space<vmem>>, vector<8x512xf32>
    tpu.vector_store %arg6[%c64_62, %c512_63], %192 {strides = array<i32>} : memref<112x1024xf32, #tpu.memory_space<vmem>>, vector<8x512xf32>,
    %c767_i32_64 = arith.constant 767 : i32
    %194 = tpu.dynamic_rotate %120 by %c767_i32_64 dim 1 : vector<4x768xf32>, i32 -> vector<4x768xf32>
    %c2_65 = arith.constant 2 : index
    %c0_66 = arith.constant 0 : index
    %195 = vector.load %arg2[%c2_65, %c0_66] : memref<16x512xf32, #tpu.memory_space<vmem>>, vector<1x512xf32>
    %196 = vector.shape_cast %195 : vector<1x512xf32> to vector<1x512xf32>
    %197 = vector.broadcast %196 : vector<1x512xf32> to vector<4x512xf32>
    %198 = vector.extract_strided_slice %194 {offsets = [0, 56], sizes = [4, 512], strides = [1, 1]} : vector<4x768xf32> to vector<4x512xf32>
    %199 = arith.mulf %198, %197 : vector<4x512xf32>
    %200 = vector.extract_strided_slice %194 {offsets = [0, 120], sizes = [4, 512], strides = [1, 1]} : vector<4x768xf32> to vector<4x512xf32>
    %201 = arith.mulf %200, %197 : vector<4x512xf32>
    %202 = tpu.concatenate %199, %201 in 0 : vector<4x512xf32>, vector<4x512xf32> -> vector<8x512xf32>
    %c72_67 = arith.constant 72 : index
    %c512_68 = arith.constant 512 : index
    %203 = vector.load %arg6[%c72_67, %c512_68] : memref<112x1024xf32, #tpu.memory_space<vmem>>, vector<8x512xf32>
    tpu.vector_store %arg6[%c72_67, %c512_68], %202 {strides = array<i32>} : memref<112x1024xf32, #tpu.memory_space<vmem>>, vector<8x512xf32>,
    %204 = vector.extract_strided_slice %194 {offsets = [0, 184], sizes = [4, 512], strides = [1, 1]} : vector<4x768xf32> to vector<4x512xf32>
    %205 = arith.mulf %204, %197 : vector<4x512xf32>
    %c5_69 = arith.constant 5 : index
    %c0_70 = arith.constant 0 : index
    %206 = vector.load %arg2[%c5_69, %c0_70] : memref<16x512xf32, #tpu.memory_space<vmem>>, vector<1x512xf32>
    %207 = vector.shape_cast %206 : vector<1x512xf32> to vector<1x512xf32>
    %208 = vector.broadcast %207 : vector<1x512xf32> to vector<4x512xf32>
    %209 = vector.extract_strided_slice %194 {offsets = [0, 64], sizes = [4, 512], strides = [1, 1]} : vector<4x768xf32> to vector<4x512xf32>
    %210 = arith.mulf %209, %208 : vector<4x512xf32>
    %211 = tpu.concatenate %205, %210 in 0 : vector<4x512xf32>, vector<4x512xf32> -> vector<8x512xf32>
    %c80_71 = arith.constant 80 : index
    %c512_72 = arith.constant 512 : index
    %212 = vector.load %arg6[%c80_71, %c512_72] : memref<112x1024xf32, #tpu.memory_space<vmem>>, vector<8x512xf32>
    tpu.vector_store %arg6[%c80_71, %c512_72], %211 {strides = array<i32>} : memref<112x1024xf32, #tpu.memory_space<vmem>>, vector<8x512xf32>,
    %213 = vector.extract_strided_slice %194 {offsets = [0, 128], sizes = [4, 512], strides = [1, 1]} : vector<4x768xf32> to vector<4x512xf32>
    %214 = arith.mulf %213, %208 : vector<4x512xf32>
    %215 = vector.extract_strided_slice %194 {offsets = [0, 192], sizes = [4, 512], strides = [1, 1]} : vector<4x768xf32> to vector<4x512xf32>
    %216 = arith.mulf %215, %208 : vector<4x512xf32>
    %217 = tpu.concatenate %214, %216 in 0 : vector<4x512xf32>, vector<4x512xf32> -> vector<8x512xf32>
    %c88_73 = arith.constant 88 : index
    %c512_74 = arith.constant 512 : index
    %218 = vector.load %arg6[%c88_73, %c512_74] : memref<112x1024xf32, #tpu.memory_space<vmem>>, vector<8x512xf32>
    tpu.vector_store %arg6[%c88_73, %c512_74], %217 {strides = array<i32>} : memref<112x1024xf32, #tpu.memory_space<vmem>>, vector<8x512xf32>,
    %c8_75 = arith.constant 8 : index
    %c0_76 = arith.constant 0 : index
    %219 = vector.load %arg2[%c8_75, %c0_76] : memref<16x512xf32, #tpu.memory_space<vmem>>, vector<1x512xf32>
    %220 = vector.shape_cast %219 : vector<1x512xf32> to vector<1x512xf32>
    %221 = vector.broadcast %220 : vector<1x512xf32> to vector<4x512xf32>
    %222 = vector.extract_strided_slice %194 {offsets = [0, 72], sizes = [4, 512], strides = [1, 1]} : vector<4x768xf32> to vector<4x512xf32>
    %223 = arith.mulf %222, %221 : vector<4x512xf32>
    %224 = vector.extract_strided_slice %194 {offsets = [0, 136], sizes = [4, 512], strides = [1, 1]} : vector<4x768xf32> to vector<4x512xf32>
    %225 = arith.mulf %224, %221 : vector<4x512xf32>
    %226 = tpu.concatenate %223, %225 in 0 : vector<4x512xf32>, vector<4x512xf32> -> vector<8x512xf32>
    %c96_77 = arith.constant 96 : index
    %c512_78 = arith.constant 512 : index
    %227 = vector.load %arg6[%c96_77, %c512_78] : memref<112x1024xf32, #tpu.memory_space<vmem>>, vector<8x512xf32>
    tpu.vector_store %arg6[%c96_77, %c512_78], %226 {strides = array<i32>} : memref<112x1024xf32, #tpu.memory_space<vmem>>, vector<8x512xf32>,
    %228 = vector.extract_strided_slice %194 {offsets = [0, 200], sizes = [4, 512], strides = [1, 1]} : vector<4x768xf32> to vector<4x512xf32>
    %229 = arith.mulf %228, %221 : vector<4x512xf32>
    %cst_79 = arith.constant 0.000000e+00 : f32
    %230 = vector.broadcast %cst_79 : f32 to vector<4x512xf32>
    %231 = tpu.concatenate %229, %230 in 0 : vector<4x512xf32>, vector<4x512xf32> -> vector<8x512xf32>
    %c104_80 = arith.constant 104 : index
    %c512_81 = arith.constant 512 : index
    %232 = vector.load %arg6[%c104_80, %c512_81] : memref<112x1024xf32, #tpu.memory_space<vmem>>, vector<8x512xf32>
    tpu.vector_store %arg6[%c104_80, %c512_81], %231 {strides = array<i32>} : memref<112x1024xf32, #tpu.memory_space<vmem>>, vector<8x512xf32>,
    %c0_82 = arith.constant 0 : index
    %c0_83 = arith.constant 0 : index
    %233 = vector.load %arg6[%c0_82, %c0_83] : memref<112x1024xf32, #tpu.memory_space<vmem>>, vector<112x1024xf32>
    %cst_84 = arith.constant dense<0.000000e+00> : vector<4x1024xf32>
    %234 = tpu.matmul %1, %233, %cst_84 {dimension_numbers = #tpu.dot_dimension_numbers<[1], [0], [0], [1], [0, 0, 1, 1], [], []>} : vector<4x112xf32>, vector<112x1024xf32>, vector<4x1024xf32> -> vector<4x1024xf32>
    %cst_85 = arith.constant dense<0.000000e+00> : vector<4xf32>
    %235 = vector.multi_reduction <add>, %234, %cst_85 [1] : vector<4x1024xf32> to vector<4xf32>
    %236 = vector.shape_cast %235 : vector<4xf32> to vector<4x1xf32>
    %237 = arith.mulf %234, %234 : vector<4x1024xf32>
    %cst_86 = arith.constant dense<0.000000e+00> : vector<4xf32>
    %238 = vector.multi_reduction <add>, %237, %cst_86 [1] : vector<4x1024xf32> to vector<4xf32>
    %239 = vector.shape_cast %238 : vector<4xf32> to vector<4x1xf32>
    %cst_87 = arith.constant 9.765625E-4 : f32
    %240 = vector.broadcast %cst_87 : f32 to vector<4x1xf32>
    %241 = arith.mulf %236, %240 : vector<4x1xf32>
    %cst_88 = arith.constant 9.765625E-4 : f32
    %242 = vector.broadcast %cst_88 : f32 to vector<4x1xf32>
    %243 = arith.mulf %239, %242 : vector<4x1xf32>
    %244 = arith.mulf %241, %241 : vector<4x1xf32>
    %245 = arith.subf %243, %244 : vector<4x1xf32>
    %cst_89 = arith.constant 9.99999974E-6 : f32
    %246 = vector.broadcast %cst_89 : f32 to vector<4x1xf32>
    %247 = arith.addf %245, %246 : vector<4x1xf32>
    %248 = math.rsqrt %247 : vector<4x1xf32>
    %249 = arith.mulf %2, %248 : vector<4x1xf32>
    %250 = arith.mulf %241, %249 : vector<4x1xf32>
    %251 = arith.subf %3, %250 : vector<4x1xf32>
    %252 = vector.broadcast %249 : vector<4x1xf32> to vector<4x1024xf32>
    %253 = arith.mulf %234, %252 : vector<4x1024xf32>
    %254 = vector.broadcast %251 : vector<4x1xf32> to vector<4x1024xf32>
    %255 = arith.addf %253, %254 : vector<4x1024xf32>
    %cst_90 = arith.constant 0.000000e+00 : f32
    %256 = vector.broadcast %cst_90 : f32 to vector<4x1024xf32>
    %257 = arith.maximumf %255, %256 : vector<4x1024xf32>
    %258 = vector.extract_strided_slice %257 {offsets = [0, 0], sizes = [4, 512], strides = [1, 1]} : vector<4x1024xf32> to vector<4x512xf32>
    %259 = tpu.concatenate %4, %258, %4 in 1 : vector<4x128xf32>, vector<4x512xf32>, vector<4x128xf32> -> vector<4x768xf32>
    %c1_i32_91 = arith.constant 1 : i32
    %260 = tpu.dynamic_rotate %259 by %c1_i32_91 dim 1 : vector<4x768xf32>, i32 -> vector<4x768xf32>
    %c0_92 = arith.constant 0 : index
    %c0_93 = arith.constant 0 : index
    %261 = vector.load %arg2[%c0_92, %c0_93] : memref<16x512xf32, #tpu.memory_space<vmem>>, vector<1x512xf32>
    %262 = vector.shape_cast %261 : vector<1x512xf32> to vector<1x512xf32>
    %263 = vector.broadcast %262 : vector<1x512xf32> to vector<4x512xf32>
    %264 = vector.extract_strided_slice %260 {offsets = [0, 56], sizes = [4, 512], strides = [1, 1]} : vector<4x768xf32> to vector<4x512xf32>
    %265 = arith.mulf %264, %263 : vector<4x512xf32>
    %266 = vector.extract_strided_slice %260 {offsets = [0, 120], sizes = [4, 512], strides = [1, 1]} : vector<4x768xf32> to vector<4x512xf32>
    %267 = arith.mulf %266, %263 : vector<4x512xf32>
    %268 = tpu.concatenate %265, %267 in 0 : vector<4x512xf32>, vector<4x512xf32> -> vector<8x512xf32>
    %c0_94 = arith.constant 0 : index
    %c0_95 = arith.constant 0 : index
    %269 = vector.load %arg6[%c0_94, %c0_95] : memref<112x1024xf32, #tpu.memory_space<vmem>>, vector<8x512xf32>
    tpu.vector_store %arg6[%c0_94, %c0_95], %268 {strides = array<i32>} : memref<112x1024xf32, #tpu.memory_space<vmem>>, vector<8x512xf32>,
    %270 = vector.extract_strided_slice %260 {offsets = [0, 184], sizes = [4, 512], strides = [1, 1]} : vector<4x768xf32> to vector<4x512xf32>
    %271 = arith.mulf %270, %263 : vector<4x512xf32>
    %c3_96 = arith.constant 3 : index
    %c0_97 = arith.constant 0 : index
    %272 = vector.load %arg2[%c3_96, %c0_97] : memref<16x512xf32, #tpu.memory_space<vmem>>, vector<1x512xf32>
    %273 = vector.shape_cast %272 : vector<1x512xf32> to vector<1x512xf32>
    %274 = vector.broadcast %273 : vector<1x512xf32> to vector<4x512xf32>
    %275 = vector.extract_strided_slice %260 {offsets = [0, 64], sizes = [4, 512], strides = [1, 1]} : vector<4x768xf32> to vector<4x512xf32>
    %276 = arith.mulf %275, %274 : vector<4x512xf32>
    %277 = tpu.concatenate %271, %276 in 0 : vector<4x512xf32>, vector<4x512xf32> -> vector<8x512xf32>
    %c8_98 = arith.constant 8 : index
    %c0_99 = arith.constant 0 : index
    %278 = vector.load %arg6[%c8_98, %c0_99] : memref<112x1024xf32, #tpu.memory_space<vmem>>, vector<8x512xf32>
    tpu.vector_store %arg6[%c8_98, %c0_99], %277 {strides = array<i32>} : memref<112x1024xf32, #tpu.memory_space<vmem>>, vector<8x512xf32>,
    %279 = vector.extract_strided_slice %260 {offsets = [0, 128], sizes = [4, 512], strides = [1, 1]} : vector<4x768xf32> to vector<4x512xf32>
    %280 = arith.mulf %279, %274 : vector<4x512xf32>
    %281 = vector.extract_strided_slice %260 {offsets = [0, 192], sizes = [4, 512], strides = [1, 1]} : vector<4x768xf32> to vector<4x512xf32>
    %282 = arith.mulf %281, %274 : vector<4x512xf32>
    %283 = tpu.concatenate %280, %282 in 0 : vector<4x512xf32>, vector<4x512xf32> -> vector<8x512xf32>
    %c16_100 = arith.constant 16 : index
    %c0_101 = arith.constant 0 : index
    %284 = vector.load %arg6[%c16_100, %c0_101] : memref<112x1024xf32, #tpu.memory_space<vmem>>, vector<8x512xf32>
    tpu.vector_store %arg6[%c16_100, %c0_101], %283 {strides = array<i32>} : memref<112x1024xf32, #tpu.memory_space<vmem>>, vector<8x512xf32>,
    %c6_102 = arith.constant 6 : index
    %c0_103 = arith.constant 0 : index
    %285 = vector.load %arg2[%c6_102, %c0_103] : memref<16x512xf32, #tpu.memory_space<vmem>>, vector<1x512xf32>
    %286 = vector.shape_cast %285 : vector<1x512xf32> to vector<1x512xf32>
    %287 = vector.broadcast %286 : vector<1x512xf32> to vector<4x512xf32>
    %288 = vector.extract_strided_slice %260 {offsets = [0, 72], sizes = [4, 512], strides = [1, 1]} : vector<4x768xf32> to vector<4x512xf32>
    %289 = arith.mulf %288, %287 : vector<4x512xf32>
    %290 = vector.extract_strided_slice %260 {offsets = [0, 136], sizes = [4, 512], strides = [1, 1]} : vector<4x768xf32> to vector<4x512xf32>
    %291 = arith.mulf %290, %287 : vector<4x512xf32>
    %292 = tpu.concatenate %289, %291 in 0 : vector<4x512xf32>, vector<4x512xf32> -> vector<8x512xf32>
    %c24_104 = arith.constant 24 : index
    %c0_105 = arith.constant 0 : index
    %293 = vector.load %arg6[%c24_104, %c0_105] : memref<112x1024xf32, #tpu.memory_space<vmem>>, vector<8x512xf32>
    tpu.vector_store %arg6[%c24_104, %c0_105], %292 {strides = array<i32>} : memref<112x1024xf32, #tpu.memory_space<vmem>>, vector<8x512xf32>,
    %294 = vector.extract_strided_slice %260 {offsets = [0, 200], sizes = [4, 512], strides = [1, 1]} : vector<4x768xf32> to vector<4x512xf32>
    %295 = arith.mulf %294, %287 : vector<4x512xf32>
    %c1_106 = arith.constant 1 : index
    %c0_107 = arith.constant 0 : index
    %296 = vector.load %arg2[%c1_106, %c0_107] : memref<16x512xf32, #tpu.memory_space<vmem>>, vector<1x512xf32>
    %297 = vector.shape_cast %296 : vector<1x512xf32> to vector<1x512xf32>
    %298 = vector.broadcast %297 : vector<1x512xf32> to vector<4x512xf32>
    %299 = vector.extract_strided_slice %259 {offsets = [0, 56], sizes = [4, 512], strides = [1, 1]} : vector<4x768xf32> to vector<4x512xf32>
    %300 = arith.mulf %299, %298 : vector<4x512xf32>
    %301 = tpu.concatenate %295, %300 in 0 : vector<4x512xf32>, vector<4x512xf32> -> vector<8x512xf32>
    %c32_108 = arith.constant 32 : index
    %c0_109 = arith.constant 0 : index
    %302 = vector.load %arg6[%c32_108, %c0_109] : memref<112x1024xf32, #tpu.memory_space<vmem>>, vector<8x512xf32>
    tpu.vector_store %arg6[%c32_108, %c0_109], %301 {strides = array<i32>} : memref<112x1024xf32, #tpu.memory_space<vmem>>, vector<8x512xf32>,
    %303 = vector.extract_strided_slice %259 {offsets = [0, 120], sizes = [4, 512], strides = [1, 1]} : vector<4x768xf32> to vector<4x512xf32>
    %304 = arith.mulf %303, %298 : vector<4x512xf32>
    %305 = vector.extract_strided_slice %259 {offsets = [0, 184], sizes = [4, 512], strides = [1, 1]} : vector<4x768xf32> to vector<4x512xf32>
    %306 = arith.mulf %305, %298 : vector<4x512xf32>
    %307 = tpu.concatenate %304, %306 in 0 : vector<4x512xf32>, vector<4x512xf32> -> vector<8x512xf32>
    %c40_110 = arith.constant 40 : index
    %c0_111 = arith.constant 0 : index
    %308 = vector.load %arg6[%c40_110, %c0_111] : memref<112x1024xf32, #tpu.memory_space<vmem>>, vector<8x512xf32>
    tpu.vector_store %arg6[%c40_110, %c0_111], %307 {strides = array<i32>} : memref<112x1024xf32, #tpu.memory_space<vmem>>, vector<8x512xf32>,
    %c4_112 = arith.constant 4 : index
    %c0_113 = arith.constant 0 : index
    %309 = vector.load %arg2[%c4_112, %c0_113] : memref<16x512xf32, #tpu.memory_space<vmem>>, vector<1x512xf32>
    %310 = vector.shape_cast %309 : vector<1x512xf32> to vector<1x512xf32>
    %311 = vector.broadcast %310 : vector<1x512xf32> to vector<4x512xf32>
    %312 = vector.extract_strided_slice %259 {offsets = [0, 64], sizes = [4, 512], strides = [1, 1]} : vector<4x768xf32> to vector<4x512xf32>
    %313 = arith.mulf %312, %311 : vector<4x512xf32>
    %314 = vector.extract_strided_slice %259 {offsets = [0, 128], sizes = [4, 512], strides = [1, 1]} : vector<4x768xf32> to vector<4x512xf32>
    %315 = arith.mulf %314, %311 : vector<4x512xf32>
    %316 = tpu.concatenate %313, %315 in 0 : vector<4x512xf32>, vector<4x512xf32> -> vector<8x512xf32>
    %c48_114 = arith.constant 48 : index
    %c0_115 = arith.constant 0 : index
    %317 = vector.load %arg6[%c48_114, %c0_115] : memref<112x1024xf32, #tpu.memory_space<vmem>>, vector<8x512xf32>
    tpu.vector_store %arg6[%c48_114, %c0_115], %316 {strides = array<i32>} : memref<112x1024xf32, #tpu.memory_space<vmem>>, vector<8x512xf32>,
    %318 = vector.extract_strided_slice %259 {offsets = [0, 192], sizes = [4, 512], strides = [1, 1]} : vector<4x768xf32> to vector<4x512xf32>
    %319 = arith.mulf %318, %311 : vector<4x512xf32>
    %c7_116 = arith.constant 7 : index
    %c0_117 = arith.constant 0 : index
    %320 = vector.load %arg2[%c7_116, %c0_117] : memref<16x512xf32, #tpu.memory_space<vmem>>, vector<1x512xf32>
    %321 = vector.shape_cast %320 : vector<1x512xf32> to vector<1x512xf32>
    %322 = vector.broadcast %321 : vector<1x512xf32> to vector<4x512xf32>
    %323 = vector.extract_strided_slice %259 {offsets = [0, 72], sizes = [4, 512], strides = [1, 1]} : vector<4x768xf32> to vector<4x512xf32>
    %324 = arith.mulf %323, %322 : vector<4x512xf32>
    %325 = tpu.concatenate %319, %324 in 0 : vector<4x512xf32>, vector<4x512xf32> -> vector<8x512xf32>
    %c56_118 = arith.constant 56 : index
    %c0_119 = arith.constant 0 : index
    %326 = vector.load %arg6[%c56_118, %c0_119] : memref<112x1024xf32, #tpu.memory_space<vmem>>, vector<8x512xf32>
    tpu.vector_store %arg6[%c56_118, %c0_119], %325 {strides = array<i32>} : memref<112x1024xf32, #tpu.memory_space<vmem>>, vector<8x512xf32>,
    %327 = vector.extract_strided_slice %259 {offsets = [0, 136], sizes = [4, 512], strides = [1, 1]} : vector<4x768xf32> to vector<4x512xf32>
    %328 = arith.mulf %327, %322 : vector<4x512xf32>
    %329 = vector.extract_strided_slice %259 {offsets = [0, 200], sizes = [4, 512], strides = [1, 1]} : vector<4x768xf32> to vector<4x512xf32>
    %330 = arith.mulf %329, %322 : vector<4x512xf32>
    %331 = tpu.concatenate %328, %330 in 0 : vector<4x512xf32>, vector<4x512xf32> -> vector<8x512xf32>
    %c64_120 = arith.constant 64 : index
    %c0_121 = arith.constant 0 : index
    %332 = vector.load %arg6[%c64_120, %c0_121] : memref<112x1024xf32, #tpu.memory_space<vmem>>, vector<8x512xf32>
    tpu.vector_store %arg6[%c64_120, %c0_121], %331 {strides = array<i32>} : memref<112x1024xf32, #tpu.memory_space<vmem>>, vector<8x512xf32>,
    %c767_i32_122 = arith.constant 767 : i32
    %333 = tpu.dynamic_rotate %259 by %c767_i32_122 dim 1 : vector<4x768xf32>, i32 -> vector<4x768xf32>
    %c2_123 = arith.constant 2 : index
    %c0_124 = arith.constant 0 : index
    %334 = vector.load %arg2[%c2_123, %c0_124] : memref<16x512xf32, #tpu.memory_space<vmem>>, vector<1x512xf32>
    %335 = vector.shape_cast %334 : vector<1x512xf32> to vector<1x512xf32>
    %336 = vector.broadcast %335 : vector<1x512xf32> to vector<4x512xf32>
    %337 = vector.extract_strided_slice %333 {offsets = [0, 56], sizes = [4, 512], strides = [1, 1]} : vector<4x768xf32> to vector<4x512xf32>
    %338 = arith.mulf %337, %336 : vector<4x512xf32>
    %339 = vector.extract_strided_slice %333 {offsets = [0, 120], sizes = [4, 512], strides = [1, 1]} : vector<4x768xf32> to vector<4x512xf32>
    %340 = arith.mulf %339, %336 : vector<4x512xf32>
    %341 = tpu.concatenate %338, %340 in 0 : vector<4x512xf32>, vector<4x512xf32> -> vector<8x512xf32>
    %c72_125 = arith.constant 72 : index
    %c0_126 = arith.constant 0 : index
    %342 = vector.load %arg6[%c72_125, %c0_126] : memref<112x1024xf32, #tpu.memory_space<vmem>>, vector<8x512xf32>
    tpu.vector_store %arg6[%c72_125, %c0_126], %341 {strides = array<i32>} : memref<112x1024xf32, #tpu.memory_space<vmem>>, vector<8x512xf32>,
    %343 = vector.extract_strided_slice %333 {offsets = [0, 184], sizes = [4, 512], strides = [1, 1]} : vector<4x768xf32> to vector<4x512xf32>
    %344 = arith.mulf %343, %336 : vector<4x512xf32>
    %c5_127 = arith.constant 5 : index
    %c0_128 = arith.constant 0 : index
    %345 = vector.load %arg2[%c5_127, %c0_128] : memref<16x512xf32, #tpu.memory_space<vmem>>, vector<1x512xf32>
    %346 = vector.shape_cast %345 : vector<1x512xf32> to vector<1x512xf32>
    %347 = vector.broadcast %346 : vector<1x512xf32> to vector<4x512xf32>
    %348 = vector.extract_strided_slice %333 {offsets = [0, 64], sizes = [4, 512], strides = [1, 1]} : vector<4x768xf32> to vector<4x512xf32>
    %349 = arith.mulf %348, %347 : vector<4x512xf32>
    %350 = tpu.concatenate %344, %349 in 0 : vector<4x512xf32>, vector<4x512xf32> -> vector<8x512xf32>
    %c80_129 = arith.constant 80 : index
    %c0_130 = arith.constant 0 : index
    %351 = vector.load %arg6[%c80_129, %c0_130] : memref<112x1024xf32, #tpu.memory_space<vmem>>, vector<8x512xf32>
    tpu.vector_store %arg6[%c80_129, %c0_130], %350 {strides = array<i32>} : memref<112x1024xf32, #tpu.memory_space<vmem>>, vector<8x512xf32>,
    %352 = vector.extract_strided_slice %333 {offsets = [0, 128], sizes = [4, 512], strides = [1, 1]} : vector<4x768xf32> to vector<4x512xf32>
    %353 = arith.mulf %352, %347 : vector<4x512xf32>
    %354 = vector.extract_strided_slice %333 {offsets = [0, 192], sizes = [4, 512], strides = [1, 1]} : vector<4x768xf32> to vector<4x512xf32>
    %355 = arith.mulf %354, %347 : vector<4x512xf32>
    %356 = tpu.concatenate %353, %355 in 0 : vector<4x512xf32>, vector<4x512xf32> -> vector<8x512xf32>
    %c88_131 = arith.constant 88 : index
    %c0_132 = arith.constant 0 : index
    %357 = vector.load %arg6[%c88_131, %c0_132] : memref<112x1024xf32, #tpu.memory_space<vmem>>, vector<8x512xf32>
    tpu.vector_store %arg6[%c88_131, %c0_132], %356 {strides = array<i32>} : memref<112x1024xf32, #tpu.memory_space<vmem>>, vector<8x512xf32>,
    %c8_133 = arith.constant 8 : index
    %c0_134 = arith.constant 0 : index
    %358 = vector.load %arg2[%c8_133, %c0_134] : memref<16x512xf32, #tpu.memory_space<vmem>>, vector<1x512xf32>
    %359 = vector.shape_cast %358 : vector<1x512xf32> to vector<1x512xf32>
    %360 = vector.broadcast %359 : vector<1x512xf32> to vector<4x512xf32>
    %361 = vector.extract_strided_slice %333 {offsets = [0, 72], sizes = [4, 512], strides = [1, 1]} : vector<4x768xf32> to vector<4x512xf32>
    %362 = arith.mulf %361, %360 : vector<4x512xf32>
    %363 = vector.extract_strided_slice %333 {offsets = [0, 136], sizes = [4, 512], strides = [1, 1]} : vector<4x768xf32> to vector<4x512xf32>
    %364 = arith.mulf %363, %360 : vector<4x512xf32>
    %365 = tpu.concatenate %362, %364 in 0 : vector<4x512xf32>, vector<4x512xf32> -> vector<8x512xf32>
    %c96_135 = arith.constant 96 : index
    %c0_136 = arith.constant 0 : index
    %366 = vector.load %arg6[%c96_135, %c0_136] : memref<112x1024xf32, #tpu.memory_space<vmem>>, vector<8x512xf32>
    tpu.vector_store %arg6[%c96_135, %c0_136], %365 {strides = array<i32>} : memref<112x1024xf32, #tpu.memory_space<vmem>>, vector<8x512xf32>,
    %367 = vector.extract_strided_slice %333 {offsets = [0, 200], sizes = [4, 512], strides = [1, 1]} : vector<4x768xf32> to vector<4x512xf32>
    %368 = arith.mulf %367, %360 : vector<4x512xf32>
    %cst_137 = arith.constant 0.000000e+00 : f32
    %369 = vector.broadcast %cst_137 : f32 to vector<4x512xf32>
    %370 = tpu.concatenate %368, %369 in 0 : vector<4x512xf32>, vector<4x512xf32> -> vector<8x512xf32>
    %c104_138 = arith.constant 104 : index
    %c0_139 = arith.constant 0 : index
    %371 = vector.load %arg6[%c104_138, %c0_139] : memref<112x1024xf32, #tpu.memory_space<vmem>>, vector<8x512xf32>
    tpu.vector_store %arg6[%c104_138, %c0_139], %370 {strides = array<i32>} : memref<112x1024xf32, #tpu.memory_space<vmem>>, vector<8x512xf32>,
    %372 = vector.extract_strided_slice %257 {offsets = [0, 512], sizes = [4, 512], strides = [1, 1]} : vector<4x1024xf32> to vector<4x512xf32>
    %373 = tpu.concatenate %4, %372, %4 in 1 : vector<4x128xf32>, vector<4x512xf32>, vector<4x128xf32> -> vector<4x768xf32>
    %c1_i32_140 = arith.constant 1 : i32
    %374 = tpu.dynamic_rotate %373 by %c1_i32_140 dim 1 : vector<4x768xf32>, i32 -> vector<4x768xf32>
    %c0_141 = arith.constant 0 : index
    %c0_142 = arith.constant 0 : index
    %375 = vector.load %arg2[%c0_141, %c0_142] : memref<16x512xf32, #tpu.memory_space<vmem>>, vector<1x512xf32>
    %376 = vector.shape_cast %375 : vector<1x512xf32> to vector<1x512xf32>
    %377 = vector.broadcast %376 : vector<1x512xf32> to vector<4x512xf32>
    %378 = vector.extract_strided_slice %374 {offsets = [0, 56], sizes = [4, 512], strides = [1, 1]} : vector<4x768xf32> to vector<4x512xf32>
    %379 = arith.mulf %378, %377 : vector<4x512xf32>
    %380 = vector.extract_strided_slice %374 {offsets = [0, 120], sizes = [4, 512], strides = [1, 1]} : vector<4x768xf32> to vector<4x512xf32>
    %381 = arith.mulf %380, %377 : vector<4x512xf32>
    %382 = tpu.concatenate %379, %381 in 0 : vector<4x512xf32>, vector<4x512xf32> -> vector<8x512xf32>
    %c0_143 = arith.constant 0 : index
    %c512_144 = arith.constant 512 : index
    %383 = vector.load %arg6[%c0_143, %c512_144] : memref<112x1024xf32, #tpu.memory_space<vmem>>, vector<8x512xf32>
    tpu.vector_store %arg6[%c0_143, %c512_144], %382 {strides = array<i32>} : memref<112x1024xf32, #tpu.memory_space<vmem>>, vector<8x512xf32>,
    %384 = vector.extract_strided_slice %374 {offsets = [0, 184], sizes = [4, 512], strides = [1, 1]} : vector<4x768xf32> to vector<4x512xf32>
    %385 = arith.mulf %384, %377 : vector<4x512xf32>
    %c3_145 = arith.constant 3 : index
    %c0_146 = arith.constant 0 : index
    %386 = vector.load %arg2[%c3_145, %c0_146] : memref<16x512xf32, #tpu.memory_space<vmem>>, vector<1x512xf32>
    %387 = vector.shape_cast %386 : vector<1x512xf32> to vector<1x512xf32>
    %388 = vector.broadcast %387 : vector<1x512xf32> to vector<4x512xf32>
    %389 = vector.extract_strided_slice %374 {offsets = [0, 64], sizes = [4, 512], strides = [1, 1]} : vector<4x768xf32> to vector<4x512xf32>
    %390 = arith.mulf %389, %388 : vector<4x512xf32>
    %391 = tpu.concatenate %385, %390 in 0 : vector<4x512xf32>, vector<4x512xf32> -> vector<8x512xf32>
    %c8_147 = arith.constant 8 : index
    %c512_148 = arith.constant 512 : index
    %392 = vector.load %arg6[%c8_147, %c512_148] : memref<112x1024xf32, #tpu.memory_space<vmem>>, vector<8x512xf32>
    tpu.vector_store %arg6[%c8_147, %c512_148], %391 {strides = array<i32>} : memref<112x1024xf32, #tpu.memory_space<vmem>>, vector<8x512xf32>,
    %393 = vector.extract_strided_slice %374 {offsets = [0, 128], sizes = [4, 512], strides = [1, 1]} : vector<4x768xf32> to vector<4x512xf32>
    %394 = arith.mulf %393, %388 : vector<4x512xf32>
    %395 = vector.extract_strided_slice %374 {offsets = [0, 192], sizes = [4, 512], strides = [1, 1]} : vector<4x768xf32> to vector<4x512xf32>
    %396 = arith.mulf %395, %388 : vector<4x512xf32>
    %397 = tpu.concatenate %394, %396 in 0 : vector<4x512xf32>, vector<4x512xf32> -> vector<8x512xf32>
    %c16_149 = arith.constant 16 : index
    %c512_150 = arith.constant 512 : index
    %398 = vector.load %arg6[%c16_149, %c512_150] : memref<112x1024xf32, #tpu.memory_space<vmem>>, vector<8x512xf32>
    tpu.vector_store %arg6[%c16_149, %c512_150], %397 {strides = array<i32>} : memref<112x1024xf32, #tpu.memory_space<vmem>>, vector<8x512xf32>,
    %c6_151 = arith.constant 6 : index
    %c0_152 = arith.constant 0 : index
    %399 = vector.load %arg2[%c6_151, %c0_152] : memref<16x512xf32, #tpu.memory_space<vmem>>, vector<1x512xf32>
    %400 = vector.shape_cast %399 : vector<1x512xf32> to vector<1x512xf32>
    %401 = vector.broadcast %400 : vector<1x512xf32> to vector<4x512xf32>
    %402 = vector.extract_strided_slice %374 {offsets = [0, 72], sizes = [4, 512], strides = [1, 1]} : vector<4x768xf32> to vector<4x512xf32>
    %403 = arith.mulf %402, %401 : vector<4x512xf32>
    %404 = vector.extract_strided_slice %374 {offsets = [0, 136], sizes = [4, 512], strides = [1, 1]} : vector<4x768xf32> to vector<4x512xf32>
    %405 = arith.mulf %404, %401 : vector<4x512xf32>
    %406 = tpu.concatenate %403, %405 in 0 : vector<4x512xf32>, vector<4x512xf32> -> vector<8x512xf32>
    %c24_153 = arith.constant 24 : index
    %c512_154 = arith.constant 512 : index
    %407 = vector.load %arg6[%c24_153, %c512_154] : memref<112x1024xf32, #tpu.memory_space<vmem>>, vector<8x512xf32>
    tpu.vector_store %arg6[%c24_153, %c512_154], %406 {strides = array<i32>} : memref<112x1024xf32, #tpu.memory_space<vmem>>, vector<8x512xf32>,
    %408 = vector.extract_strided_slice %374 {offsets = [0, 200], sizes = [4, 512], strides = [1, 1]} : vector<4x768xf32> to vector<4x512xf32>
    %409 = arith.mulf %408, %401 : vector<4x512xf32>
    %c1_155 = arith.constant 1 : index
    %c0_156 = arith.constant 0 : index
    %410 = vector.load %arg2[%c1_155, %c0_156] : memref<16x512xf32, #tpu.memory_space<vmem>>, vector<1x512xf32>
    %411 = vector.shape_cast %410 : vector<1x512xf32> to vector<1x512xf32>
    %412 = vector.broadcast %411 : vector<1x512xf32> to vector<4x512xf32>
    %413 = vector.extract_strided_slice %373 {offsets = [0, 56], sizes = [4, 512], strides = [1, 1]} : vector<4x768xf32> to vector<4x512xf32>
    %414 = arith.mulf %413, %412 : vector<4x512xf32>
    %415 = tpu.concatenate %409, %414 in 0 : vector<4x512xf32>, vector<4x512xf32> -> vector<8x512xf32>
    %c32_157 = arith.constant 32 : index
    %c512_158 = arith.constant 512 : index
    %416 = vector.load %arg6[%c32_157, %c512_158] : memref<112x1024xf32, #tpu.memory_space<vmem>>, vector<8x512xf32>
    tpu.vector_store %arg6[%c32_157, %c512_158], %415 {strides = array<i32>} : memref<112x1024xf32, #tpu.memory_space<vmem>>, vector<8x512xf32>,
    %417 = vector.extract_strided_slice %373 {offsets = [0, 120], sizes = [4, 512], strides = [1, 1]} : vector<4x768xf32> to vector<4x512xf32>
    %418 = arith.mulf %417, %412 : vector<4x512xf32>
    %419 = vector.extract_strided_slice %373 {offsets = [0, 184], sizes = [4, 512], strides = [1, 1]} : vector<4x768xf32> to vector<4x512xf32>
    %420 = arith.mulf %419, %412 : vector<4x512xf32>
    %421 = tpu.concatenate %418, %420 in 0 : vector<4x512xf32>, vector<4x512xf32> -> vector<8x512xf32>
    %c40_159 = arith.constant 40 : index
    %c512_160 = arith.constant 512 : index
    %422 = vector.load %arg6[%c40_159, %c512_160] : memref<112x1024xf32, #tpu.memory_space<vmem>>, vector<8x512xf32>
    tpu.vector_store %arg6[%c40_159, %c512_160], %421 {strides = array<i32>} : memref<112x1024xf32, #tpu.memory_space<vmem>>, vector<8x512xf32>,
    %c4_161 = arith.constant 4 : index
    %c0_162 = arith.constant 0 : index
    %423 = vector.load %arg2[%c4_161, %c0_162] : memref<16x512xf32, #tpu.memory_space<vmem>>, vector<1x512xf32>
    %424 = vector.shape_cast %423 : vector<1x512xf32> to vector<1x512xf32>
    %425 = vector.broadcast %424 : vector<1x512xf32> to vector<4x512xf32>
    %426 = vector.extract_strided_slice %373 {offsets = [0, 64], sizes = [4, 512], strides = [1, 1]} : vector<4x768xf32> to vector<4x512xf32>
    %427 = arith.mulf %426, %425 : vector<4x512xf32>
    %428 = vector.extract_strided_slice %373 {offsets = [0, 128], sizes = [4, 512], strides = [1, 1]} : vector<4x768xf32> to vector<4x512xf32>
    %429 = arith.mulf %428, %425 : vector<4x512xf32>
    %430 = tpu.concatenate %427, %429 in 0 : vector<4x512xf32>, vector<4x512xf32> -> vector<8x512xf32>
    %c48_163 = arith.constant 48 : index
    %c512_164 = arith.constant 512 : index
    %431 = vector.load %arg6[%c48_163, %c512_164] : memref<112x1024xf32, #tpu.memory_space<vmem>>, vector<8x512xf32>
    tpu.vector_store %arg6[%c48_163, %c512_164], %430 {strides = array<i32>} : memref<112x1024xf32, #tpu.memory_space<vmem>>, vector<8x512xf32>,
    %432 = vector.extract_strided_slice %373 {offsets = [0, 192], sizes = [4, 512], strides = [1, 1]} : vector<4x768xf32> to vector<4x512xf32>
    %433 = arith.mulf %432, %425 : vector<4x512xf32>
    %c7_165 = arith.constant 7 : index
    %c0_166 = arith.constant 0 : index
    %434 = vector.load %arg2[%c7_165, %c0_166] : memref<16x512xf32, #tpu.memory_space<vmem>>, vector<1x512xf32>
    %435 = vector.shape_cast %434 : vector<1x512xf32> to vector<1x512xf32>
    %436 = vector.broadcast %435 : vector<1x512xf32> to vector<4x512xf32>
    %437 = vector.extract_strided_slice %373 {offsets = [0, 72], sizes = [4, 512], strides = [1, 1]} : vector<4x768xf32> to vector<4x512xf32>
    %438 = arith.mulf %437, %436 : vector<4x512xf32>
    %439 = tpu.concatenate %433, %438 in 0 : vector<4x512xf32>, vector<4x512xf32> -> vector<8x512xf32>
    %c56_167 = arith.constant 56 : index
    %c512_168 = arith.constant 512 : index
    %440 = vector.load %arg6[%c56_167, %c512_168] : memref<112x1024xf32, #tpu.memory_space<vmem>>, vector<8x512xf32>
    tpu.vector_store %arg6[%c56_167, %c512_168], %439 {strides = array<i32>} : memref<112x1024xf32, #tpu.memory_space<vmem>>, vector<8x512xf32>,
    %441 = vector.extract_strided_slice %373 {offsets = [0, 136], sizes = [4, 512], strides = [1, 1]} : vector<4x768xf32> to vector<4x512xf32>
    %442 = arith.mulf %441, %436 : vector<4x512xf32>
    %443 = vector.extract_strided_slice %373 {offsets = [0, 200], sizes = [4, 512], strides = [1, 1]} : vector<4x768xf32> to vector<4x512xf32>
    %444 = arith.mulf %443, %436 : vector<4x512xf32>
    %445 = tpu.concatenate %442, %444 in 0 : vector<4x512xf32>, vector<4x512xf32> -> vector<8x512xf32>
    %c64_169 = arith.constant 64 : index
    %c512_170 = arith.constant 512 : index
    %446 = vector.load %arg6[%c64_169, %c512_170] : memref<112x1024xf32, #tpu.memory_space<vmem>>, vector<8x512xf32>
    tpu.vector_store %arg6[%c64_169, %c512_170], %445 {strides = array<i32>} : memref<112x1024xf32, #tpu.memory_space<vmem>>, vector<8x512xf32>,
    %c767_i32_171 = arith.constant 767 : i32
    %447 = tpu.dynamic_rotate %373 by %c767_i32_171 dim 1 : vector<4x768xf32>, i32 -> vector<4x768xf32>
    %c2_172 = arith.constant 2 : index
    %c0_173 = arith.constant 0 : index
    %448 = vector.load %arg2[%c2_172, %c0_173] : memref<16x512xf32, #tpu.memory_space<vmem>>, vector<1x512xf32>
    %449 = vector.shape_cast %448 : vector<1x512xf32> to vector<1x512xf32>
    %450 = vector.broadcast %449 : vector<1x512xf32> to vector<4x512xf32>
    %451 = vector.extract_strided_slice %447 {offsets = [0, 56], sizes = [4, 512], strides = [1, 1]} : vector<4x768xf32> to vector<4x512xf32>
    %452 = arith.mulf %451, %450 : vector<4x512xf32>
    %453 = vector.extract_strided_slice %447 {offsets = [0, 120], sizes = [4, 512], strides = [1, 1]} : vector<4x768xf32> to vector<4x512xf32>
    %454 = arith.mulf %453, %450 : vector<4x512xf32>
    %455 = tpu.concatenate %452, %454 in 0 : vector<4x512xf32>, vector<4x512xf32> -> vector<8x512xf32>
    %c72_174 = arith.constant 72 : index
    %c512_175 = arith.constant 512 : index
    %456 = vector.load %arg6[%c72_174, %c512_175] : memref<112x1024xf32, #tpu.memory_space<vmem>>, vector<8x512xf32>
    tpu.vector_store %arg6[%c72_174, %c512_175], %455 {strides = array<i32>} : memref<112x1024xf32, #tpu.memory_space<vmem>>, vector<8x512xf32>,
    %457 = vector.extract_strided_slice %447 {offsets = [0, 184], sizes = [4, 512], strides = [1, 1]} : vector<4x768xf32> to vector<4x512xf32>
    %458 = arith.mulf %457, %450 : vector<4x512xf32>
    %c5_176 = arith.constant 5 : index
    %c0_177 = arith.constant 0 : index
    %459 = vector.load %arg2[%c5_176, %c0_177] : memref<16x512xf32, #tpu.memory_space<vmem>>, vector<1x512xf32>
    %460 = vector.shape_cast %459 : vector<1x512xf32> to vector<1x512xf32>
    %461 = vector.broadcast %460 : vector<1x512xf32> to vector<4x512xf32>
    %462 = vector.extract_strided_slice %447 {offsets = [0, 64], sizes = [4, 512], strides = [1, 1]} : vector<4x768xf32> to vector<4x512xf32>
    %463 = arith.mulf %462, %461 : vector<4x512xf32>
    %464 = tpu.concatenate %458, %463 in 0 : vector<4x512xf32>, vector<4x512xf32> -> vector<8x512xf32>
    %c80_178 = arith.constant 80 : index
    %c512_179 = arith.constant 512 : index
    %465 = vector.load %arg6[%c80_178, %c512_179] : memref<112x1024xf32, #tpu.memory_space<vmem>>, vector<8x512xf32>
    tpu.vector_store %arg6[%c80_178, %c512_179], %464 {strides = array<i32>} : memref<112x1024xf32, #tpu.memory_space<vmem>>, vector<8x512xf32>,
    %466 = vector.extract_strided_slice %447 {offsets = [0, 128], sizes = [4, 512], strides = [1, 1]} : vector<4x768xf32> to vector<4x512xf32>
    %467 = arith.mulf %466, %461 : vector<4x512xf32>
    %468 = vector.extract_strided_slice %447 {offsets = [0, 192], sizes = [4, 512], strides = [1, 1]} : vector<4x768xf32> to vector<4x512xf32>
    %469 = arith.mulf %468, %461 : vector<4x512xf32>
    %470 = tpu.concatenate %467, %469 in 0 : vector<4x512xf32>, vector<4x512xf32> -> vector<8x512xf32>
    %c88_180 = arith.constant 88 : index
    %c512_181 = arith.constant 512 : index
    %471 = vector.load %arg6[%c88_180, %c512_181] : memref<112x1024xf32, #tpu.memory_space<vmem>>, vector<8x512xf32>
    tpu.vector_store %arg6[%c88_180, %c512_181], %470 {strides = array<i32>} : memref<112x1024xf32, #tpu.memory_space<vmem>>, vector<8x512xf32>,
    %c8_182 = arith.constant 8 : index
    %c0_183 = arith.constant 0 : index
    %472 = vector.load %arg2[%c8_182, %c0_183] : memref<16x512xf32, #tpu.memory_space<vmem>>, vector<1x512xf32>
    %473 = vector.shape_cast %472 : vector<1x512xf32> to vector<1x512xf32>
    %474 = vector.broadcast %473 : vector<1x512xf32> to vector<4x512xf32>
    %475 = vector.extract_strided_slice %447 {offsets = [0, 72], sizes = [4, 512], strides = [1, 1]} : vector<4x768xf32> to vector<4x512xf32>
    %476 = arith.mulf %475, %474 : vector<4x512xf32>
    %477 = vector.extract_strided_slice %447 {offsets = [0, 136], sizes = [4, 512], strides = [1, 1]} : vector<4x768xf32> to vector<4x512xf32>
    %478 = arith.mulf %477, %474 : vector<4x512xf32>
    %479 = tpu.concatenate %476, %478 in 0 : vector<4x512xf32>, vector<4x512xf32> -> vector<8x512xf32>
    %c96_184 = arith.constant 96 : index
    %c512_185 = arith.constant 512 : index
    %480 = vector.load %arg6[%c96_184, %c512_185] : memref<112x1024xf32, #tpu.memory_space<vmem>>, vector<8x512xf32>
    tpu.vector_store %arg6[%c96_184, %c512_185], %479 {strides = array<i32>} : memref<112x1024xf32, #tpu.memory_space<vmem>>, vector<8x512xf32>,
    %481 = vector.extract_strided_slice %447 {offsets = [0, 200], sizes = [4, 512], strides = [1, 1]} : vector<4x768xf32> to vector<4x512xf32>
    %482 = arith.mulf %481, %474 : vector<4x512xf32>
    %cst_186 = arith.constant 0.000000e+00 : f32
    %483 = vector.broadcast %cst_186 : f32 to vector<4x512xf32>
    %484 = tpu.concatenate %482, %483 in 0 : vector<4x512xf32>, vector<4x512xf32> -> vector<8x512xf32>
    %c104_187 = arith.constant 104 : index
    %c512_188 = arith.constant 512 : index
    %485 = vector.load %arg6[%c104_187, %c512_188] : memref<112x1024xf32, #tpu.memory_space<vmem>>, vector<8x512xf32>
    tpu.vector_store %arg6[%c104_187, %c512_188], %484 {strides = array<i32>} : memref<112x1024xf32, #tpu.memory_space<vmem>>, vector<8x512xf32>,
    %c0_189 = arith.constant 0 : index
    %c0_190 = arith.constant 0 : index
    %486 = vector.load %arg6[%c0_189, %c0_190] : memref<112x1024xf32, #tpu.memory_space<vmem>>, vector<112x1024xf32>
    %cst_191 = arith.constant dense<0.000000e+00> : vector<4x1024xf32>
    %487 = tpu.matmul %1, %486, %cst_191 {dimension_numbers = #tpu.dot_dimension_numbers<[1], [0], [0], [1], [0, 0, 1, 1], [], []>} : vector<4x112xf32>, vector<112x1024xf32>, vector<4x1024xf32> -> vector<4x1024xf32>
    %cst_192 = arith.constant dense<0.000000e+00> : vector<4xf32>
    %488 = vector.multi_reduction <add>, %487, %cst_192 [1] : vector<4x1024xf32> to vector<4xf32>
    %489 = vector.shape_cast %488 : vector<4xf32> to vector<4x1xf32>
    %490 = arith.mulf %487, %487 : vector<4x1024xf32>
    %cst_193 = arith.constant dense<0.000000e+00> : vector<4xf32>
    %491 = vector.multi_reduction <add>, %490, %cst_193 [1] : vector<4x1024xf32> to vector<4xf32>
    %492 = vector.shape_cast %491 : vector<4xf32> to vector<4x1xf32>
    %cst_194 = arith.constant 9.765625E-4 : f32
    %493 = vector.broadcast %cst_194 : f32 to vector<4x1xf32>
    %494 = arith.mulf %489, %493 : vector<4x1xf32>
    %cst_195 = arith.constant 9.765625E-4 : f32
    %495 = vector.broadcast %cst_195 : f32 to vector<4x1xf32>
    %496 = arith.mulf %492, %495 : vector<4x1xf32>
    %497 = arith.mulf %494, %494 : vector<4x1xf32>
    %498 = arith.subf %496, %497 : vector<4x1xf32>
    %cst_196 = arith.constant 9.99999974E-6 : f32
    %499 = vector.broadcast %cst_196 : f32 to vector<4x1xf32>
    %500 = arith.addf %498, %499 : vector<4x1xf32>
    %501 = math.rsqrt %500 : vector<4x1xf32>
    %502 = arith.mulf %2, %501 : vector<4x1xf32>
    %503 = arith.mulf %494, %502 : vector<4x1xf32>
    %504 = arith.subf %3, %503 : vector<4x1xf32>
    %505 = vector.broadcast %502 : vector<4x1xf32> to vector<4x1024xf32>
    %506 = arith.mulf %487, %505 : vector<4x1024xf32>
    %507 = vector.broadcast %504 : vector<4x1xf32> to vector<4x1024xf32>
    %508 = arith.addf %506, %507 : vector<4x1024xf32>
    %cst_197 = arith.constant 0.000000e+00 : f32
    %509 = vector.broadcast %cst_197 : f32 to vector<4x1024xf32>
    %510 = arith.maximumf %508, %509 : vector<4x1024xf32>
    %511 = arith.mulf %257, %510 : vector<4x1024xf32>
    %512 = arith.addf %511, %0 : vector<4x1024xf32>
    %c0_198 = arith.constant 0 : index
    %c0_199 = arith.constant 0 : index
    %513 = vector.load %arg5[%c0_198, %c0_199] : memref<4x1024xf32, #tpu.memory_space<vmem>>, vector<4x1024xf32>
    tpu.vector_store %arg5[%c0_198, %c0_199], %512 {strides = array<i32>} : memref<4x1024xf32, #tpu.memory_space<vmem>>, vector<4x1024xf32>,
    return
  }
}

</mosaic_0001>

<llo_original>
// kernel: tpu_custom_call.1
$region0: #{tpu_custom_call.1}
  #allocation0 [shape = 'u32[]', space=smem, size = 0x4, offset = 0x4, fixed_abs, tag = 'smem constant byte address 0x4 - core index']
  #allocation1 [shape = 'u32[144,128]{1,0:T(1,128)}', space=vmem, size = 0x12000, scoped, tag = 'internal scratch']
  #allocation2 [shape = 'f32[112,1024]{1,0:T(8,128)}', space=vmem, size = 0x70000, scoped, tag = 'scratch operand']
  %s0 = inlined_call_operand.hbm [shape: f32[4,1024], index: 0, kind: input, shape index: {}]
  %s1 = inlined_call_operand.vmem [shape: f32[4,112], index: 1, kind: input, shape index: {}]
  %s2 = inlined_call_operand.hbm [shape: f32[16,512], index: 2, kind: input, shape index: {}]
  %s3 = inlined_call_operand.vmem [shape: f32[4,1], index: 3, kind: input, shape index: {}]
  %s4 = inlined_call_operand.vmem [shape: f32[4,1], index: 4, kind: input, shape index: {}]
  %s5 = inlined_call_operand.hbm [shape: f32[4,1024], index: 5, kind: output, shape index: {}]
  %s6 = sld [smem:[#allocation0]]
  $region38: #{tpu_custom_call.1} parent=0
    _
  %s8 = ssub.s32 1, %s6
  %s9 = scalar_select 0, %s8, %s6
  $region1: #{tpu_custom_call.1} parent=0
    #allocation3 [shape = 'u8[16384]{0}', space=vmem, size = 0x4000, scoped, tag = 'input window, operand 0, single buffered']
    #allocation4 [shape = 's32[1]{0}', space=sflag, size = 0x4, scoped, tag = 'scoped memory for tpu_custom_call.1']
    #allocation5 [shape = 's32[1]{0}', space=sflag, size = 0x4, scoped, tag = 'scoped memory for tpu_custom_call.1']
    #allocation6 [shape = 'u8[32768]{0}', space=vmem, size = 0x8000, scoped, tag = 'input window, operand 2, single buffered']
    #allocation7 [shape = 's32[1]{0}', space=sflag, size = 0x4, scoped, tag = 'scoped memory for tpu_custom_call.1']
    #allocation8 [shape = 'u8[16384]{0}', space=vmem, size = 0x4000, scoped, tag = 'output window, operand 0, single buffered']
    %10 = vsyncpa [#allocation4], 0
    %11 = vsyncpa [#allocation7], 0
    %12 = vsyncpa [#allocation5], 0
    // Predicated region
    $region2: #{tpu_custom_call.1} parent=1 // pred_check
      _
    $region3: #{tpu_custom_call.1} parent=1 // pred_check_branch
      %14 = sbr.rel (0) target = $region5
    $region4: #{tpu_custom_call.1} parent=1 // pred_region
      %s16 = ssub.s32 512, 512
      %17 = vsyncadd [#allocation4], %s16
      %s19 = sshll.u32 [#allocation3], 4
      %s20 = int_to_ptr.vmem [resolvable:$true] %s19
      %22 = dma.hbm_to_vmem [thread:$0]  %s0, 512, %s20, [#allocation4]
    $region5: #{tpu_custom_call.1} parent=1 // pred_fallthru
      _
    // Predicated region
    $region6: #{tpu_custom_call.1} parent=1 // pred_check
      _
    $region7: #{tpu_custom_call.1} parent=1 // pred_check_branch
      %24 = sbr.rel (0) target = $region9
    $region8: #{tpu_custom_call.1} parent=1 // pred_region
      _
    $region9: #{tpu_custom_call.1} parent=1 // pred_fallthru
      _
    // Predicated region
    $region10: #{tpu_custom_call.1} parent=1 // pred_check
      _
    $region11: #{tpu_custom_call.1} parent=1 // pred_check_branch
      %26 = sbr.rel (0) target = $region13
    $region12: #{tpu_custom_call.1} parent=1 // pred_region
      %s28 = ssub.s32 1024, 1024
      %29 = vsyncadd [#allocation7], %s28
      %s30 = sshll.u32 [#allocation6], 4
      %s31 = int_to_ptr.vmem [resolvable:$true] %s30
      %36 = dma.hbm_to_vmem [thread:$0]  %s2, 1024, %s31, [#allocation7], 512, 512, 32
    $region13: #{tpu_custom_call.1} parent=1 // pred_fallthru
      _
    // Predicated region
    $region14: #{tpu_custom_call.1} parent=1 // pred_check
      _
    $region15: #{tpu_custom_call.1} parent=1 // pred_check_branch
      %38 = sbr.rel (0) target = $region17
    $region16: #{tpu_custom_call.1} parent=1 // pred_region
      _
    $region17: #{tpu_custom_call.1} parent=1 // pred_fallthru
      _
    // Predicated region
    $region18: #{tpu_custom_call.1} parent=1 // pred_check
      _
    $region19: #{tpu_custom_call.1} parent=1 // pred_check_branch
      %40 = sbr.rel (0) target = $region21
    $region20: #{tpu_custom_call.1} parent=1 // pred_region
      _
    $region21: #{tpu_custom_call.1} parent=1 // pred_fallthru
      _
    // Predicated region
    $region22: #{tpu_custom_call.1} parent=1 // pred_check
      _
    $region23: #{tpu_custom_call.1} parent=1 // pred_check_branch
      %42 = sbr.rel (0) target = $region25
    $region24: #{tpu_custom_call.1} parent=1 // pred_region
      %43 = dma.done [#allocation4], 512
    $region25: #{tpu_custom_call.1} parent=1 // pred_fallthru
      _
    // Predicated region
    $region26: #{tpu_custom_call.1} parent=1 // pred_check
      _
    $region27: #{tpu_custom_call.1} parent=1 // pred_check_branch
      %45 = sbr.rel (0) target = $region29
    $region28: #{tpu_custom_call.1} parent=1 // pred_region
      %46 = dma.done [#allocation7], 1024
    $region29: #{tpu_custom_call.1} parent=1 // pred_fallthru
      _
    %v47 = vld [vmem:[#allocation3] sm:$0xff]
    %v48 = vld [vmem:[#allocation3 + $0x8] sm:$0xff]
    %v49 = vld [vmem:[#allocation3 + $0x10] sm:$0xff]
    %v50 = vld [vmem:[#allocation3 + $0x18] sm:$0xff]
    %v51 = vld [vmem:[%s1] sm:$0xf]
    %v52 = vld [vmem:[%s3] sm:$0xf]
    %v53 = vld [vmem:[%s4] sm:$0xf]
    %v56 = vcombine.high %v47, %v47
    %v57 = vcombine.high %v48, %v48
    %60 = vrot.lane.b32.xlu0 0.0, 1
    %v61 = vpop.permute.xlu0 %60
    %62 = vrot.lane.b32.xlu0 %v47, 1
    %v63 = vpop.permute.xlu0 %62
    %64 = vrot.lane.b32.xlu0 %v56, 1
    %v65 = vpop.permute.xlu0 %64
    %66 = vrot.lane.b32.xlu0 %v48, 1
    %v67 = vpop.permute.xlu0 %66
    %68 = vrot.lane.b32.xlu0 %v57, 1
    %v69 = vpop.permute.xlu0 %68
    %v70 = vlaneseq
    %v71 = vand.u32 %v70, 127
    %vm72 = vcmp.lt.s32.totalorder %v71, 1
    %v73 = vsel %vm72, %v69, %v61
    %v74 = vsel %vm72, %v67, %v69
    %v75 = vsel %vm72, %v65, %v67
    %v76 = vsel %vm72, %v63, %v65
    %v77 = vsel %vm72, %v61, %v63
    %v78 = vld [vmem:[#allocation6] ss:$8 sm:$0xf]
    %v80 = vlaneseq
    %v81 = vshrl.u32 %v80, 7
    %v82 = vsub.s32 0, %v81
    %v83 = vrot.slane %v78, %v82
    %v84 = vlaneseq
    %v85 = vshrl.u32 %v84, 7
    %v86 = vsub.s32 1, %v85
    %v87 = vrot.slane %v78, %v86
    %v88 = vlaneseq
    %v89 = vshrl.u32 %v88, 7
    %v90 = vsub.s32 2, %v89
    %v91 = vrot.slane %v78, %v90
    %v92 = vlaneseq
    %v93 = vshrl.u32 %v92, 7
    %v94 = vsub.s32 3, %v93
    %v95 = vrot.slane %v78, %v94
    %96 = vrot.lane.b32.xlu0 %v83, 56
    %v97 = vpop.permute.xlu0 %96
    %98 = vrot.lane.b32.xlu0 %v87, 56
    %v99 = vpop.permute.xlu0 %98
    %100 = vrot.lane.b32.xlu0 %v91, 56
    %v101 = vpop.permute.xlu0 %100
    %102 = vrot.lane.b32.xlu0 %v95, 56
    %v103 = vpop.permute.xlu0 %102
    %vm104 = vcmask 457728
    %v105 = vsel %vm104, %v97, %v99
    %v106 = vsel %vm104, %v99, %v101
    %v107 = vsel %vm104, %v101, %v103
    %v113 = vmul.f32 %v61, %v97
    %v114 = vmul.f32 %v77, %v105
    %v115 = vmul.f32 %v76, %v106
    %v116 = vmul.f32 %v75, %v107
    %v117 = vmul.f32 %v74, %v103
    %118 = vrot.lane.b32.xlu0 %v83, 120
    %v119 = vpop.permute.xlu0 %118
    %120 = vrot.lane.b32.xlu0 %v87, 120
    %v121 = vpop.permute.xlu0 %120
    %122 = vrot.lane.b32.xlu0 %v91, 120
    %v123 = vpop.permute.xlu0 %122
    %124 = vrot.lane.b32.xlu0 %v95, 120
    %v125 = vpop.permute.xlu0 %124
    %vm126 = vcmask 982016
    %v127 = vsel %vm126, %v119, %v121
    %v128 = vsel %vm126, %v121, %v123
    %v129 = vsel %vm126, %v123, %v125
    %v135 = vmul.f32 %v61, %v119
    %v136 = vmul.f32 %v77, %v127
    %v137 = vmul.f32 %v76, %v128
    %v138 = vmul.f32 %v75, %v129
    %v139 = vmul.f32 %v74, %v125
    %v145 = vrot.slane %v135, 4
    %v146 = vrot.slane %v136, 4
    %v147 = vrot.slane %v137, 4
    %v148 = vrot.slane %v138, 4
    %v149 = vrot.slane %v139, 4
    %150 = vrot.lane.b32.xlu0 %v145, 64
    %v151 = vpop.permute.xlu0 %150
    %152 = vrot.lane.b32.xlu0 %v146, 64
    %v153 = vpop.permute.xlu0 %152
    %154 = vrot.lane.b32.xlu0 %v147, 64
    %v155 = vpop.permute.xlu0 %154
    %156 = vrot.lane.b32.xlu0 %v148, 64
    %v157 = vpop.permute.xlu0 %156
    %158 = vrot.lane.b32.xlu0 %v149, 64
    %v159 = vpop.permute.xlu0 %158
    %vm160 = vcmask 523264
    %v161 = vsel %vm160, %v151, %v153
    %v162 = vsel %vm160, %v153, %v155
    %v163 = vsel %vm160, %v155, %v157
    %v164 = vsel %vm160, %v157, %v159
    %vm170 = vcmask 1043456
    %v171 = vsel %vm170, %v113, %v161
    %v172 = vsel %vm170, %v114, %v162
    %v173 = vsel %vm170, %v115, %v163
    %v174 = vsel %vm170, %v116, %v164
    %v175 = vsel %vm170, %v117, %v159
    %181 = vrot.lane.b32.xlu0 %v171, 72
    %v182 = vpop.permute.xlu0 %181
    %183 = vrot.lane.b32.xlu0 %v172, 72
    %v184 = vpop.permute.xlu0 %183
    %185 = vrot.lane.b32.xlu0 %v173, 72
    %v186 = vpop.permute.xlu0 %185
    %187 = vrot.lane.b32.xlu0 %v174, 72
    %v188 = vpop.permute.xlu0 %187
    %189 = vrot.lane.b32.xlu0 %v175, 72
    %v190 = vpop.permute.xlu0 %189
    %vm191 = vcmask 588800
    %v192 = vsel %vm191, %v182, %v184
    %v193 = vsel %vm191, %v184, %v186
    %v194 = vsel %vm191, %v186, %v188
    %v195 = vsel %vm191, %v188, %v190
    %200 = vst [vmem:[#allocation2] sm:$0xff] %v192
    %201 = vst [vmem:[#allocation2 + $0x8] sm:$0xff] %v193
    %202 = vst [vmem:[#allocation2 + $0x10] sm:$0xff] %v194
    %203 = vst [vmem:[#allocation2 + $0x18] sm:$0xff] %v195
    %v204 = vmul.f32 %v77, %v97
    %v205 = vmul.f32 %v76, %v105
    %v206 = vmul.f32 %v75, %v106
    %v207 = vmul.f32 %v74, %v107
    %v208 = vmul.f32 %v73, %v103
    %s209 = scalar_lea.vmem [#allocation6], 3
    %v210 = vld [vmem:[%s209] ss:$8 sm:$0xf]
    %v212 = vlaneseq
    %v213 = vshrl.u32 %v212, 7
    %v214 = vsub.s32 0, %v213
    %v215 = vrot.slane %v210, %v214
    %v216 = vlaneseq
    %v217 = vshrl.u32 %v216, 7
    %v218 = vsub.s32 1, %v217
    %v219 = vrot.slane %v210, %v218
    %v220 = vlaneseq
    %v221 = vshrl.u32 %v220, 7
    %v222 = vsub.s32 2, %v221
    %v223 = vrot.slane %v210, %v222
    %v224 = vlaneseq
    %v225 = vshrl.u32 %v224, 7
    %v226 = vsub.s32 3, %v225
    %v227 = vrot.slane %v210, %v226
    %232 = vrot.lane.b32.xlu0 %v215, 64
    %v233 = vpop.permute.xlu0 %232
    %234 = vrot.lane.b32.xlu0 %v219, 64
    %v235 = vpop.permute.xlu0 %234
    %236 = vrot.lane.b32.xlu0 %v223, 64
    %v237 = vpop.permute.xlu0 %236
    %238 = vrot.lane.b32.xlu0 %v227, 64
    %v239 = vpop.permute.xlu0 %238
    %v240 = vsel %vm160, %v233, %v235
    %v241 = vsel %vm160, %v235, %v237
    %v242 = vsel %vm160, %v237, %v239
    %v248 = vmul.f32 %v61, %v233
    %v249 = vmul.f32 %v77, %v240
    %v250 = vmul.f32 %v76, %v241
    %v251 = vmul.f32 %v75, %v242
    %v252 = vmul.f32 %v74, %v239
    %v258 = vrot.slane %v248, 4
    %v259 = vrot.slane %v249, 4
    %v260 = vrot.slane %v250, 4
    %v261 = vrot.slane %v251, 4
    %v262 = vrot.slane %v252, 4
    %263 = vrot.lane.b32.xlu0 %v258, 120
    %v264 = vpop.permute.xlu0 %263
    %265 = vrot.lane.b32.xlu0 %v259, 120
    %v266 = vpop.permute.xlu0 %265
    %267 = vrot.lane.b32.xlu0 %v260, 120
    %v268 = vpop.permute.xlu0 %267
    %269 = vrot.lane.b32.xlu0 %v261, 120
    %v270 = vpop.permute.xlu0 %269
    %271 = vrot.lane.b32.xlu0 %v262, 120
    %v272 = vpop.permute.xlu0 %271
    %v273 = vsel %vm126, %v264, %v266
    %v274 = vsel %vm126, %v266, %v268
    %v275 = vsel %vm126, %v268, %v270
    %v276 = vsel %vm126, %v270, %v272
    %v282 = vsel %vm170, %v204, %v273
    %v283 = vsel %vm170, %v205, %v274
    %v284 = vsel %vm170, %v206, %v275
    %v285 = vsel %vm170, %v207, %v276
    %v286 = vsel %vm170, %v208, %v272
    %292 = vrot.lane.b32.xlu0 %v282, 72
    %v293 = vpop.permute.xlu0 %292
    %294 = vrot.lane.b32.xlu0 %v283, 72
    %v295 = vpop.permute.xlu0 %294
    %296 = vrot.lane.b32.xlu0 %v284, 72
    %v297 = vpop.permute.xlu0 %296
    %298 = vrot.lane.b32.xlu0 %v285, 72
    %v299 = vpop.permute.xlu0 %298
    %300 = vrot.lane.b32.xlu0 %v286, 72
    %v301 = vpop.permute.xlu0 %300
    %v302 = vsel %vm191, %v293, %v295
    %v303 = vsel %vm191, %v295, %v297
    %v304 = vsel %vm191, %v297, %v299
    %v305 = vsel %vm191, %v299, %v301
    %310 = vst [vmem:[#allocation2 + $0x40] sm:$0xff] %v302
    %311 = vst [vmem:[#allocation2 + $0x48] sm:$0xff] %v303
    %312 = vst [vmem:[#allocation2 + $0x50] sm:$0xff] %v304
    %313 = vst [vmem:[#allocation2 + $0x58] sm:$0xff] %v305
    %v314 = vmul.f32 %v77, %v215
    %v315 = vmul.f32 %v76, %v219
    %v316 = vmul.f32 %v75, %v223
    %v317 = vmul.f32 %v74, %v227
    %v318 = vmul.f32 %v77, %v233
    %v319 = vmul.f32 %v76, %v240
    %v320 = vmul.f32 %v75, %v241
    %v321 = vmul.f32 %v74, %v242
    %v322 = vmul.f32 %v73, %v239
    %v328 = vrot.slane %v318, 4
    %v329 = vrot.slane %v319, 4
    %v330 = vrot.slane %v320, 4
    %v331 = vrot.slane %v321, 4
    %v332 = vrot.slane %v322, 4
    %333 = vrot.lane.b32.xlu0 %v328, 64
    %v334 = vpop.permute.xlu0 %333
    %335 = vrot.lane.b32.xlu0 %v329, 64
    %v336 = vpop.permute.xlu0 %335
    %337 = vrot.lane.b32.xlu0 %v330, 64
    %v338 = vpop.permute.xlu0 %337
    %339 = vrot.lane.b32.xlu0 %v331, 64
    %v340 = vpop.permute.xlu0 %339
    %341 = vrot.lane.b32.xlu0 %v332, 64
    %v342 = vpop.permute.xlu0 %341
    %v343 = vsel %vm160, %v334, %v336
    %v344 = vsel %vm160, %v336, %v338
    %v345 = vsel %vm160, %v338, %v340
    %v346 = vsel %vm160, %v340, %v342
    %v351 = vsel %vm170, %v314, %v343
    %v352 = vsel %vm170, %v315, %v344
    %v353 = vsel %vm170, %v316, %v345
    %v354 = vsel %vm170, %v317, %v346
    %355 = vst [vmem:[#allocation2 + $0x80] sm:$0xff] %v351
    %356 = vst [vmem:[#allocation2 + $0x88] sm:$0xff] %v352
    %357 = vst [vmem:[#allocation2 + $0x90] sm:$0xff] %v353
    %358 = vst [vmem:[#allocation2 + $0x98] sm:$0xff] %v354
    %s359 = scalar_lea.vmem [#allocation6], 6
    %v360 = vld [vmem:[%s359] ss:$8 sm:$0xf]
    %v362 = vlaneseq
    %v363 = vshrl.u32 %v362, 7
    %v364 = vsub.s32 0, %v363
    %v365 = vrot.slane %v360, %v364
    %v366 = vlaneseq
    %v367 = vshrl.u32 %v366, 7
    %v368 = vsub.s32 1, %v367
    %v369 = vrot.slane %v360, %v368
    %v370 = vlaneseq
    %v371 = vshrl.u32 %v370, 7
    %v372 = vsub.s32 2, %v371
    %v373 = vrot.slane %v360, %v372
    %v374 = vlaneseq
    %v375 = vshrl.u32 %v374, 7
    %v376 = vsub.s32 3, %v375
    %v377 = vrot.slane %v360, %v376
    %378 = vrot.lane.b32.xlu0 %v365, 72
    %v379 = vpop.permute.xlu0 %378
    %380 = vrot.lane.b32.xlu0 %v369, 72
    %v381 = vpop.permute.xlu0 %380
    %382 = vrot.lane.b32.xlu0 %v373, 72
    %v383 = vpop.permute.xlu0 %382
    %384 = vrot.lane.b32.xlu0 %v377, 72
    %v385 = vpop.permute.xlu0 %384
    %v386 = vsel %vm191, %v379, %v381
    %v387 = vsel %vm191, %v381, %v383
    %v388 = vsel %vm191, %v383, %v385
    %v394 = vmul.f32 %v61, %v379
    %v395 = vmul.f32 %v77, %v386
    %v396 = vmul.f32 %v76, %v387
    %v397 = vmul.f32 %v75, %v388
    %v398 = vmul.f32 %v74, %v385
    %399 = vrot.lane.b32.xlu0 %v365, 8
    %v400 = vpop.permute.xlu0 %399
    %401 = vrot.lane.b32.xlu0 %v369, 8
    %v402 = vpop.permute.xlu0 %401
    %403 = vrot.lane.b32.xlu0 %v373, 8
    %v404 = vpop.permute.xlu0 %403
    %405 = vrot.lane.b32.xlu0 %v377, 8
    %v406 = vpop.permute.xlu0 %405
    %vm407 = vcmask 64512
    %v408 = vsel %vm407, %v400, %v402
    %v409 = vsel %vm407, %v402, %v404
    %v410 = vsel %vm407, %v404, %v406
    %v416 = vmul.f32 %v77, %v400
    %v417 = vmul.f32 %v76, %v408
    %v418 = vmul.f32 %v75, %v409
    %v419 = vmul.f32 %v74, %v410
    %v420 = vmul.f32 %v73, %v406
    %v426 = vrot.slane %v416, 4
    %v427 = vrot.slane %v417, 4
    %v428 = vrot.slane %v418, 4
    %v429 = vrot.slane %v419, 4
    %v430 = vrot.slane %v420, 4
    %431 = vrot.lane.b32.xlu0 %v426, 64
    %v432 = vpop.permute.xlu0 %431
    %433 = vrot.lane.b32.xlu0 %v427, 64
    %v434 = vpop.permute.xlu0 %433
    %435 = vrot.lane.b32.xlu0 %v428, 64
    %v436 = vpop.permute.xlu0 %435
    %437 = vrot.lane.b32.xlu0 %v429, 64
    %v438 = vpop.permute.xlu0 %437
    %439 = vrot.lane.b32.xlu0 %v430, 64
    %v440 = vpop.permute.xlu0 %439
    %v441 = vsel %vm160, %v432, %v434
    %v442 = vsel %vm160, %v434, %v436
    %v443 = vsel %vm160, %v436, %v438
    %v444 = vsel %vm160, %v438, %v440
    %v450 = vsel %vm170, %v394, %v432
    %v451 = vsel %vm170, %v395, %v441
    %v452 = vsel %vm170, %v396, %v442
    %v453 = vsel %vm170, %v397, %v443
    %v454 = vsel %vm170, %v398, %v444
    %460 = vrot.lane.b32.xlu0 %v450, 56
    %v461 = vpop.permute.xlu0 %460
    %462 = vrot.lane.b32.xlu0 %v451, 56
    %v463 = vpop.permute.xlu0 %462
    %464 = vrot.lane.b32.xlu0 %v452, 56
    %v465 = vpop.permute.xlu0 %464
    %466 = vrot.lane.b32.xlu0 %v453, 56
    %v467 = vpop.permute.xlu0 %466
    %468 = vrot.lane.b32.xlu0 %v454, 56
    %v469 = vpop.permute.xlu0 %468
    %v470 = vsel %vm104, %v461, %v463
    %v471 = vsel %vm104, %v463, %v465
    %v472 = vsel %vm104, %v465, %v467
    %v473 = vsel %vm104, %v467, %v469
    %478 = vst [vmem:[#allocation2 + $0xc0] sm:$0xff] %v470
    %479 = vst [vmem:[#allocation2 + $0xc8] sm:$0xff] %v471
    %480 = vst [vmem:[#allocation2 + $0xd0] sm:$0xff] %v472
    %481 = vst [vmem:[#allocation2 + $0xd8] sm:$0xff] %v473
    %v482 = vmul.f32 %v77, %v379
    %v483 = vmul.f32 %v76, %v386
    %v484 = vmul.f32 %v75, %v387
    %v485 = vmul.f32 %v74, %v388
    %v486 = vmul.f32 %v73, %v385
    %s487 = scalar_lea.vmem [#allocation6], 1
    %v488 = vld [vmem:[%s487] ss:$8 sm:$0xf]
    %v490 = vlaneseq
    %v491 = vshrl.u32 %v490, 7
    %v492 = vsub.s32 0, %v491
    %v493 = vrot.slane %v488, %v492
    %v494 = vlaneseq
    %v495 = vshrl.u32 %v494, 7
    %v496 = vsub.s32 1, %v495
    %v497 = vrot.slane %v488, %v496
    %v498 = vlaneseq
    %v499 = vshrl.u32 %v498, 7
    %v500 = vsub.s32 2, %v499
    %v501 = vrot.slane %v488, %v500
    %v502 = vlaneseq
    %v503 = vshrl.u32 %v502, 7
    %v504 = vsub.s32 3, %v503
    %v505 = vrot.slane %v488, %v504
    %506 = vrot.lane.b32.xlu0 %v493, 56
    %v507 = vpop.permute.xlu0 %506
    %508 = vrot.lane.b32.xlu0 %v497, 56
    %v509 = vpop.permute.xlu0 %508
    %510 = vrot.lane.b32.xlu0 %v501, 56
    %v511 = vpop.permute.xlu0 %510
    %512 = vrot.lane.b32.xlu0 %v505, 56
    %v513 = vpop.permute.xlu0 %512
    %v514 = vsel %vm104, %v507, %v509
    %v515 = vsel %vm104, %v509, %v511
    %v516 = vsel %vm104, %v511, %v513
    %v522 = vmul.f32 %v507, 0.0
    %v523 = vmul.f32 %v47, %v514
    %v524 = vmul.f32 %v56, %v515
    %v525 = vmul.f32 %v48, %v516
    %v526 = vmul.f32 %v57, %v513
    %v532 = vrot.slane %v522, 4
    %v533 = vrot.slane %v523, 4
    %v534 = vrot.slane %v524, 4
    %v535 = vrot.slane %v525, 4
    %v536 = vrot.slane %v526, 4
    %537 = vrot.lane.b32.xlu0 %v532, 16
    %v538 = vpop.permute.xlu0 %537
    %539 = vrot.lane.b32.xlu0 %v533, 16
    %v540 = vpop.permute.xlu0 %539
    %541 = vrot.lane.b32.xlu0 %v534, 16
    %v542 = vpop.permute.xlu0 %541
    %543 = vrot.lane.b32.xlu0 %v535, 16
    %v544 = vpop.permute.xlu0 %543
    %545 = vrot.lane.b32.xlu0 %v536, 16
    %v546 = vpop.permute.xlu0 %545
    %vm547 = vcmask 130048
    %v548 = vsel %vm547, %v538, %v540
    %v549 = vsel %vm547, %v540, %v542
    %v550 = vsel %vm547, %v542, %v544
    %v551 = vsel %vm547, %v544, %v546
    %v557 = vsel %vm170, %v482, %v538
    %v558 = vsel %vm170, %v483, %v548
    %v559 = vsel %vm170, %v484, %v549
    %v560 = vsel %vm170, %v485, %v550
    %v561 = vsel %vm170, %v486, %v551
    %567 = vrot.lane.b32.xlu0 %v557, 56
    %v568 = vpop.permute.xlu0 %567
    %569 = vrot.lane.b32.xlu0 %v558, 56
    %v570 = vpop.permute.xlu0 %569
    %571 = vrot.lane.b32.xlu0 %v559, 56
    %v572 = vpop.permute.xlu0 %571
    %573 = vrot.lane.b32.xlu0 %v560, 56
    %v574 = vpop.permute.xlu0 %573
    %575 = vrot.lane.b32.xlu0 %v561, 56
    %v576 = vpop.permute.xlu0 %575
    %v577 = vsel %vm104, %v568, %v570
    %v578 = vsel %vm104, %v570, %v572
    %v579 = vsel %vm104, %v572, %v574
    %v580 = vsel %vm104, %v574, %v576
    %585 = vst [vmem:[#allocation2 + $0x100] sm:$0xff] %v577
    %586 = vst [vmem:[#allocation2 + $0x108] sm:$0xff] %v578
    %587 = vst [vmem:[#allocation2 + $0x110] sm:$0xff] %v579
    %588 = vst [vmem:[#allocation2 + $0x118] sm:$0xff] %v580
    %589 = vrot.lane.b32.xlu0 %v493, 120
    %v590 = vpop.permute.xlu0 %589
    %591 = vrot.lane.b32.xlu0 %v497, 120
    %v592 = vpop.permute.xlu0 %591
    %593 = vrot.lane.b32.xlu0 %v501, 120
    %v594 = vpop.permute.xlu0 %593
    %595 = vrot.lane.b32.xlu0 %v505, 120
    %v596 = vpop.permute.xlu0 %595
    %v597 = vsel %vm126, %v590, %v592
    %v598 = vsel %vm126, %v592, %v594
    %v599 = vsel %vm126, %v594, %v596
    %v605 = vmul.f32 %v590, 0.0
    %v606 = vmul.f32 %v47, %v597
    %v607 = vmul.f32 %v56, %v598
    %v608 = vmul.f32 %v48, %v599
    %v609 = vmul.f32 %v57, %v596
    %v610 = vmul.f32 %v47, %v507
    %v611 = vmul.f32 %v56, %v514
    %v612 = vmul.f32 %v48, %v515
    %v613 = vmul.f32 %v57, %v516
    %v614 = vmul.f32 %v513, 0.0
    %v620 = vrot.slane %v610, 4
    %v621 = vrot.slane %v611, 4
    %v622 = vrot.slane %v612, 4
    %v623 = vrot.slane %v613, 4
    %v624 = vrot.slane %v614, 4
    %625 = vrot.lane.b32.xlu0 %v620, 64
    %v626 = vpop.permute.xlu0 %625
    %627 = vrot.lane.b32.xlu0 %v621, 64
    %v628 = vpop.permute.xlu0 %627
    %629 = vrot.lane.b32.xlu0 %v622, 64
    %v630 = vpop.permute.xlu0 %629
    %631 = vrot.lane.b32.xlu0 %v623, 64
    %v632 = vpop.permute.xlu0 %631
    %633 = vrot.lane.b32.xlu0 %v624, 64
    %v634 = vpop.permute.xlu0 %633
    %v635 = vsel %vm160, %v626, %v628
    %v636 = vsel %vm160, %v628, %v630
    %v637 = vsel %vm160, %v630, %v632
    %v638 = vsel %vm160, %v632, %v634
    %v644 = vsel %vm170, %v605, %v626
    %v645 = vsel %vm170, %v606, %v635
    %v646 = vsel %vm170, %v607, %v636
    %v647 = vsel %vm170, %v608, %v637
    %v648 = vsel %vm170, %v609, %v638
    %654 = vrot.lane.b32.xlu0 %v644, 8
    %v655 = vpop.permute.xlu0 %654
    %656 = vrot.lane.b32.xlu0 %v645, 8
    %v657 = vpop.permute.xlu0 %656
    %658 = vrot.lane.b32.xlu0 %v646, 8
    %v659 = vpop.permute.xlu0 %658
    %660 = vrot.lane.b32.xlu0 %v647, 8
    %v661 = vpop.permute.xlu0 %660
    %662 = vrot.lane.b32.xlu0 %v648, 8
    %v663 = vpop.permute.xlu0 %662
    %v664 = vsel %vm407, %v655, %v657
    %v665 = vsel %vm407, %v657, %v659
    %v666 = vsel %vm407, %v659, %v661
    %v667 = vsel %vm407, %v661, %v663
    %672 = vst [vmem:[#allocation2 + $0x140] sm:$0xff] %v664
    %673 = vst [vmem:[#allocation2 + $0x148] sm:$0xff] %v665
    %674 = vst [vmem:[#allocation2 + $0x150] sm:$0xff] %v666
    %675 = vst [vmem:[#allocation2 + $0x158] sm:$0xff] %v667
    %s676 = scalar_lea.vmem [#allocation6], 4
    %v677 = vld [vmem:[%s676] ss:$8 sm:$0xf]
    %v679 = vlaneseq
    %v680 = vshrl.u32 %v679, 7
    %v681 = vsub.s32 0, %v680
    %v682 = vrot.slane %v677, %v681
    %v683 = vlaneseq
    %v684 = vshrl.u32 %v683, 7
    %v685 = vsub.s32 1, %v684
    %v686 = vrot.slane %v677, %v685
    %v687 = vlaneseq
    %v688 = vshrl.u32 %v687, 7
    %v689 = vsub.s32 2, %v688
    %v690 = vrot.slane %v677, %v689
    %v691 = vlaneseq
    %v692 = vshrl.u32 %v691, 7
    %v693 = vsub.s32 3, %v692
    %v694 = vrot.slane %v677, %v693
    %699 = vrot.lane.b32.xlu0 %v682, 64
    %v700 = vpop.permute.xlu0 %699
    %701 = vrot.lane.b32.xlu0 %v686, 64
    %v702 = vpop.permute.xlu0 %701
    %703 = vrot.lane.b32.xlu0 %v690, 64
    %v704 = vpop.permute.xlu0 %703
    %705 = vrot.lane.b32.xlu0 %v694, 64
    %v706 = vpop.permute.xlu0 %705
    %v707 = vsel %vm160, %v700, %v702
    %v708 = vsel %vm160, %v702, %v704
    %v709 = vsel %vm160, %v704, %v706
    %v715 = vmul.f32 %v700, 0.0
    %v716 = vmul.f32 %v47, %v707
    %v717 = vmul.f32 %v56, %v708
    %v718 = vmul.f32 %v48, %v709
    %v719 = vmul.f32 %v57, %v706
    %v720 = vmul.f32 %v47, %v682
    %v721 = vmul.f32 %v56, %v686
    %v722 = vmul.f32 %v48, %v690
    %v723 = vmul.f32 %v57, %v694
    %v728 = vrot.slane %v720, 4
    %v729 = vrot.slane %v721, 4
    %v730 = vrot.slane %v722, 4
    %v731 = vrot.slane %v723, 4
    %732 = vrot.lane.b32.xlu0 %v728, 64
    %v733 = vpop.permute.xlu0 %732
    %734 = vrot.lane.b32.xlu0 %v729, 64
    %v735 = vpop.permute.xlu0 %734
    %736 = vrot.lane.b32.xlu0 %v730, 64
    %v737 = vpop.permute.xlu0 %736
    %738 = vrot.lane.b32.xlu0 %v731, 64
    %v739 = vpop.permute.xlu0 %738
    %v740 = vsel %vm160, %v733, %v735
    %v741 = vsel %vm160, %v735, %v737
    %v742 = vsel %vm160, %v737, %v739
    %v748 = vsel %vm170, %v715, %v733
    %v749 = vsel %vm170, %v716, %v740
    %v750 = vsel %vm170, %v717, %v741
    %v751 = vsel %vm170, %v718, %v742
    %v752 = vsel %vm170, %v719, %v739
    %758 = vrot.lane.b32.xlu0 %v748, 64
    %v759 = vpop.permute.xlu0 %758
    %760 = vrot.lane.b32.xlu0 %v749, 64
    %v761 = vpop.permute.xlu0 %760
    %762 = vrot.lane.b32.xlu0 %v750, 64
    %v763 = vpop.permute.xlu0 %762
    %764 = vrot.lane.b32.xlu0 %v751, 64
    %v765 = vpop.permute.xlu0 %764
    %766 = vrot.lane.b32.xlu0 %v752, 64
    %v767 = vpop.permute.xlu0 %766
    %v768 = vsel %vm160, %v759, %v761
    %v769 = vsel %vm160, %v761, %v763
    %v770 = vsel %vm160, %v763, %v765
    %v771 = vsel %vm160, %v765, %v767
    %776 = vst [vmem:[#allocation2 + $0x180] sm:$0xff] %v768
    %777 = vst [vmem:[#allocation2 + $0x188] sm:$0xff] %v769
    %778 = vst [vmem:[#allocation2 + $0x190] sm:$0xff] %v770
    %779 = vst [vmem:[#allocation2 + $0x198] sm:$0xff] %v771
    %v780 = vmul.f32 %v47, %v700
    %v781 = vmul.f32 %v56, %v707
    %v782 = vmul.f32 %v48, %v708
    %v783 = vmul.f32 %v57, %v709
    %v784 = vmul.f32 %v706, 0.0
    %s785 = scalar_lea.vmem [#allocation6], 7
    %v786 = vld [vmem:[%s785] ss:$8 sm:$0xf]
    %v788 = vlaneseq
    %v789 = vshrl.u32 %v788, 7
    %v790 = vsub.s32 0, %v789
    %v791 = vrot.slane %v786, %v790
    %v792 = vlaneseq
    %v793 = vshrl.u32 %v792, 7
    %v794 = vsub.s32 1, %v793
    %v795 = vrot.slane %v786, %v794
    %v796 = vlaneseq
    %v797 = vshrl.u32 %v796, 7
    %v798 = vsub.s32 2, %v797
    %v799 = vrot.slane %v786, %v798
    %v800 = vlaneseq
    %v801 = vshrl.u32 %v800, 7
    %v802 = vsub.s32 3, %v801
    %v803 = vrot.slane %v786, %v802
    %804 = vrot.lane.b32.xlu0 %v791, 72
    %v805 = vpop.permute.xlu0 %804
    %806 = vrot.lane.b32.xlu0 %v795, 72
    %v807 = vpop.permute.xlu0 %806
    %808 = vrot.lane.b32.xlu0 %v799, 72
    %v809 = vpop.permute.xlu0 %808
    %810 = vrot.lane.b32.xlu0 %v803, 72
    %v811 = vpop.permute.xlu0 %810
    %v812 = vsel %vm191, %v805, %v807
    %v813 = vsel %vm191, %v807, %v809
    %v814 = vsel %vm191, %v809, %v811
    %v820 = vmul.f32 %v805, 0.0
    %v821 = vmul.f32 %v47, %v812
    %v822 = vmul.f32 %v56, %v813
    %v823 = vmul.f32 %v48, %v814
    %v824 = vmul.f32 %v57, %v811
    %v830 = vrot.slane %v820, 4
    %v831 = vrot.slane %v821, 4
    %v832 = vrot.slane %v822, 4
    %v833 = vrot.slane %v823, 4
    %v834 = vrot.slane %v824, 4
    %835 = vrot.lane.b32.xlu0 %v830, 120
    %v836 = vpop.permute.xlu0 %835
    %837 = vrot.lane.b32.xlu0 %v831, 120
    %v838 = vpop.permute.xlu0 %837
    %839 = vrot.lane.b32.xlu0 %v832, 120
    %v840 = vpop.permute.xlu0 %839
    %841 = vrot.lane.b32.xlu0 %v833, 120
    %v842 = vpop.permute.xlu0 %841
    %843 = vrot.lane.b32.xlu0 %v834, 120
    %v844 = vpop.permute.xlu0 %843
    %v845 = vsel %vm126, %v836, %v838
    %v846 = vsel %vm126, %v838, %v840
    %v847 = vsel %vm126, %v840, %v842
    %v848 = vsel %vm126, %v842, %v844
    %v854 = vsel %vm170, %v780, %v845
    %v855 = vsel %vm170, %v781, %v846
    %v856 = vsel %vm170, %v782, %v847
    %v857 = vsel %vm170, %v783, %v848
    %v858 = vsel %vm170, %v784, %v844
    %864 = vrot.lane.b32.xlu0 %v854, 64
    %v865 = vpop.permute.xlu0 %864
    %866 = vrot.lane.b32.xlu0 %v855, 64
    %v867 = vpop.permute.xlu0 %866
    %868 = vrot.lane.b32.xlu0 %v856, 64
    %v869 = vpop.permute.xlu0 %868
    %870 = vrot.lane.b32.xlu0 %v857, 64
    %v871 = vpop.permute.xlu0 %870
    %872 = vrot.lane.b32.xlu0 %v858, 64
    %v873 = vpop.permute.xlu0 %872
    %v874 = vsel %vm160, %v865, %v867
    %v875 = vsel %vm160, %v867, %v869
    %v876 = vsel %vm160, %v869, %v871
    %v877 = vsel %vm160, %v871, %v873
    %882 = vst [vmem:[#allocation2 + $0x1c0] sm:$0xff] %v874
    %883 = vst [vmem:[#allocation2 + $0x1c8] sm:$0xff] %v875
    %884 = vst [vmem:[#allocation2 + $0x1d0] sm:$0xff] %v876
    %885 = vst [vmem:[#allocation2 + $0x1d8] sm:$0xff] %v877
    %886 = vrot.lane.b32.xlu0 %v791, 8
    %v887 = vpop.permute.xlu0 %886
    %888 = vrot.lane.b32.xlu0 %v795, 8
    %v889 = vpop.permute.xlu0 %888
    %890 = vrot.lane.b32.xlu0 %v799, 8
    %v891 = vpop.permute.xlu0 %890
    %892 = vrot.lane.b32.xlu0 %v803, 8
    %v893 = vpop.permute.xlu0 %892
    %v894 = vsel %vm407, %v887, %v889
    %v895 = vsel %vm407, %v889, %v891
    %v896 = vsel %vm407, %v891, %v893
    %v902 = vmul.f32 %v47, %v887
    %v903 = vmul.f32 %v56, %v894
    %v904 = vmul.f32 %v48, %v895
    %v905 = vmul.f32 %v57, %v896
    %v906 = vmul.f32 %v893, 0.0
    %v907 = vmul.f32 %v47, %v805
    %v908 = vmul.f32 %v56, %v812
    %v909 = vmul.f32 %v48, %v813
    %v910 = vmul.f32 %v57, %v814
    %v911 = vmul.f32 %v811, 0.0
    %v917 = vrot.slane %v907, 4
    %v918 = vrot.slane %v908, 4
    %v919 = vrot.slane %v909, 4
    %v920 = vrot.slane %v910, 4
    %v921 = vrot.slane %v911, 4
    %922 = vrot.lane.b32.xlu0 %v917, 64
    %v923 = vpop.permute.xlu0 %922
    %924 = vrot.lane.b32.xlu0 %v918, 64
    %v925 = vpop.permute.xlu0 %924
    %926 = vrot.lane.b32.xlu0 %v919, 64
    %v927 = vpop.permute.xlu0 %926
    %928 = vrot.lane.b32.xlu0 %v920, 64
    %v929 = vpop.permute.xlu0 %928
    %930 = vrot.lane.b32.xlu0 %v921, 64
    %v931 = vpop.permute.xlu0 %930
    %v932 = vsel %vm160, %v923, %v925
    %v933 = vsel %vm160, %v925, %v927
    %v934 = vsel %vm160, %v927, %v929
    %v935 = vsel %vm160, %v929, %v931
    %v941 = vsel %vm170, %v902, %v932
    %v942 = vsel %vm170, %v903, %v933
    %v943 = vsel %vm170, %v904, %v934
    %v944 = vsel %vm170, %v905, %v935
    %v945 = vsel %vm170, %v906, %v931
    %951 = vrot.lane.b32.xlu0 %v941, 120
    %v952 = vpop.permute.xlu0 %951
    %953 = vrot.lane.b32.xlu0 %v942, 120
    %v954 = vpop.permute.xlu0 %953
    %955 = vrot.lane.b32.xlu0 %v943, 120
    %v956 = vpop.permute.xlu0 %955
    %957 = vrot.lane.b32.xlu0 %v944, 120
    %v958 = vpop.permute.xlu0 %957
    %959 = vrot.lane.b32.xlu0 %v945, 120
    %v960 = vpop.permute.xlu0 %959
    %v961 = vsel %vm126, %v952, %v954
    %v962 = vsel %vm126, %v954, %v956
    %v963 = vsel %vm126, %v956, %v958
    %v964 = vsel %vm126, %v958, %v960
    %969 = vst [vmem:[#allocation2 + $0x200] sm:$0xff] %v961
    %970 = vst [vmem:[#allocation2 + $0x208] sm:$0xff] %v962
    %971 = vst [vmem:[#allocation2 + $0x210] sm:$0xff] %v963
    %972 = vst [vmem:[#allocation2 + $0x218] sm:$0xff] %v964
    %973 = vrot.lane.b32.xlu0 0.0, 127
    %v974 = vpop.permute.xlu0 %973
    %975 = vrot.lane.b32.xlu0 %v47, 127
    %v976 = vpop.permute.xlu0 %975
    %977 = vrot.lane.b32.xlu0 %v56, 127
    %v978 = vpop.permute.xlu0 %977
    %979 = vrot.lane.b32.xlu0 %v48, 127
    %v980 = vpop.permute.xlu0 %979
    %981 = vrot.lane.b32.xlu0 %v57, 127
    %v982 = vpop.permute.xlu0 %981
    %vm983 = vcmp.lt.s32.totalorder %v71, 127
    %v984 = vsel %vm983, %v982, %v974
    %v985 = vsel %vm983, %v980, %v982
    %v986 = vsel %vm983, %v978, %v980
    %v987 = vsel %vm983, %v976, %v978
    %v988 = vsel %vm983, %v974, %v976
    %s989 = scalar_lea.vmem [#allocation6], 2
    %v990 = vld [vmem:[%s989] ss:$8 sm:$0xf]
    %v992 = vlaneseq
    %v993 = vshrl.u32 %v992, 7
    %v994 = vsub.s32 0, %v993
    %v995 = vrot.slane %v990, %v994
    %v996 = vlaneseq
    %v997 = vshrl.u32 %v996, 7
    %v998 = vsub.s32 1, %v997
    %v999 = vrot.slane %v990, %v998
    %v1000 = vlaneseq
    %v1001 = vshrl.u32 %v1000, 7
    %v1002 = vsub.s32 2, %v1001
    %v1003 = vrot.slane %v990, %v1002
    %v1004 = vlaneseq
    %v1005 = vshrl.u32 %v1004, 7
    %v1006 = vsub.s32 3, %v1005
    %v1007 = vrot.slane %v990, %v1006
    %1008 = vrot.lane.b32.xlu0 %v995, 56
    %v1009 = vpop.permute.xlu0 %1008
    %1010 = vrot.lane.b32.xlu0 %v999, 56
    %v1011 = vpop.permute.xlu0 %1010
    %1012 = vrot.lane.b32.xlu0 %v1003, 56
    %v1013 = vpop.permute.xlu0 %1012
    %1014 = vrot.lane.b32.xlu0 %v1007, 56
    %v1015 = vpop.permute.xlu0 %1014
    %v1016 = vsel %vm104, %v1009, %v1011
    %v1017 = vsel %vm104, %v1011, %v1013
    %v1018 = vsel %vm104, %v1013, %v1015
    %v1024 = vmul.f32 %v988, %v1009
    %v1025 = vmul.f32 %v987, %v1016
    %v1026 = vmul.f32 %v986, %v1017
    %v1027 = vmul.f32 %v985, %v1018
    %v1028 = vmul.f32 %v984, %v1015
    %1029 = vrot.lane.b32.xlu0 %v995, 120
    %v1030 = vpop.permute.xlu0 %1029
    %1031 = vrot.lane.b32.xlu0 %v999, 120
    %v1032 = vpop.permute.xlu0 %1031
    %1033 = vrot.lane.b32.xlu0 %v1003, 120
    %v1034 = vpop.permute.xlu0 %1033
    %1035 = vrot.lane.b32.xlu0 %v1007, 120
    %v1036 = vpop.permute.xlu0 %1035
    %v1037 = vsel %vm126, %v1030, %v1032
    %v1038 = vsel %vm126, %v1032, %v1034
    %v1039 = vsel %vm126, %v1034, %v1036
    %v1045 = vmul.f32 %v988, %v1030
    %v1046 = vmul.f32 %v987, %v1037
    %v1047 = vmul.f32 %v986, %v1038
    %v1048 = vmul.f32 %v985, %v1039
    %v1049 = vmul.f32 %v984, %v1036
    %v1055 = vrot.slane %v1045, 4
    %v1056 = vrot.slane %v1046, 4
    %v1057 = vrot.slane %v1047, 4
    %v1058 = vrot.slane %v1048, 4
    %v1059 = vrot.slane %v1049, 4
    %1060 = vrot.lane.b32.xlu0 %v1055, 64
    %v1061 = vpop.permute.xlu0 %1060
    %1062 = vrot.lane.b32.xlu0 %v1056, 64
    %v1063 = vpop.permute.xlu0 %1062
    %1064 = vrot.lane.b32.xlu0 %v1057, 64
    %v1065 = vpop.permute.xlu0 %1064
    %1066 = vrot.lane.b32.xlu0 %v1058, 64
    %v1067 = vpop.permute.xlu0 %1066
    %1068 = vrot.lane.b32.xlu0 %v1059, 64
    %v1069 = vpop.permute.xlu0 %1068
    %v1070 = vsel %vm160, %v1061, %v1063
    %v1071 = vsel %vm160, %v1063, %v1065
    %v1072 = vsel %vm160, %v1065, %v1067
    %v1073 = vsel %vm160, %v1067, %v1069
    %v1079 = vsel %vm170, %v1024, %v1070
    %v1080 = vsel %vm170, %v1025, %v1071
    %v1081 = vsel %vm170, %v1026, %v1072
    %v1082 = vsel %vm170, %v1027, %v1073
    %v1083 = vsel %vm170, %v1028, %v1069
    %1089 = vrot.lane.b32.xlu0 %v1079, 72
    %v1090 = vpop.permute.xlu0 %1089
    %1091 = vrot.lane.b32.xlu0 %v1080, 72
    %v1092 = vpop.permute.xlu0 %1091
    %1093 = vrot.lane.b32.xlu0 %v1081, 72
    %v1094 = vpop.permute.xlu0 %1093
    %1095 = vrot.lane.b32.xlu0 %v1082, 72
    %v1096 = vpop.permute.xlu0 %1095
    %1097 = vrot.lane.b32.xlu0 %v1083, 72
    %v1098 = vpop.permute.xlu0 %1097
    %v1099 = vsel %vm191, %v1090, %v1092
    %v1100 = vsel %vm191, %v1092, %v1094
    %v1101 = vsel %vm191, %v1094, %v1096
    %v1102 = vsel %vm191, %v1096, %v1098
    %1107 = vst [vmem:[#allocation2 + $0x240] sm:$0xff] %v1099
    %1108 = vst [vmem:[#allocation2 + $0x248] sm:$0xff] %v1100
    %1109 = vst [vmem:[#allocation2 + $0x250] sm:$0xff] %v1101
    %1110 = vst [vmem:[#allocation2 + $0x258] sm:$0xff] %v1102
    %v1111 = vmul.f32 %v987, %v1009
    %v1112 = vmul.f32 %v986, %v1016
    %v1113 = vmul.f32 %v985, %v1017
    %v1114 = vmul.f32 %v984, %v1018
    %v1115 = vmul.f32 %v974, %v1015
    %s1116 = scalar_lea.vmem [#allocation6], 5
    %v1117 = vld [vmem:[%s1116] ss:$8 sm:$0xf]
    %v1119 = vlaneseq
    %v1120 = vshrl.u32 %v1119, 7
    %v1121 = vsub.s32 0, %v1120
    %v1122 = vrot.slane %v1117, %v1121
    %v1123 = vlaneseq
    %v1124 = vshrl.u32 %v1123, 7
    %v1125 = vsub.s32 1, %v1124
    %v1126 = vrot.slane %v1117, %v1125
    %v1127 = vlaneseq
    %v1128 = vshrl.u32 %v1127, 7
    %v1129 = vsub.s32 2, %v1128
    %v1130 = vrot.slane %v1117, %v1129
    %v1131 = vlaneseq
    %v1132 = vshrl.u32 %v1131, 7
    %v1133 = vsub.s32 3, %v1132
    %v1134 = vrot.slane %v1117, %v1133
    %1139 = vrot.lane.b32.xlu0 %v1122, 64
    %v1140 = vpop.permute.xlu0 %1139
    %1141 = vrot.lane.b32.xlu0 %v1126, 64
    %v1142 = vpop.permute.xlu0 %1141
    %1143 = vrot.lane.b32.xlu0 %v1130, 64
    %v1144 = vpop.permute.xlu0 %1143
    %1145 = vrot.lane.b32.xlu0 %v1134, 64
    %v1146 = vpop.permute.xlu0 %1145
    %v1147 = vsel %vm160, %v1140, %v1142
    %v1148 = vsel %vm160, %v1142, %v1144
    %v1149 = vsel %vm160, %v1144, %v1146
    %v1155 = vmul.f32 %v988, %v1140
    %v1156 = vmul.f32 %v987, %v1147
    %v1157 = vmul.f32 %v986, %v1148
    %v1158 = vmul.f32 %v985, %v1149
    %v1159 = vmul.f32 %v984, %v1146
    %v1165 = vrot.slane %v1155, 4
    %v1166 = vrot.slane %v1156, 4
    %v1167 = vrot.slane %v1157, 4
    %v1168 = vrot.slane %v1158, 4
    %v1169 = vrot.slane %v1159, 4
    %1170 = vrot.lane.b32.xlu0 %v1165, 120
    %v1171 = vpop.permute.xlu0 %1170
    %1172 = vrot.lane.b32.xlu0 %v1166, 120
    %v1173 = vpop.permute.xlu0 %1172
    %1174 = vrot.lane.b32.xlu0 %v1167, 120
    %v1175 = vpop.permute.xlu0 %1174
    %1176 = vrot.lane.b32.xlu0 %v1168, 120
    %v1177 = vpop.permute.xlu0 %1176
    %1178 = vrot.lane.b32.xlu0 %v1169, 120
    %v1179 = vpop.permute.xlu0 %1178
    %v1180 = vsel %vm126, %v1171, %v1173
    %v1181 = vsel %vm126, %v1173, %v1175
    %v1182 = vsel %vm126, %v1175, %v1177
    %v1183 = vsel %vm126, %v1177, %v1179
    %v1189 = vsel %vm170, %v1111, %v1180
    %v1190 = vsel %vm170, %v1112, %v1181
    %v1191 = vsel %vm170, %v1113, %v1182
    %v1192 = vsel %vm170, %v1114, %v1183
    %v1193 = vsel %vm170, %v1115, %v1179
    %1199 = vrot.lane.b32.xlu0 %v1189, 72
    %v1200 = vpop.permute.xlu0 %1199
    %1201 = vrot.lane.b32.xlu0 %v1190, 72
    %v1202 = vpop.permute.xlu0 %1201
    %1203 = vrot.lane.b32.xlu0 %v1191, 72
    %v1204 = vpop.permute.xlu0 %1203
    %1205 = vrot.lane.b32.xlu0 %v1192, 72
    %v1206 = vpop.permute.xlu0 %1205
    %1207 = vrot.lane.b32.xlu0 %v1193, 72
    %v1208 = vpop.permute.xlu0 %1207
    %v1209 = vsel %vm191, %v1200, %v1202
    %v1210 = vsel %vm191, %v1202, %v1204
    %v1211 = vsel %vm191, %v1204, %v1206
    %v1212 = vsel %vm191, %v1206, %v1208
    %1217 = vst [vmem:[#allocation2 + $0x280] sm:$0xff] %v1209
    %1218 = vst [vmem:[#allocation2 + $0x288] sm:$0xff] %v1210
    %1219 = vst [vmem:[#allocation2 + $0x290] sm:$0xff] %v1211
    %1220 = vst [vmem:[#allocation2 + $0x298] sm:$0xff] %v1212
    %v1221 = vmul.f32 %v987, %v1122
    %v1222 = vmul.f32 %v986, %v1126
    %v1223 = vmul.f32 %v985, %v1130
    %v1224 = vmul.f32 %v984, %v1134
    %v1225 = vmul.f32 %v987, %v1140
    %v1226 = vmul.f32 %v986, %v1147
    %v1227 = vmul.f32 %v985, %v1148
    %v1228 = vmul.f32 %v984, %v1149
    %v1229 = vmul.f32 %v974, %v1146
    %v1235 = vrot.slane %v1225, 4
    %v1236 = vrot.slane %v1226, 4
    %v1237 = vrot.slane %v1227, 4
    %v1238 = vrot.slane %v1228, 4
    %v1239 = vrot.slane %v1229, 4
    %1240 = vrot.lane.b32.xlu0 %v1235, 64
    %v1241 = vpop.permute.xlu0 %1240
    %1242 = vrot.lane.b32.xlu0 %v1236, 64
    %v1243 = vpop.permute.xlu0 %1242
    %1244 = vrot.lane.b32.xlu0 %v1237, 64
    %v1245 = vpop.permute.xlu0 %1244
    %1246 = vrot.lane.b32.xlu0 %v1238, 64
    %v1247 = vpop.permute.xlu0 %1246
    %1248 = vrot.lane.b32.xlu0 %v1239, 64
    %v1249 = vpop.permute.xlu0 %1248
    %v1250 = vsel %vm160, %v1241, %v1243
    %v1251 = vsel %vm160, %v1243, %v1245
    %v1252 = vsel %vm160, %v1245, %v1247
    %v1253 = vsel %vm160, %v1247, %v1249
    %v1258 = vsel %vm170, %v1221, %v1250
    %v1259 = vsel %vm170, %v1222, %v1251
    %v1260 = vsel %vm170, %v1223, %v1252
    %v1261 = vsel %vm170, %v1224, %v1253
    %1262 = vst [vmem:[#allocation2 + $0x2c0] sm:$0xff] %v1258
    %1263 = vst [vmem:[#allocation2 + $0x2c8] sm:$0xff] %v1259
    %1264 = vst [vmem:[#allocation2 + $0x2d0] sm:$0xff] %v1260
    %1265 = vst [vmem:[#allocation2 + $0x2d8] sm:$0xff] %v1261
    %s1266 = scalar_lea.vmem [#allocation6], 32
    %v1267 = vld [vmem:[%s1266] ss:$8 sm:$0xf]
    %v1269 = vlaneseq
    %v1270 = vshrl.u32 %v1269, 7
    %v1271 = vsub.s32 0, %v1270
    %v1272 = vrot.slane %v1267, %v1271
    %v1273 = vlaneseq
    %v1274 = vshrl.u32 %v1273, 7
    %v1275 = vsub.s32 1, %v1274
    %v1276 = vrot.slane %v1267, %v1275
    %v1277 = vlaneseq
    %v1278 = vshrl.u32 %v1277, 7
    %v1279 = vsub.s32 2, %v1278
    %v1280 = vrot.slane %v1267, %v1279
    %v1281 = vlaneseq
    %v1282 = vshrl.u32 %v1281, 7
    %v1283 = vsub.s32 3, %v1282
    %v1284 = vrot.slane %v1267, %v1283
    %1285 = vrot.lane.b32.xlu0 %v1272, 72
    %v1286 = vpop.permute.xlu0 %1285
    %1287 = vrot.lane.b32.xlu0 %v1276, 72
    %v1288 = vpop.permute.xlu0 %1287
    %1289 = vrot.lane.b32.xlu0 %v1280, 72
    %v1290 = vpop.permute.xlu0 %1289
    %1291 = vrot.lane.b32.xlu0 %v1284, 72
    %v1292 = vpop.permute.xlu0 %1291
    %v1293 = vsel %vm191, %v1286, %v1288
    %v1294 = vsel %vm191, %v1288, %v1290
    %v1295 = vsel %vm191, %v1290, %v1292
    %v1301 = vmul.f32 %v988, %v1286
    %v1302 = vmul.f32 %v987, %v1293
    %v1303 = vmul.f32 %v986, %v1294
    %v1304 = vmul.f32 %v985, %v1295
    %v1305 = vmul.f32 %v984, %v1292
    %1306 = vrot.lane.b32.xlu0 %v1272, 8
    %v1307 = vpop.permute.xlu0 %1306
    %1308 = vrot.lane.b32.xlu0 %v1276, 8
    %v1309 = vpop.permute.xlu0 %1308
    %1310 = vrot.lane.b32.xlu0 %v1280, 8
    %v1311 = vpop.permute.xlu0 %1310
    %1312 = vrot.lane.b32.xlu0 %v1284, 8
    %v1313 = vpop.permute.xlu0 %1312
    %v1314 = vsel %vm407, %v1307, %v1309
    %v1315 = vsel %vm407, %v1309, %v1311
    %v1316 = vsel %vm407, %v1311, %v1313
    %v1322 = vmul.f32 %v987, %v1307
    %v1323 = vmul.f32 %v986, %v1314
    %v1324 = vmul.f32 %v985, %v1315
    %v1325 = vmul.f32 %v984, %v1316
    %v1326 = vmul.f32 %v974, %v1313
    %v1332 = vrot.slane %v1322, 4
    %v1333 = vrot.slane %v1323, 4
    %v1334 = vrot.slane %v1324, 4
    %v1335 = vrot.slane %v1325, 4
    %v1336 = vrot.slane %v1326, 4
    %1337 = vrot.lane.b32.xlu0 %v1332, 64
    %v1338 = vpop.permute.xlu0 %1337
    %1339 = vrot.lane.b32.xlu0 %v1333, 64
    %v1340 = vpop.permute.xlu0 %1339
    %1341 = vrot.lane.b32.xlu0 %v1334, 64
    %v1342 = vpop.permute.xlu0 %1341
    %1343 = vrot.lane.b32.xlu0 %v1335, 64
    %v1344 = vpop.permute.xlu0 %1343
    %1345 = vrot.lane.b32.xlu0 %v1336, 64
    %v1346 = vpop.permute.xlu0 %1345
    %v1347 = vsel %vm160, %v1338, %v1340
    %v1348 = vsel %vm160, %v1340, %v1342
    %v1349 = vsel %vm160, %v1342, %v1344
    %v1350 = vsel %vm160, %v1344, %v1346
    %v1356 = vsel %vm170, %v1301, %v1338
    %v1357 = vsel %vm170, %v1302, %v1347
    %v1358 = vsel %vm170, %v1303, %v1348
    %v1359 = vsel %vm170, %v1304, %v1349
    %v1360 = vsel %vm170, %v1305, %v1350
    %1366 = vrot.lane.b32.xlu0 %v1356, 56
    %v1367 = vpop.permute.xlu0 %1366
    %1368 = vrot.lane.b32.xlu0 %v1357, 56
    %v1369 = vpop.permute.xlu0 %1368
    %1370 = vrot.lane.b32.xlu0 %v1358, 56
    %v1371 = vpop.permute.xlu0 %1370
    %1372 = vrot.lane.b32.xlu0 %v1359, 56
    %v1373 = vpop.permute.xlu0 %1372
    %1374 = vrot.lane.b32.xlu0 %v1360, 56
    %v1375 = vpop.permute.xlu0 %1374
    %v1376 = vsel %vm104, %v1367, %v1369
    %v1377 = vsel %vm104, %v1369, %v1371
    %v1378 = vsel %vm104, %v1371, %v1373
    %v1379 = vsel %vm104, %v1373, %v1375
    %1384 = vst [vmem:[#allocation2 + $0x300] sm:$0xff] %v1376
    %1385 = vst [vmem:[#allocation2 + $0x308] sm:$0xff] %v1377
    %1386 = vst [vmem:[#allocation2 + $0x310] sm:$0xff] %v1378
    %1387 = vst [vmem:[#allocation2 + $0x318] sm:$0xff] %v1379
    %v1388 = vmul.f32 %v987, %v1286
    %v1389 = vmul.f32 %v986, %v1293
    %v1390 = vmul.f32 %v985, %v1294
    %v1391 = vmul.f32 %v984, %v1295
    %v1392 = vmul.f32 %v974, %v1292
    %v1393 = vsel %vm170, %v1388, 0.0
    %v1394 = vsel %vm170, %v1389, 0.0
    %v1395 = vsel %vm170, %v1390, 0.0
    %v1396 = vsel %vm170, %v1391, 0.0
    %v1397 = vsel %vm170, %v1392, 0.0
    %1403 = vrot.lane.b32.xlu0 %v1393, 56
    %v1404 = vpop.permute.xlu0 %1403
    %1405 = vrot.lane.b32.xlu0 %v1394, 56
    %v1406 = vpop.permute.xlu0 %1405
    %1407 = vrot.lane.b32.xlu0 %v1395, 56
    %v1408 = vpop.permute.xlu0 %1407
    %1409 = vrot.lane.b32.xlu0 %v1396, 56
    %v1410 = vpop.permute.xlu0 %1409
    %1411 = vrot.lane.b32.xlu0 %v1397, 56
    %v1412 = vpop.permute.xlu0 %1411
    %v1413 = vsel %vm104, %v1404, %v1406
    %v1414 = vsel %vm104, %v1406, %v1408
    %v1415 = vsel %vm104, %v1408, %v1410
    %v1416 = vsel %vm104, %v1410, %v1412
    %1421 = vst [vmem:[#allocation2 + $0x340] sm:$0xff] %v1413
    %1422 = vst [vmem:[#allocation2 + $0x348] sm:$0xff] %v1414
    %1423 = vst [vmem:[#allocation2 + $0x350] sm:$0xff] %v1415
    %1424 = vst [vmem:[#allocation2 + $0x358] sm:$0xff] %v1416
    %v1427 = vcombine.high %v49, %v49
    %v1428 = vcombine.high %v50, %v50
    %1431 = vrot.lane.b32.xlu0 %v49, 1
    %v1432 = vpop.permute.xlu0 %1431
    %1433 = vrot.lane.b32.xlu0 %v1427, 1
    %v1434 = vpop.permute.xlu0 %1433
    %1435 = vrot.lane.b32.xlu0 %v50, 1
    %v1436 = vpop.permute.xlu0 %1435
    %1437 = vrot.lane.b32.xlu0 %v1428, 1
    %v1438 = vpop.permute.xlu0 %1437
    %v1439 = vsel %vm72, %v1438, %v61
    %v1440 = vsel %vm72, %v1436, %v1438
    %v1441 = vsel %vm72, %v1434, %v1436
    %v1442 = vsel %vm72, %v1432, %v1434
    %v1443 = vsel %vm72, %v61, %v1432
    %v1444 = vld [vmem:[#allocation6] ss:$8 sm:$0xf]
    %v1446 = vlaneseq
    %v1447 = vshrl.u32 %v1446, 7
    %v1448 = vsub.s32 0, %v1447
    %v1449 = vrot.slane %v1444, %v1448
    %v1450 = vlaneseq
    %v1451 = vshrl.u32 %v1450, 7
    %v1452 = vsub.s32 1, %v1451
    %v1453 = vrot.slane %v1444, %v1452
    %v1454 = vlaneseq
    %v1455 = vshrl.u32 %v1454, 7
    %v1456 = vsub.s32 2, %v1455
    %v1457 = vrot.slane %v1444, %v1456
    %v1458 = vlaneseq
    %v1459 = vshrl.u32 %v1458, 7
    %v1460 = vsub.s32 3, %v1459
    %v1461 = vrot.slane %v1444, %v1460
    %1462 = vrot.lane.b32.xlu0 %v1449, 56
    %v1463 = vpop.permute.xlu0 %1462
    %1464 = vrot.lane.b32.xlu0 %v1453, 56
    %v1465 = vpop.permute.xlu0 %1464
    %1466 = vrot.lane.b32.xlu0 %v1457, 56
    %v1467 = vpop.permute.xlu0 %1466
    %1468 = vrot.lane.b32.xlu0 %v1461, 56
    %v1469 = vpop.permute.xlu0 %1468
    %v1470 = vsel %vm104, %v1463, %v1465
    %v1471 = vsel %vm104, %v1465, %v1467
    %v1472 = vsel %vm104, %v1467, %v1469
    %v1478 = vmul.f32 %v61, %v1463
    %v1479 = vmul.f32 %v1443, %v1470
    %v1480 = vmul.f32 %v1442, %v1471
    %v1481 = vmul.f32 %v1441, %v1472
    %v1482 = vmul.f32 %v1440, %v1469
    %1483 = vrot.lane.b32.xlu0 %v1449, 120
    %v1484 = vpop.permute.xlu0 %1483
    %1485 = vrot.lane.b32.xlu0 %v1453, 120
    %v1486 = vpop.permute.xlu0 %1485
    %1487 = vrot.lane.b32.xlu0 %v1457, 120
    %v1488 = vpop.permute.xlu0 %1487
    %1489 = vrot.lane.b32.xlu0 %v1461, 120
    %v1490 = vpop.permute.xlu0 %1489
    %v1491 = vsel %vm126, %v1484, %v1486
    %v1492 = vsel %vm126, %v1486, %v1488
    %v1493 = vsel %vm126, %v1488, %v1490
    %v1499 = vmul.f32 %v61, %v1484
    %v1500 = vmul.f32 %v1443, %v1491
    %v1501 = vmul.f32 %v1442, %v1492
    %v1502 = vmul.f32 %v1441, %v1493
    %v1503 = vmul.f32 %v1440, %v1490
    %v1509 = vrot.slane %v1499, 4
    %v1510 = vrot.slane %v1500, 4
    %v1511 = vrot.slane %v1501, 4
    %v1512 = vrot.slane %v1502, 4
    %v1513 = vrot.slane %v1503, 4
    %1514 = vrot.lane.b32.xlu0 %v1509, 64
    %v1515 = vpop.permute.xlu0 %1514
    %1516 = vrot.lane.b32.xlu0 %v1510, 64
    %v1517 = vpop.permute.xlu0 %1516
    %1518 = vrot.lane.b32.xlu0 %v1511, 64
    %v1519 = vpop.permute.xlu0 %1518
    %1520 = vrot.lane.b32.xlu0 %v1512, 64
    %v1521 = vpop.permute.xlu0 %1520
    %1522 = vrot.lane.b32.xlu0 %v1513, 64
    %v1523 = vpop.permute.xlu0 %1522
    %v1524 = vsel %vm160, %v1515, %v1517
    %v1525 = vsel %vm160, %v1517, %v1519
    %v1526 = vsel %vm160, %v1519, %v1521
    %v1527 = vsel %vm160, %v1521, %v1523
    %v1533 = vsel %vm170, %v1478, %v1524
    %v1534 = vsel %vm170, %v1479, %v1525
    %v1535 = vsel %vm170, %v1480, %v1526
    %v1536 = vsel %vm170, %v1481, %v1527
    %v1537 = vsel %vm170, %v1482, %v1523
    %1543 = vrot.lane.b32.xlu0 %v1533, 72
    %v1544 = vpop.permute.xlu0 %1543
    %1545 = vrot.lane.b32.xlu0 %v1534, 72
    %v1546 = vpop.permute.xlu0 %1545
    %1547 = vrot.lane.b32.xlu0 %v1535, 72
    %v1548 = vpop.permute.xlu0 %1547
    %1549 = vrot.lane.b32.xlu0 %v1536, 72
    %v1550 = vpop.permute.xlu0 %1549
    %1551 = vrot.lane.b32.xlu0 %v1537, 72
    %v1552 = vpop.permute.xlu0 %1551
    %v1553 = vsel %vm191, %v1544, %v1546
    %v1554 = vsel %vm191, %v1546, %v1548
    %v1555 = vsel %vm191, %v1548, %v1550
    %v1556 = vsel %vm191, %v1550, %v1552
    %1561 = vst [vmem:[#allocation2 + $0x20] sm:$0xff] %v1553
    %1562 = vst [vmem:[#allocation2 + $0x28] sm:$0xff] %v1554
    %1563 = vst [vmem:[#allocation2 + $0x30] sm:$0xff] %v1555
    %1564 = vst [vmem:[#allocation2 + $0x38] sm:$0xff] %v1556
    %v1565 = vmul.f32 %v1443, %v1463
    %v1566 = vmul.f32 %v1442, %v1470
    %v1567 = vmul.f32 %v1441, %v1471
    %v1568 = vmul.f32 %v1440, %v1472
    %v1569 = vmul.f32 %v1439, %v1469
    %v1570 = vld [vmem:[%s209] ss:$8 sm:$0xf]
    %v1572 = vlaneseq
    %v1573 = vshrl.u32 %v1572, 7
    %v1574 = vsub.s32 0, %v1573
    %v1575 = vrot.slane %v1570, %v1574
    %v1576 = vlaneseq
    %v1577 = vshrl.u32 %v1576, 7
    %v1578 = vsub.s32 1, %v1577
    %v1579 = vrot.slane %v1570, %v1578
    %v1580 = vlaneseq
    %v1581 = vshrl.u32 %v1580, 7
    %v1582 = vsub.s32 2, %v1581
    %v1583 = vrot.slane %v1570, %v1582
    %v1584 = vlaneseq
    %v1585 = vshrl.u32 %v1584, 7
    %v1586 = vsub.s32 3, %v1585
    %v1587 = vrot.slane %v1570, %v1586
    %1592 = vrot.lane.b32.xlu0 %v1575, 64
    %v1593 = vpop.permute.xlu0 %1592
    %1594 = vrot.lane.b32.xlu0 %v1579, 64
    %v1595 = vpop.permute.xlu0 %1594
    %1596 = vrot.lane.b32.xlu0 %v1583, 64
    %v1597 = vpop.permute.xlu0 %1596
    %1598 = vrot.lane.b32.xlu0 %v1587, 64
    %v1599 = vpop.permute.xlu0 %1598
    %v1600 = vsel %vm160, %v1593, %v1595
    %v1601 = vsel %vm160, %v1595, %v1597
    %v1602 = vsel %vm160, %v1597, %v1599
    %v1608 = vmul.f32 %v61, %v1593
    %v1609 = vmul.f32 %v1443, %v1600
    %v1610 = vmul.f32 %v1442, %v1601
    %v1611 = vmul.f32 %v1441, %v1602
    %v1612 = vmul.f32 %v1440, %v1599
    %v1618 = vrot.slane %v1608, 4
    %v1619 = vrot.slane %v1609, 4
    %v1620 = vrot.slane %v1610, 4
    %v1621 = vrot.slane %v1611, 4
    %v1622 = vrot.slane %v1612, 4
    %1623 = vrot.lane.b32.xlu0 %v1618, 120
    %v1624 = vpop.permute.xlu0 %1623
    %1625 = vrot.lane.b32.xlu0 %v1619, 120
    %v1626 = vpop.permute.xlu0 %1625
    %1627 = vrot.lane.b32.xlu0 %v1620, 120
    %v1628 = vpop.permute.xlu0 %1627
    %1629 = vrot.lane.b32.xlu0 %v1621, 120
    %v1630 = vpop.permute.xlu0 %1629
    %1631 = vrot.lane.b32.xlu0 %v1622, 120
    %v1632 = vpop.permute.xlu0 %1631
    %v1633 = vsel %vm126, %v1624, %v1626
    %v1634 = vsel %vm126, %v1626, %v1628
    %v1635 = vsel %vm126, %v1628, %v1630
    %v1636 = vsel %vm126, %v1630, %v1632
    %v1642 = vsel %vm170, %v1565, %v1633
    %v1643 = vsel %vm170, %v1566, %v1634
    %v1644 = vsel %vm170, %v1567, %v1635
    %v1645 = vsel %vm170, %v1568, %v1636
    %v1646 = vsel %vm170, %v1569, %v1632
    %1652 = vrot.lane.b32.xlu0 %v1642, 72
    %v1653 = vpop.permute.xlu0 %1652
    %1654 = vrot.lane.b32.xlu0 %v1643, 72
    %v1655 = vpop.permute.xlu0 %1654
    %1656 = vrot.lane.b32.xlu0 %v1644, 72
    %v1657 = vpop.permute.xlu0 %1656
    %1658 = vrot.lane.b32.xlu0 %v1645, 72
    %v1659 = vpop.permute.xlu0 %1658
    %1660 = vrot.lane.b32.xlu0 %v1646, 72
    %v1661 = vpop.permute.xlu0 %1660
    %v1662 = vsel %vm191, %v1653, %v1655
    %v1663 = vsel %vm191, %v1655, %v1657
    %v1664 = vsel %vm191, %v1657, %v1659
    %v1665 = vsel %vm191, %v1659, %v1661
    %1670 = vst [vmem:[#allocation2 + $0x60] sm:$0xff] %v1662
    %1671 = vst [vmem:[#allocation2 + $0x68] sm:$0xff] %v1663
    %1672 = vst [vmem:[#allocation2 + $0x70] sm:$0xff] %v1664
    %1673 = vst [vmem:[#allocation2 + $0x78] sm:$0xff] %v1665
    %v1674 = vmul.f32 %v1443, %v1575
    %v1675 = vmul.f32 %v1442, %v1579
    %v1676 = vmul.f32 %v1441, %v1583
    %v1677 = vmul.f32 %v1440, %v1587
    %v1678 = vmul.f32 %v1443, %v1593
    %v1679 = vmul.f32 %v1442, %v1600
    %v1680 = vmul.f32 %v1441, %v1601
    %v1681 = vmul.f32 %v1440, %v1602
    %v1682 = vmul.f32 %v1439, %v1599
    %v1688 = vrot.slane %v1678, 4
    %v1689 = vrot.slane %v1679, 4
    %v1690 = vrot.slane %v1680, 4
    %v1691 = vrot.slane %v1681, 4
    %v1692 = vrot.slane %v1682, 4
    %1693 = vrot.lane.b32.xlu0 %v1688, 64
    %v1694 = vpop.permute.xlu0 %1693
    %1695 = vrot.lane.b32.xlu0 %v1689, 64
    %v1696 = vpop.permute.xlu0 %1695
    %1697 = vrot.lane.b32.xlu0 %v1690, 64
    %v1698 = vpop.permute.xlu0 %1697
    %1699 = vrot.lane.b32.xlu0 %v1691, 64
    %v1700 = vpop.permute.xlu0 %1699
    %1701 = vrot.lane.b32.xlu0 %v1692, 64
    %v1702 = vpop.permute.xlu0 %1701
    %v1703 = vsel %vm160, %v1694, %v1696
    %v1704 = vsel %vm160, %v1696, %v1698
    %v1705 = vsel %vm160, %v1698, %v1700
    %v1706 = vsel %vm160, %v1700, %v1702
    %v1711 = vsel %vm170, %v1674, %v1703
    %v1712 = vsel %vm170, %v1675, %v1704
    %v1713 = vsel %vm170, %v1676, %v1705
    %v1714 = vsel %vm170, %v1677, %v1706
    %1715 = vst [vmem:[#allocation2 + $0xa0] sm:$0xff] %v1711
    %1716 = vst [vmem:[#allocation2 + $0xa8] sm:$0xff] %v1712
    %1717 = vst [vmem:[#allocation2 + $0xb0] sm:$0xff] %v1713
    %1718 = vst [vmem:[#allocation2 + $0xb8] sm:$0xff] %v1714
    %v1719 = vld [vmem:[%s359] ss:$8 sm:$0xf]
    %v1721 = vlaneseq
    %v1722 = vshrl.u32 %v1721, 7
    %v1723 = vsub.s32 0, %v1722
    %v1724 = vrot.slane %v1719, %v1723
    %v1725 = vlaneseq
    %v1726 = vshrl.u32 %v1725, 7
    %v1727 = vsub.s32 1, %v1726
    %v1728 = vrot.slane %v1719, %v1727
    %v1729 = vlaneseq
    %v1730 = vshrl.u32 %v1729, 7
    %v1731 = vsub.s32 2, %v1730
    %v1732 = vrot.slane %v1719, %v1731
    %v1733 = vlaneseq
    %v1734 = vshrl.u32 %v1733, 7
    %v1735 = vsub.s32 3, %v1734
    %v1736 = vrot.slane %v1719, %v1735
    %1737 = vrot.lane.b32.xlu0 %v1724, 72
    %v1738 = vpop.permute.xlu0 %1737
    %1739 = vrot.lane.b32.xlu0 %v1728, 72
    %v1740 = vpop.permute.xlu0 %1739
    %1741 = vrot.lane.b32.xlu0 %v1732, 72
    %v1742 = vpop.permute.xlu0 %1741
    %1743 = vrot.lane.b32.xlu0 %v1736, 72
    %v1744 = vpop.permute.xlu0 %1743
    %v1745 = vsel %vm191, %v1738, %v1740
    %v1746 = vsel %vm191, %v1740, %v1742
    %v1747 = vsel %vm191, %v1742, %v1744
    %v1753 = vmul.f32 %v61, %v1738
    %v1754 = vmul.f32 %v1443, %v1745
    %v1755 = vmul.f32 %v1442, %v1746
    %v1756 = vmul.f32 %v1441, %v1747
    %v1757 = vmul.f32 %v1440, %v1744
    %1758 = vrot.lane.b32.xlu0 %v1724, 8
    %v1759 = vpop.permute.xlu0 %1758
    %1760 = vrot.lane.b32.xlu0 %v1728, 8
    %v1761 = vpop.permute.xlu0 %1760
    %1762 = vrot.lane.b32.xlu0 %v1732, 8
    %v1763 = vpop.permute.xlu0 %1762
    %1764 = vrot.lane.b32.xlu0 %v1736, 8
    %v1765 = vpop.permute.xlu0 %1764
    %v1766 = vsel %vm407, %v1759, %v1761
    %v1767 = vsel %vm407, %v1761, %v1763
    %v1768 = vsel %vm407, %v1763, %v1765
    %v1774 = vmul.f32 %v1443, %v1759
    %v1775 = vmul.f32 %v1442, %v1766
    %v1776 = vmul.f32 %v1441, %v1767
    %v1777 = vmul.f32 %v1440, %v1768
    %v1778 = vmul.f32 %v1439, %v1765
    %v1784 = vrot.slane %v1774, 4
    %v1785 = vrot.slane %v1775, 4
    %v1786 = vrot.slane %v1776, 4
    %v1787 = vrot.slane %v1777, 4
    %v1788 = vrot.slane %v1778, 4
    %1789 = vrot.lane.b32.xlu0 %v1784, 64
    %v1790 = vpop.permute.xlu0 %1789
    %1791 = vrot.lane.b32.xlu0 %v1785, 64
    %v1792 = vpop.permute.xlu0 %1791
    %1793 = vrot.lane.b32.xlu0 %v1786, 64
    %v1794 = vpop.permute.xlu0 %1793
    %1795 = vrot.lane.b32.xlu0 %v1787, 64
    %v1796 = vpop.permute.xlu0 %1795
    %1797 = vrot.lane.b32.xlu0 %v1788, 64
    %v1798 = vpop.permute.xlu0 %1797
    %v1799 = vsel %vm160, %v1790, %v1792
    %v1800 = vsel %vm160, %v1792, %v1794
    %v1801 = vsel %vm160, %v1794, %v1796
    %v1802 = vsel %vm160, %v1796, %v1798
    %v1808 = vsel %vm170, %v1753, %v1790
    %v1809 = vsel %vm170, %v1754, %v1799
    %v1810 = vsel %vm170, %v1755, %v1800
    %v1811 = vsel %vm170, %v1756, %v1801
    %v1812 = vsel %vm170, %v1757, %v1802
    %1818 = vrot.lane.b32.xlu0 %v1808, 56
    %v1819 = vpop.permute.xlu0 %1818
    %1820 = vrot.lane.b32.xlu0 %v1809, 56
    %v1821 = vpop.permute.xlu0 %1820
    %1822 = vrot.lane.b32.xlu0 %v1810, 56
    %v1823 = vpop.permute.xlu0 %1822
    %1824 = vrot.lane.b32.xlu0 %v1811, 56
    %v1825 = vpop.permute.xlu0 %1824
    %1826 = vrot.lane.b32.xlu0 %v1812, 56
    %v1827 = vpop.permute.xlu0 %1826
    %v1828 = vsel %vm104, %v1819, %v1821
    %v1829 = vsel %vm104, %v1821, %v1823
    %v1830 = vsel %vm104, %v1823, %v1825
    %v1831 = vsel %vm104, %v1825, %v1827
    %1836 = vst [vmem:[#allocation2 + $0xe0] sm:$0xff] %v1828
    %1837 = vst [vmem:[#allocation2 + $0xe8] sm:$0xff] %v1829
    %1838 = vst [vmem:[#allocation2 + $0xf0] sm:$0xff] %v1830
    %1839 = vst [vmem:[#allocation2 + $0xf8] sm:$0xff] %v1831
    %v1840 = vmul.f32 %v1443, %v1738
    %v1841 = vmul.f32 %v1442, %v1745
    %v1842 = vmul.f32 %v1441, %v1746
    %v1843 = vmul.f32 %v1440, %v1747
    %v1844 = vmul.f32 %v1439, %v1744
    %v1845 = vld [vmem:[%s487] ss:$8 sm:$0xf]
    %v1847 = vlaneseq
    %v1848 = vshrl.u32 %v1847, 7
    %v1849 = vsub.s32 0, %v1848
    %v1850 = vrot.slane %v1845, %v1849
    %v1851 = vlaneseq
    %v1852 = vshrl.u32 %v1851, 7
    %v1853 = vsub.s32 1, %v1852
    %v1854 = vrot.slane %v1845, %v1853
    %v1855 = vlaneseq
    %v1856 = vshrl.u32 %v1855, 7
    %v1857 = vsub.s32 2, %v1856
    %v1858 = vrot.slane %v1845, %v1857
    %v1859 = vlaneseq
    %v1860 = vshrl.u32 %v1859, 7
    %v1861 = vsub.s32 3, %v1860
    %v1862 = vrot.slane %v1845, %v1861
    %1863 = vrot.lane.b32.xlu0 %v1850, 56
    %v1864 = vpop.permute.xlu0 %1863
    %1865 = vrot.lane.b32.xlu0 %v1854, 56
    %v1866 = vpop.permute.xlu0 %1865
    %1867 = vrot.lane.b32.xlu0 %v1858, 56
    %v1868 = vpop.permute.xlu0 %1867
    %1869 = vrot.lane.b32.xlu0 %v1862, 56
    %v1870 = vpop.permute.xlu0 %1869
    %v1871 = vsel %vm104, %v1864, %v1866
    %v1872 = vsel %vm104, %v1866, %v1868
    %v1873 = vsel %vm104, %v1868, %v1870
    %v1879 = vmul.f32 %v1864, 0.0
    %v1880 = vmul.f32 %v49, %v1871
    %v1881 = vmul.f32 %v1427, %v1872
    %v1882 = vmul.f32 %v50, %v1873
    %v1883 = vmul.f32 %v1428, %v1870
    %v1889 = vrot.slane %v1879, 4
    %v1890 = vrot.slane %v1880, 4
    %v1891 = vrot.slane %v1881, 4
    %v1892 = vrot.slane %v1882, 4
    %v1893 = vrot.slane %v1883, 4
    %1894 = vrot.lane.b32.xlu0 %v1889, 16
    %v1895 = vpop.permute.xlu0 %1894
    %1896 = vrot.lane.b32.xlu0 %v1890, 16
    %v1897 = vpop.permute.xlu0 %1896
    %1898 = vrot.lane.b32.xlu0 %v1891, 16
    %v1899 = vpop.permute.xlu0 %1898
    %1900 = vrot.lane.b32.xlu0 %v1892, 16
    %v1901 = vpop.permute.xlu0 %1900
    %1902 = vrot.lane.b32.xlu0 %v1893, 16
    %v1903 = vpop.permute.xlu0 %1902
    %v1904 = vsel %vm547, %v1895, %v1897
    %v1905 = vsel %vm547, %v1897, %v1899
    %v1906 = vsel %vm547, %v1899, %v1901
    %v1907 = vsel %vm547, %v1901, %v1903
    %v1913 = vsel %vm170, %v1840, %v1895
    %v1914 = vsel %vm170, %v1841, %v1904
    %v1915 = vsel %vm170, %v1842, %v1905
    %v1916 = vsel %vm170, %v1843, %v1906
    %v1917 = vsel %vm170, %v1844, %v1907
    %1923 = vrot.lane.b32.xlu0 %v1913, 56
    %v1924 = vpop.permute.xlu0 %1923
    %1925 = vrot.lane.b32.xlu0 %v1914, 56
    %v1926 = vpop.permute.xlu0 %1925
    %1927 = vrot.lane.b32.xlu0 %v1915, 56
    %v1928 = vpop.permute.xlu0 %1927
    %1929 = vrot.lane.b32.xlu0 %v1916, 56
    %v1930 = vpop.permute.xlu0 %1929
    %1931 = vrot.lane.b32.xlu0 %v1917, 56
    %v1932 = vpop.permute.xlu0 %1931
    %v1933 = vsel %vm104, %v1924, %v1926
    %v1934 = vsel %vm104, %v1926, %v1928
    %v1935 = vsel %vm104, %v1928, %v1930
    %v1936 = vsel %vm104, %v1930, %v1932
    %1941 = vst [vmem:[#allocation2 + $0x120] sm:$0xff] %v1933
    %1942 = vst [vmem:[#allocation2 + $0x128] sm:$0xff] %v1934
    %1943 = vst [vmem:[#allocation2 + $0x130] sm:$0xff] %v1935
    %1944 = vst [vmem:[#allocation2 + $0x138] sm:$0xff] %v1936
    %1945 = vrot.lane.b32.xlu0 %v1850, 120
    %v1946 = vpop.permute.xlu0 %1945
    %1947 = vrot.lane.b32.xlu0 %v1854, 120
    %v1948 = vpop.permute.xlu0 %1947
    %1949 = vrot.lane.b32.xlu0 %v1858, 120
    %v1950 = vpop.permute.xlu0 %1949
    %1951 = vrot.lane.b32.xlu0 %v1862, 120
    %v1952 = vpop.permute.xlu0 %1951
    %v1953 = vsel %vm126, %v1946, %v1948
    %v1954 = vsel %vm126, %v1948, %v1950
    %v1955 = vsel %vm126, %v1950, %v1952
    %v1961 = vmul.f32 %v1946, 0.0
    %v1962 = vmul.f32 %v49, %v1953
    %v1963 = vmul.f32 %v1427, %v1954
    %v1964 = vmul.f32 %v50, %v1955
    %v1965 = vmul.f32 %v1428, %v1952
    %v1966 = vmul.f32 %v49, %v1864
    %v1967 = vmul.f32 %v1427, %v1871
    %v1968 = vmul.f32 %v50, %v1872
    %v1969 = vmul.f32 %v1428, %v1873
    %v1970 = vmul.f32 %v1870, 0.0
    %v1976 = vrot.slane %v1966, 4
    %v1977 = vrot.slane %v1967, 4
    %v1978 = vrot.slane %v1968, 4
    %v1979 = vrot.slane %v1969, 4
    %v1980 = vrot.slane %v1970, 4
    %1981 = vrot.lane.b32.xlu0 %v1976, 64
    %v1982 = vpop.permute.xlu0 %1981
    %1983 = vrot.lane.b32.xlu0 %v1977, 64
    %v1984 = vpop.permute.xlu0 %1983
    %1985 = vrot.lane.b32.xlu0 %v1978, 64
    %v1986 = vpop.permute.xlu0 %1985
    %1987 = vrot.lane.b32.xlu0 %v1979, 64
    %v1988 = vpop.permute.xlu0 %1987
    %1989 = vrot.lane.b32.xlu0 %v1980, 64
    %v1990 = vpop.permute.xlu0 %1989
    %v1991 = vsel %vm160, %v1982, %v1984
    %v1992 = vsel %vm160, %v1984, %v1986
    %v1993 = vsel %vm160, %v1986, %v1988
    %v1994 = vsel %vm160, %v1988, %v1990
    %v2000 = vsel %vm170, %v1961, %v1982
    %v2001 = vsel %vm170, %v1962, %v1991
    %v2002 = vsel %vm170, %v1963, %v1992
    %v2003 = vsel %vm170, %v1964, %v1993
    %v2004 = vsel %vm170, %v1965, %v1994
    %2010 = vrot.lane.b32.xlu0 %v2000, 8
    %v2011 = vpop.permute.xlu0 %2010
    %2012 = vrot.lane.b32.xlu0 %v2001, 8
    %v2013 = vpop.permute.xlu0 %2012
    %2014 = vrot.lane.b32.xlu0 %v2002, 8
    %v2015 = vpop.permute.xlu0 %2014
    %2016 = vrot.lane.b32.xlu0 %v2003, 8
    %v2017 = vpop.permute.xlu0 %2016
    %2018 = vrot.lane.b32.xlu0 %v2004, 8
    %v2019 = vpop.permute.xlu0 %2018
    %v2020 = vsel %vm407, %v2011, %v2013
    %v2021 = vsel %vm407, %v2013, %v2015
    %v2022 = vsel %vm407, %v2015, %v2017
    %v2023 = vsel %vm407, %v2017, %v2019
    %2028 = vst [vmem:[#allocation2 + $0x160] sm:$0xff] %v2020
    %2029 = vst [vmem:[#allocation2 + $0x168] sm:$0xff] %v2021
    %2030 = vst [vmem:[#allocation2 + $0x170] sm:$0xff] %v2022
    %2031 = vst [vmem:[#allocation2 + $0x178] sm:$0xff] %v2023
    %v2032 = vld [vmem:[%s676] ss:$8 sm:$0xf]
    %v2034 = vlaneseq
    %v2035 = vshrl.u32 %v2034, 7
    %v2036 = vsub.s32 0, %v2035
    %v2037 = vrot.slane %v2032, %v2036
    %v2038 = vlaneseq
    %v2039 = vshrl.u32 %v2038, 7
    %v2040 = vsub.s32 1, %v2039
    %v2041 = vrot.slane %v2032, %v2040
    %v2042 = vlaneseq
    %v2043 = vshrl.u32 %v2042, 7
    %v2044 = vsub.s32 2, %v2043
    %v2045 = vrot.slane %v2032, %v2044
    %v2046 = vlaneseq
    %v2047 = vshrl.u32 %v2046, 7
    %v2048 = vsub.s32 3, %v2047
    %v2049 = vrot.slane %v2032, %v2048
    %2054 = vrot.lane.b32.xlu0 %v2037, 64
    %v2055 = vpop.permute.xlu0 %2054
    %2056 = vrot.lane.b32.xlu0 %v2041, 64
    %v2057 = vpop.permute.xlu0 %2056
    %2058 = vrot.lane.b32.xlu0 %v2045, 64
    %v2059 = vpop.permute.xlu0 %2058
    %2060 = vrot.lane.b32.xlu0 %v2049, 64
    %v2061 = vpop.permute.xlu0 %2060
    %v2062 = vsel %vm160, %v2055, %v2057
    %v2063 = vsel %vm160, %v2057, %v2059
    %v2064 = vsel %vm160, %v2059, %v2061
    %v2070 = vmul.f32 %v2055, 0.0
    %v2071 = vmul.f32 %v49, %v2062
    %v2072 = vmul.f32 %v1427, %v2063
    %v2073 = vmul.f32 %v50, %v2064
    %v2074 = vmul.f32 %v1428, %v2061
    %v2075 = vmul.f32 %v49, %v2037
    %v2076 = vmul.f32 %v1427, %v2041
    %v2077 = vmul.f32 %v50, %v2045
    %v2078 = vmul.f32 %v1428, %v2049
    %v2083 = vrot.slane %v2075, 4
    %v2084 = vrot.slane %v2076, 4
    %v2085 = vrot.slane %v2077, 4
    %v2086 = vrot.slane %v2078, 4
    %2087 = vrot.lane.b32.xlu0 %v2083, 64
    %v2088 = vpop.permute.xlu0 %2087
    %2089 = vrot.lane.b32.xlu0 %v2084, 64
    %v2090 = vpop.permute.xlu0 %2089
    %2091 = vrot.lane.b32.xlu0 %v2085, 64
    %v2092 = vpop.permute.xlu0 %2091
    %2093 = vrot.lane.b32.xlu0 %v2086, 64
    %v2094 = vpop.permute.xlu0 %2093
    %v2095 = vsel %vm160, %v2088, %v2090
    %v2096 = vsel %vm160, %v2090, %v2092
    %v2097 = vsel %vm160, %v2092, %v2094
    %v2103 = vsel %vm170, %v2070, %v2088
    %v2104 = vsel %vm170, %v2071, %v2095
    %v2105 = vsel %vm170, %v2072, %v2096
    %v2106 = vsel %vm170, %v2073, %v2097
    %v2107 = vsel %vm170, %v2074, %v2094
    %2113 = vrot.lane.b32.xlu0 %v2103, 64
    %v2114 = vpop.permute.xlu0 %2113
    %2115 = vrot.lane.b32.xlu0 %v2104, 64
    %v2116 = vpop.permute.xlu0 %2115
    %2117 = vrot.lane.b32.xlu0 %v2105, 64
    %v2118 = vpop.permute.xlu0 %2117
    %2119 = vrot.lane.b32.xlu0 %v2106, 64
    %v2120 = vpop.permute.xlu0 %2119
    %2121 = vrot.lane.b32.xlu0 %v2107, 64
    %v2122 = vpop.permute.xlu0 %2121
    %v2123 = vsel %vm160, %v2114, %v2116
    %v2124 = vsel %vm160, %v2116, %v2118
    %v2125 = vsel %vm160, %v2118, %v2120
    %v2126 = vsel %vm160, %v2120, %v2122
    %2131 = vst [vmem:[#allocation2 + $0x1a0] sm:$0xff] %v2123
    %2132 = vst [vmem:[#allocation2 + $0x1a8] sm:$0xff] %v2124
    %2133 = vst [vmem:[#allocation2 + $0x1b0] sm:$0xff] %v2125
    %2134 = vst [vmem:[#allocation2 + $0x1b8] sm:$0xff] %v2126
    %v2135 = vmul.f32 %v49, %v2055
    %v2136 = vmul.f32 %v1427, %v2062
    %v2137 = vmul.f32 %v50, %v2063
    %v2138 = vmul.f32 %v1428, %v2064
    %v2139 = vmul.f32 %v2061, 0.0
    %v2140 = vld [vmem:[%s785] ss:$8 sm:$0xf]
    %v2142 = vlaneseq
    %v2143 = vshrl.u32 %v2142, 7
    %v2144 = vsub.s32 0, %v2143
    %v2145 = vrot.slane %v2140, %v2144
    %v2146 = vlaneseq
    %v2147 = vshrl.u32 %v2146, 7
    %v2148 = vsub.s32 1, %v2147
    %v2149 = vrot.slane %v2140, %v2148
    %v2150 = vlaneseq
    %v2151 = vshrl.u32 %v2150, 7
    %v2152 = vsub.s32 2, %v2151
    %v2153 = vrot.slane %v2140, %v2152
    %v2154 = vlaneseq
    %v2155 = vshrl.u32 %v2154, 7
    %v2156 = vsub.s32 3, %v2155
    %v2157 = vrot.slane %v2140, %v2156
    %2158 = vrot.lane.b32.xlu0 %v2145, 72
    %v2159 = vpop.permute.xlu0 %2158
    %2160 = vrot.lane.b32.xlu0 %v2149, 72
    %v2161 = vpop.permute.xlu0 %2160
    %2162 = vrot.lane.b32.xlu0 %v2153, 72
    %v2163 = vpop.permute.xlu0 %2162
    %2164 = vrot.lane.b32.xlu0 %v2157, 72
    %v2165 = vpop.permute.xlu0 %2164
    %v2166 = vsel %vm191, %v2159, %v2161
    %v2167 = vsel %vm191, %v2161, %v2163
    %v2168 = vsel %vm191, %v2163, %v2165
    %v2174 = vmul.f32 %v2159, 0.0
    %v2175 = vmul.f32 %v49, %v2166
    %v2176 = vmul.f32 %v1427, %v2167
    %v2177 = vmul.f32 %v50, %v2168
    %v2178 = vmul.f32 %v1428, %v2165
    %v2184 = vrot.slane %v2174, 4
    %v2185 = vrot.slane %v2175, 4
    %v2186 = vrot.slane %v2176, 4
    %v2187 = vrot.slane %v2177, 4
    %v2188 = vrot.slane %v2178, 4
    %2189 = vrot.lane.b32.xlu0 %v2184, 120
    %v2190 = vpop.permute.xlu0 %2189
    %2191 = vrot.lane.b32.xlu0 %v2185, 120
    %v2192 = vpop.permute.xlu0 %2191
    %2193 = vrot.lane.b32.xlu0 %v2186, 120
    %v2194 = vpop.permute.xlu0 %2193
    %2195 = vrot.lane.b32.xlu0 %v2187, 120
    %v2196 = vpop.permute.xlu0 %2195
    %2197 = vrot.lane.b32.xlu0 %v2188, 120
    %v2198 = vpop.permute.xlu0 %2197
    %v2199 = vsel %vm126, %v2190, %v2192
    %v2200 = vsel %vm126, %v2192, %v2194
    %v2201 = vsel %vm126, %v2194, %v2196
    %v2202 = vsel %vm126, %v2196, %v2198
    %v2208 = vsel %vm170, %v2135, %v2199
    %v2209 = vsel %vm170, %v2136, %v2200
    %v2210 = vsel %vm170, %v2137, %v2201
    %v2211 = vsel %vm170, %v2138, %v2202
    %v2212 = vsel %vm170, %v2139, %v2198
    %2218 = vrot.lane.b32.xlu0 %v2208, 64
    %v2219 = vpop.permute.xlu0 %2218
    %2220 = vrot.lane.b32.xlu0 %v2209, 64
    %v2221 = vpop.permute.xlu0 %2220
    %2222 = vrot.lane.b32.xlu0 %v2210, 64
    %v2223 = vpop.permute.xlu0 %2222
    %2224 = vrot.lane.b32.xlu0 %v2211, 64
    %v2225 = vpop.permute.xlu0 %2224
    %2226 = vrot.lane.b32.xlu0 %v2212, 64
    %v2227 = vpop.permute.xlu0 %2226
    %v2228 = vsel %vm160, %v2219, %v2221
    %v2229 = vsel %vm160, %v2221, %v2223
    %v2230 = vsel %vm160, %v2223, %v2225
    %v2231 = vsel %vm160, %v2225, %v2227
    %2236 = vst [vmem:[#allocation2 + $0x1e0] sm:$0xff] %v2228
    %2237 = vst [vmem:[#allocation2 + $0x1e8] sm:$0xff] %v2229
    %2238 = vst [vmem:[#allocation2 + $0x1f0] sm:$0xff] %v2230
    %2239 = vst [vmem:[#allocation2 + $0x1f8] sm:$0xff] %v2231
    %2240 = vrot.lane.b32.xlu0 %v2145, 8
    %v2241 = vpop.permute.xlu0 %2240
    %2242 = vrot.lane.b32.xlu0 %v2149, 8
    %v2243 = vpop.permute.xlu0 %2242
    %2244 = vrot.lane.b32.xlu0 %v2153, 8
    %v2245 = vpop.permute.xlu0 %2244
    %2246 = vrot.lane.b32.xlu0 %v2157, 8
    %v2247 = vpop.permute.xlu0 %2246
    %v2248 = vsel %vm407, %v2241, %v2243
    %v2249 = vsel %vm407, %v2243, %v2245
    %v2250 = vsel %vm407, %v2245, %v2247
    %v2256 = vmul.f32 %v49, %v2241
    %v2257 = vmul.f32 %v1427, %v2248
    %v2258 = vmul.f32 %v50, %v2249
    %v2259 = vmul.f32 %v1428, %v2250
    %v2260 = vmul.f32 %v2247, 0.0
    %v2261 = vmul.f32 %v49, %v2159
    %v2262 = vmul.f32 %v1427, %v2166
    %v2263 = vmul.f32 %v50, %v2167
    %v2264 = vmul.f32 %v1428, %v2168
    %v2265 = vmul.f32 %v2165, 0.0
    %v2271 = vrot.slane %v2261, 4
    %v2272 = vrot.slane %v2262, 4
    %v2273 = vrot.slane %v2263, 4
    %v2274 = vrot.slane %v2264, 4
    %v2275 = vrot.slane %v2265, 4
    %2276 = vrot.lane.b32.xlu0 %v2271, 64
    %v2277 = vpop.permute.xlu0 %2276
    %2278 = vrot.lane.b32.xlu0 %v2272, 64
    %v2279 = vpop.permute.xlu0 %2278
    %2280 = vrot.lane.b32.xlu0 %v2273, 64
    %v2281 = vpop.permute.xlu0 %2280
    %2282 = vrot.lane.b32.xlu0 %v2274, 64
    %v2283 = vpop.permute.xlu0 %2282
    %2284 = vrot.lane.b32.xlu0 %v2275, 64
    %v2285 = vpop.permute.xlu0 %2284
    %v2286 = vsel %vm160, %v2277, %v2279
    %v2287 = vsel %vm160, %v2279, %v2281
    %v2288 = vsel %vm160, %v2281, %v2283
    %v2289 = vsel %vm160, %v2283, %v2285
    %v2295 = vsel %vm170, %v2256, %v2286
    %v2296 = vsel %vm170, %v2257, %v2287
    %v2297 = vsel %vm170, %v2258, %v2288
    %v2298 = vsel %vm170, %v2259, %v2289
    %v2299 = vsel %vm170, %v2260, %v2285
    %2305 = vrot.lane.b32.xlu0 %v2295, 120
    %v2306 = vpop.permute.xlu0 %2305
    %2307 = vrot.lane.b32.xlu0 %v2296, 120
    %v2308 = vpop.permute.xlu0 %2307
    %2309 = vrot.lane.b32.xlu0 %v2297, 120
    %v2310 = vpop.permute.xlu0 %2309
    %2311 = vrot.lane.b32.xlu0 %v2298, 120
    %v2312 = vpop.permute.xlu0 %2311
    %2313 = vrot.lane.b32.xlu0 %v2299, 120
    %v2314 = vpop.permute.xlu0 %2313
    %v2315 = vsel %vm126, %v2306, %v2308
    %v2316 = vsel %vm126, %v2308, %v2310
    %v2317 = vsel %vm126, %v2310, %v2312
    %v2318 = vsel %vm126, %v2312, %v2314
    %2323 = vst [vmem:[#allocation2 + $0x220] sm:$0xff] %v2315
    %2324 = vst [vmem:[#allocation2 + $0x228] sm:$0xff] %v2316
    %2325 = vst [vmem:[#allocation2 + $0x230] sm:$0xff] %v2317
    %2326 = vst [vmem:[#allocation2 + $0x238] sm:$0xff] %v2318
    %2327 = vrot.lane.b32.xlu0 %v49, 127
    %v2328 = vpop.permute.xlu0 %2327
    %2329 = vrot.lane.b32.xlu0 %v1427, 127
    %v2330 = vpop.permute.xlu0 %2329
    %2331 = vrot.lane.b32.xlu0 %v50, 127
    %v2332 = vpop.permute.xlu0 %2331
    %2333 = vrot.lane.b32.xlu0 %v1428, 127
    %v2334 = vpop.permute.xlu0 %2333
    %v2335 = vsel %vm983, %v2334, %v974
    %v2336 = vsel %vm983, %v2332, %v2334
    %v2337 = vsel %vm983, %v2330, %v2332
    %v2338 = vsel %vm983, %v2328, %v2330
    %v2339 = vsel %vm983, %v974, %v2328
    %v2340 = vld [vmem:[%s989] ss:$8 sm:$0xf]
    %v2342 = vlaneseq
    %v2343 = vshrl.u32 %v2342, 7
    %v2344 = vsub.s32 0, %v2343
    %v2345 = vrot.slane %v2340, %v2344
    %v2346 = vlaneseq
    %v2347 = vshrl.u32 %v2346, 7
    %v2348 = vsub.s32 1, %v2347
    %v2349 = vrot.slane %v2340, %v2348
    %v2350 = vlaneseq
    %v2351 = vshrl.u32 %v2350, 7
    %v2352 = vsub.s32 2, %v2351
    %v2353 = vrot.slane %v2340, %v2352
    %v2354 = vlaneseq
    %v2355 = vshrl.u32 %v2354, 7
    %v2356 = vsub.s32 3, %v2355
    %v2357 = vrot.slane %v2340, %v2356
    %2358 = vrot.lane.b32.xlu0 %v2345, 56
    %v2359 = vpop.permute.xlu0 %2358
    %2360 = vrot.lane.b32.xlu0 %v2349, 56
    %v2361 = vpop.permute.xlu0 %2360
    %2362 = vrot.lane.b32.xlu0 %v2353, 56
    %v2363 = vpop.permute.xlu0 %2362
    %2364 = vrot.lane.b32.xlu0 %v2357, 56
    %v2365 = vpop.permute.xlu0 %2364
    %v2366 = vsel %vm104, %v2359, %v2361
    %v2367 = vsel %vm104, %v2361, %v2363
    %v2368 = vsel %vm104, %v2363, %v2365
    %v2374 = vmul.f32 %v2339, %v2359
    %v2375 = vmul.f32 %v2338, %v2366
    %v2376 = vmul.f32 %v2337, %v2367
    %v2377 = vmul.f32 %v2336, %v2368
    %v2378 = vmul.f32 %v2335, %v2365
    %2379 = vrot.lane.b32.xlu0 %v2345, 120
    %v2380 = vpop.permute.xlu0 %2379
    %2381 = vrot.lane.b32.xlu0 %v2349, 120
    %v2382 = vpop.permute.xlu0 %2381
    %2383 = vrot.lane.b32.xlu0 %v2353, 120
    %v2384 = vpop.permute.xlu0 %2383
    %2385 = vrot.lane.b32.xlu0 %v2357, 120
    %v2386 = vpop.permute.xlu0 %2385
    %v2387 = vsel %vm126, %v2380, %v2382
    %v2388 = vsel %vm126, %v2382, %v2384
    %v2389 = vsel %vm126, %v2384, %v2386
    %v2395 = vmul.f32 %v2339, %v2380
    %v2396 = vmul.f32 %v2338, %v2387
    %v2397 = vmul.f32 %v2337, %v2388
    %v2398 = vmul.f32 %v2336, %v2389
    %v2399 = vmul.f32 %v2335, %v2386
    %v2405 = vrot.slane %v2395, 4
    %v2406 = vrot.slane %v2396, 4
    %v2407 = vrot.slane %v2397, 4
    %v2408 = vrot.slane %v2398, 4
    %v2409 = vrot.slane %v2399, 4
    %2410 = vrot.lane.b32.xlu0 %v2405, 64
    %v2411 = vpop.permute.xlu0 %2410
    %2412 = vrot.lane.b32.xlu0 %v2406, 64
    %v2413 = vpop.permute.xlu0 %2412
    %2414 = vrot.lane.b32.xlu0 %v2407, 64
    %v2415 = vpop.permute.xlu0 %2414
    %2416 = vrot.lane.b32.xlu0 %v2408, 64
    %v2417 = vpop.permute.xlu0 %2416
    %2418 = vrot.lane.b32.xlu0 %v2409, 64
    %v2419 = vpop.permute.xlu0 %2418
    %v2420 = vsel %vm160, %v2411, %v2413
    %v2421 = vsel %vm160, %v2413, %v2415
    %v2422 = vsel %vm160, %v2415, %v2417
    %v2423 = vsel %vm160, %v2417, %v2419
    %v2429 = vsel %vm170, %v2374, %v2420
    %v2430 = vsel %vm170, %v2375, %v2421
    %v2431 = vsel %vm170, %v2376, %v2422
    %v2432 = vsel %vm170, %v2377, %v2423
    %v2433 = vsel %vm170, %v2378, %v2419
    %2439 = vrot.lane.b32.xlu0 %v2429, 72
    %v2440 = vpop.permute.xlu0 %2439
    %2441 = vrot.lane.b32.xlu0 %v2430, 72
    %v2442 = vpop.permute.xlu0 %2441
    %2443 = vrot.lane.b32.xlu0 %v2431, 72
    %v2444 = vpop.permute.xlu0 %2443
    %2445 = vrot.lane.b32.xlu0 %v2432, 72
    %v2446 = vpop.permute.xlu0 %2445
    %2447 = vrot.lane.b32.xlu0 %v2433, 72
    %v2448 = vpop.permute.xlu0 %2447
    %v2449 = vsel %vm191, %v2440, %v2442
    %v2450 = vsel %vm191, %v2442, %v2444
    %v2451 = vsel %vm191, %v2444, %v2446
    %v2452 = vsel %vm191, %v2446, %v2448
    %2457 = vst [vmem:[#allocation2 + $0x260] sm:$0xff] %v2449
    %2458 = vst [vmem:[#allocation2 + $0x268] sm:$0xff] %v2450
    %2459 = vst [vmem:[#allocation2 + $0x270] sm:$0xff] %v2451
    %2460 = vst [vmem:[#allocation2 + $0x278] sm:$0xff] %v2452
    %v2461 = vmul.f32 %v2338, %v2359
    %v2462 = vmul.f32 %v2337, %v2366
    %v2463 = vmul.f32 %v2336, %v2367
    %v2464 = vmul.f32 %v2335, %v2368
    %v2465 = vmul.f32 %v974, %v2365
    %v2466 = vld [vmem:[%s1116] ss:$8 sm:$0xf]
    %v2468 = vlaneseq
    %v2469 = vshrl.u32 %v2468, 7
    %v2470 = vsub.s32 0, %v2469
    %v2471 = vrot.slane %v2466, %v2470
    %v2472 = vlaneseq
    %v2473 = vshrl.u32 %v2472, 7
    %v2474 = vsub.s32 1, %v2473
    %v2475 = vrot.slane %v2466, %v2474
    %v2476 = vlaneseq
    %v2477 = vshrl.u32 %v2476, 7
    %v2478 = vsub.s32 2, %v2477
    %v2479 = vrot.slane %v2466, %v2478
    %v2480 = vlaneseq
    %v2481 = vshrl.u32 %v2480, 7
    %v2482 = vsub.s32 3, %v2481
    %v2483 = vrot.slane %v2466, %v2482
    %2488 = vrot.lane.b32.xlu0 %v2471, 64
    %v2489 = vpop.permute.xlu0 %2488
    %2490 = vrot.lane.b32.xlu0 %v2475, 64
    %v2491 = vpop.permute.xlu0 %2490
    %2492 = vrot.lane.b32.xlu0 %v2479, 64
    %v2493 = vpop.permute.xlu0 %2492
    %2494 = vrot.lane.b32.xlu0 %v2483, 64
    %v2495 = vpop.permute.xlu0 %2494
    %v2496 = vsel %vm160, %v2489, %v2491
    %v2497 = vsel %vm160, %v2491, %v2493
    %v2498 = vsel %vm160, %v2493, %v2495
    %v2504 = vmul.f32 %v2339, %v2489
    %v2505 = vmul.f32 %v2338, %v2496
    %v2506 = vmul.f32 %v2337, %v2497
    %v2507 = vmul.f32 %v2336, %v2498
    %v2508 = vmul.f32 %v2335, %v2495
    %v2514 = vrot.slane %v2504, 4
    %v2515 = vrot.slane %v2505, 4
    %v2516 = vrot.slane %v2506, 4
    %v2517 = vrot.slane %v2507, 4
    %v2518 = vrot.slane %v2508, 4
    %2519 = vrot.lane.b32.xlu0 %v2514, 120
    %v2520 = vpop.permute.xlu0 %2519
    %2521 = vrot.lane.b32.xlu0 %v2515, 120
    %v2522 = vpop.permute.xlu0 %2521
    %2523 = vrot.lane.b32.xlu0 %v2516, 120
    %v2524 = vpop.permute.xlu0 %2523
    %2525 = vrot.lane.b32.xlu0 %v2517, 120
    %v2526 = vpop.permute.xlu0 %2525
    %2527 = vrot.lane.b32.xlu0 %v2518, 120
    %v2528 = vpop.permute.xlu0 %2527
    %v2529 = vsel %vm126, %v2520, %v2522
    %v2530 = vsel %vm126, %v2522, %v2524
    %v2531 = vsel %vm126, %v2524, %v2526
    %v2532 = vsel %vm126, %v2526, %v2528
    %v2538 = vsel %vm170, %v2461, %v2529
    %v2539 = vsel %vm170, %v2462, %v2530
    %v2540 = vsel %vm170, %v2463, %v2531
    %v2541 = vsel %vm170, %v2464, %v2532
    %v2542 = vsel %vm170, %v2465, %v2528
    %2548 = vrot.lane.b32.xlu0 %v2538, 72
    %v2549 = vpop.permute.xlu0 %2548
    %2550 = vrot.lane.b32.xlu0 %v2539, 72
    %v2551 = vpop.permute.xlu0 %2550
    %2552 = vrot.lane.b32.xlu0 %v2540, 72
    %v2553 = vpop.permute.xlu0 %2552
    %2554 = vrot.lane.b32.xlu0 %v2541, 72
    %v2555 = vpop.permute.xlu0 %2554
    %2556 = vrot.lane.b32.xlu0 %v2542, 72
    %v2557 = vpop.permute.xlu0 %2556
    %v2558 = vsel %vm191, %v2549, %v2551
    %v2559 = vsel %vm191, %v2551, %v2553
    %v2560 = vsel %vm191, %v2553, %v2555
    %v2561 = vsel %vm191, %v2555, %v2557
    %2566 = vst [vmem:[#allocation2 + $0x2a0] sm:$0xff] %v2558
    %2567 = vst [vmem:[#allocation2 + $0x2a8] sm:$0xff] %v2559
    %2568 = vst [vmem:[#allocation2 + $0x2b0] sm:$0xff] %v2560
    %2569 = vst [vmem:[#allocation2 + $0x2b8] sm:$0xff] %v2561
    %v2570 = vmul.f32 %v2338, %v2471
    %v2571 = vmul.f32 %v2337, %v2475
    %v2572 = vmul.f32 %v2336, %v2479
    %v2573 = vmul.f32 %v2335, %v2483
    %v2574 = vmul.f32 %v2338, %v2489
    %v2575 = vmul.f32 %v2337, %v2496
    %v2576 = vmul.f32 %v2336, %v2497
    %v2577 = vmul.f32 %v2335, %v2498
    %v2578 = vmul.f32 %v974, %v2495
    %v2584 = vrot.slane %v2574, 4
    %v2585 = vrot.slane %v2575, 4
    %v2586 = vrot.slane %v2576, 4
    %v2587 = vrot.slane %v2577, 4
    %v2588 = vrot.slane %v2578, 4
    %2589 = vrot.lane.b32.xlu0 %v2584, 64
    %v2590 = vpop.permute.xlu0 %2589
    %2591 = vrot.lane.b32.xlu0 %v2585, 64
    %v2592 = vpop.permute.xlu0 %2591
    %2593 = vrot.lane.b32.xlu0 %v2586, 64
    %v2594 = vpop.permute.xlu0 %2593
    %2595 = vrot.lane.b32.xlu0 %v2587, 64
    %v2596 = vpop.permute.xlu0 %2595
    %2597 = vrot.lane.b32.xlu0 %v2588, 64
    %v2598 = vpop.permute.xlu0 %2597
    %v2599 = vsel %vm160, %v2590, %v2592
    %v2600 = vsel %vm160, %v2592, %v2594
    %v2601 = vsel %vm160, %v2594, %v2596
    %v2602 = vsel %vm160, %v2596, %v2598
    %v2607 = vsel %vm170, %v2570, %v2599
    %v2608 = vsel %vm170, %v2571, %v2600
    %v2609 = vsel %vm170, %v2572, %v2601
    %v2610 = vsel %vm170, %v2573, %v2602
    %2611 = vst [vmem:[#allocation2 + $0x2e0] sm:$0xff] %v2607
    %2612 = vst [vmem:[#allocation2 + $0x2e8] sm:$0xff] %v2608
    %2613 = vst [vmem:[#allocation2 + $0x2f0] sm:$0xff] %v2609
    %2614 = vst [vmem:[#allocation2 + $0x2f8] sm:$0xff] %v2610
    %v2615 = vld [vmem:[%s1266] ss:$8 sm:$0xf]
    %v2617 = vlaneseq
    %v2618 = vshrl.u32 %v2617, 7
    %v2619 = vsub.s32 0, %v2618
    %v2620 = vrot.slane %v2615, %v2619
    %v2621 = vlaneseq
    %v2622 = vshrl.u32 %v2621, 7
    %v2623 = vsub.s32 1, %v2622
    %v2624 = vrot.slane %v2615, %v2623
    %v2625 = vlaneseq
    %v2626 = vshrl.u32 %v2625, 7
    %v2627 = vsub.s32 2, %v2626
    %v2628 = vrot.slane %v2615, %v2627
    %v2629 = vlaneseq
    %v2630 = vshrl.u32 %v2629, 7
    %v2631 = vsub.s32 3, %v2630
    %v2632 = vrot.slane %v2615, %v2631
    %2633 = vrot.lane.b32.xlu0 %v2620, 72
    %v2634 = vpop.permute.xlu0 %2633
    %2635 = vrot.lane.b32.xlu0 %v2624, 72
    %v2636 = vpop.permute.xlu0 %2635
    %2637 = vrot.lane.b32.xlu0 %v2628, 72
    %v2638 = vpop.permute.xlu0 %2637
    %2639 = vrot.lane.b32.xlu0 %v2632, 72
    %v2640 = vpop.permute.xlu0 %2639
    %v2641 = vsel %vm191, %v2634, %v2636
    %v2642 = vsel %vm191, %v2636, %v2638
    %v2643 = vsel %vm191, %v2638, %v2640
    %v2649 = vmul.f32 %v2339, %v2634
    %v2650 = vmul.f32 %v2338, %v2641
    %v2651 = vmul.f32 %v2337, %v2642
    %v2652 = vmul.f32 %v2336, %v2643
    %v2653 = vmul.f32 %v2335, %v2640
    %2654 = vrot.lane.b32.xlu0 %v2620, 8
    %v2655 = vpop.permute.xlu0 %2654
    %2656 = vrot.lane.b32.xlu0 %v2624, 8
    %v2657 = vpop.permute.xlu0 %2656
    %2658 = vrot.lane.b32.xlu0 %v2628, 8
    %v2659 = vpop.permute.xlu0 %2658
    %2660 = vrot.lane.b32.xlu0 %v2632, 8
    %v2661 = vpop.permute.xlu0 %2660
    %v2662 = vsel %vm407, %v2655, %v2657
    %v2663 = vsel %vm407, %v2657, %v2659
    %v2664 = vsel %vm407, %v2659, %v2661
    %v2670 = vmul.f32 %v2338, %v2655
    %v2671 = vmul.f32 %v2337, %v2662
    %v2672 = vmul.f32 %v2336, %v2663
    %v2673 = vmul.f32 %v2335, %v2664
    %v2674 = vmul.f32 %v974, %v2661
    %v2680 = vrot.slane %v2670, 4
    %v2681 = vrot.slane %v2671, 4
    %v2682 = vrot.slane %v2672, 4
    %v2683 = vrot.slane %v2673, 4
    %v2684 = vrot.slane %v2674, 4
    %2685 = vrot.lane.b32.xlu0 %v2680, 64
    %v2686 = vpop.permute.xlu0 %2685
    %2687 = vrot.lane.b32.xlu0 %v2681, 64
    %v2688 = vpop.permute.xlu0 %2687
    %2689 = vrot.lane.b32.xlu0 %v2682, 64
    %v2690 = vpop.permute.xlu0 %2689
    %2691 = vrot.lane.b32.xlu0 %v2683, 64
    %v2692 = vpop.permute.xlu0 %2691
    %2693 = vrot.lane.b32.xlu0 %v2684, 64
    %v2694 = vpop.permute.xlu0 %2693
    %v2695 = vsel %vm160, %v2686, %v2688
    %v2696 = vsel %vm160, %v2688, %v2690
    %v2697 = vsel %vm160, %v2690, %v2692
    %v2698 = vsel %vm160, %v2692, %v2694
    %v2704 = vsel %vm170, %v2649, %v2686
    %v2705 = vsel %vm170, %v2650, %v2695
    %v2706 = vsel %vm170, %v2651, %v2696
    %v2707 = vsel %vm170, %v2652, %v2697
    %v2708 = vsel %vm170, %v2653, %v2698
    %2714 = vrot.lane.b32.xlu0 %v2704, 56
    %v2715 = vpop.permute.xlu0 %2714
    %2716 = vrot.lane.b32.xlu0 %v2705, 56
    %v2717 = vpop.permute.xlu0 %2716
    %2718 = vrot.lane.b32.xlu0 %v2706, 56
    %v2719 = vpop.permute.xlu0 %2718
    %2720 = vrot.lane.b32.xlu0 %v2707, 56
    %v2721 = vpop.permute.xlu0 %2720
    %2722 = vrot.lane.b32.xlu0 %v2708, 56
    %v2723 = vpop.permute.xlu0 %2722
    %v2724 = vsel %vm104, %v2715, %v2717
    %v2725 = vsel %vm104, %v2717, %v2719
    %v2726 = vsel %vm104, %v2719, %v2721
    %v2727 = vsel %vm104, %v2721, %v2723
    %2732 = vst [vmem:[#allocation2 + $0x320] sm:$0xff] %v2724
    %2733 = vst [vmem:[#allocation2 + $0x328] sm:$0xff] %v2725
    %2734 = vst [vmem:[#allocation2 + $0x330] sm:$0xff] %v2726
    %2735 = vst [vmem:[#allocation2 + $0x338] sm:$0xff] %v2727
    %v2736 = vmul.f32 %v2338, %v2634
    %v2737 = vmul.f32 %v2337, %v2641
    %v2738 = vmul.f32 %v2336, %v2642
    %v2739 = vmul.f32 %v2335, %v2643
    %v2740 = vmul.f32 %v974, %v2640
    %v2741 = vsel %vm170, %v2736, 0.0
    %v2742 = vsel %vm170, %v2737, 0.0
    %v2743 = vsel %vm170, %v2738, 0.0
    %v2744 = vsel %vm170, %v2739, 0.0
    %v2745 = vsel %vm170, %v2740, 0.0
    %2751 = vrot.lane.b32.xlu0 %v2741, 56
    %v2752 = vpop.permute.xlu0 %2751
    %2753 = vrot.lane.b32.xlu0 %v2742, 56
    %v2754 = vpop.permute.xlu0 %2753
    %2755 = vrot.lane.b32.xlu0 %v2743, 56
    %v2756 = vpop.permute.xlu0 %2755
    %2757 = vrot.lane.b32.xlu0 %v2744, 56
    %v2758 = vpop.permute.xlu0 %2757
    %2759 = vrot.lane.b32.xlu0 %v2745, 56
    %v2760 = vpop.permute.xlu0 %2759
    %v2761 = vsel %vm104, %v2752, %v2754
    %v2762 = vsel %vm104, %v2754, %v2756
    %v2763 = vsel %vm104, %v2756, %v2758
    %v2764 = vsel %vm104, %v2758, %v2760
    %2769 = vst [vmem:[#allocation2 + $0x360] sm:$0xff] %v2761
    %2770 = vst [vmem:[#allocation2 + $0x368] sm:$0xff] %v2762
    %2771 = vst [vmem:[#allocation2 + $0x370] sm:$0xff] %v2763
    %2772 = vst [vmem:[#allocation2 + $0x378] sm:$0xff] %v2764
    %v2773 = vld [vmem:[#allocation2] sm:$0xff]
    %v2774 = vld [vmem:[#allocation2 + $0x8] sm:$0xff]
    %v2775 = vld [vmem:[#allocation2 + $0x10] sm:$0xff]
    %v2776 = vld [vmem:[#allocation2 + $0x18] sm:$0xff]
    %v2777 = vld [vmem:[#allocation2 + $0x20] sm:$0xff]
    %v2778 = vld [vmem:[#allocation2 + $0x28] sm:$0xff]
    %v2779 = vld [vmem:[#allocation2 + $0x30] sm:$0xff]
    %v2780 = vld [vmem:[#allocation2 + $0x38] sm:$0xff]
    %v2781 = vld [vmem:[#allocation2 + $0x40] sm:$0xff]
    %v2782 = vld [vmem:[#allocation2 + $0x48] sm:$0xff]
    %v2783 = vld [vmem:[#allocation2 + $0x50] sm:$0xff]
    %v2784 = vld [vmem:[#allocation2 + $0x58] sm:$0xff]
    %v2785 = vld [vmem:[#allocation2 + $0x60] sm:$0xff]
    %v2786 = vld [vmem:[#allocation2 + $0x68] sm:$0xff]
    %v2787 = vld [vmem:[#allocation2 + $0x70] sm:$0xff]
    %v2788 = vld [vmem:[#allocation2 + $0x78] sm:$0xff]
    %v2789 = vld [vmem:[#allocation2 + $0x80] sm:$0xff]
    %v2790 = vld [vmem:[#allocation2 + $0x88] sm:$0xff]
    %v2791 = vld [vmem:[#allocation2 + $0x90] sm:$0xff]
    %v2792 = vld [vmem:[#allocation2 + $0x98] sm:$0xff]
    %v2793 = vld [vmem:[#allocation2 + $0xa0] sm:$0xff]
    %v2794 = vld [vmem:[#allocation2 + $0xa8] sm:$0xff]
    %v2795 = vld [vmem:[#allocation2 + $0xb0] sm:$0xff]
    %v2796 = vld [vmem:[#allocation2 + $0xb8] sm:$0xff]
    %v2797 = vld [vmem:[#allocation2 + $0xc0] sm:$0xff]
    %v2798 = vld [vmem:[#allocation2 + $0xc8] sm:$0xff]
    %v2799 = vld [vmem:[#allocation2 + $0xd0] sm:$0xff]
    %v2800 = vld [vmem:[#allocation2 + $0xd8] sm:$0xff]
    %v2801 = vld [vmem:[#allocation2 + $0xe0] sm:$0xff]
    %v2802 = vld [vmem:[#allocation2 + $0xe8] sm:$0xff]
    %v2803 = vld [vmem:[#allocation2 + $0xf0] sm:$0xff]
    %v2804 = vld [vmem:[#allocation2 + $0xf8] sm:$0xff]
    %v2805 = vld [vmem:[#allocation2 + $0x100] sm:$0xff]
    %v2806 = vld [vmem:[#allocation2 + $0x108] sm:$0xff]
    %v2807 = vld [vmem:[#allocation2 + $0x110] sm:$0xff]
    %v2808 = vld [vmem:[#allocation2 + $0x118] sm:$0xff]
    %v2809 = vld [vmem:[#allocation2 + $0x120] sm:$0xff]
    %v2810 = vld [vmem:[#allocation2 + $0x128] sm:$0xff]
    %v2811 = vld [vmem:[#allocation2 + $0x130] sm:$0xff]
    %v2812 = vld [vmem:[#allocation2 + $0x138] sm:$0xff]
    %v2813 = vld [vmem:[#allocation2 + $0x140] sm:$0xff]
    %v2814 = vld [vmem:[#allocation2 + $0x148] sm:$0xff]
    %v2815 = vld [vmem:[#allocation2 + $0x150] sm:$0xff]
    %v2816 = vld [vmem:[#allocation2 + $0x158] sm:$0xff]
    %v2817 = vld [vmem:[#allocation2 + $0x160] sm:$0xff]
    %v2818 = vld [vmem:[#allocation2 + $0x168] sm:$0xff]
    %v2819 = vld [vmem:[#allocation2 + $0x170] sm:$0xff]
    %v2820 = vld [vmem:[#allocation2 + $0x178] sm:$0xff]
    %v2821 = vld [vmem:[#allocation2 + $0x180] sm:$0xff]
    %v2822 = vld [vmem:[#allocation2 + $0x188] sm:$0xff]
    %v2823 = vld [vmem:[#allocation2 + $0x190] sm:$0xff]
    %v2824 = vld [vmem:[#allocation2 + $0x198] sm:$0xff]
    %v2825 = vld [vmem:[#allocation2 + $0x1a0] sm:$0xff]
    %v2826 = vld [vmem:[#allocation2 + $0x1a8] sm:$0xff]
    %v2827 = vld [vmem:[#allocation2 + $0x1b0] sm:$0xff]
    %v2828 = vld [vmem:[#allocation2 + $0x1b8] sm:$0xff]
    %v2829 = vld [vmem:[#allocation2 + $0x1c0] sm:$0xff]
    %v2830 = vld [vmem:[#allocation2 + $0x1c8] sm:$0xff]
    %v2831 = vld [vmem:[#allocation2 + $0x1d0] sm:$0xff]
    %v2832 = vld [vmem:[#allocation2 + $0x1d8] sm:$0xff]
    %v2833 = vld [vmem:[#allocation2 + $0x1e0] sm:$0xff]
    %v2834 = vld [vmem:[#allocation2 + $0x1e8] sm:$0xff]
    %v2835 = vld [vmem:[#allocation2 + $0x1f0] sm:$0xff]
    %v2836 = vld [vmem:[#allocation2 + $0x1f8] sm:$0xff]
    %v2837 = vld [vmem:[#allocation2 + $0x200] sm:$0xff]
    %v2838 = vld [vmem:[#allocation2 + $0x208] sm:$0xff]
    %v2839 = vld [vmem:[#allocation2 + $0x210] sm:$0xff]
    %v2840 = vld [vmem:[#allocation2 + $0x218] sm:$0xff]
    %v2841 = vld [vmem:[#allocation2 + $0x220] sm:$0xff]
    %v2842 = vld [vmem:[#allocation2 + $0x228] sm:$0xff]
    %v2843 = vld [vmem:[#allocation2 + $0x230] sm:$0xff]
    %v2844 = vld [vmem:[#allocation2 + $0x238] sm:$0xff]
    %v2845 = vld [vmem:[#allocation2 + $0x240] sm:$0xff]
    %v2846 = vld [vmem:[#allocation2 + $0x248] sm:$0xff]
    %v2847 = vld [vmem:[#allocation2 + $0x250] sm:$0xff]
    %v2848 = vld [vmem:[#allocation2 + $0x258] sm:$0xff]
    %v2849 = vld [vmem:[#allocation2 + $0x260] sm:$0xff]
    %v2850 = vld [vmem:[#allocation2 + $0x268] sm:$0xff]
    %v2851 = vld [vmem:[#allocation2 + $0x270] sm:$0xff]
    %v2852 = vld [vmem:[#allocation2 + $0x278] sm:$0xff]
    %v2853 = vld [vmem:[#allocation2 + $0x280] sm:$0xff]
    %v2854 = vld [vmem:[#allocation2 + $0x288] sm:$0xff]
    %v2855 = vld [vmem:[#allocation2 + $0x290] sm:$0xff]
    %v2856 = vld [vmem:[#allocation2 + $0x298] sm:$0xff]
    %v2857 = vld [vmem:[#allocation2 + $0x2a0] sm:$0xff]
    %v2858 = vld [vmem:[#allocation2 + $0x2a8] sm:$0xff]
    %v2859 = vld [vmem:[#allocation2 + $0x2b0] sm:$0xff]
    %v2860 = vld [vmem:[#allocation2 + $0x2b8] sm:$0xff]
    %v2861 = vld [vmem:[#allocation2 + $0x2c0] sm:$0xff]
    %v2862 = vld [vmem:[#allocation2 + $0x2c8] sm:$0xff]
    %v2863 = vld [vmem:[#allocation2 + $0x2d0] sm:$0xff]
    %v2864 = vld [vmem:[#allocation2 + $0x2d8] sm:$0xff]
    %v2865 = vld [vmem:[#allocation2 + $0x2e0] sm:$0xff]
    %v2866 = vld [vmem:[#allocation2 + $0x2e8] sm:$0xff]
    %v2867 = vld [vmem:[#allocation2 + $0x2f0] sm:$0xff]
    %v2868 = vld [vmem:[#allocation2 + $0x2f8] sm:$0xff]
    %v2869 = vld [vmem:[#allocation2 + $0x300] sm:$0xff]
    %v2870 = vld [vmem:[#allocation2 + $0x308] sm:$0xff]
    %v2871 = vld [vmem:[#allocation2 + $0x310] sm:$0xff]
    %v2872 = vld [vmem:[#allocation2 + $0x318] sm:$0xff]
    %v2873 = vld [vmem:[#allocation2 + $0x320] sm:$0xff]
    %v2874 = vld [vmem:[#allocation2 + $0x328] sm:$0xff]
    %v2875 = vld [vmem:[#allocation2 + $0x330] sm:$0xff]
    %v2876 = vld [vmem:[#allocation2 + $0x338] sm:$0xff]
    %v2877 = vld [vmem:[#allocation2 + $0x340] sm:$0xff]
    %v2878 = vld [vmem:[#allocation2 + $0x348] sm:$0xff]
    %v2879 = vld [vmem:[#allocation2 + $0x350] sm:$0xff]
    %v2880 = vld [vmem:[#allocation2 + $0x358] sm:$0xff]
    %v2881 = vld [vmem:[#allocation2 + $0x360] sm:$0xff]
    %v2882 = vld [vmem:[#allocation2 + $0x368] sm:$0xff]
    %v2883 = vld [vmem:[#allocation2 + $0x370] sm:$0xff]
    %v2884 = vld [vmem:[#allocation2 + $0x378] sm:$0xff]
    %vm2885 = vcmask 916480
    %v2887 = vsel %vm2885, %v51, 0
    %2889 = vmatprep.subr.mxu0 0.0
    %2890 = vmatpush1.msra.mxu0 0.0
    %2891 = vmatprep.subr.mxu0 0.0
    %2892 = vmatpush1.msra.mxu0 0.0
    %2893 = vmatprep.subr.mxu0 %v2878
    %2894 = vmatpush1.msra.mxu0 %v2877
    %2895 = vmatprep.subr.mxu0 %v2870
    %2896 = vmatpush1.msra.mxu0 %v2869
    %2897 = vmatprep.subr.mxu0 %v2862
    %2898 = vmatpush1.msra.mxu0 %v2861
    %2899 = vmatprep.subr.mxu0 %v2854
    %2900 = vmatpush1.msra.mxu0 %v2853
    %2901 = vmatprep.subr.mxu0 %v2846
    %2902 = vmatpush1.msra.mxu0 %v2845
    %2903 = vmatprep.subr.mxu0 %v2838
    %2904 = vmatpush1.msra.mxu0 %v2837
    %2905 = vmatprep.subr.mxu0 %v2830
    %2906 = vmatpush1.msra.mxu0 %v2829
    %2907 = vmatprep.subr.mxu0 %v2822
    %2908 = vmatpush1.msra.mxu0 %v2821
    %2909 = vmatprep.subr.mxu0 %v2814
    %2910 = vmatpush1.msra.mxu0 %v2813
    %2911 = vmatprep.subr.mxu0 %v2806
    %2912 = vmatpush1.msra.mxu0 %v2805
    %2913 = vmatprep.subr.mxu0 %v2798
    %2914 = vmatpush1.msra.mxu0 %v2797
    %2915 = vmatprep.subr.mxu0 %v2790
    %2916 = vmatpush1.msra.mxu0 %v2789
    %2917 = vmatprep.subr.mxu0 %v2782
    %2918 = vmatpush1.msra.mxu0 %v2781
    %2919 = vmatprep.subr.mxu0 %v2774
    %2920 = vmatpush1.msra.mxu0 %v2773
    %2921 = vmatprep.subr.mxu0 0.0
    %2922 = vmatpush2.msra.mxu0 0.0
    %2923 = vmatprep.subr.mxu0 0.0
    %2924 = vmatpush2.msra.mxu0 0.0
    %2925 = vmatprep.subr.mxu0 0.0
    %2926 = vmatpush2.msra.mxu0 0.0
    %2927 = vmatprep.subr.mxu0 0.0
    %2928 = vmatpush2.msra.mxu0 0.0
    %2929 = vmatprep.subr.mxu0 0.0
    %2930 = vmatpush2.msra.mxu0 0.0
    %2931 = vmatprep.subr.mxu0 0.0
    %2932 = vmatpush2.msra.mxu0 0.0
    %2933 = vmatprep.subr.mxu0 0.0
    %2934 = vmatpush2.msra.mxu0 0.0
    %2935 = vmatprep.subr.mxu0 0.0
    %2936 = vmatpush2.msra.mxu0 0.0
    %2937 = vmatprep.subr.mxu0 0.0
    %2938 = vmatpush2.msra.mxu0 0.0
    %2939 = vmatprep.subr.mxu0 0.0
    %2940 = vmatpush2.msra.mxu0 0.0
    %2941 = vmatprep.subr.mxu0 0.0
    %2942 = vmatpush2.msra.mxu0 0.0
    %2943 = vmatprep.subr.mxu0 0.0
    %2944 = vmatpush2.msra.mxu0 0.0
    %2945 = vmatprep.subr.mxu0 0.0
    %2946 = vmatpush2.msra.mxu0 0.0
    %2947 = vmatprep.subr.mxu0 0.0
    %2948 = vmatpush2.msra.mxu0 0.0
    %2949 = vmatprep.subr.mxu0 0.0
    %2950 = vmatpush2.msra.mxu0 0.0
    %2951 = vmatprep.subr.mxu0 0.0
    %2952 = vmatpush2.msra.mxu0 0.0
    %2953 = vmatprep.mubr.f32.mxu0 0.0
    %2954 = vmatmul.mubr.f32.gmra.mxu0 %v2887
    %v2955 = vpop.f32.mrf.mxu0
    %v2956 = vadd.f32 0.0, %v2955
    %v2957 = vpop.f32.mrf.mxu0
    %v2958 = vadd.f32 0.0, %v2957
    %2959 = vdwg.mxu0
    %2960 = vmatprep.subr.mxu0 0.0
    %2961 = vmatpush1.msra.mxu0 0.0
    %2962 = vmatprep.subr.mxu0 0.0
    %2963 = vmatpush1.msra.mxu0 0.0
    %2964 = vmatprep.subr.mxu0 %v2880
    %2965 = vmatpush1.msra.mxu0 %v2879
    %2966 = vmatprep.subr.mxu0 %v2872
    %2967 = vmatpush1.msra.mxu0 %v2871
    %2968 = vmatprep.subr.mxu0 %v2864
    %2969 = vmatpush1.msra.mxu0 %v2863
    %2970 = vmatprep.subr.mxu0 %v2856
    %2971 = vmatpush1.msra.mxu0 %v2855
    %2972 = vmatprep.subr.mxu0 %v2848
    %2973 = vmatpush1.msra.mxu0 %v2847
    %2974 = vmatprep.subr.mxu0 %v2840
    %2975 = vmatpush1.msra.mxu0 %v2839
    %2976 = vmatprep.subr.mxu0 %v2832
    %2977 = vmatpush1.msra.mxu0 %v2831
    %2978 = vmatprep.subr.mxu0 %v2824
    %2979 = vmatpush1.msra.mxu0 %v2823
    %2980 = vmatprep.subr.mxu0 %v2816
    %2981 = vmatpush1.msra.mxu0 %v2815
    %2982 = vmatprep.subr.mxu0 %v2808
    %2983 = vmatpush1.msra.mxu0 %v2807
    %2984 = vmatprep.subr.mxu0 %v2800
    %2985 = vmatpush1.msra.mxu0 %v2799
    %2986 = vmatprep.subr.mxu0 %v2792
    %2987 = vmatpush1.msra.mxu0 %v2791
    %2988 = vmatprep.subr.mxu0 %v2784
    %2989 = vmatpush1.msra.mxu0 %v2783
    %2990 = vmatprep.subr.mxu0 %v2776
    %2991 = vmatpush1.msra.mxu0 %v2775
    %2992 = vmatprep.subr.mxu0 0.0
    %2993 = vmatpush2.msra.mxu0 0.0
    %2994 = vmatprep.subr.mxu0 0.0
    %2995 = vmatpush2.msra.mxu0 0.0
    %2996 = vmatprep.subr.mxu0 0.0
    %2997 = vmatpush2.msra.mxu0 0.0
    %2998 = vmatprep.subr.mxu0 0.0
    %2999 = vmatpush2.msra.mxu0 0.0
    %3000 = vmatprep.subr.mxu0 0.0
    %3001 = vmatpush2.msra.mxu0 0.0
    %3002 = vmatprep.subr.mxu0 0.0
    %3003 = vmatpush2.msra.mxu0 0.0
    %3004 = vmatprep.subr.mxu0 0.0
    %3005 = vmatpush2.msra.mxu0 0.0
    %3006 = vmatprep.subr.mxu0 0.0
    %3007 = vmatpush2.msra.mxu0 0.0
    %3008 = vmatprep.subr.mxu0 0.0
    %3009 = vmatpush2.msra.mxu0 0.0
    %3010 = vmatprep.subr.mxu0 0.0
    %3011 = vmatpush2.msra.mxu0 0.0
    %3012 = vmatprep.subr.mxu0 0.0
    %3013 = vmatpush2.msra.mxu0 0.0
    %3014 = vmatprep.subr.mxu0 0.0
    %3015 = vmatpush2.msra.mxu0 0.0
    %3016 = vmatprep.subr.mxu0 0.0
    %3017 = vmatpush2.msra.mxu0 0.0
    %3018 = vmatprep.subr.mxu0 0.0
    %3019 = vmatpush2.msra.mxu0 0.0
    %3020 = vmatprep.subr.mxu0 0.0
    %3021 = vmatpush2.msra.mxu0 0.0
    %3022 = vmatprep.subr.mxu0 0.0
    %3023 = vmatpush2.msra.mxu0 0.0
    %3024 = vmatprep.mubr.f32.mxu0 0.0
    %3025 = vmatmul.mubr.f32.gmra.mxu0 %v2887
    %v3026 = vpop.f32.mrf.mxu0
    %v3027 = vadd.f32 0.0, %v3026
    %v3028 = vpop.f32.mrf.mxu0
    %v3029 = vadd.f32 0.0, %v3028
    %3030 = vdwg.mxu0
    %3031 = vmatprep.subr.mxu0 0.0
    %3032 = vmatpush1.msra.mxu0 0.0
    %3033 = vmatprep.subr.mxu0 0.0
    %3034 = vmatpush1.msra.mxu0 0.0
    %3035 = vmatprep.subr.mxu0 %v2882
    %3036 = vmatpush1.msra.mxu0 %v2881
    %3037 = vmatprep.subr.mxu0 %v2874
    %3038 = vmatpush1.msra.mxu0 %v2873
    %3039 = vmatprep.subr.mxu0 %v2866
    %3040 = vmatpush1.msra.mxu0 %v2865
    %3041 = vmatprep.subr.mxu0 %v2858
    %3042 = vmatpush1.msra.mxu0 %v2857
    %3043 = vmatprep.subr.mxu0 %v2850
    %3044 = vmatpush1.msra.mxu0 %v2849
    %3045 = vmatprep.subr.mxu0 %v2842
    %3046 = vmatpush1.msra.mxu0 %v2841
    %3047 = vmatprep.subr.mxu0 %v2834
    %3048 = vmatpush1.msra.mxu0 %v2833
    %3049 = vmatprep.subr.mxu0 %v2826
    %3050 = vmatpush1.msra.mxu0 %v2825
    %3051 = vmatprep.subr.mxu0 %v2818
    %3052 = vmatpush1.msra.mxu0 %v2817
    %3053 = vmatprep.subr.mxu0 %v2810
    %3054 = vmatpush1.msra.mxu0 %v2809
    %3055 = vmatprep.subr.mxu0 %v2802
    %3056 = vmatpush1.msra.mxu0 %v2801
    %3057 = vmatprep.subr.mxu0 %v2794
    %3058 = vmatpush1.msra.mxu0 %v2793
    %3059 = vmatprep.subr.mxu0 %v2786
    %3060 = vmatpush1.msra.mxu0 %v2785
    %3061 = vmatprep.subr.mxu0 %v2778
    %3062 = vmatpush1.msra.mxu0 %v2777
    %3063 = vmatprep.subr.mxu0 0.0
    %3064 = vmatpush2.msra.mxu0 0.0
    %3065 = vmatprep.subr.mxu0 0.0
    %3066 = vmatpush2.msra.mxu0 0.0
    %3067 = vmatprep.subr.mxu0 0.0
    %3068 = vmatpush2.msra.mxu0 0.0
    %3069 = vmatprep.subr.mxu0 0.0
    %3070 = vmatpush2.msra.mxu0 0.0
    %3071 = vmatprep.subr.mxu0 0.0
    %3072 = vmatpush2.msra.mxu0 0.0
    %3073 = vmatprep.subr.mxu0 0.0
    %3074 = vmatpush2.msra.mxu0 0.0
    %3075 = vmatprep.subr.mxu0 0.0
    %3076 = vmatpush2.msra.mxu0 0.0
    %3077 = vmatprep.subr.mxu0 0.0
    %3078 = vmatpush2.msra.mxu0 0.0
    %3079 = vmatprep.subr.mxu0 0.0
    %3080 = vmatpush2.msra.mxu0 0.0
    %3081 = vmatprep.subr.mxu0 0.0
    %3082 = vmatpush2.msra.mxu0 0.0
    %3083 = vmatprep.subr.mxu0 0.0
    %3084 = vmatpush2.msra.mxu0 0.0
    %3085 = vmatprep.subr.mxu0 0.0
    %3086 = vmatpush2.msra.mxu0 0.0
    %3087 = vmatprep.subr.mxu0 0.0
    %3088 = vmatpush2.msra.mxu0 0.0
    %3089 = vmatprep.subr.mxu0 0.0
    %3090 = vmatpush2.msra.mxu0 0.0
    %3091 = vmatprep.subr.mxu0 0.0
    %3092 = vmatpush2.msra.mxu0 0.0
    %3093 = vmatprep.subr.mxu0 0.0
    %3094 = vmatpush2.msra.mxu0 0.0
    %3095 = vmatprep.mubr.f32.mxu0 0.0
    %3096 = vmatmul.mubr.f32.gmra.mxu0 %v2887
    %v3097 = vpop.f32.mrf.mxu0
    %v3098 = vadd.f32 0.0, %v3097
    %v3099 = vpop.f32.mrf.mxu0
    %v3100 = vadd.f32 0.0, %v3099
    %3101 = vdwg.mxu0
    %3102 = vmatprep.subr.mxu0 0.0
    %3103 = vmatpush1.msra.mxu0 0.0
    %3104 = vmatprep.subr.mxu0 0.0
    %3105 = vmatpush1.msra.mxu0 0.0
    %3106 = vmatprep.subr.mxu0 %v2884
    %3107 = vmatpush1.msra.mxu0 %v2883
    %3108 = vmatprep.subr.mxu0 %v2876
    %3109 = vmatpush1.msra.mxu0 %v2875
    %3110 = vmatprep.subr.mxu0 %v2868
    %3111 = vmatpush1.msra.mxu0 %v2867
    %3112 = vmatprep.subr.mxu0 %v2860
    %3113 = vmatpush1.msra.mxu0 %v2859
    %3114 = vmatprep.subr.mxu0 %v2852
    %3115 = vmatpush1.msra.mxu0 %v2851
    %3116 = vmatprep.subr.mxu0 %v2844
    %3117 = vmatpush1.msra.mxu0 %v2843
    %3118 = vmatprep.subr.mxu0 %v2836
    %3119 = vmatpush1.msra.mxu0 %v2835
    %3120 = vmatprep.subr.mxu0 %v2828
    %3121 = vmatpush1.msra.mxu0 %v2827
    %3122 = vmatprep.subr.mxu0 %v2820
    %3123 = vmatpush1.msra.mxu0 %v2819
    %3124 = vmatprep.subr.mxu0 %v2812
    %3125 = vmatpush1.msra.mxu0 %v2811
    %3126 = vmatprep.subr.mxu0 %v2804
    %3127 = vmatpush1.msra.mxu0 %v2803
    %3128 = vmatprep.subr.mxu0 %v2796
    %3129 = vmatpush1.msra.mxu0 %v2795
    %3130 = vmatprep.subr.mxu0 %v2788
    %3131 = vmatpush1.msra.mxu0 %v2787
    %3132 = vmatprep.subr.mxu0 %v2780
    %3133 = vmatpush1.msra.mxu0 %v2779
    %3134 = vmatprep.subr.mxu0 0.0
    %3135 = vmatpush2.msra.mxu0 0.0
    %3136 = vmatprep.subr.mxu0 0.0
    %3137 = vmatpush2.msra.mxu0 0.0
    %3138 = vmatprep.subr.mxu0 0.0
    %3139 = vmatpush2.msra.mxu0 0.0
    %3140 = vmatprep.subr.mxu0 0.0
    %3141 = vmatpush2.msra.mxu0 0.0
    %3142 = vmatprep.subr.mxu0 0.0
    %3143 = vmatpush2.msra.mxu0 0.0
    %3144 = vmatprep.subr.mxu0 0.0
    %3145 = vmatpush2.msra.mxu0 0.0
    %3146 = vmatprep.subr.mxu0 0.0
    %3147 = vmatpush2.msra.mxu0 0.0
    %3148 = vmatprep.subr.mxu0 0.0
    %3149 = vmatpush2.msra.mxu0 0.0
    %3150 = vmatprep.subr.mxu0 0.0
    %3151 = vmatpush2.msra.mxu0 0.0
    %3152 = vmatprep.subr.mxu0 0.0
    %3153 = vmatpush2.msra.mxu0 0.0
    %3154 = vmatprep.subr.mxu0 0.0
    %3155 = vmatpush2.msra.mxu0 0.0
    %3156 = vmatprep.subr.mxu0 0.0
    %3157 = vmatpush2.msra.mxu0 0.0
    %3158 = vmatprep.subr.mxu0 0.0
    %3159 = vmatpush2.msra.mxu0 0.0
    %3160 = vmatprep.subr.mxu0 0.0
    %3161 = vmatpush2.msra.mxu0 0.0
    %3162 = vmatprep.subr.mxu0 0.0
    %3163 = vmatpush2.msra.mxu0 0.0
    %3164 = vmatprep.subr.mxu0 0.0
    %3165 = vmatpush2.msra.mxu0 0.0
    %3166 = vmatprep.mubr.f32.mxu0 0.0
    %3167 = vmatmul.mubr.f32.gmra.mxu0 %v2887
    %v3168 = vpop.f32.mrf.mxu0
    %v3169 = vadd.f32 0.0, %v3168
    %v3170 = vpop.f32.mrf.mxu0
    %v3171 = vadd.f32 0.0, %v3170
    %3172 = vdwg.mxu0
    %v3173 = vsel %vm170, %v2956, 0.0
    %v3174 = vsel %vm170, %v2958, 0.0
    %v3175 = vadd.f32 %v3173, %v3174
    %v3176 = vsel %vm170, %v3027, 0.0
    %v3177 = vadd.f32 %v3175, %v3176
    %v3178 = vsel %vm170, %v3029, 0.0
    %v3179 = vadd.f32 %v3177, %v3178
    %v3180 = vsel %vm170, %v3098, 0.0
    %v3181 = vadd.f32 %v3179, %v3180
    %v3182 = vsel %vm170, %v3100, 0.0
    %v3183 = vadd.f32 %v3181, %v3182
    %v3184 = vsel %vm170, %v3169, 0.0
    %v3185 = vadd.f32 %v3183, %v3184
    %v3186 = vsel %vm170, %v3171, 0.0
    %v3187 = vadd.f32 %v3185, %v3186
    %3188 = vadd.xlane.f32.xlu0 %v3187
    %v3189 = vpop.xlane.xlu0 %3188
    %v3190 = vmul.f32 %v2956, %v2956
    %v3191 = vmul.f32 %v2958, %v2958
    %v3192 = vmul.f32 %v3027, %v3027
    %v3193 = vmul.f32 %v3029, %v3029
    %v3194 = vmul.f32 %v3098, %v3098
    %v3195 = vmul.f32 %v3100, %v3100
    %v3196 = vmul.f32 %v3169, %v3169
    %v3197 = vmul.f32 %v3171, %v3171
    %v3198 = vsel %vm170, %v3190, 0.0
    %v3199 = vsel %vm170, %v3191, 0.0
    %v3200 = vadd.f32 %v3198, %v3199
    %v3201 = vsel %vm170, %v3192, 0.0
    %v3202 = vadd.f32 %v3200, %v3201
    %v3203 = vsel %vm170, %v3193, 0.0
    %v3204 = vadd.f32 %v3202, %v3203
    %v3205 = vsel %vm170, %v3194, 0.0
    %v3206 = vadd.f32 %v3204, %v3205
    %v3207 = vsel %vm170, %v3195, 0.0
    %v3208 = vadd.f32 %v3206, %v3207
    %v3209 = vsel %vm170, %v3196, 0.0
    %v3210 = vadd.f32 %v3208, %v3209
    %v3211 = vsel %vm170, %v3197, 0.0
    %v3212 = vadd.f32 %v3210, %v3211
    %3213 = vadd.xlane.f32.xlu0 %v3212
    %v3214 = vpop.xlane.xlu0 %3213
    %v3215 = vmul.f32 %v3189, 0.0009765625
    %v3216 = vmul.f32 %v3214, 0.0009765625
    %v3217 = vmul.f32 %v3215, %v3215
    %v3218 = vsub.f32 %v3216, %v3217
    %v3219 = vadd.f32 %v3218, 1e-05
    %v3220 = vrsqrt.pop %v3219
    %v3221 = vmul.f32 %v52, %v3220
    %v3222 = vmul.f32 %v3215, %v3221
    %v3223 = vsub.f32 %v53, %v3222
    %3225 = vset.pattern.permute.xlu0 0
    %3226 = vperm.xlu0 %3225, %v3221
    %v3227 = vpop.permute.xlu0 %3226
    %v3229 = vmul.f32 %v2956, %v3227
    %v3230 = vmul.f32 %v2958, %v3227
    %v3231 = vmul.f32 %v3027, %v3227
    %v3232 = vmul.f32 %v3029, %v3227
    %v3233 = vmul.f32 %v3098, %v3227
    %v3234 = vmul.f32 %v3100, %v3227
    %v3235 = vmul.f32 %v3169, %v3227
    %v3236 = vmul.f32 %v3171, %v3227
    %3238 = vset.pattern.permute.xlu0 0
    %3239 = vperm.xlu0 %3238, %v3223
    %v3240 = vpop.permute.xlu0 %3239
    %v3242 = vadd.f32 %v3229, %v3240
    %v3243 = vadd.f32 %v3230, %v3240
    %v3244 = vadd.f32 %v3231, %v3240
    %v3245 = vadd.f32 %v3232, %v3240
    %v3246 = vadd.f32 %v3233, %v3240
    %v3247 = vadd.f32 %v3234, %v3240
    %v3248 = vadd.f32 %v3235, %v3240
    %v3249 = vadd.f32 %v3236, %v3240
    %v3250 = vmax.f32 %v3242, 0.0
    %v3251 = vmax.f32 %v3243, 0.0
    %v3252 = vmax.f32 %v3244, 0.0
    %v3253 = vmax.f32 %v3245, 0.0
    %v3254 = vmax.f32 %v3246, 0.0
    %v3255 = vmax.f32 %v3247, 0.0
    %v3256 = vmax.f32 %v3248, 0.0
    %v3257 = vmax.f32 %v3249, 0.0
    %3258 = vrot.lane.b32.xlu0 %v3250, 1
    %v3259 = vpop.permute.xlu0 %3258
    %3260 = vrot.lane.b32.xlu0 %v3251, 1
    %v3261 = vpop.permute.xlu0 %3260
    %3262 = vrot.lane.b32.xlu0 %v3252, 1
    %v3263 = vpop.permute.xlu0 %3262
    %3264 = vrot.lane.b32.xlu0 %v3253, 1
    %v3265 = vpop.permute.xlu0 %3264
    %v3266 = vsel %vm72, %v3265, %v61
    %v3267 = vsel %vm72, %v3263, %v3265
    %v3268 = vsel %vm72, %v3261, %v3263
    %v3269 = vsel %vm72, %v3259, %v3261
    %v3270 = vsel %vm72, %v61, %v3259
    %v3271 = vld [vmem:[#allocation6] ss:$8 sm:$0xf]
    %v3273 = vlaneseq
    %v3274 = vshrl.u32 %v3273, 7
    %v3275 = vsub.s32 0, %v3274
    %v3276 = vrot.slane %v3271, %v3275
    %v3277 = vlaneseq
    %v3278 = vshrl.u32 %v3277, 7
    %v3279 = vsub.s32 1, %v3278
    %v3280 = vrot.slane %v3271, %v3279
    %v3281 = vlaneseq
    %v3282 = vshrl.u32 %v3281, 7
    %v3283 = vsub.s32 2, %v3282
    %v3284 = vrot.slane %v3271, %v3283
    %v3285 = vlaneseq
    %v3286 = vshrl.u32 %v3285, 7
    %v3287 = vsub.s32 3, %v3286
    %v3288 = vrot.slane %v3271, %v3287
    %3289 = vrot.lane.b32.xlu0 %v3276, 56
    %v3290 = vpop.permute.xlu0 %3289
    %3291 = vrot.lane.b32.xlu0 %v3280, 56
    %v3292 = vpop.permute.xlu0 %3291
    %3293 = vrot.lane.b32.xlu0 %v3284, 56
    %v3294 = vpop.permute.xlu0 %3293
    %3295 = vrot.lane.b32.xlu0 %v3288, 56
    %v3296 = vpop.permute.xlu0 %3295
    %v3297 = vsel %vm104, %v3290, %v3292
    %v3298 = vsel %vm104, %v3292, %v3294
    %v3299 = vsel %vm104, %v3294, %v3296
    %v3305 = vmul.f32 %v61, %v3290
    %v3306 = vmul.f32 %v3270, %v3297
    %v3307 = vmul.f32 %v3269, %v3298
    %v3308 = vmul.f32 %v3268, %v3299
    %v3309 = vmul.f32 %v3267, %v3296
    %3310 = vrot.lane.b32.xlu0 %v3276, 120
    %v3311 = vpop.permute.xlu0 %3310
    %3312 = vrot.lane.b32.xlu0 %v3280, 120
    %v3313 = vpop.permute.xlu0 %3312
    %3314 = vrot.lane.b32.xlu0 %v3284, 120
    %v3315 = vpop.permute.xlu0 %3314
    %3316 = vrot.lane.b32.xlu0 %v3288, 120
    %v3317 = vpop.permute.xlu0 %3316
    %v3318 = vsel %vm126, %v3311, %v3313
    %v3319 = vsel %vm126, %v3313, %v3315
    %v3320 = vsel %vm126, %v3315, %v3317
    %v3326 = vmul.f32 %v61, %v3311
    %v3327 = vmul.f32 %v3270, %v3318
    %v3328 = vmul.f32 %v3269, %v3319
    %v3329 = vmul.f32 %v3268, %v3320
    %v3330 = vmul.f32 %v3267, %v3317
    %v3336 = vrot.slane %v3326, 4
    %v3337 = vrot.slane %v3327, 4
    %v3338 = vrot.slane %v3328, 4
    %v3339 = vrot.slane %v3329, 4
    %v3340 = vrot.slane %v3330, 4
    %3341 = vrot.lane.b32.xlu0 %v3336, 64
    %v3342 = vpop.permute.xlu0 %3341
    %3343 = vrot.lane.b32.xlu0 %v3337, 64
    %v3344 = vpop.permute.xlu0 %3343
    %3345 = vrot.lane.b32.xlu0 %v3338, 64
    %v3346 = vpop.permute.xlu0 %3345
    %3347 = vrot.lane.b32.xlu0 %v3339, 64
    %v3348 = vpop.permute.xlu0 %3347
    %3349 = vrot.lane.b32.xlu0 %v3340, 64
    %v3350 = vpop.permute.xlu0 %3349
    %v3351 = vsel %vm160, %v3342, %v3344
    %v3352 = vsel %vm160, %v3344, %v3346
    %v3353 = vsel %vm160, %v3346, %v3348
    %v3354 = vsel %vm160, %v3348, %v3350
    %v3360 = vsel %vm170, %v3305, %v3351
    %v3361 = vsel %vm170, %v3306, %v3352
    %v3362 = vsel %vm170, %v3307, %v3353
    %v3363 = vsel %vm170, %v3308, %v3354
    %v3364 = vsel %vm170, %v3309, %v3350
    %3370 = vrot.lane.b32.xlu0 %v3360, 72
    %v3371 = vpop.permute.xlu0 %3370
    %3372 = vrot.lane.b32.xlu0 %v3361, 72
    %v3373 = vpop.permute.xlu0 %3372
    %3374 = vrot.lane.b32.xlu0 %v3362, 72
    %v3375 = vpop.permute.xlu0 %3374
    %3376 = vrot.lane.b32.xlu0 %v3363, 72
    %v3377 = vpop.permute.xlu0 %3376
    %3378 = vrot.lane.b32.xlu0 %v3364, 72
    %v3379 = vpop.permute.xlu0 %3378
    %v3380 = vsel %vm191, %v3371, %v3373
    %v3381 = vsel %vm191, %v3373, %v3375
    %v3382 = vsel %vm191, %v3375, %v3377
    %v3383 = vsel %vm191, %v3377, %v3379
    %3388 = vst [vmem:[#allocation2] sm:$0xff] %v3380
    %3389 = vst [vmem:[#allocation2 + $0x8] sm:$0xff] %v3381
    %3390 = vst [vmem:[#allocation2 + $0x10] sm:$0xff] %v3382
    %3391 = vst [vmem:[#allocation2 + $0x18] sm:$0xff] %v3383
    %v3392 = vmul.f32 %v3270, %v3290
    %v3393 = vmul.f32 %v3269, %v3297
    %v3394 = vmul.f32 %v3268, %v3298
    %v3395 = vmul.f32 %v3267, %v3299
    %v3396 = vmul.f32 %v3266, %v3296
    %v3397 = vld [vmem:[%s209] ss:$8 sm:$0xf]
    %v3399 = vlaneseq
    %v3400 = vshrl.u32 %v3399, 7
    %v3401 = vsub.s32 0, %v3400
    %v3402 = vrot.slane %v3397, %v3401
    %v3403 = vlaneseq
    %v3404 = vshrl.u32 %v3403, 7
    %v3405 = vsub.s32 1, %v3404
    %v3406 = vrot.slane %v3397, %v3405
    %v3407 = vlaneseq
    %v3408 = vshrl.u32 %v3407, 7
    %v3409 = vsub.s32 2, %v3408
    %v3410 = vrot.slane %v3397, %v3409
    %v3411 = vlaneseq
    %v3412 = vshrl.u32 %v3411, 7
    %v3413 = vsub.s32 3, %v3412
    %v3414 = vrot.slane %v3397, %v3413
    %3419 = vrot.lane.b32.xlu0 %v3402, 64
    %v3420 = vpop.permute.xlu0 %3419
    %3421 = vrot.lane.b32.xlu0 %v3406, 64
    %v3422 = vpop.permute.xlu0 %3421
    %3423 = vrot.lane.b32.xlu0 %v3410, 64
    %v3424 = vpop.permute.xlu0 %3423
    %3425 = vrot.lane.b32.xlu0 %v3414, 64
    %v3426 = vpop.permute.xlu0 %3425
    %v3427 = vsel %vm160, %v3420, %v3422
    %v3428 = vsel %vm160, %v3422, %v3424
    %v3429 = vsel %vm160, %v3424, %v3426
    %v3435 = vmul.f32 %v61, %v3420
    %v3436 = vmul.f32 %v3270, %v3427
    %v3437 = vmul.f32 %v3269, %v3428
    %v3438 = vmul.f32 %v3268, %v3429
    %v3439 = vmul.f32 %v3267, %v3426
    %v3445 = vrot.slane %v3435, 4
    %v3446 = vrot.slane %v3436, 4
    %v3447 = vrot.slane %v3437, 4
    %v3448 = vrot.slane %v3438, 4
    %v3449 = vrot.slane %v3439, 4
    %3450 = vrot.lane.b32.xlu0 %v3445, 120
    %v3451 = vpop.permute.xlu0 %3450
    %3452 = vrot.lane.b32.xlu0 %v3446, 120
    %v3453 = vpop.permute.xlu0 %3452
    %3454 = vrot.lane.b32.xlu0 %v3447, 120
    %v3455 = vpop.permute.xlu0 %3454
    %3456 = vrot.lane.b32.xlu0 %v3448, 120
    %v3457 = vpop.permute.xlu0 %3456
    %3458 = vrot.lane.b32.xlu0 %v3449, 120
    %v3459 = vpop.permute.xlu0 %3458
    %v3460 = vsel %vm126, %v3451, %v3453
    %v3461 = vsel %vm126, %v3453, %v3455
    %v3462 = vsel %vm126, %v3455, %v3457
    %v3463 = vsel %vm126, %v3457, %v3459
    %v3469 = vsel %vm170, %v3392, %v3460
    %v3470 = vsel %vm170, %v3393, %v3461
    %v3471 = vsel %vm170, %v3394, %v3462
    %v3472 = vsel %vm170, %v3395, %v3463
    %v3473 = vsel %vm170, %v3396, %v3459
    %3479 = vrot.lane.b32.xlu0 %v3469, 72
    %v3480 = vpop.permute.xlu0 %3479
    %3481 = vrot.lane.b32.xlu0 %v3470, 72
    %v3482 = vpop.permute.xlu0 %3481
    %3483 = vrot.lane.b32.xlu0 %v3471, 72
    %v3484 = vpop.permute.xlu0 %3483
    %3485 = vrot.lane.b32.xlu0 %v3472, 72
    %v3486 = vpop.permute.xlu0 %3485
    %3487 = vrot.lane.b32.xlu0 %v3473, 72
    %v3488 = vpop.permute.xlu0 %3487
    %v3489 = vsel %vm191, %v3480, %v3482
    %v3490 = vsel %vm191, %v3482, %v3484
    %v3491 = vsel %vm191, %v3484, %v3486
    %v3492 = vsel %vm191, %v3486, %v3488
    %3497 = vst [vmem:[#allocation2 + $0x40] sm:$0xff] %v3489
    %3498 = vst [vmem:[#allocation2 + $0x48] sm:$0xff] %v3490
    %3499 = vst [vmem:[#allocation2 + $0x50] sm:$0xff] %v3491
    %3500 = vst [vmem:[#allocation2 + $0x58] sm:$0xff] %v3492
    %v3501 = vmul.f32 %v3270, %v3402
    %v3502 = vmul.f32 %v3269, %v3406
    %v3503 = vmul.f32 %v3268, %v3410
    %v3504 = vmul.f32 %v3267, %v3414
    %v3505 = vmul.f32 %v3270, %v3420
    %v3506 = vmul.f32 %v3269, %v3427
    %v3507 = vmul.f32 %v3268, %v3428
    %v3508 = vmul.f32 %v3267, %v3429
    %v3509 = vmul.f32 %v3266, %v3426
    %v3515 = vrot.slane %v3505, 4
    %v3516 = vrot.slane %v3506, 4
    %v3517 = vrot.slane %v3507, 4
    %v3518 = vrot.slane %v3508, 4
    %v3519 = vrot.slane %v3509, 4
    %3520 = vrot.lane.b32.xlu0 %v3515, 64
    %v3521 = vpop.permute.xlu0 %3520
    %3522 = vrot.lane.b32.xlu0 %v3516, 64
    %v3523 = vpop.permute.xlu0 %3522
    %3524 = vrot.lane.b32.xlu0 %v3517, 64
    %v3525 = vpop.permute.xlu0 %3524
    %3526 = vrot.lane.b32.xlu0 %v3518, 64
    %v3527 = vpop.permute.xlu0 %3526
    %3528 = vrot.lane.b32.xlu0 %v3519, 64
    %v3529 = vpop.permute.xlu0 %3528
    %v3530 = vsel %vm160, %v3521, %v3523
    %v3531 = vsel %vm160, %v3523, %v3525
    %v3532 = vsel %vm160, %v3525, %v3527
    %v3533 = vsel %vm160, %v3527, %v3529
    %v3538 = vsel %vm170, %v3501, %v3530
    %v3539 = vsel %vm170, %v3502, %v3531
    %v3540 = vsel %vm170, %v3503, %v3532
    %v3541 = vsel %vm170, %v3504, %v3533
    %3542 = vst [vmem:[#allocation2 + $0x80] sm:$0xff] %v3538
    %3543 = vst [vmem:[#allocation2 + $0x88] sm:$0xff] %v3539
    %3544 = vst [vmem:[#allocation2 + $0x90] sm:$0xff] %v3540
    %3545 = vst [vmem:[#allocation2 + $0x98] sm:$0xff] %v3541
    %v3546 = vld [vmem:[%s359] ss:$8 sm:$0xf]
    %v3548 = vlaneseq
    %v3549 = vshrl.u32 %v3548, 7
    %v3550 = vsub.s32 0, %v3549
    %v3551 = vrot.slane %v3546, %v3550
    %v3552 = vlaneseq
    %v3553 = vshrl.u32 %v3552, 7
    %v3554 = vsub.s32 1, %v3553
    %v3555 = vrot.slane %v3546, %v3554
    %v3556 = vlaneseq
    %v3557 = vshrl.u32 %v3556, 7
    %v3558 = vsub.s32 2, %v3557
    %v3559 = vrot.slane %v3546, %v3558
    %v3560 = vlaneseq
    %v3561 = vshrl.u32 %v3560, 7
    %v3562 = vsub.s32 3, %v3561
    %v3563 = vrot.slane %v3546, %v3562
    %3564 = vrot.lane.b32.xlu0 %v3551, 72
    %v3565 = vpop.permute.xlu0 %3564
    %3566 = vrot.lane.b32.xlu0 %v3555, 72
    %v3567 = vpop.permute.xlu0 %3566
    %3568 = vrot.lane.b32.xlu0 %v3559, 72
    %v3569 = vpop.permute.xlu0 %3568
    %3570 = vrot.lane.b32.xlu0 %v3563, 72
    %v3571 = vpop.permute.xlu0 %3570
    %v3572 = vsel %vm191, %v3565, %v3567
    %v3573 = vsel %vm191, %v3567, %v3569
    %v3574 = vsel %vm191, %v3569, %v3571
    %v3580 = vmul.f32 %v61, %v3565
    %v3581 = vmul.f32 %v3270, %v3572
    %v3582 = vmul.f32 %v3269, %v3573
    %v3583 = vmul.f32 %v3268, %v3574
    %v3584 = vmul.f32 %v3267, %v3571
    %3585 = vrot.lane.b32.xlu0 %v3551, 8
    %v3586 = vpop.permute.xlu0 %3585
    %3587 = vrot.lane.b32.xlu0 %v3555, 8
    %v3588 = vpop.permute.xlu0 %3587
    %3589 = vrot.lane.b32.xlu0 %v3559, 8
    %v3590 = vpop.permute.xlu0 %3589
    %3591 = vrot.lane.b32.xlu0 %v3563, 8
    %v3592 = vpop.permute.xlu0 %3591
    %v3593 = vsel %vm407, %v3586, %v3588
    %v3594 = vsel %vm407, %v3588, %v3590
    %v3595 = vsel %vm407, %v3590, %v3592
    %v3601 = vmul.f32 %v3270, %v3586
    %v3602 = vmul.f32 %v3269, %v3593
    %v3603 = vmul.f32 %v3268, %v3594
    %v3604 = vmul.f32 %v3267, %v3595
    %v3605 = vmul.f32 %v3266, %v3592
    %v3611 = vrot.slane %v3601, 4
    %v3612 = vrot.slane %v3602, 4
    %v3613 = vrot.slane %v3603, 4
    %v3614 = vrot.slane %v3604, 4
    %v3615 = vrot.slane %v3605, 4
    %3616 = vrot.lane.b32.xlu0 %v3611, 64
    %v3617 = vpop.permute.xlu0 %3616
    %3618 = vrot.lane.b32.xlu0 %v3612, 64
    %v3619 = vpop.permute.xlu0 %3618
    %3620 = vrot.lane.b32.xlu0 %v3613, 64
    %v3621 = vpop.permute.xlu0 %3620
    %3622 = vrot.lane.b32.xlu0 %v3614, 64
    %v3623 = vpop.permute.xlu0 %3622
    %3624 = vrot.lane.b32.xlu0 %v3615, 64
    %v3625 = vpop.permute.xlu0 %3624
    %v3626 = vsel %vm160, %v3617, %v3619
    %v3627 = vsel %vm160, %v3619, %v3621
    %v3628 = vsel %vm160, %v3621, %v3623
    %v3629 = vsel %vm160, %v3623, %v3625
    %v3635 = vsel %vm170, %v3580, %v3617
    %v3636 = vsel %vm170, %v3581, %v3626
    %v3637 = vsel %vm170, %v3582, %v3627
    %v3638 = vsel %vm170, %v3583, %v3628
    %v3639 = vsel %vm170, %v3584, %v3629
    %3645 = vrot.lane.b32.xlu0 %v3635, 56
    %v3646 = vpop.permute.xlu0 %3645
    %3647 = vrot.lane.b32.xlu0 %v3636, 56
    %v3648 = vpop.permute.xlu0 %3647
    %3649 = vrot.lane.b32.xlu0 %v3637, 56
    %v3650 = vpop.permute.xlu0 %3649
    %3651 = vrot.lane.b32.xlu0 %v3638, 56
    %v3652 = vpop.permute.xlu0 %3651
    %3653 = vrot.lane.b32.xlu0 %v3639, 56
    %v3654 = vpop.permute.xlu0 %3653
    %v3655 = vsel %vm104, %v3646, %v3648
    %v3656 = vsel %vm104, %v3648, %v3650
    %v3657 = vsel %vm104, %v3650, %v3652
    %v3658 = vsel %vm104, %v3652, %v3654
    %3663 = vst [vmem:[#allocation2 + $0xc0] sm:$0xff] %v3655
    %3664 = vst [vmem:[#allocation2 + $0xc8] sm:$0xff] %v3656
    %3665 = vst [vmem:[#allocation2 + $0xd0] sm:$0xff] %v3657
    %3666 = vst [vmem:[#allocation2 + $0xd8] sm:$0xff] %v3658
    %v3667 = vmul.f32 %v3270, %v3565
    %v3668 = vmul.f32 %v3269, %v3572
    %v3669 = vmul.f32 %v3268, %v3573
    %v3670 = vmul.f32 %v3267, %v3574
    %v3671 = vmul.f32 %v3266, %v3571
    %v3672 = vld [vmem:[%s487] ss:$8 sm:$0xf]
    %v3674 = vlaneseq
    %v3675 = vshrl.u32 %v3674, 7
    %v3676 = vsub.s32 0, %v3675
    %v3677 = vrot.slane %v3672, %v3676
    %v3678 = vlaneseq
    %v3679 = vshrl.u32 %v3678, 7
    %v3680 = vsub.s32 1, %v3679
    %v3681 = vrot.slane %v3672, %v3680
    %v3682 = vlaneseq
    %v3683 = vshrl.u32 %v3682, 7
    %v3684 = vsub.s32 2, %v3683
    %v3685 = vrot.slane %v3672, %v3684
    %v3686 = vlaneseq
    %v3687 = vshrl.u32 %v3686, 7
    %v3688 = vsub.s32 3, %v3687
    %v3689 = vrot.slane %v3672, %v3688
    %3690 = vrot.lane.b32.xlu0 %v3677, 56
    %v3691 = vpop.permute.xlu0 %3690
    %3692 = vrot.lane.b32.xlu0 %v3681, 56
    %v3693 = vpop.permute.xlu0 %3692
    %3694 = vrot.lane.b32.xlu0 %v3685, 56
    %v3695 = vpop.permute.xlu0 %3694
    %3696 = vrot.lane.b32.xlu0 %v3689, 56
    %v3697 = vpop.permute.xlu0 %3696
    %v3698 = vsel %vm104, %v3691, %v3693
    %v3699 = vsel %vm104, %v3693, %v3695
    %v3700 = vsel %vm104, %v3695, %v3697
    %v3706 = vmul.f32 %v3691, 0.0
    %v3707 = vmul.f32 %v3250, %v3698
    %v3708 = vmul.f32 %v3251, %v3699
    %v3709 = vmul.f32 %v3252, %v3700
    %v3710 = vmul.f32 %v3253, %v3697
    %v3716 = vrot.slane %v3706, 4
    %v3717 = vrot.slane %v3707, 4
    %v3718 = vrot.slane %v3708, 4
    %v3719 = vrot.slane %v3709, 4
    %v3720 = vrot.slane %v3710, 4
    %3721 = vrot.lane.b32.xlu0 %v3716, 16
    %v3722 = vpop.permute.xlu0 %3721
    %3723 = vrot.lane.b32.xlu0 %v3717, 16
    %v3724 = vpop.permute.xlu0 %3723
    %3725 = vrot.lane.b32.xlu0 %v3718, 16
    %v3726 = vpop.permute.xlu0 %3725
    %3727 = vrot.lane.b32.xlu0 %v3719, 16
    %v3728 = vpop.permute.xlu0 %3727
    %3729 = vrot.lane.b32.xlu0 %v3720, 16
    %v3730 = vpop.permute.xlu0 %3729
    %v3731 = vsel %vm547, %v3722, %v3724
    %v3732 = vsel %vm547, %v3724, %v3726
    %v3733 = vsel %vm547, %v3726, %v3728
    %v3734 = vsel %vm547, %v3728, %v3730
    %v3740 = vsel %vm170, %v3667, %v3722
    %v3741 = vsel %vm170, %v3668, %v3731
    %v3742 = vsel %vm170, %v3669, %v3732
    %v3743 = vsel %vm170, %v3670, %v3733
    %v3744 = vsel %vm170, %v3671, %v3734
    %3750 = vrot.lane.b32.xlu0 %v3740, 56
    %v3751 = vpop.permute.xlu0 %3750
    %3752 = vrot.lane.b32.xlu0 %v3741, 56
    %v3753 = vpop.permute.xlu0 %3752
    %3754 = vrot.lane.b32.xlu0 %v3742, 56
    %v3755 = vpop.permute.xlu0 %3754
    %3756 = vrot.lane.b32.xlu0 %v3743, 56
    %v3757 = vpop.permute.xlu0 %3756
    %3758 = vrot.lane.b32.xlu0 %v3744, 56
    %v3759 = vpop.permute.xlu0 %3758
    %v3760 = vsel %vm104, %v3751, %v3753
    %v3761 = vsel %vm104, %v3753, %v3755
    %v3762 = vsel %vm104, %v3755, %v3757
    %v3763 = vsel %vm104, %v3757, %v3759
    %3768 = vst [vmem:[#allocation2 + $0x100] sm:$0xff] %v3760
    %3769 = vst [vmem:[#allocation2 + $0x108] sm:$0xff] %v3761
    %3770 = vst [vmem:[#allocation2 + $0x110] sm:$0xff] %v3762
    %3771 = vst [vmem:[#allocation2 + $0x118] sm:$0xff] %v3763
    %3772 = vrot.lane.b32.xlu0 %v3677, 120
    %v3773 = vpop.permute.xlu0 %3772
    %3774 = vrot.lane.b32.xlu0 %v3681, 120
    %v3775 = vpop.permute.xlu0 %3774
    %3776 = vrot.lane.b32.xlu0 %v3685, 120
    %v3777 = vpop.permute.xlu0 %3776
    %3778 = vrot.lane.b32.xlu0 %v3689, 120
    %v3779 = vpop.permute.xlu0 %3778
    %v3780 = vsel %vm126, %v3773, %v3775
    %v3781 = vsel %vm126, %v3775, %v3777
    %v3782 = vsel %vm126, %v3777, %v3779
    %v3788 = vmul.f32 %v3773, 0.0
    %v3789 = vmul.f32 %v3250, %v3780
    %v3790 = vmul.f32 %v3251, %v3781
    %v3791 = vmul.f32 %v3252, %v3782
    %v3792 = vmul.f32 %v3253, %v3779
    %v3793 = vmul.f32 %v3250, %v3691
    %v3794 = vmul.f32 %v3251, %v3698
    %v3795 = vmul.f32 %v3252, %v3699
    %v3796 = vmul.f32 %v3253, %v3700
    %v3797 = vmul.f32 %v3697, 0.0
    %v3803 = vrot.slane %v3793, 4
    %v3804 = vrot.slane %v3794, 4
    %v3805 = vrot.slane %v3795, 4
    %v3806 = vrot.slane %v3796, 4
    %v3807 = vrot.slane %v3797, 4
    %3808 = vrot.lane.b32.xlu0 %v3803, 64
    %v3809 = vpop.permute.xlu0 %3808
    %3810 = vrot.lane.b32.xlu0 %v3804, 64
    %v3811 = vpop.permute.xlu0 %3810
    %3812 = vrot.lane.b32.xlu0 %v3805, 64
    %v3813 = vpop.permute.xlu0 %3812
    %3814 = vrot.lane.b32.xlu0 %v3806, 64
    %v3815 = vpop.permute.xlu0 %3814
    %3816 = vrot.lane.b32.xlu0 %v3807, 64
    %v3817 = vpop.permute.xlu0 %3816
    %v3818 = vsel %vm160, %v3809, %v3811
    %v3819 = vsel %vm160, %v3811, %v3813
    %v3820 = vsel %vm160, %v3813, %v3815
    %v3821 = vsel %vm160, %v3815, %v3817
    %v3827 = vsel %vm170, %v3788, %v3809
    %v3828 = vsel %vm170, %v3789, %v3818
    %v3829 = vsel %vm170, %v3790, %v3819
    %v3830 = vsel %vm170, %v3791, %v3820
    %v3831 = vsel %vm170, %v3792, %v3821
    %3837 = vrot.lane.b32.xlu0 %v3827, 8
    %v3838 = vpop.permute.xlu0 %3837
    %3839 = vrot.lane.b32.xlu0 %v3828, 8
    %v3840 = vpop.permute.xlu0 %3839
    %3841 = vrot.lane.b32.xlu0 %v3829, 8
    %v3842 = vpop.permute.xlu0 %3841
    %3843 = vrot.lane.b32.xlu0 %v3830, 8
    %v3844 = vpop.permute.xlu0 %3843
    %3845 = vrot.lane.b32.xlu0 %v3831, 8
    %v3846 = vpop.permute.xlu0 %3845
    %v3847 = vsel %vm407, %v3838, %v3840
    %v3848 = vsel %vm407, %v3840, %v3842
    %v3849 = vsel %vm407, %v3842, %v3844
    %v3850 = vsel %vm407, %v3844, %v3846
    %3855 = vst [vmem:[#allocation2 + $0x140] sm:$0xff] %v3847
    %3856 = vst [vmem:[#allocation2 + $0x148] sm:$0xff] %v3848
    %3857 = vst [vmem:[#allocation2 + $0x150] sm:$0xff] %v3849
    %3858 = vst [vmem:[#allocation2 + $0x158] sm:$0xff] %v3850
    %v3859 = vld [vmem:[%s676] ss:$8 sm:$0xf]
    %v3861 = vlaneseq
    %v3862 = vshrl.u32 %v3861, 7
    %v3863 = vsub.s32 0, %v3862
    %v3864 = vrot.slane %v3859, %v3863
    %v3865 = vlaneseq
    %v3866 = vshrl.u32 %v3865, 7
    %v3867 = vsub.s32 1, %v3866
    %v3868 = vrot.slane %v3859, %v3867
    %v3869 = vlaneseq
    %v3870 = vshrl.u32 %v3869, 7
    %v3871 = vsub.s32 2, %v3870
    %v3872 = vrot.slane %v3859, %v3871
    %v3873 = vlaneseq
    %v3874 = vshrl.u32 %v3873, 7
    %v3875 = vsub.s32 3, %v3874
    %v3876 = vrot.slane %v3859, %v3875
    %3881 = vrot.lane.b32.xlu0 %v3864, 64
    %v3882 = vpop.permute.xlu0 %3881
    %3883 = vrot.lane.b32.xlu0 %v3868, 64
    %v3884 = vpop.permute.xlu0 %3883
    %3885 = vrot.lane.b32.xlu0 %v3872, 64
    %v3886 = vpop.permute.xlu0 %3885
    %3887 = vrot.lane.b32.xlu0 %v3876, 64
    %v3888 = vpop.permute.xlu0 %3887
    %v3889 = vsel %vm160, %v3882, %v3884
    %v3890 = vsel %vm160, %v3884, %v3886
    %v3891 = vsel %vm160, %v3886, %v3888
    %v3897 = vmul.f32 %v3882, 0.0
    %v3898 = vmul.f32 %v3250, %v3889
    %v3899 = vmul.f32 %v3251, %v3890
    %v3900 = vmul.f32 %v3252, %v3891
    %v3901 = vmul.f32 %v3253, %v3888
    %v3902 = vmul.f32 %v3250, %v3864
    %v3903 = vmul.f32 %v3251, %v3868
    %v3904 = vmul.f32 %v3252, %v3872
    %v3905 = vmul.f32 %v3253, %v3876
    %v3910 = vrot.slane %v3902, 4
    %v3911 = vrot.slane %v3903, 4
    %v3912 = vrot.slane %v3904, 4
    %v3913 = vrot.slane %v3905, 4
    %3914 = vrot.lane.b32.xlu0 %v3910, 64
    %v3915 = vpop.permute.xlu0 %3914
    %3916 = vrot.lane.b32.xlu0 %v3911, 64
    %v3917 = vpop.permute.xlu0 %3916
    %3918 = vrot.lane.b32.xlu0 %v3912, 64
    %v3919 = vpop.permute.xlu0 %3918
    %3920 = vrot.lane.b32.xlu0 %v3913, 64
    %v3921 = vpop.permute.xlu0 %3920
    %v3922 = vsel %vm160, %v3915, %v3917
    %v3923 = vsel %vm160, %v3917, %v3919
    %v3924 = vsel %vm160, %v3919, %v3921
    %v3930 = vsel %vm170, %v3897, %v3915
    %v3931 = vsel %vm170, %v3898, %v3922
    %v3932 = vsel %vm170, %v3899, %v3923
    %v3933 = vsel %vm170, %v3900, %v3924
    %v3934 = vsel %vm170, %v3901, %v3921
    %3940 = vrot.lane.b32.xlu0 %v3930, 64
    %v3941 = vpop.permute.xlu0 %3940
    %3942 = vrot.lane.b32.xlu0 %v3931, 64
    %v3943 = vpop.permute.xlu0 %3942
    %3944 = vrot.lane.b32.xlu0 %v3932, 64
    %v3945 = vpop.permute.xlu0 %3944
    %3946 = vrot.lane.b32.xlu0 %v3933, 64
    %v3947 = vpop.permute.xlu0 %3946
    %3948 = vrot.lane.b32.xlu0 %v3934, 64
    %v3949 = vpop.permute.xlu0 %3948
    %v3950 = vsel %vm160, %v3941, %v3943
    %v3951 = vsel %vm160, %v3943, %v3945
    %v3952 = vsel %vm160, %v3945, %v3947
    %v3953 = vsel %vm160, %v3947, %v3949
    %3958 = vst [vmem:[#allocation2 + $0x180] sm:$0xff] %v3950
    %3959 = vst [vmem:[#allocation2 + $0x188] sm:$0xff] %v3951
    %3960 = vst [vmem:[#allocation2 + $0x190] sm:$0xff] %v3952
    %3961 = vst [vmem:[#allocation2 + $0x198] sm:$0xff] %v3953
    %v3962 = vmul.f32 %v3250, %v3882
    %v3963 = vmul.f32 %v3251, %v3889
    %v3964 = vmul.f32 %v3252, %v3890
    %v3965 = vmul.f32 %v3253, %v3891
    %v3966 = vmul.f32 %v3888, 0.0
    %v3967 = vld [vmem:[%s785] ss:$8 sm:$0xf]
    %v3969 = vlaneseq
    %v3970 = vshrl.u32 %v3969, 7
    %v3971 = vsub.s32 0, %v3970
    %v3972 = vrot.slane %v3967, %v3971
    %v3973 = vlaneseq
    %v3974 = vshrl.u32 %v3973, 7
    %v3975 = vsub.s32 1, %v3974
    %v3976 = vrot.slane %v3967, %v3975
    %v3977 = vlaneseq
    %v3978 = vshrl.u32 %v3977, 7
    %v3979 = vsub.s32 2, %v3978
    %v3980 = vrot.slane %v3967, %v3979
    %v3981 = vlaneseq
    %v3982 = vshrl.u32 %v3981, 7
    %v3983 = vsub.s32 3, %v3982
    %v3984 = vrot.slane %v3967, %v3983
    %3985 = vrot.lane.b32.xlu0 %v3972, 72
    %v3986 = vpop.permute.xlu0 %3985
    %3987 = vrot.lane.b32.xlu0 %v3976, 72
    %v3988 = vpop.permute.xlu0 %3987
    %3989 = vrot.lane.b32.xlu0 %v3980, 72
    %v3990 = vpop.permute.xlu0 %3989
    %3991 = vrot.lane.b32.xlu0 %v3984, 72
    %v3992 = vpop.permute.xlu0 %3991
    %v3993 = vsel %vm191, %v3986, %v3988
    %v3994 = vsel %vm191, %v3988, %v3990
    %v3995 = vsel %vm191, %v3990, %v3992
    %v4001 = vmul.f32 %v3986, 0.0
    %v4002 = vmul.f32 %v3250, %v3993
    %v4003 = vmul.f32 %v3251, %v3994
    %v4004 = vmul.f32 %v3252, %v3995
    %v4005 = vmul.f32 %v3253, %v3992
    %v4011 = vrot.slane %v4001, 4
    %v4012 = vrot.slane %v4002, 4
    %v4013 = vrot.slane %v4003, 4
    %v4014 = vrot.slane %v4004, 4
    %v4015 = vrot.slane %v4005, 4
    %4016 = vrot.lane.b32.xlu0 %v4011, 120
    %v4017 = vpop.permute.xlu0 %4016
    %4018 = vrot.lane.b32.xlu0 %v4012, 120
    %v4019 = vpop.permute.xlu0 %4018
    %4020 = vrot.lane.b32.xlu0 %v4013, 120
    %v4021 = vpop.permute.xlu0 %4020
    %4022 = vrot.lane.b32.xlu0 %v4014, 120
    %v4023 = vpop.permute.xlu0 %4022
    %4024 = vrot.lane.b32.xlu0 %v4015, 120
    %v4025 = vpop.permute.xlu0 %4024
    %v4026 = vsel %vm126, %v4017, %v4019
    %v4027 = vsel %vm126, %v4019, %v4021
    %v4028 = vsel %vm126, %v4021, %v4023
    %v4029 = vsel %vm126, %v4023, %v4025
    %v4035 = vsel %vm170, %v3962, %v4026
    %v4036 = vsel %vm170, %v3963, %v4027
    %v4037 = vsel %vm170, %v3964, %v4028
    %v4038 = vsel %vm170, %v3965, %v4029
    %v4039 = vsel %vm170, %v3966, %v4025
    %4045 = vrot.lane.b32.xlu0 %v4035, 64
    %v4046 = vpop.permute.xlu0 %4045
    %4047 = vrot.lane.b32.xlu0 %v4036, 64
    %v4048 = vpop.permute.xlu0 %4047
    %4049 = vrot.lane.b32.xlu0 %v4037, 64
    %v4050 = vpop.permute.xlu0 %4049
    %4051 = vrot.lane.b32.xlu0 %v4038, 64
    %v4052 = vpop.permute.xlu0 %4051
    %4053 = vrot.lane.b32.xlu0 %v4039, 64
    %v4054 = vpop.permute.xlu0 %4053
    %v4055 = vsel %vm160, %v4046, %v4048
    %v4056 = vsel %vm160, %v4048, %v4050
    %v4057 = vsel %vm160, %v4050, %v4052
    %v4058 = vsel %vm160, %v4052, %v4054
    %4063 = vst [vmem:[#allocation2 + $0x1c0] sm:$0xff] %v4055
    %4064 = vst [vmem:[#allocation2 + $0x1c8] sm:$0xff] %v4056
    %4065 = vst [vmem:[#allocation2 + $0x1d0] sm:$0xff] %v4057
    %4066 = vst [vmem:[#allocation2 + $0x1d8] sm:$0xff] %v4058
    %4067 = vrot.lane.b32.xlu0 %v3972, 8
    %v4068 = vpop.permute.xlu0 %4067
    %4069 = vrot.lane.b32.xlu0 %v3976, 8
    %v4070 = vpop.permute.xlu0 %4069
    %4071 = vrot.lane.b32.xlu0 %v3980, 8
    %v4072 = vpop.permute.xlu0 %4071
    %4073 = vrot.lane.b32.xlu0 %v3984, 8
    %v4074 = vpop.permute.xlu0 %4073
    %v4075 = vsel %vm407, %v4068, %v4070
    %v4076 = vsel %vm407, %v4070, %v4072
    %v4077 = vsel %vm407, %v4072, %v4074
    %v4083 = vmul.f32 %v3250, %v4068
    %v4084 = vmul.f32 %v3251, %v4075
    %v4085 = vmul.f32 %v3252, %v4076
    %v4086 = vmul.f32 %v3253, %v4077
    %v4087 = vmul.f32 %v4074, 0.0
    %v4088 = vmul.f32 %v3250, %v3986
    %v4089 = vmul.f32 %v3251, %v3993
    %v4090 = vmul.f32 %v3252, %v3994
    %v4091 = vmul.f32 %v3253, %v3995
    %v4092 = vmul.f32 %v3992, 0.0
    %v4098 = vrot.slane %v4088, 4
    %v4099 = vrot.slane %v4089, 4
    %v4100 = vrot.slane %v4090, 4
    %v4101 = vrot.slane %v4091, 4
    %v4102 = vrot.slane %v4092, 4
    %4103 = vrot.lane.b32.xlu0 %v4098, 64
    %v4104 = vpop.permute.xlu0 %4103
    %4105 = vrot.lane.b32.xlu0 %v4099, 64
    %v4106 = vpop.permute.xlu0 %4105
    %4107 = vrot.lane.b32.xlu0 %v4100, 64
    %v4108 = vpop.permute.xlu0 %4107
    %4109 = vrot.lane.b32.xlu0 %v4101, 64
    %v4110 = vpop.permute.xlu0 %4109
    %4111 = vrot.lane.b32.xlu0 %v4102, 64
    %v4112 = vpop.permute.xlu0 %4111
    %v4113 = vsel %vm160, %v4104, %v4106
    %v4114 = vsel %vm160, %v4106, %v4108
    %v4115 = vsel %vm160, %v4108, %v4110
    %v4116 = vsel %vm160, %v4110, %v4112
    %v4122 = vsel %vm170, %v4083, %v4113
    %v4123 = vsel %vm170, %v4084, %v4114
    %v4124 = vsel %vm170, %v4085, %v4115
    %v4125 = vsel %vm170, %v4086, %v4116
    %v4126 = vsel %vm170, %v4087, %v4112
    %4132 = vrot.lane.b32.xlu0 %v4122, 120
    %v4133 = vpop.permute.xlu0 %4132
    %4134 = vrot.lane.b32.xlu0 %v4123, 120
    %v4135 = vpop.permute.xlu0 %4134
    %4136 = vrot.lane.b32.xlu0 %v4124, 120
    %v4137 = vpop.permute.xlu0 %4136
    %4138 = vrot.lane.b32.xlu0 %v4125, 120
    %v4139 = vpop.permute.xlu0 %4138
    %4140 = vrot.lane.b32.xlu0 %v4126, 120
    %v4141 = vpop.permute.xlu0 %4140
    %v4142 = vsel %vm126, %v4133, %v4135
    %v4143 = vsel %vm126, %v4135, %v4137
    %v4144 = vsel %vm126, %v4137, %v4139
    %v4145 = vsel %vm126, %v4139, %v4141
    %4150 = vst [vmem:[#allocation2 + $0x200] sm:$0xff] %v4142
    %4151 = vst [vmem:[#allocation2 + $0x208] sm:$0xff] %v4143
    %4152 = vst [vmem:[#allocation2 + $0x210] sm:$0xff] %v4144
    %4153 = vst [vmem:[#allocation2 + $0x218] sm:$0xff] %v4145
    %4154 = vrot.lane.b32.xlu0 %v3250, 127
    %v4155 = vpop.permute.xlu0 %4154
    %4156 = vrot.lane.b32.xlu0 %v3251, 127
    %v4157 = vpop.permute.xlu0 %4156
    %4158 = vrot.lane.b32.xlu0 %v3252, 127
    %v4159 = vpop.permute.xlu0 %4158
    %4160 = vrot.lane.b32.xlu0 %v3253, 127
    %v4161 = vpop.permute.xlu0 %4160
    %v4162 = vsel %vm983, %v4161, %v974
    %v4163 = vsel %vm983, %v4159, %v4161
    %v4164 = vsel %vm983, %v4157, %v4159
    %v4165 = vsel %vm983, %v4155, %v4157
    %v4166 = vsel %vm983, %v974, %v4155
    %v4167 = vld [vmem:[%s989] ss:$8 sm:$0xf]
    %v4169 = vlaneseq
    %v4170 = vshrl.u32 %v4169, 7
    %v4171 = vsub.s32 0, %v4170
    %v4172 = vrot.slane %v4167, %v4171
    %v4173 = vlaneseq
    %v4174 = vshrl.u32 %v4173, 7
    %v4175 = vsub.s32 1, %v4174
    %v4176 = vrot.slane %v4167, %v4175
    %v4177 = vlaneseq
    %v4178 = vshrl.u32 %v4177, 7
    %v4179 = vsub.s32 2, %v4178
    %v4180 = vrot.slane %v4167, %v4179
    %v4181 = vlaneseq
    %v4182 = vshrl.u32 %v4181, 7
    %v4183 = vsub.s32 3, %v4182
    %v4184 = vrot.slane %v4167, %v4183
    %4185 = vrot.lane.b32.xlu0 %v4172, 56
    %v4186 = vpop.permute.xlu0 %4185
    %4187 = vrot.lane.b32.xlu0 %v4176, 56
    %v4188 = vpop.permute.xlu0 %4187
    %4189 = vrot.lane.b32.xlu0 %v4180, 56
    %v4190 = vpop.permute.xlu0 %4189
    %4191 = vrot.lane.b32.xlu0 %v4184, 56
    %v4192 = vpop.permute.xlu0 %4191
    %v4193 = vsel %vm104, %v4186, %v4188
    %v4194 = vsel %vm104, %v4188, %v4190
    %v4195 = vsel %vm104, %v4190, %v4192
    %v4201 = vmul.f32 %v4166, %v4186
    %v4202 = vmul.f32 %v4165, %v4193
    %v4203 = vmul.f32 %v4164, %v4194
    %v4204 = vmul.f32 %v4163, %v4195
    %v4205 = vmul.f32 %v4162, %v4192
    %4206 = vrot.lane.b32.xlu0 %v4172, 120
    %v4207 = vpop.permute.xlu0 %4206
    %4208 = vrot.lane.b32.xlu0 %v4176, 120
    %v4209 = vpop.permute.xlu0 %4208
    %4210 = vrot.lane.b32.xlu0 %v4180, 120
    %v4211 = vpop.permute.xlu0 %4210
    %4212 = vrot.lane.b32.xlu0 %v4184, 120
    %v4213 = vpop.permute.xlu0 %4212
    %v4214 = vsel %vm126, %v4207, %v4209
    %v4215 = vsel %vm126, %v4209, %v4211
    %v4216 = vsel %vm126, %v4211, %v4213
    %v4222 = vmul.f32 %v4166, %v4207
    %v4223 = vmul.f32 %v4165, %v4214
    %v4224 = vmul.f32 %v4164, %v4215
    %v4225 = vmul.f32 %v4163, %v4216
    %v4226 = vmul.f32 %v4162, %v4213
    %v4232 = vrot.slane %v4222, 4
    %v4233 = vrot.slane %v4223, 4
    %v4234 = vrot.slane %v4224, 4
    %v4235 = vrot.slane %v4225, 4
    %v4236 = vrot.slane %v4226, 4
    %4237 = vrot.lane.b32.xlu0 %v4232, 64
    %v4238 = vpop.permute.xlu0 %4237
    %4239 = vrot.lane.b32.xlu0 %v4233, 64
    %v4240 = vpop.permute.xlu0 %4239
    %4241 = vrot.lane.b32.xlu0 %v4234, 64
    %v4242 = vpop.permute.xlu0 %4241
    %4243 = vrot.lane.b32.xlu0 %v4235, 64
    %v4244 = vpop.permute.xlu0 %4243
    %4245 = vrot.lane.b32.xlu0 %v4236, 64
    %v4246 = vpop.permute.xlu0 %4245
    %v4247 = vsel %vm160, %v4238, %v4240
    %v4248 = vsel %vm160, %v4240, %v4242
    %v4249 = vsel %vm160, %v4242, %v4244
    %v4250 = vsel %vm160, %v4244, %v4246
    %v4256 = vsel %vm170, %v4201, %v4247
    %v4257 = vsel %vm170, %v4202, %v4248
    %v4258 = vsel %vm170, %v4203, %v4249
    %v4259 = vsel %vm170, %v4204, %v4250
    %v4260 = vsel %vm170, %v4205, %v4246
    %4266 = vrot.lane.b32.xlu0 %v4256, 72
    %v4267 = vpop.permute.xlu0 %4266
    %4268 = vrot.lane.b32.xlu0 %v4257, 72
    %v4269 = vpop.permute.xlu0 %4268
    %4270 = vrot.lane.b32.xlu0 %v4258, 72
    %v4271 = vpop.permute.xlu0 %4270
    %4272 = vrot.lane.b32.xlu0 %v4259, 72
    %v4273 = vpop.permute.xlu0 %4272
    %4274 = vrot.lane.b32.xlu0 %v4260, 72
    %v4275 = vpop.permute.xlu0 %4274
    %v4276 = vsel %vm191, %v4267, %v4269
    %v4277 = vsel %vm191, %v4269, %v4271
    %v4278 = vsel %vm191, %v4271, %v4273
    %v4279 = vsel %vm191, %v4273, %v4275
    %4284 = vst [vmem:[#allocation2 + $0x240] sm:$0xff] %v4276
    %4285 = vst [vmem:[#allocation2 + $0x248] sm:$0xff] %v4277
    %4286 = vst [vmem:[#allocation2 + $0x250] sm:$0xff] %v4278
    %4287 = vst [vmem:[#allocation2 + $0x258] sm:$0xff] %v4279
    %v4288 = vmul.f32 %v4165, %v4186
    %v4289 = vmul.f32 %v4164, %v4193
    %v4290 = vmul.f32 %v4163, %v4194
    %v4291 = vmul.f32 %v4162, %v4195
    %v4292 = vmul.f32 %v974, %v4192
    %v4293 = vld [vmem:[%s1116] ss:$8 sm:$0xf]
    %v4295 = vlaneseq
    %v4296 = vshrl.u32 %v4295, 7
    %v4297 = vsub.s32 0, %v4296
    %v4298 = vrot.slane %v4293, %v4297
    %v4299 = vlaneseq
    %v4300 = vshrl.u32 %v4299, 7
    %v4301 = vsub.s32 1, %v4300
    %v4302 = vrot.slane %v4293, %v4301
    %v4303 = vlaneseq
    %v4304 = vshrl.u32 %v4303, 7
    %v4305 = vsub.s32 2, %v4304
    %v4306 = vrot.slane %v4293, %v4305
    %v4307 = vlaneseq
    %v4308 = vshrl.u32 %v4307, 7
    %v4309 = vsub.s32 3, %v4308
    %v4310 = vrot.slane %v4293, %v4309
    %4315 = vrot.lane.b32.xlu0 %v4298, 64
    %v4316 = vpop.permute.xlu0 %4315
    %4317 = vrot.lane.b32.xlu0 %v4302, 64
    %v4318 = vpop.permute.xlu0 %4317
    %4319 = vrot.lane.b32.xlu0 %v4306, 64
    %v4320 = vpop.permute.xlu0 %4319
    %4321 = vrot.lane.b32.xlu0 %v4310, 64
    %v4322 = vpop.permute.xlu0 %4321
    %v4323 = vsel %vm160, %v4316, %v4318
    %v4324 = vsel %vm160, %v4318, %v4320
    %v4325 = vsel %vm160, %v4320, %v4322
    %v4331 = vmul.f32 %v4166, %v4316
    %v4332 = vmul.f32 %v4165, %v4323
    %v4333 = vmul.f32 %v4164, %v4324
    %v4334 = vmul.f32 %v4163, %v4325
    %v4335 = vmul.f32 %v4162, %v4322
    %v4341 = vrot.slane %v4331, 4
    %v4342 = vrot.slane %v4332, 4
    %v4343 = vrot.slane %v4333, 4
    %v4344 = vrot.slane %v4334, 4
    %v4345 = vrot.slane %v4335, 4
    %4346 = vrot.lane.b32.xlu0 %v4341, 120
    %v4347 = vpop.permute.xlu0 %4346
    %4348 = vrot.lane.b32.xlu0 %v4342, 120
    %v4349 = vpop.permute.xlu0 %4348
    %4350 = vrot.lane.b32.xlu0 %v4343, 120
    %v4351 = vpop.permute.xlu0 %4350
    %4352 = vrot.lane.b32.xlu0 %v4344, 120
    %v4353 = vpop.permute.xlu0 %4352
    %4354 = vrot.lane.b32.xlu0 %v4345, 120
    %v4355 = vpop.permute.xlu0 %4354
    %v4356 = vsel %vm126, %v4347, %v4349
    %v4357 = vsel %vm126, %v4349, %v4351
    %v4358 = vsel %vm126, %v4351, %v4353
    %v4359 = vsel %vm126, %v4353, %v4355
    %v4365 = vsel %vm170, %v4288, %v4356
    %v4366 = vsel %vm170, %v4289, %v4357
    %v4367 = vsel %vm170, %v4290, %v4358
    %v4368 = vsel %vm170, %v4291, %v4359
    %v4369 = vsel %vm170, %v4292, %v4355
    %4375 = vrot.lane.b32.xlu0 %v4365, 72
    %v4376 = vpop.permute.xlu0 %4375
    %4377 = vrot.lane.b32.xlu0 %v4366, 72
    %v4378 = vpop.permute.xlu0 %4377
    %4379 = vrot.lane.b32.xlu0 %v4367, 72
    %v4380 = vpop.permute.xlu0 %4379
    %4381 = vrot.lane.b32.xlu0 %v4368, 72
    %v4382 = vpop.permute.xlu0 %4381
    %4383 = vrot.lane.b32.xlu0 %v4369, 72
    %v4384 = vpop.permute.xlu0 %4383
    %v4385 = vsel %vm191, %v4376, %v4378
    %v4386 = vsel %vm191, %v4378, %v4380
    %v4387 = vsel %vm191, %v4380, %v4382
    %v4388 = vsel %vm191, %v4382, %v4384
    %4393 = vst [vmem:[#allocation2 + $0x280] sm:$0xff] %v4385
    %4394 = vst [vmem:[#allocation2 + $0x288] sm:$0xff] %v4386
    %4395 = vst [vmem:[#allocation2 + $0x290] sm:$0xff] %v4387
    %4396 = vst [vmem:[#allocation2 + $0x298] sm:$0xff] %v4388
    %v4397 = vmul.f32 %v4165, %v4298
    %v4398 = vmul.f32 %v4164, %v4302
    %v4399 = vmul.f32 %v4163, %v4306
    %v4400 = vmul.f32 %v4162, %v4310
    %v4401 = vmul.f32 %v4165, %v4316
    %v4402 = vmul.f32 %v4164, %v4323
    %v4403 = vmul.f32 %v4163, %v4324
    %v4404 = vmul.f32 %v4162, %v4325
    %v4405 = vmul.f32 %v974, %v4322
    %v4411 = vrot.slane %v4401, 4
    %v4412 = vrot.slane %v4402, 4
    %v4413 = vrot.slane %v4403, 4
    %v4414 = vrot.slane %v4404, 4
    %v4415 = vrot.slane %v4405, 4
    %4416 = vrot.lane.b32.xlu0 %v4411, 64
    %v4417 = vpop.permute.xlu0 %4416
    %4418 = vrot.lane.b32.xlu0 %v4412, 64
    %v4419 = vpop.permute.xlu0 %4418
    %4420 = vrot.lane.b32.xlu0 %v4413, 64
    %v4421 = vpop.permute.xlu0 %4420
    %4422 = vrot.lane.b32.xlu0 %v4414, 64
    %v4423 = vpop.permute.xlu0 %4422
    %4424 = vrot.lane.b32.xlu0 %v4415, 64
    %v4425 = vpop.permute.xlu0 %4424
    %v4426 = vsel %vm160, %v4417, %v4419
    %v4427 = vsel %vm160, %v4419, %v4421
    %v4428 = vsel %vm160, %v4421, %v4423
    %v4429 = vsel %vm160, %v4423, %v4425
    %v4434 = vsel %vm170, %v4397, %v4426
    %v4435 = vsel %vm170, %v4398, %v4427
    %v4436 = vsel %vm170, %v4399, %v4428
    %v4437 = vsel %vm170, %v4400, %v4429
    %4438 = vst [vmem:[#allocation2 + $0x2c0] sm:$0xff] %v4434
    %4439 = vst [vmem:[#allocation2 + $0x2c8] sm:$0xff] %v4435
    %4440 = vst [vmem:[#allocation2 + $0x2d0] sm:$0xff] %v4436
    %4441 = vst [vmem:[#allocation2 + $0x2d8] sm:$0xff] %v4437
    %v4442 = vld [vmem:[%s1266] ss:$8 sm:$0xf]
    %v4444 = vlaneseq
    %v4445 = vshrl.u32 %v4444, 7
    %v4446 = vsub.s32 0, %v4445
    %v4447 = vrot.slane %v4442, %v4446
    %v4448 = vlaneseq
    %v4449 = vshrl.u32 %v4448, 7
    %v4450 = vsub.s32 1, %v4449
    %v4451 = vrot.slane %v4442, %v4450
    %v4452 = vlaneseq
    %v4453 = vshrl.u32 %v4452, 7
    %v4454 = vsub.s32 2, %v4453
    %v4455 = vrot.slane %v4442, %v4454
    %v4456 = vlaneseq
    %v4457 = vshrl.u32 %v4456, 7
    %v4458 = vsub.s32 3, %v4457
    %v4459 = vrot.slane %v4442, %v4458
    %4460 = vrot.lane.b32.xlu0 %v4447, 72
    %v4461 = vpop.permute.xlu0 %4460
    %4462 = vrot.lane.b32.xlu0 %v4451, 72
    %v4463 = vpop.permute.xlu0 %4462
    %4464 = vrot.lane.b32.xlu0 %v4455, 72
    %v4465 = vpop.permute.xlu0 %4464
    %4466 = vrot.lane.b32.xlu0 %v4459, 72
    %v4467 = vpop.permute.xlu0 %4466
    %v4468 = vsel %vm191, %v4461, %v4463
    %v4469 = vsel %vm191, %v4463, %v4465
    %v4470 = vsel %vm191, %v4465, %v4467
    %v4476 = vmul.f32 %v4166, %v4461
    %v4477 = vmul.f32 %v4165, %v4468
    %v4478 = vmul.f32 %v4164, %v4469
    %v4479 = vmul.f32 %v4163, %v4470
    %v4480 = vmul.f32 %v4162, %v4467
    %4481 = vrot.lane.b32.xlu0 %v4447, 8
    %v4482 = vpop.permute.xlu0 %4481
    %4483 = vrot.lane.b32.xlu0 %v4451, 8
    %v4484 = vpop.permute.xlu0 %4483
    %4485 = vrot.lane.b32.xlu0 %v4455, 8
    %v4486 = vpop.permute.xlu0 %4485
    %4487 = vrot.lane.b32.xlu0 %v4459, 8
    %v4488 = vpop.permute.xlu0 %4487
    %v4489 = vsel %vm407, %v4482, %v4484
    %v4490 = vsel %vm407, %v4484, %v4486
    %v4491 = vsel %vm407, %v4486, %v4488
    %v4497 = vmul.f32 %v4165, %v4482
    %v4498 = vmul.f32 %v4164, %v4489
    %v4499 = vmul.f32 %v4163, %v4490
    %v4500 = vmul.f32 %v4162, %v4491
    %v4501 = vmul.f32 %v974, %v4488
    %v4507 = vrot.slane %v4497, 4
    %v4508 = vrot.slane %v4498, 4
    %v4509 = vrot.slane %v4499, 4
    %v4510 = vrot.slane %v4500, 4
    %v4511 = vrot.slane %v4501, 4
    %4512 = vrot.lane.b32.xlu0 %v4507, 64
    %v4513 = vpop.permute.xlu0 %4512
    %4514 = vrot.lane.b32.xlu0 %v4508, 64
    %v4515 = vpop.permute.xlu0 %4514
    %4516 = vrot.lane.b32.xlu0 %v4509, 64
    %v4517 = vpop.permute.xlu0 %4516
    %4518 = vrot.lane.b32.xlu0 %v4510, 64
    %v4519 = vpop.permute.xlu0 %4518
    %4520 = vrot.lane.b32.xlu0 %v4511, 64
    %v4521 = vpop.permute.xlu0 %4520
    %v4522 = vsel %vm160, %v4513, %v4515
    %v4523 = vsel %vm160, %v4515, %v4517
    %v4524 = vsel %vm160, %v4517, %v4519
    %v4525 = vsel %vm160, %v4519, %v4521
    %v4531 = vsel %vm170, %v4476, %v4513
    %v4532 = vsel %vm170, %v4477, %v4522
    %v4533 = vsel %vm170, %v4478, %v4523
    %v4534 = vsel %vm170, %v4479, %v4524
    %v4535 = vsel %vm170, %v4480, %v4525
    %4541 = vrot.lane.b32.xlu0 %v4531, 56
    %v4542 = vpop.permute.xlu0 %4541
    %4543 = vrot.lane.b32.xlu0 %v4532, 56
    %v4544 = vpop.permute.xlu0 %4543
    %4545 = vrot.lane.b32.xlu0 %v4533, 56
    %v4546 = vpop.permute.xlu0 %4545
    %4547 = vrot.lane.b32.xlu0 %v4534, 56
    %v4548 = vpop.permute.xlu0 %4547
    %4549 = vrot.lane.b32.xlu0 %v4535, 56
    %v4550 = vpop.permute.xlu0 %4549
    %v4551 = vsel %vm104, %v4542, %v4544
    %v4552 = vsel %vm104, %v4544, %v4546
    %v4553 = vsel %vm104, %v4546, %v4548
    %v4554 = vsel %vm104, %v4548, %v4550
    %4559 = vst [vmem:[#allocation2 + $0x300] sm:$0xff] %v4551
    %4560 = vst [vmem:[#allocation2 + $0x308] sm:$0xff] %v4552
    %4561 = vst [vmem:[#allocation2 + $0x310] sm:$0xff] %v4553
    %4562 = vst [vmem:[#allocation2 + $0x318] sm:$0xff] %v4554
    %v4563 = vmul.f32 %v4165, %v4461
    %v4564 = vmul.f32 %v4164, %v4468
    %v4565 = vmul.f32 %v4163, %v4469
    %v4566 = vmul.f32 %v4162, %v4470
    %v4567 = vmul.f32 %v974, %v4467
    %v4568 = vsel %vm170, %v4563, 0.0
    %v4569 = vsel %vm170, %v4564, 0.0
    %v4570 = vsel %vm170, %v4565, 0.0
    %v4571 = vsel %vm170, %v4566, 0.0
    %v4572 = vsel %vm170, %v4567, 0.0
    %4578 = vrot.lane.b32.xlu0 %v4568, 56
    %v4579 = vpop.permute.xlu0 %4578
    %4580 = vrot.lane.b32.xlu0 %v4569, 56
    %v4581 = vpop.permute.xlu0 %4580
    %4582 = vrot.lane.b32.xlu0 %v4570, 56
    %v4583 = vpop.permute.xlu0 %4582
    %4584 = vrot.lane.b32.xlu0 %v4571, 56
    %v4585 = vpop.permute.xlu0 %4584
    %4586 = vrot.lane.b32.xlu0 %v4572, 56
    %v4587 = vpop.permute.xlu0 %4586
    %v4588 = vsel %vm104, %v4579, %v4581
    %v4589 = vsel %vm104, %v4581, %v4583
    %v4590 = vsel %vm104, %v4583, %v4585
    %v4591 = vsel %vm104, %v4585, %v4587
    %4596 = vst [vmem:[#allocation2 + $0x340] sm:$0xff] %v4588
    %4597 = vst [vmem:[#allocation2 + $0x348] sm:$0xff] %v4589
    %4598 = vst [vmem:[#allocation2 + $0x350] sm:$0xff] %v4590
    %4599 = vst [vmem:[#allocation2 + $0x358] sm:$0xff] %v4591
    %4600 = vrot.lane.b32.xlu0 %v3254, 1
    %v4601 = vpop.permute.xlu0 %4600
    %4602 = vrot.lane.b32.xlu0 %v3255, 1
    %v4603 = vpop.permute.xlu0 %4602
    %4604 = vrot.lane.b32.xlu0 %v3256, 1
    %v4605 = vpop.permute.xlu0 %4604
    %4606 = vrot.lane.b32.xlu0 %v3257, 1
    %v4607 = vpop.permute.xlu0 %4606
    %v4608 = vsel %vm72, %v4607, %v61
    %v4609 = vsel %vm72, %v4605, %v4607
    %v4610 = vsel %vm72, %v4603, %v4605
    %v4611 = vsel %vm72, %v4601, %v4603
    %v4612 = vsel %vm72, %v61, %v4601
    %v4613 = vld [vmem:[#allocation6] ss:$8 sm:$0xf]
    %v4615 = vlaneseq
    %v4616 = vshrl.u32 %v4615, 7
    %v4617 = vsub.s32 0, %v4616
    %v4618 = vrot.slane %v4613, %v4617
    %v4619 = vlaneseq
    %v4620 = vshrl.u32 %v4619, 7
    %v4621 = vsub.s32 1, %v4620
    %v4622 = vrot.slane %v4613, %v4621
    %v4623 = vlaneseq
    %v4624 = vshrl.u32 %v4623, 7
    %v4625 = vsub.s32 2, %v4624
    %v4626 = vrot.slane %v4613, %v4625
    %v4627 = vlaneseq
    %v4628 = vshrl.u32 %v4627, 7
    %v4629 = vsub.s32 3, %v4628
    %v4630 = vrot.slane %v4613, %v4629
    %4631 = vrot.lane.b32.xlu0 %v4618, 56
    %v4632 = vpop.permute.xlu0 %4631
    %4633 = vrot.lane.b32.xlu0 %v4622, 56
    %v4634 = vpop.permute.xlu0 %4633
    %4635 = vrot.lane.b32.xlu0 %v4626, 56
    %v4636 = vpop.permute.xlu0 %4635
    %4637 = vrot.lane.b32.xlu0 %v4630, 56
    %v4638 = vpop.permute.xlu0 %4637
    %v4639 = vsel %vm104, %v4632, %v4634
    %v4640 = vsel %vm104, %v4634, %v4636
    %v4641 = vsel %vm104, %v4636, %v4638
    %v4647 = vmul.f32 %v61, %v4632
    %v4648 = vmul.f32 %v4612, %v4639
    %v4649 = vmul.f32 %v4611, %v4640
    %v4650 = vmul.f32 %v4610, %v4641
    %v4651 = vmul.f32 %v4609, %v4638
    %4652 = vrot.lane.b32.xlu0 %v4618, 120
    %v4653 = vpop.permute.xlu0 %4652
    %4654 = vrot.lane.b32.xlu0 %v4622, 120
    %v4655 = vpop.permute.xlu0 %4654
    %4656 = vrot.lane.b32.xlu0 %v4626, 120
    %v4657 = vpop.permute.xlu0 %4656
    %4658 = vrot.lane.b32.xlu0 %v4630, 120
    %v4659 = vpop.permute.xlu0 %4658
    %v4660 = vsel %vm126, %v4653, %v4655
    %v4661 = vsel %vm126, %v4655, %v4657
    %v4662 = vsel %vm126, %v4657, %v4659
    %v4668 = vmul.f32 %v61, %v4653
    %v4669 = vmul.f32 %v4612, %v4660
    %v4670 = vmul.f32 %v4611, %v4661
    %v4671 = vmul.f32 %v4610, %v4662
    %v4672 = vmul.f32 %v4609, %v4659
    %v4678 = vrot.slane %v4668, 4
    %v4679 = vrot.slane %v4669, 4
    %v4680 = vrot.slane %v4670, 4
    %v4681 = vrot.slane %v4671, 4
    %v4682 = vrot.slane %v4672, 4
    %4683 = vrot.lane.b32.xlu0 %v4678, 64
    %v4684 = vpop.permute.xlu0 %4683
    %4685 = vrot.lane.b32.xlu0 %v4679, 64
    %v4686 = vpop.permute.xlu0 %4685
    %4687 = vrot.lane.b32.xlu0 %v4680, 64
    %v4688 = vpop.permute.xlu0 %4687
    %4689 = vrot.lane.b32.xlu0 %v4681, 64
    %v4690 = vpop.permute.xlu0 %4689
    %4691 = vrot.lane.b32.xlu0 %v4682, 64
    %v4692 = vpop.permute.xlu0 %4691
    %v4693 = vsel %vm160, %v4684, %v4686
    %v4694 = vsel %vm160, %v4686, %v4688
    %v4695 = vsel %vm160, %v4688, %v4690
    %v4696 = vsel %vm160, %v4690, %v4692
    %v4702 = vsel %vm170, %v4647, %v4693
    %v4703 = vsel %vm170, %v4648, %v4694
    %v4704 = vsel %vm170, %v4649, %v4695
    %v4705 = vsel %vm170, %v4650, %v4696
    %v4706 = vsel %vm170, %v4651, %v4692
    %4712 = vrot.lane.b32.xlu0 %v4702, 72
    %v4713 = vpop.permute.xlu0 %4712
    %4714 = vrot.lane.b32.xlu0 %v4703, 72
    %v4715 = vpop.permute.xlu0 %4714
    %4716 = vrot.lane.b32.xlu0 %v4704, 72
    %v4717 = vpop.permute.xlu0 %4716
    %4718 = vrot.lane.b32.xlu0 %v4705, 72
    %v4719 = vpop.permute.xlu0 %4718
    %4720 = vrot.lane.b32.xlu0 %v4706, 72
    %v4721 = vpop.permute.xlu0 %4720
    %v4722 = vsel %vm191, %v4713, %v4715
    %v4723 = vsel %vm191, %v4715, %v4717
    %v4724 = vsel %vm191, %v4717, %v4719
    %v4725 = vsel %vm191, %v4719, %v4721
    %4730 = vst [vmem:[#allocation2 + $0x20] sm:$0xff] %v4722
    %4731 = vst [vmem:[#allocation2 + $0x28] sm:$0xff] %v4723
    %4732 = vst [vmem:[#allocation2 + $0x30] sm:$0xff] %v4724
    %4733 = vst [vmem:[#allocation2 + $0x38] sm:$0xff] %v4725
    %v4734 = vmul.f32 %v4612, %v4632
    %v4735 = vmul.f32 %v4611, %v4639
    %v4736 = vmul.f32 %v4610, %v4640
    %v4737 = vmul.f32 %v4609, %v4641
    %v4738 = vmul.f32 %v4608, %v4638
    %v4739 = vld [vmem:[%s209] ss:$8 sm:$0xf]
    %v4741 = vlaneseq
    %v4742 = vshrl.u32 %v4741, 7
    %v4743 = vsub.s32 0, %v4742
    %v4744 = vrot.slane %v4739, %v4743
    %v4745 = vlaneseq
    %v4746 = vshrl.u32 %v4745, 7
    %v4747 = vsub.s32 1, %v4746
    %v4748 = vrot.slane %v4739, %v4747
    %v4749 = vlaneseq
    %v4750 = vshrl.u32 %v4749, 7
    %v4751 = vsub.s32 2, %v4750
    %v4752 = vrot.slane %v4739, %v4751
    %v4753 = vlaneseq
    %v4754 = vshrl.u32 %v4753, 7
    %v4755 = vsub.s32 3, %v4754
    %v4756 = vrot.slane %v4739, %v4755
    %4761 = vrot.lane.b32.xlu0 %v4744, 64
    %v4762 = vpop.permute.xlu0 %4761
    %4763 = vrot.lane.b32.xlu0 %v4748, 64
    %v4764 = vpop.permute.xlu0 %4763
    %4765 = vrot.lane.b32.xlu0 %v4752, 64
    %v4766 = vpop.permute.xlu0 %4765
    %4767 = vrot.lane.b32.xlu0 %v4756, 64
    %v4768 = vpop.permute.xlu0 %4767
    %v4769 = vsel %vm160, %v4762, %v4764
    %v4770 = vsel %vm160, %v4764, %v4766
    %v4771 = vsel %vm160, %v4766, %v4768
    %v4777 = vmul.f32 %v61, %v4762
    %v4778 = vmul.f32 %v4612, %v4769
    %v4779 = vmul.f32 %v4611, %v4770
    %v4780 = vmul.f32 %v4610, %v4771
    %v4781 = vmul.f32 %v4609, %v4768
    %v4787 = vrot.slane %v4777, 4
    %v4788 = vrot.slane %v4778, 4
    %v4789 = vrot.slane %v4779, 4
    %v4790 = vrot.slane %v4780, 4
    %v4791 = vrot.slane %v4781, 4
    %4792 = vrot.lane.b32.xlu0 %v4787, 120
    %v4793 = vpop.permute.xlu0 %4792
    %4794 = vrot.lane.b32.xlu0 %v4788, 120
    %v4795 = vpop.permute.xlu0 %4794
    %4796 = vrot.lane.b32.xlu0 %v4789, 120
    %v4797 = vpop.permute.xlu0 %4796
    %4798 = vrot.lane.b32.xlu0 %v4790, 120
    %v4799 = vpop.permute.xlu0 %4798
    %4800 = vrot.lane.b32.xlu0 %v4791, 120
    %v4801 = vpop.permute.xlu0 %4800
    %v4802 = vsel %vm126, %v4793, %v4795
    %v4803 = vsel %vm126, %v4795, %v4797
    %v4804 = vsel %vm126, %v4797, %v4799
    %v4805 = vsel %vm126, %v4799, %v4801
    %v4811 = vsel %vm170, %v4734, %v4802
    %v4812 = vsel %vm170, %v4735, %v4803
    %v4813 = vsel %vm170, %v4736, %v4804
    %v4814 = vsel %vm170, %v4737, %v4805
    %v4815 = vsel %vm170, %v4738, %v4801
    %4821 = vrot.lane.b32.xlu0 %v4811, 72
    %v4822 = vpop.permute.xlu0 %4821
    %4823 = vrot.lane.b32.xlu0 %v4812, 72
    %v4824 = vpop.permute.xlu0 %4823
    %4825 = vrot.lane.b32.xlu0 %v4813, 72
    %v4826 = vpop.permute.xlu0 %4825
    %4827 = vrot.lane.b32.xlu0 %v4814, 72
    %v4828 = vpop.permute.xlu0 %4827
    %4829 = vrot.lane.b32.xlu0 %v4815, 72
    %v4830 = vpop.permute.xlu0 %4829
    %v4831 = vsel %vm191, %v4822, %v4824
    %v4832 = vsel %vm191, %v4824, %v4826
    %v4833 = vsel %vm191, %v4826, %v4828
    %v4834 = vsel %vm191, %v4828, %v4830
    %4839 = vst [vmem:[#allocation2 + $0x60] sm:$0xff] %v4831
    %4840 = vst [vmem:[#allocation2 + $0x68] sm:$0xff] %v4832
    %4841 = vst [vmem:[#allocation2 + $0x70] sm:$0xff] %v4833
    %4842 = vst [vmem:[#allocation2 + $0x78] sm:$0xff] %v4834
    %v4843 = vmul.f32 %v4612, %v4744
    %v4844 = vmul.f32 %v4611, %v4748
    %v4845 = vmul.f32 %v4610, %v4752
    %v4846 = vmul.f32 %v4609, %v4756
    %v4847 = vmul.f32 %v4612, %v4762
    %v4848 = vmul.f32 %v4611, %v4769
    %v4849 = vmul.f32 %v4610, %v4770
    %v4850 = vmul.f32 %v4609, %v4771
    %v4851 = vmul.f32 %v4608, %v4768
    %v4857 = vrot.slane %v4847, 4
    %v4858 = vrot.slane %v4848, 4
    %v4859 = vrot.slane %v4849, 4
    %v4860 = vrot.slane %v4850, 4
    %v4861 = vrot.slane %v4851, 4
    %4862 = vrot.lane.b32.xlu0 %v4857, 64
    %v4863 = vpop.permute.xlu0 %4862
    %4864 = vrot.lane.b32.xlu0 %v4858, 64
    %v4865 = vpop.permute.xlu0 %4864
    %4866 = vrot.lane.b32.xlu0 %v4859, 64
    %v4867 = vpop.permute.xlu0 %4866
    %4868 = vrot.lane.b32.xlu0 %v4860, 64
    %v4869 = vpop.permute.xlu0 %4868
    %4870 = vrot.lane.b32.xlu0 %v4861, 64
    %v4871 = vpop.permute.xlu0 %4870
    %v4872 = vsel %vm160, %v4863, %v4865
    %v4873 = vsel %vm160, %v4865, %v4867
    %v4874 = vsel %vm160, %v4867, %v4869
    %v4875 = vsel %vm160, %v4869, %v4871
    %v4880 = vsel %vm170, %v4843, %v4872
    %v4881 = vsel %vm170, %v4844, %v4873
    %v4882 = vsel %vm170, %v4845, %v4874
    %v4883 = vsel %vm170, %v4846, %v4875
    %4884 = vst [vmem:[#allocation2 + $0xa0] sm:$0xff] %v4880
    %4885 = vst [vmem:[#allocation2 + $0xa8] sm:$0xff] %v4881
    %4886 = vst [vmem:[#allocation2 + $0xb0] sm:$0xff] %v4882
    %4887 = vst [vmem:[#allocation2 + $0xb8] sm:$0xff] %v4883
    %v4888 = vld [vmem:[%s359] ss:$8 sm:$0xf]
    %v4890 = vlaneseq
    %v4891 = vshrl.u32 %v4890, 7
    %v4892 = vsub.s32 0, %v4891
    %v4893 = vrot.slane %v4888, %v4892
    %v4894 = vlaneseq
    %v4895 = vshrl.u32 %v4894, 7
    %v4896 = vsub.s32 1, %v4895
    %v4897 = vrot.slane %v4888, %v4896
    %v4898 = vlaneseq
    %v4899 = vshrl.u32 %v4898, 7
    %v4900 = vsub.s32 2, %v4899
    %v4901 = vrot.slane %v4888, %v4900
    %v4902 = vlaneseq
    %v4903 = vshrl.u32 %v4902, 7
    %v4904 = vsub.s32 3, %v4903
    %v4905 = vrot.slane %v4888, %v4904
    %4906 = vrot.lane.b32.xlu0 %v4893, 72
    %v4907 = vpop.permute.xlu0 %4906
    %4908 = vrot.lane.b32.xlu0 %v4897, 72
    %v4909 = vpop.permute.xlu0 %4908
    %4910 = vrot.lane.b32.xlu0 %v4901, 72
    %v4911 = vpop.permute.xlu0 %4910
    %4912 = vrot.lane.b32.xlu0 %v4905, 72
    %v4913 = vpop.permute.xlu0 %4912
    %v4914 = vsel %vm191, %v4907, %v4909
    %v4915 = vsel %vm191, %v4909, %v4911
    %v4916 = vsel %vm191, %v4911, %v4913
    %v4922 = vmul.f32 %v61, %v4907
    %v4923 = vmul.f32 %v4612, %v4914
    %v4924 = vmul.f32 %v4611, %v4915
    %v4925 = vmul.f32 %v4610, %v4916
    %v4926 = vmul.f32 %v4609, %v4913
    %4927 = vrot.lane.b32.xlu0 %v4893, 8
    %v4928 = vpop.permute.xlu0 %4927
    %4929 = vrot.lane.b32.xlu0 %v4897, 8
    %v4930 = vpop.permute.xlu0 %4929
    %4931 = vrot.lane.b32.xlu0 %v4901, 8
    %v4932 = vpop.permute.xlu0 %4931
    %4933 = vrot.lane.b32.xlu0 %v4905, 8
    %v4934 = vpop.permute.xlu0 %4933
    %v4935 = vsel %vm407, %v4928, %v4930
    %v4936 = vsel %vm407, %v4930, %v4932
    %v4937 = vsel %vm407, %v4932, %v4934
    %v4943 = vmul.f32 %v4612, %v4928
    %v4944 = vmul.f32 %v4611, %v4935
    %v4945 = vmul.f32 %v4610, %v4936
    %v4946 = vmul.f32 %v4609, %v4937
    %v4947 = vmul.f32 %v4608, %v4934
    %v4953 = vrot.slane %v4943, 4
    %v4954 = vrot.slane %v4944, 4
    %v4955 = vrot.slane %v4945, 4
    %v4956 = vrot.slane %v4946, 4
    %v4957 = vrot.slane %v4947, 4
    %4958 = vrot.lane.b32.xlu0 %v4953, 64
    %v4959 = vpop.permute.xlu0 %4958
    %4960 = vrot.lane.b32.xlu0 %v4954, 64
    %v4961 = vpop.permute.xlu0 %4960
    %4962 = vrot.lane.b32.xlu0 %v4955, 64
    %v4963 = vpop.permute.xlu0 %4962
    %4964 = vrot.lane.b32.xlu0 %v4956, 64
    %v4965 = vpop.permute.xlu0 %4964
    %4966 = vrot.lane.b32.xlu0 %v4957, 64
    %v4967 = vpop.permute.xlu0 %4966
    %v4968 = vsel %vm160, %v4959, %v4961
    %v4969 = vsel %vm160, %v4961, %v4963
    %v4970 = vsel %vm160, %v4963, %v4965
    %v4971 = vsel %vm160, %v4965, %v4967
    %v4977 = vsel %vm170, %v4922, %v4959
    %v4978 = vsel %vm170, %v4923, %v4968
    %v4979 = vsel %vm170, %v4924, %v4969
    %v4980 = vsel %vm170, %v4925, %v4970
    %v4981 = vsel %vm170, %v4926, %v4971
    %4987 = vrot.lane.b32.xlu0 %v4977, 56
    %v4988 = vpop.permute.xlu0 %4987
    %4989 = vrot.lane.b32.xlu0 %v4978, 56
    %v4990 = vpop.permute.xlu0 %4989
    %4991 = vrot.lane.b32.xlu0 %v4979, 56
    %v4992 = vpop.permute.xlu0 %4991
    %4993 = vrot.lane.b32.xlu0 %v4980, 56
    %v4994 = vpop.permute.xlu0 %4993
    %4995 = vrot.lane.b32.xlu0 %v4981, 56
    %v4996 = vpop.permute.xlu0 %4995
    %v4997 = vsel %vm104, %v4988, %v4990
    %v4998 = vsel %vm104, %v4990, %v4992
    %v4999 = vsel %vm104, %v4992, %v4994
    %v5000 = vsel %vm104, %v4994, %v4996
    %5005 = vst [vmem:[#allocation2 + $0xe0] sm:$0xff] %v4997
    %5006 = vst [vmem:[#allocation2 + $0xe8] sm:$0xff] %v4998
    %5007 = vst [vmem:[#allocation2 + $0xf0] sm:$0xff] %v4999
    %5008 = vst [vmem:[#allocation2 + $0xf8] sm:$0xff] %v5000
    %v5009 = vmul.f32 %v4612, %v4907
    %v5010 = vmul.f32 %v4611, %v4914
    %v5011 = vmul.f32 %v4610, %v4915
    %v5012 = vmul.f32 %v4609, %v4916
    %v5013 = vmul.f32 %v4608, %v4913
    %v5014 = vld [vmem:[%s487] ss:$8 sm:$0xf]
    %v5016 = vlaneseq
    %v5017 = vshrl.u32 %v5016, 7
    %v5018 = vsub.s32 0, %v5017
    %v5019 = vrot.slane %v5014, %v5018
    %v5020 = vlaneseq
    %v5021 = vshrl.u32 %v5020, 7
    %v5022 = vsub.s32 1, %v5021
    %v5023 = vrot.slane %v5014, %v5022
    %v5024 = vlaneseq
    %v5025 = vshrl.u32 %v5024, 7
    %v5026 = vsub.s32 2, %v5025
    %v5027 = vrot.slane %v5014, %v5026
    %v5028 = vlaneseq
    %v5029 = vshrl.u32 %v5028, 7
    %v5030 = vsub.s32 3, %v5029
    %v5031 = vrot.slane %v5014, %v5030
    %5032 = vrot.lane.b32.xlu0 %v5019, 56
    %v5033 = vpop.permute.xlu0 %5032
    %5034 = vrot.lane.b32.xlu0 %v5023, 56
    %v5035 = vpop.permute.xlu0 %5034
    %5036 = vrot.lane.b32.xlu0 %v5027, 56
    %v5037 = vpop.permute.xlu0 %5036
    %5038 = vrot.lane.b32.xlu0 %v5031, 56
    %v5039 = vpop.permute.xlu0 %5038
    %v5040 = vsel %vm104, %v5033, %v5035
    %v5041 = vsel %vm104, %v5035, %v5037
    %v5042 = vsel %vm104, %v5037, %v5039
    %v5048 = vmul.f32 %v5033, 0.0
    %v5049 = vmul.f32 %v3254, %v5040
    %v5050 = vmul.f32 %v3255, %v5041
    %v5051 = vmul.f32 %v3256, %v5042
    %v5052 = vmul.f32 %v3257, %v5039
    %v5058 = vrot.slane %v5048, 4
    %v5059 = vrot.slane %v5049, 4
    %v5060 = vrot.slane %v5050, 4
    %v5061 = vrot.slane %v5051, 4
    %v5062 = vrot.slane %v5052, 4
    %5063 = vrot.lane.b32.xlu0 %v5058, 16
    %v5064 = vpop.permute.xlu0 %5063
    %5065 = vrot.lane.b32.xlu0 %v5059, 16
    %v5066 = vpop.permute.xlu0 %5065
    %5067 = vrot.lane.b32.xlu0 %v5060, 16
    %v5068 = vpop.permute.xlu0 %5067
    %5069 = vrot.lane.b32.xlu0 %v5061, 16
    %v5070 = vpop.permute.xlu0 %5069
    %5071 = vrot.lane.b32.xlu0 %v5062, 16
    %v5072 = vpop.permute.xlu0 %5071
    %v5073 = vsel %vm547, %v5064, %v5066
    %v5074 = vsel %vm547, %v5066, %v5068
    %v5075 = vsel %vm547, %v5068, %v5070
    %v5076 = vsel %vm547, %v5070, %v5072
    %v5082 = vsel %vm170, %v5009, %v5064
    %v5083 = vsel %vm170, %v5010, %v5073
    %v5084 = vsel %vm170, %v5011, %v5074
    %v5085 = vsel %vm170, %v5012, %v5075
    %v5086 = vsel %vm170, %v5013, %v5076
    %5092 = vrot.lane.b32.xlu0 %v5082, 56
    %v5093 = vpop.permute.xlu0 %5092
    %5094 = vrot.lane.b32.xlu0 %v5083, 56
    %v5095 = vpop.permute.xlu0 %5094
    %5096 = vrot.lane.b32.xlu0 %v5084, 56
    %v5097 = vpop.permute.xlu0 %5096
    %5098 = vrot.lane.b32.xlu0 %v5085, 56
    %v5099 = vpop.permute.xlu0 %5098
    %5100 = vrot.lane.b32.xlu0 %v5086, 56
    %v5101 = vpop.permute.xlu0 %5100
    %v5102 = vsel %vm104, %v5093, %v5095
    %v5103 = vsel %vm104, %v5095, %v5097
    %v5104 = vsel %vm104, %v5097, %v5099
    %v5105 = vsel %vm104, %v5099, %v5101
    %5110 = vst [vmem:[#allocation2 + $0x120] sm:$0xff] %v5102
    %5111 = vst [vmem:[#allocation2 + $0x128] sm:$0xff] %v5103
    %5112 = vst [vmem:[#allocation2 + $0x130] sm:$0xff] %v5104
    %5113 = vst [vmem:[#allocation2 + $0x138] sm:$0xff] %v5105
    %5114 = vrot.lane.b32.xlu0 %v5019, 120
    %v5115 = vpop.permute.xlu0 %5114
    %5116 = vrot.lane.b32.xlu0 %v5023, 120
    %v5117 = vpop.permute.xlu0 %5116
    %5118 = vrot.lane.b32.xlu0 %v5027, 120
    %v5119 = vpop.permute.xlu0 %5118
    %5120 = vrot.lane.b32.xlu0 %v5031, 120
    %v5121 = vpop.permute.xlu0 %5120
    %v5122 = vsel %vm126, %v5115, %v5117
    %v5123 = vsel %vm126, %v5117, %v5119
    %v5124 = vsel %vm126, %v5119, %v5121
    %v5130 = vmul.f32 %v5115, 0.0
    %v5131 = vmul.f32 %v3254, %v5122
    %v5132 = vmul.f32 %v3255, %v5123
    %v5133 = vmul.f32 %v3256, %v5124
    %v5134 = vmul.f32 %v3257, %v5121
    %v5135 = vmul.f32 %v3254, %v5033
    %v5136 = vmul.f32 %v3255, %v5040
    %v5137 = vmul.f32 %v3256, %v5041
    %v5138 = vmul.f32 %v3257, %v5042
    %v5139 = vmul.f32 %v5039, 0.0
    %v5145 = vrot.slane %v5135, 4
    %v5146 = vrot.slane %v5136, 4
    %v5147 = vrot.slane %v5137, 4
    %v5148 = vrot.slane %v5138, 4
    %v5149 = vrot.slane %v5139, 4
    %5150 = vrot.lane.b32.xlu0 %v5145, 64
    %v5151 = vpop.permute.xlu0 %5150
    %5152 = vrot.lane.b32.xlu0 %v5146, 64
    %v5153 = vpop.permute.xlu0 %5152
    %5154 = vrot.lane.b32.xlu0 %v5147, 64
    %v5155 = vpop.permute.xlu0 %5154
    %5156 = vrot.lane.b32.xlu0 %v5148, 64
    %v5157 = vpop.permute.xlu0 %5156
    %5158 = vrot.lane.b32.xlu0 %v5149, 64
    %v5159 = vpop.permute.xlu0 %5158
    %v5160 = vsel %vm160, %v5151, %v5153
    %v5161 = vsel %vm160, %v5153, %v5155
    %v5162 = vsel %vm160, %v5155, %v5157
    %v5163 = vsel %vm160, %v5157, %v5159
    %v5169 = vsel %vm170, %v5130, %v5151
    %v5170 = vsel %vm170, %v5131, %v5160
    %v5171 = vsel %vm170, %v5132, %v5161
    %v5172 = vsel %vm170, %v5133, %v5162
    %v5173 = vsel %vm170, %v5134, %v5163
    %5179 = vrot.lane.b32.xlu0 %v5169, 8
    %v5180 = vpop.permute.xlu0 %5179
    %5181 = vrot.lane.b32.xlu0 %v5170, 8
    %v5182 = vpop.permute.xlu0 %5181
    %5183 = vrot.lane.b32.xlu0 %v5171, 8
    %v5184 = vpop.permute.xlu0 %5183
    %5185 = vrot.lane.b32.xlu0 %v5172, 8
    %v5186 = vpop.permute.xlu0 %5185
    %5187 = vrot.lane.b32.xlu0 %v5173, 8
    %v5188 = vpop.permute.xlu0 %5187
    %v5189 = vsel %vm407, %v5180, %v5182
    %v5190 = vsel %vm407, %v5182, %v5184
    %v5191 = vsel %vm407, %v5184, %v5186
    %v5192 = vsel %vm407, %v5186, %v5188
    %5197 = vst [vmem:[#allocation2 + $0x160] sm:$0xff] %v5189
    %5198 = vst [vmem:[#allocation2 + $0x168] sm:$0xff] %v5190
    %5199 = vst [vmem:[#allocation2 + $0x170] sm:$0xff] %v5191
    %5200 = vst [vmem:[#allocation2 + $0x178] sm:$0xff] %v5192
    %v5201 = vld [vmem:[%s676] ss:$8 sm:$0xf]
    %v5203 = vlaneseq
    %v5204 = vshrl.u32 %v5203, 7
    %v5205 = vsub.s32 0, %v5204
    %v5206 = vrot.slane %v5201, %v5205
    %v5207 = vlaneseq
    %v5208 = vshrl.u32 %v5207, 7
    %v5209 = vsub.s32 1, %v5208
    %v5210 = vrot.slane %v5201, %v5209
    %v5211 = vlaneseq
    %v5212 = vshrl.u32 %v5211, 7
    %v5213 = vsub.s32 2, %v5212
    %v5214 = vrot.slane %v5201, %v5213
    %v5215 = vlaneseq
    %v5216 = vshrl.u32 %v5215, 7
    %v5217 = vsub.s32 3, %v5216
    %v5218 = vrot.slane %v5201, %v5217
    %5223 = vrot.lane.b32.xlu0 %v5206, 64
    %v5224 = vpop.permute.xlu0 %5223
    %5225 = vrot.lane.b32.xlu0 %v5210, 64
    %v5226 = vpop.permute.xlu0 %5225
    %5227 = vrot.lane.b32.xlu0 %v5214, 64
    %v5228 = vpop.permute.xlu0 %5227
    %5229 = vrot.lane.b32.xlu0 %v5218, 64
    %v5230 = vpop.permute.xlu0 %5229
    %v5231 = vsel %vm160, %v5224, %v5226
    %v5232 = vsel %vm160, %v5226, %v5228
    %v5233 = vsel %vm160, %v5228, %v5230
    %v5239 = vmul.f32 %v5224, 0.0
    %v5240 = vmul.f32 %v3254, %v5231
    %v5241 = vmul.f32 %v3255, %v5232
    %v5242 = vmul.f32 %v3256, %v5233
    %v5243 = vmul.f32 %v3257, %v5230
    %v5244 = vmul.f32 %v3254, %v5206
    %v5245 = vmul.f32 %v3255, %v5210
    %v5246 = vmul.f32 %v3256, %v5214
    %v5247 = vmul.f32 %v3257, %v5218
    %v5252 = vrot.slane %v5244, 4
    %v5253 = vrot.slane %v5245, 4
    %v5254 = vrot.slane %v5246, 4
    %v5255 = vrot.slane %v5247, 4
    %5256 = vrot.lane.b32.xlu0 %v5252, 64
    %v5257 = vpop.permute.xlu0 %5256
    %5258 = vrot.lane.b32.xlu0 %v5253, 64
    %v5259 = vpop.permute.xlu0 %5258
    %5260 = vrot.lane.b32.xlu0 %v5254, 64
    %v5261 = vpop.permute.xlu0 %5260
    %5262 = vrot.lane.b32.xlu0 %v5255, 64
    %v5263 = vpop.permute.xlu0 %5262
    %v5264 = vsel %vm160, %v5257, %v5259
    %v5265 = vsel %vm160, %v5259, %v5261
    %v5266 = vsel %vm160, %v5261, %v5263
    %v5272 = vsel %vm170, %v5239, %v5257
    %v5273 = vsel %vm170, %v5240, %v5264
    %v5274 = vsel %vm170, %v5241, %v5265
    %v5275 = vsel %vm170, %v5242, %v5266
    %v5276 = vsel %vm170, %v5243, %v5263
    %5282 = vrot.lane.b32.xlu0 %v5272, 64
    %v5283 = vpop.permute.xlu0 %5282
    %5284 = vrot.lane.b32.xlu0 %v5273, 64
    %v5285 = vpop.permute.xlu0 %5284
    %5286 = vrot.lane.b32.xlu0 %v5274, 64
    %v5287 = vpop.permute.xlu0 %5286
    %5288 = vrot.lane.b32.xlu0 %v5275, 64
    %v5289 = vpop.permute.xlu0 %5288
    %5290 = vrot.lane.b32.xlu0 %v5276, 64
    %v5291 = vpop.permute.xlu0 %5290
    %v5292 = vsel %vm160, %v5283, %v5285
    %v5293 = vsel %vm160, %v5285, %v5287
    %v5294 = vsel %vm160, %v5287, %v5289
    %v5295 = vsel %vm160, %v5289, %v5291
    %5300 = vst [vmem:[#allocation2 + $0x1a0] sm:$0xff] %v5292
    %5301 = vst [vmem:[#allocation2 + $0x1a8] sm:$0xff] %v5293
    %5302 = vst [vmem:[#allocation2 + $0x1b0] sm:$0xff] %v5294
    %5303 = vst [vmem:[#allocation2 + $0x1b8] sm:$0xff] %v5295
    %v5304 = vmul.f32 %v3254, %v5224
    %v5305 = vmul.f32 %v3255, %v5231
    %v5306 = vmul.f32 %v3256, %v5232
    %v5307 = vmul.f32 %v3257, %v5233
    %v5308 = vmul.f32 %v5230, 0.0
    %v5309 = vld [vmem:[%s785] ss:$8 sm:$0xf]
    %v5311 = vlaneseq
    %v5312 = vshrl.u32 %v5311, 7
    %v5313 = vsub.s32 0, %v5312
    %v5314 = vrot.slane %v5309, %v5313
    %v5315 = vlaneseq
    %v5316 = vshrl.u32 %v5315, 7
    %v5317 = vsub.s32 1, %v5316
    %v5318 = vrot.slane %v5309, %v5317
    %v5319 = vlaneseq
    %v5320 = vshrl.u32 %v5319, 7
    %v5321 = vsub.s32 2, %v5320
    %v5322 = vrot.slane %v5309, %v5321
    %v5323 = vlaneseq
    %v5324 = vshrl.u32 %v5323, 7
    %v5325 = vsub.s32 3, %v5324
    %v5326 = vrot.slane %v5309, %v5325
    %5327 = vrot.lane.b32.xlu0 %v5314, 72
    %v5328 = vpop.permute.xlu0 %5327
    %5329 = vrot.lane.b32.xlu0 %v5318, 72
    %v5330 = vpop.permute.xlu0 %5329
    %5331 = vrot.lane.b32.xlu0 %v5322, 72
    %v5332 = vpop.permute.xlu0 %5331
    %5333 = vrot.lane.b32.xlu0 %v5326, 72
    %v5334 = vpop.permute.xlu0 %5333
    %v5335 = vsel %vm191, %v5328, %v5330
    %v5336 = vsel %vm191, %v5330, %v5332
    %v5337 = vsel %vm191, %v5332, %v5334
    %v5343 = vmul.f32 %v5328, 0.0
    %v5344 = vmul.f32 %v3254, %v5335
    %v5345 = vmul.f32 %v3255, %v5336
    %v5346 = vmul.f32 %v3256, %v5337
    %v5347 = vmul.f32 %v3257, %v5334
    %v5353 = vrot.slane %v5343, 4
    %v5354 = vrot.slane %v5344, 4
    %v5355 = vrot.slane %v5345, 4
    %v5356 = vrot.slane %v5346, 4
    %v5357 = vrot.slane %v5347, 4
    %5358 = vrot.lane.b32.xlu0 %v5353, 120
    %v5359 = vpop.permute.xlu0 %5358
    %5360 = vrot.lane.b32.xlu0 %v5354, 120
    %v5361 = vpop.permute.xlu0 %5360
    %5362 = vrot.lane.b32.xlu0 %v5355, 120
    %v5363 = vpop.permute.xlu0 %5362
    %5364 = vrot.lane.b32.xlu0 %v5356, 120
    %v5365 = vpop.permute.xlu0 %5364
    %5366 = vrot.lane.b32.xlu0 %v5357, 120
    %v5367 = vpop.permute.xlu0 %5366
    %v5368 = vsel %vm126, %v5359, %v5361
    %v5369 = vsel %vm126, %v5361, %v5363
    %v5370 = vsel %vm126, %v5363, %v5365
    %v5371 = vsel %vm126, %v5365, %v5367
    %v5377 = vsel %vm170, %v5304, %v5368
    %v5378 = vsel %vm170, %v5305, %v5369
    %v5379 = vsel %vm170, %v5306, %v5370
    %v5380 = vsel %vm170, %v5307, %v5371
    %v5381 = vsel %vm170, %v5308, %v5367
    %5387 = vrot.lane.b32.xlu0 %v5377, 64
    %v5388 = vpop.permute.xlu0 %5387
    %5389 = vrot.lane.b32.xlu0 %v5378, 64
    %v5390 = vpop.permute.xlu0 %5389
    %5391 = vrot.lane.b32.xlu0 %v5379, 64
    %v5392 = vpop.permute.xlu0 %5391
    %5393 = vrot.lane.b32.xlu0 %v5380, 64
    %v5394 = vpop.permute.xlu0 %5393
    %5395 = vrot.lane.b32.xlu0 %v5381, 64
    %v5396 = vpop.permute.xlu0 %5395
    %v5397 = vsel %vm160, %v5388, %v5390
    %v5398 = vsel %vm160, %v5390, %v5392
    %v5399 = vsel %vm160, %v5392, %v5394
    %v5400 = vsel %vm160, %v5394, %v5396
    %5405 = vst [vmem:[#allocation2 + $0x1e0] sm:$0xff] %v5397
    %5406 = vst [vmem:[#allocation2 + $0x1e8] sm:$0xff] %v5398
    %5407 = vst [vmem:[#allocation2 + $0x1f0] sm:$0xff] %v5399
    %5408 = vst [vmem:[#allocation2 + $0x1f8] sm:$0xff] %v5400
    %5409 = vrot.lane.b32.xlu0 %v5314, 8
    %v5410 = vpop.permute.xlu0 %5409
    %5411 = vrot.lane.b32.xlu0 %v5318, 8
    %v5412 = vpop.permute.xlu0 %5411
    %5413 = vrot.lane.b32.xlu0 %v5322, 8
    %v5414 = vpop.permute.xlu0 %5413
    %5415 = vrot.lane.b32.xlu0 %v5326, 8
    %v5416 = vpop.permute.xlu0 %5415
    %v5417 = vsel %vm407, %v5410, %v5412
    %v5418 = vsel %vm407, %v5412, %v5414
    %v5419 = vsel %vm407, %v5414, %v5416
    %v5425 = vmul.f32 %v3254, %v5410
    %v5426 = vmul.f32 %v3255, %v5417
    %v5427 = vmul.f32 %v3256, %v5418
    %v5428 = vmul.f32 %v3257, %v5419
    %v5429 = vmul.f32 %v5416, 0.0
    %v5430 = vmul.f32 %v3254, %v5328
    %v5431 = vmul.f32 %v3255, %v5335
    %v5432 = vmul.f32 %v3256, %v5336
    %v5433 = vmul.f32 %v3257, %v5337
    %v5434 = vmul.f32 %v5334, 0.0
    %v5440 = vrot.slane %v5430, 4
    %v5441 = vrot.slane %v5431, 4
    %v5442 = vrot.slane %v5432, 4
    %v5443 = vrot.slane %v5433, 4
    %v5444 = vrot.slane %v5434, 4
    %5445 = vrot.lane.b32.xlu0 %v5440, 64
    %v5446 = vpop.permute.xlu0 %5445
    %5447 = vrot.lane.b32.xlu0 %v5441, 64
    %v5448 = vpop.permute.xlu0 %5447
    %5449 = vrot.lane.b32.xlu0 %v5442, 64
    %v5450 = vpop.permute.xlu0 %5449
    %5451 = vrot.lane.b32.xlu0 %v5443, 64
    %v5452 = vpop.permute.xlu0 %5451
    %5453 = vrot.lane.b32.xlu0 %v5444, 64
    %v5454 = vpop.permute.xlu0 %5453
    %v5455 = vsel %vm160, %v5446, %v5448
    %v5456 = vsel %vm160, %v5448, %v5450
    %v5457 = vsel %vm160, %v5450, %v5452
    %v5458 = vsel %vm160, %v5452, %v5454
    %v5464 = vsel %vm170, %v5425, %v5455
    %v5465 = vsel %vm170, %v5426, %v5456
    %v5466 = vsel %vm170, %v5427, %v5457
    %v5467 = vsel %vm170, %v5428, %v5458
    %v5468 = vsel %vm170, %v5429, %v5454
    %5474 = vrot.lane.b32.xlu0 %v5464, 120
    %v5475 = vpop.permute.xlu0 %5474
    %5476 = vrot.lane.b32.xlu0 %v5465, 120
    %v5477 = vpop.permute.xlu0 %5476
    %5478 = vrot.lane.b32.xlu0 %v5466, 120
    %v5479 = vpop.permute.xlu0 %5478
    %5480 = vrot.lane.b32.xlu0 %v5467, 120
    %v5481 = vpop.permute.xlu0 %5480
    %5482 = vrot.lane.b32.xlu0 %v5468, 120
    %v5483 = vpop.permute.xlu0 %5482
    %v5484 = vsel %vm126, %v5475, %v5477
    %v5485 = vsel %vm126, %v5477, %v5479
    %v5486 = vsel %vm126, %v5479, %v5481
    %v5487 = vsel %vm126, %v5481, %v5483
    %5492 = vst [vmem:[#allocation2 + $0x220] sm:$0xff] %v5484
    %5493 = vst [vmem:[#allocation2 + $0x228] sm:$0xff] %v5485
    %5494 = vst [vmem:[#allocation2 + $0x230] sm:$0xff] %v5486
    %5495 = vst [vmem:[#allocation2 + $0x238] sm:$0xff] %v5487
    %5496 = vrot.lane.b32.xlu0 %v3254, 127
    %v5497 = vpop.permute.xlu0 %5496
    %5498 = vrot.lane.b32.xlu0 %v3255, 127
    %v5499 = vpop.permute.xlu0 %5498
    %5500 = vrot.lane.b32.xlu0 %v3256, 127
    %v5501 = vpop.permute.xlu0 %5500
    %5502 = vrot.lane.b32.xlu0 %v3257, 127
    %v5503 = vpop.permute.xlu0 %5502
    %v5504 = vsel %vm983, %v5503, %v974
    %v5505 = vsel %vm983, %v5501, %v5503
    %v5506 = vsel %vm983, %v5499, %v5501
    %v5507 = vsel %vm983, %v5497, %v5499
    %v5508 = vsel %vm983, %v974, %v5497
    %v5509 = vld [vmem:[%s989] ss:$8 sm:$0xf]
    %v5511 = vlaneseq
    %v5512 = vshrl.u32 %v5511, 7
    %v5513 = vsub.s32 0, %v5512
    %v5514 = vrot.slane %v5509, %v5513
    %v5515 = vlaneseq
    %v5516 = vshrl.u32 %v5515, 7
    %v5517 = vsub.s32 1, %v5516
    %v5518 = vrot.slane %v5509, %v5517
    %v5519 = vlaneseq
    %v5520 = vshrl.u32 %v5519, 7
    %v5521 = vsub.s32 2, %v5520
    %v5522 = vrot.slane %v5509, %v5521
    %v5523 = vlaneseq
    %v5524 = vshrl.u32 %v5523, 7
    %v5525 = vsub.s32 3, %v5524
    %v5526 = vrot.slane %v5509, %v5525
    %5527 = vrot.lane.b32.xlu0 %v5514, 56
    %v5528 = vpop.permute.xlu0 %5527
    %5529 = vrot.lane.b32.xlu0 %v5518, 56
    %v5530 = vpop.permute.xlu0 %5529
    %5531 = vrot.lane.b32.xlu0 %v5522, 56
    %v5532 = vpop.permute.xlu0 %5531
    %5533 = vrot.lane.b32.xlu0 %v5526, 56
    %v5534 = vpop.permute.xlu0 %5533
    %v5535 = vsel %vm104, %v5528, %v5530
    %v5536 = vsel %vm104, %v5530, %v5532
    %v5537 = vsel %vm104, %v5532, %v5534
    %v5543 = vmul.f32 %v5508, %v5528
    %v5544 = vmul.f32 %v5507, %v5535
    %v5545 = vmul.f32 %v5506, %v5536
    %v5546 = vmul.f32 %v5505, %v5537
    %v5547 = vmul.f32 %v5504, %v5534
    %5548 = vrot.lane.b32.xlu0 %v5514, 120
    %v5549 = vpop.permute.xlu0 %5548
    %5550 = vrot.lane.b32.xlu0 %v5518, 120
    %v5551 = vpop.permute.xlu0 %5550
    %5552 = vrot.lane.b32.xlu0 %v5522, 120
    %v5553 = vpop.permute.xlu0 %5552
    %5554 = vrot.lane.b32.xlu0 %v5526, 120
    %v5555 = vpop.permute.xlu0 %5554
    %v5556 = vsel %vm126, %v5549, %v5551
    %v5557 = vsel %vm126, %v5551, %v5553
    %v5558 = vsel %vm126, %v5553, %v5555
    %v5564 = vmul.f32 %v5508, %v5549
    %v5565 = vmul.f32 %v5507, %v5556
    %v5566 = vmul.f32 %v5506, %v5557
    %v5567 = vmul.f32 %v5505, %v5558
    %v5568 = vmul.f32 %v5504, %v5555
    %v5574 = vrot.slane %v5564, 4
    %v5575 = vrot.slane %v5565, 4
    %v5576 = vrot.slane %v5566, 4
    %v5577 = vrot.slane %v5567, 4
    %v5578 = vrot.slane %v5568, 4
    %5579 = vrot.lane.b32.xlu0 %v5574, 64
    %v5580 = vpop.permute.xlu0 %5579
    %5581 = vrot.lane.b32.xlu0 %v5575, 64
    %v5582 = vpop.permute.xlu0 %5581
    %5583 = vrot.lane.b32.xlu0 %v5576, 64
    %v5584 = vpop.permute.xlu0 %5583
    %5585 = vrot.lane.b32.xlu0 %v5577, 64
    %v5586 = vpop.permute.xlu0 %5585
    %5587 = vrot.lane.b32.xlu0 %v5578, 64
    %v5588 = vpop.permute.xlu0 %5587
    %v5589 = vsel %vm160, %v5580, %v5582
    %v5590 = vsel %vm160, %v5582, %v5584
    %v5591 = vsel %vm160, %v5584, %v5586
    %v5592 = vsel %vm160, %v5586, %v5588
    %v5598 = vsel %vm170, %v5543, %v5589
    %v5599 = vsel %vm170, %v5544, %v5590
    %v5600 = vsel %vm170, %v5545, %v5591
    %v5601 = vsel %vm170, %v5546, %v5592
    %v5602 = vsel %vm170, %v5547, %v5588
    %5608 = vrot.lane.b32.xlu0 %v5598, 72
    %v5609 = vpop.permute.xlu0 %5608
    %5610 = vrot.lane.b32.xlu0 %v5599, 72
    %v5611 = vpop.permute.xlu0 %5610
    %5612 = vrot.lane.b32.xlu0 %v5600, 72
    %v5613 = vpop.permute.xlu0 %5612
    %5614 = vrot.lane.b32.xlu0 %v5601, 72
    %v5615 = vpop.permute.xlu0 %5614
    %5616 = vrot.lane.b32.xlu0 %v5602, 72
    %v5617 = vpop.permute.xlu0 %5616
    %v5618 = vsel %vm191, %v5609, %v5611
    %v5619 = vsel %vm191, %v5611, %v5613
    %v5620 = vsel %vm191, %v5613, %v5615
    %v5621 = vsel %vm191, %v5615, %v5617
    %5626 = vst [vmem:[#allocation2 + $0x260] sm:$0xff] %v5618
    %5627 = vst [vmem:[#allocation2 + $0x268] sm:$0xff] %v5619
    %5628 = vst [vmem:[#allocation2 + $0x270] sm:$0xff] %v5620
    %5629 = vst [vmem:[#allocation2 + $0x278] sm:$0xff] %v5621
    %v5630 = vmul.f32 %v5507, %v5528
    %v5631 = vmul.f32 %v5506, %v5535
    %v5632 = vmul.f32 %v5505, %v5536
    %v5633 = vmul.f32 %v5504, %v5537
    %v5634 = vmul.f32 %v974, %v5534
    %v5635 = vld [vmem:[%s1116] ss:$8 sm:$0xf]
    %v5637 = vlaneseq
    %v5638 = vshrl.u32 %v5637, 7
    %v5639 = vsub.s32 0, %v5638
    %v5640 = vrot.slane %v5635, %v5639
    %v5641 = vlaneseq
    %v5642 = vshrl.u32 %v5641, 7
    %v5643 = vsub.s32 1, %v5642
    %v5644 = vrot.slane %v5635, %v5643
    %v5645 = vlaneseq
    %v5646 = vshrl.u32 %v5645, 7
    %v5647 = vsub.s32 2, %v5646
    %v5648 = vrot.slane %v5635, %v5647
    %v5649 = vlaneseq
    %v5650 = vshrl.u32 %v5649, 7
    %v5651 = vsub.s32 3, %v5650
    %v5652 = vrot.slane %v5635, %v5651
    %5657 = vrot.lane.b32.xlu0 %v5640, 64
    %v5658 = vpop.permute.xlu0 %5657
    %5659 = vrot.lane.b32.xlu0 %v5644, 64
    %v5660 = vpop.permute.xlu0 %5659
    %5661 = vrot.lane.b32.xlu0 %v5648, 64
    %v5662 = vpop.permute.xlu0 %5661
    %5663 = vrot.lane.b32.xlu0 %v5652, 64
    %v5664 = vpop.permute.xlu0 %5663
    %v5665 = vsel %vm160, %v5658, %v5660
    %v5666 = vsel %vm160, %v5660, %v5662
    %v5667 = vsel %vm160, %v5662, %v5664
    %v5673 = vmul.f32 %v5508, %v5658
    %v5674 = vmul.f32 %v5507, %v5665
    %v5675 = vmul.f32 %v5506, %v5666
    %v5676 = vmul.f32 %v5505, %v5667
    %v5677 = vmul.f32 %v5504, %v5664
    %v5683 = vrot.slane %v5673, 4
    %v5684 = vrot.slane %v5674, 4
    %v5685 = vrot.slane %v5675, 4
    %v5686 = vrot.slane %v5676, 4
    %v5687 = vrot.slane %v5677, 4
    %5688 = vrot.lane.b32.xlu0 %v5683, 120
    %v5689 = vpop.permute.xlu0 %5688
    %5690 = vrot.lane.b32.xlu0 %v5684, 120
    %v5691 = vpop.permute.xlu0 %5690
    %5692 = vrot.lane.b32.xlu0 %v5685, 120
    %v5693 = vpop.permute.xlu0 %5692
    %5694 = vrot.lane.b32.xlu0 %v5686, 120
    %v5695 = vpop.permute.xlu0 %5694
    %5696 = vrot.lane.b32.xlu0 %v5687, 120
    %v5697 = vpop.permute.xlu0 %5696
    %v5698 = vsel %vm126, %v5689, %v5691
    %v5699 = vsel %vm126, %v5691, %v5693
    %v5700 = vsel %vm126, %v5693, %v5695
    %v5701 = vsel %vm126, %v5695, %v5697
    %v5707 = vsel %vm170, %v5630, %v5698
    %v5708 = vsel %vm170, %v5631, %v5699
    %v5709 = vsel %vm170, %v5632, %v5700
    %v5710 = vsel %vm170, %v5633, %v5701
    %v5711 = vsel %vm170, %v5634, %v5697
    %5717 = vrot.lane.b32.xlu0 %v5707, 72
    %v5718 = vpop.permute.xlu0 %5717
    %5719 = vrot.lane.b32.xlu0 %v5708, 72
    %v5720 = vpop.permute.xlu0 %5719
    %5721 = vrot.lane.b32.xlu0 %v5709, 72
    %v5722 = vpop.permute.xlu0 %5721
    %5723 = vrot.lane.b32.xlu0 %v5710, 72
    %v5724 = vpop.permute.xlu0 %5723
    %5725 = vrot.lane.b32.xlu0 %v5711, 72
    %v5726 = vpop.permute.xlu0 %5725
    %v5727 = vsel %vm191, %v5718, %v5720
    %v5728 = vsel %vm191, %v5720, %v5722
    %v5729 = vsel %vm191, %v5722, %v5724
    %v5730 = vsel %vm191, %v5724, %v5726
    %5735 = vst [vmem:[#allocation2 + $0x2a0] sm:$0xff] %v5727
    %5736 = vst [vmem:[#allocation2 + $0x2a8] sm:$0xff] %v5728
    %5737 = vst [vmem:[#allocation2 + $0x2b0] sm:$0xff] %v5729
    %5738 = vst [vmem:[#allocation2 + $0x2b8] sm:$0xff] %v5730
    %v5739 = vmul.f32 %v5507, %v5640
    %v5740 = vmul.f32 %v5506, %v5644
    %v5741 = vmul.f32 %v5505, %v5648
    %v5742 = vmul.f32 %v5504, %v5652
    %v5743 = vmul.f32 %v5507, %v5658
    %v5744 = vmul.f32 %v5506, %v5665
    %v5745 = vmul.f32 %v5505, %v5666
    %v5746 = vmul.f32 %v5504, %v5667
    %v5747 = vmul.f32 %v974, %v5664
    %v5753 = vrot.slane %v5743, 4
    %v5754 = vrot.slane %v5744, 4
    %v5755 = vrot.slane %v5745, 4
    %v5756 = vrot.slane %v5746, 4
    %v5757 = vrot.slane %v5747, 4
    %5758 = vrot.lane.b32.xlu0 %v5753, 64
    %v5759 = vpop.permute.xlu0 %5758
    %5760 = vrot.lane.b32.xlu0 %v5754, 64
    %v5761 = vpop.permute.xlu0 %5760
    %5762 = vrot.lane.b32.xlu0 %v5755, 64
    %v5763 = vpop.permute.xlu0 %5762
    %5764 = vrot.lane.b32.xlu0 %v5756, 64
    %v5765 = vpop.permute.xlu0 %5764
    %5766 = vrot.lane.b32.xlu0 %v5757, 64
    %v5767 = vpop.permute.xlu0 %5766
    %v5768 = vsel %vm160, %v5759, %v5761
    %v5769 = vsel %vm160, %v5761, %v5763
    %v5770 = vsel %vm160, %v5763, %v5765
    %v5771 = vsel %vm160, %v5765, %v5767
    %v5776 = vsel %vm170, %v5739, %v5768
    %v5777 = vsel %vm170, %v5740, %v5769
    %v5778 = vsel %vm170, %v5741, %v5770
    %v5779 = vsel %vm170, %v5742, %v5771
    %5780 = vst [vmem:[#allocation2 + $0x2e0] sm:$0xff] %v5776
    %5781 = vst [vmem:[#allocation2 + $0x2e8] sm:$0xff] %v5777
    %5782 = vst [vmem:[#allocation2 + $0x2f0] sm:$0xff] %v5778
    %5783 = vst [vmem:[#allocation2 + $0x2f8] sm:$0xff] %v5779
    %v5784 = vld [vmem:[%s1266] ss:$8 sm:$0xf]
    %v5786 = vlaneseq
    %v5787 = vshrl.u32 %v5786, 7
    %v5788 = vsub.s32 0, %v5787
    %v5789 = vrot.slane %v5784, %v5788
    %v5790 = vlaneseq
    %v5791 = vshrl.u32 %v5790, 7
    %v5792 = vsub.s32 1, %v5791
    %v5793 = vrot.slane %v5784, %v5792
    %v5794 = vlaneseq
    %v5795 = vshrl.u32 %v5794, 7
    %v5796 = vsub.s32 2, %v5795
    %v5797 = vrot.slane %v5784, %v5796
    %v5798 = vlaneseq
    %v5799 = vshrl.u32 %v5798, 7
    %v5800 = vsub.s32 3, %v5799
    %v5801 = vrot.slane %v5784, %v5800
    %5802 = vrot.lane.b32.xlu0 %v5789, 72
    %v5803 = vpop.permute.xlu0 %5802
    %5804 = vrot.lane.b32.xlu0 %v5793, 72
    %v5805 = vpop.permute.xlu0 %5804
    %5806 = vrot.lane.b32.xlu0 %v5797, 72
    %v5807 = vpop.permute.xlu0 %5806
    %5808 = vrot.lane.b32.xlu0 %v5801, 72
    %v5809 = vpop.permute.xlu0 %5808
    %v5810 = vsel %vm191, %v5803, %v5805
    %v5811 = vsel %vm191, %v5805, %v5807
    %v5812 = vsel %vm191, %v5807, %v5809
    %v5818 = vmul.f32 %v5508, %v5803
    %v5819 = vmul.f32 %v5507, %v5810
    %v5820 = vmul.f32 %v5506, %v5811
    %v5821 = vmul.f32 %v5505, %v5812
    %v5822 = vmul.f32 %v5504, %v5809
    %5823 = vrot.lane.b32.xlu0 %v5789, 8
    %v5824 = vpop.permute.xlu0 %5823
    %5825 = vrot.lane.b32.xlu0 %v5793, 8
    %v5826 = vpop.permute.xlu0 %5825
    %5827 = vrot.lane.b32.xlu0 %v5797, 8
    %v5828 = vpop.permute.xlu0 %5827
    %5829 = vrot.lane.b32.xlu0 %v5801, 8
    %v5830 = vpop.permute.xlu0 %5829
    %v5831 = vsel %vm407, %v5824, %v5826
    %v5832 = vsel %vm407, %v5826, %v5828
    %v5833 = vsel %vm407, %v5828, %v5830
    %v5839 = vmul.f32 %v5507, %v5824
    %v5840 = vmul.f32 %v5506, %v5831
    %v5841 = vmul.f32 %v5505, %v5832
    %v5842 = vmul.f32 %v5504, %v5833
    %v5843 = vmul.f32 %v974, %v5830
    %v5849 = vrot.slane %v5839, 4
    %v5850 = vrot.slane %v5840, 4
    %v5851 = vrot.slane %v5841, 4
    %v5852 = vrot.slane %v5842, 4
    %v5853 = vrot.slane %v5843, 4
    %5854 = vrot.lane.b32.xlu0 %v5849, 64
    %v5855 = vpop.permute.xlu0 %5854
    %5856 = vrot.lane.b32.xlu0 %v5850, 64
    %v5857 = vpop.permute.xlu0 %5856
    %5858 = vrot.lane.b32.xlu0 %v5851, 64
    %v5859 = vpop.permute.xlu0 %5858
    %5860 = vrot.lane.b32.xlu0 %v5852, 64
    %v5861 = vpop.permute.xlu0 %5860
    %5862 = vrot.lane.b32.xlu0 %v5853, 64
    %v5863 = vpop.permute.xlu0 %5862
    %v5864 = vsel %vm160, %v5855, %v5857
    %v5865 = vsel %vm160, %v5857, %v5859
    %v5866 = vsel %vm160, %v5859, %v5861
    %v5867 = vsel %vm160, %v5861, %v5863
    %v5873 = vsel %vm170, %v5818, %v5855
    %v5874 = vsel %vm170, %v5819, %v5864
    %v5875 = vsel %vm170, %v5820, %v5865
    %v5876 = vsel %vm170, %v5821, %v5866
    %v5877 = vsel %vm170, %v5822, %v5867
    %5883 = vrot.lane.b32.xlu0 %v5873, 56
    %v5884 = vpop.permute.xlu0 %5883
    %5885 = vrot.lane.b32.xlu0 %v5874, 56
    %v5886 = vpop.permute.xlu0 %5885
    %5887 = vrot.lane.b32.xlu0 %v5875, 56
    %v5888 = vpop.permute.xlu0 %5887
    %5889 = vrot.lane.b32.xlu0 %v5876, 56
    %v5890 = vpop.permute.xlu0 %5889
    %5891 = vrot.lane.b32.xlu0 %v5877, 56
    %v5892 = vpop.permute.xlu0 %5891
    %v5893 = vsel %vm104, %v5884, %v5886
    %v5894 = vsel %vm104, %v5886, %v5888
    %v5895 = vsel %vm104, %v5888, %v5890
    %v5896 = vsel %vm104, %v5890, %v5892
    %5901 = vst [vmem:[#allocation2 + $0x320] sm:$0xff] %v5893
    %5902 = vst [vmem:[#allocation2 + $0x328] sm:$0xff] %v5894
    %5903 = vst [vmem:[#allocation2 + $0x330] sm:$0xff] %v5895
    %5904 = vst [vmem:[#allocation2 + $0x338] sm:$0xff] %v5896
    %v5905 = vmul.f32 %v5507, %v5803
    %v5906 = vmul.f32 %v5506, %v5810
    %v5907 = vmul.f32 %v5505, %v5811
    %v5908 = vmul.f32 %v5504, %v5812
    %v5909 = vmul.f32 %v974, %v5809
    %v5910 = vsel %vm170, %v5905, 0.0
    %v5911 = vsel %vm170, %v5906, 0.0
    %v5912 = vsel %vm170, %v5907, 0.0
    %v5913 = vsel %vm170, %v5908, 0.0
    %v5914 = vsel %vm170, %v5909, 0.0
    %5920 = vrot.lane.b32.xlu0 %v5910, 56
    %v5921 = vpop.permute.xlu0 %5920
    %5922 = vrot.lane.b32.xlu0 %v5911, 56
    %v5923 = vpop.permute.xlu0 %5922
    %5924 = vrot.lane.b32.xlu0 %v5912, 56
    %v5925 = vpop.permute.xlu0 %5924
    %5926 = vrot.lane.b32.xlu0 %v5913, 56
    %v5927 = vpop.permute.xlu0 %5926
    %5928 = vrot.lane.b32.xlu0 %v5914, 56
    %v5929 = vpop.permute.xlu0 %5928
    %v5930 = vsel %vm104, %v5921, %v5923
    %v5931 = vsel %vm104, %v5923, %v5925
    %v5932 = vsel %vm104, %v5925, %v5927
    %v5933 = vsel %vm104, %v5927, %v5929
    %5938 = vst [vmem:[#allocation2 + $0x360] sm:$0xff] %v5930
    %5939 = vst [vmem:[#allocation2 + $0x368] sm:$0xff] %v5931
    %5940 = vst [vmem:[#allocation2 + $0x370] sm:$0xff] %v5932
    %5941 = vst [vmem:[#allocation2 + $0x378] sm:$0xff] %v5933
    %v5942 = vld [vmem:[#allocation2] sm:$0xff]
    %v5943 = vld [vmem:[#allocation2 + $0x8] sm:$0xff]
    %v5944 = vld [vmem:[#allocation2 + $0x10] sm:$0xff]
    %v5945 = vld [vmem:[#allocation2 + $0x18] sm:$0xff]
    %v5946 = vld [vmem:[#allocation2 + $0x20] sm:$0xff]
    %v5947 = vld [vmem:[#allocation2 + $0x28] sm:$0xff]
    %v5948 = vld [vmem:[#allocation2 + $0x30] sm:$0xff]
    %v5949 = vld [vmem:[#allocation2 + $0x38] sm:$0xff]
    %v5950 = vld [vmem:[#allocation2 + $0x40] sm:$0xff]
    %v5951 = vld [vmem:[#allocation2 + $0x48] sm:$0xff]
    %v5952 = vld [vmem:[#allocation2 + $0x50] sm:$0xff]
    %v5953 = vld [vmem:[#allocation2 + $0x58] sm:$0xff]
    %v5954 = vld [vmem:[#allocation2 + $0x60] sm:$0xff]
    %v5955 = vld [vmem:[#allocation2 + $0x68] sm:$0xff]
    %v5956 = vld [vmem:[#allocation2 + $0x70] sm:$0xff]
    %v5957 = vld [vmem:[#allocation2 + $0x78] sm:$0xff]
    %v5958 = vld [vmem:[#allocation2 + $0x80] sm:$0xff]
    %v5959 = vld [vmem:[#allocation2 + $0x88] sm:$0xff]
    %v5960 = vld [vmem:[#allocation2 + $0x90] sm:$0xff]
    %v5961 = vld [vmem:[#allocation2 + $0x98] sm:$0xff]
    %v5962 = vld [vmem:[#allocation2 + $0xa0] sm:$0xff]
    %v5963 = vld [vmem:[#allocation2 + $0xa8] sm:$0xff]
    %v5964 = vld [vmem:[#allocation2 + $0xb0] sm:$0xff]
    %v5965 = vld [vmem:[#allocation2 + $0xb8] sm:$0xff]
    %v5966 = vld [vmem:[#allocation2 + $0xc0] sm:$0xff]
    %v5967 = vld [vmem:[#allocation2 + $0xc8] sm:$0xff]
    %v5968 = vld [vmem:[#allocation2 + $0xd0] sm:$0xff]
    %v5969 = vld [vmem:[#allocation2 + $0xd8] sm:$0xff]
    %v5970 = vld [vmem:[#allocation2 + $0xe0] sm:$0xff]
    %v5971 = vld [vmem:[#allocation2 + $0xe8] sm:$0xff]
    %v5972 = vld [vmem:[#allocation2 + $0xf0] sm:$0xff]
    %v5973 = vld [vmem:[#allocation2 + $0xf8] sm:$0xff]
    %v5974 = vld [vmem:[#allocation2 + $0x100] sm:$0xff]
    %v5975 = vld [vmem:[#allocation2 + $0x108] sm:$0xff]
    %v5976 = vld [vmem:[#allocation2 + $0x110] sm:$0xff]
    %v5977 = vld [vmem:[#allocation2 + $0x118] sm:$0xff]
    %v5978 = vld [vmem:[#allocation2 + $0x120] sm:$0xff]
    %v5979 = vld [vmem:[#allocation2 + $0x128] sm:$0xff]
    %v5980 = vld [vmem:[#allocation2 + $0x130] sm:$0xff]
    %v5981 = vld [vmem:[#allocation2 + $0x138] sm:$0xff]
    %v5982 = vld [vmem:[#allocation2 + $0x140] sm:$0xff]
    %v5983 = vld [vmem:[#allocation2 + $0x148] sm:$0xff]
    %v5984 = vld [vmem:[#allocation2 + $0x150] sm:$0xff]
    %v5985 = vld [vmem:[#allocation2 + $0x158] sm:$0xff]
    %v5986 = vld [vmem:[#allocation2 + $0x160] sm:$0xff]
    %v5987 = vld [vmem:[#allocation2 + $0x168] sm:$0xff]
    %v5988 = vld [vmem:[#allocation2 + $0x170] sm:$0xff]
    %v5989 = vld [vmem:[#allocation2 + $0x178] sm:$0xff]
    %v5990 = vld [vmem:[#allocation2 + $0x180] sm:$0xff]
    %v5991 = vld [vmem:[#allocation2 + $0x188] sm:$0xff]
    %v5992 = vld [vmem:[#allocation2 + $0x190] sm:$0xff]
    %v5993 = vld [vmem:[#allocation2 + $0x198] sm:$0xff]
    %v5994 = vld [vmem:[#allocation2 + $0x1a0] sm:$0xff]
    %v5995 = vld [vmem:[#allocation2 + $0x1a8] sm:$0xff]
    %v5996 = vld [vmem:[#allocation2 + $0x1b0] sm:$0xff]
    %v5997 = vld [vmem:[#allocation2 + $0x1b8] sm:$0xff]
    %v5998 = vld [vmem:[#allocation2 + $0x1c0] sm:$0xff]
    %v5999 = vld [vmem:[#allocation2 + $0x1c8] sm:$0xff]
    %v6000 = vld [vmem:[#allocation2 + $0x1d0] sm:$0xff]
    %v6001 = vld [vmem:[#allocation2 + $0x1d8] sm:$0xff]
    %v6002 = vld [vmem:[#allocation2 + $0x1e0] sm:$0xff]
    %v6003 = vld [vmem:[#allocation2 + $0x1e8] sm:$0xff]
    %v6004 = vld [vmem:[#allocation2 + $0x1f0] sm:$0xff]
    %v6005 = vld [vmem:[#allocation2 + $0x1f8] sm:$0xff]
    %v6006 = vld [vmem:[#allocation2 + $0x200] sm:$0xff]
    %v6007 = vld [vmem:[#allocation2 + $0x208] sm:$0xff]
    %v6008 = vld [vmem:[#allocation2 + $0x210] sm:$0xff]
    %v6009 = vld [vmem:[#allocation2 + $0x218] sm:$0xff]
    %v6010 = vld [vmem:[#allocation2 + $0x220] sm:$0xff]
    %v6011 = vld [vmem:[#allocation2 + $0x228] sm:$0xff]
    %v6012 = vld [vmem:[#allocation2 + $0x230] sm:$0xff]
    %v6013 = vld [vmem:[#allocation2 + $0x238] sm:$0xff]
    %v6014 = vld [vmem:[#allocation2 + $0x240] sm:$0xff]
    %v6015 = vld [vmem:[#allocation2 + $0x248] sm:$0xff]
    %v6016 = vld [vmem:[#allocation2 + $0x250] sm:$0xff]
    %v6017 = vld [vmem:[#allocation2 + $0x258] sm:$0xff]
    %v6018 = vld [vmem:[#allocation2 + $0x260] sm:$0xff]
    %v6019 = vld [vmem:[#allocation2 + $0x268] sm:$0xff]
    %v6020 = vld [vmem:[#allocation2 + $0x270] sm:$0xff]
    %v6021 = vld [vmem:[#allocation2 + $0x278] sm:$0xff]
    %v6022 = vld [vmem:[#allocation2 + $0x280] sm:$0xff]
    %v6023 = vld [vmem:[#allocation2 + $0x288] sm:$0xff]
    %v6024 = vld [vmem:[#allocation2 + $0x290] sm:$0xff]
    %v6025 = vld [vmem:[#allocation2 + $0x298] sm:$0xff]
    %v6026 = vld [vmem:[#allocation2 + $0x2a0] sm:$0xff]
    %v6027 = vld [vmem:[#allocation2 + $0x2a8] sm:$0xff]
    %v6028 = vld [vmem:[#allocation2 + $0x2b0] sm:$0xff]
    %v6029 = vld [vmem:[#allocation2 + $0x2b8] sm:$0xff]
    %v6030 = vld [vmem:[#allocation2 + $0x2c0] sm:$0xff]
    %v6031 = vld [vmem:[#allocation2 + $0x2c8] sm:$0xff]
    %v6032 = vld [vmem:[#allocation2 + $0x2d0] sm:$0xff]
    %v6033 = vld [vmem:[#allocation2 + $0x2d8] sm:$0xff]
    %v6034 = vld [vmem:[#allocation2 + $0x2e0] sm:$0xff]
    %v6035 = vld [vmem:[#allocation2 + $0x2e8] sm:$0xff]
    %v6036 = vld [vmem:[#allocation2 + $0x2f0] sm:$0xff]
    %v6037 = vld [vmem:[#allocation2 + $0x2f8] sm:$0xff]
    %v6038 = vld [vmem:[#allocation2 + $0x300] sm:$0xff]
    %v6039 = vld [vmem:[#allocation2 + $0x308] sm:$0xff]
    %v6040 = vld [vmem:[#allocation2 + $0x310] sm:$0xff]
    %v6041 = vld [vmem:[#allocation2 + $0x318] sm:$0xff]
    %v6042 = vld [vmem:[#allocation2 + $0x320] sm:$0xff]
    %v6043 = vld [vmem:[#allocation2 + $0x328] sm:$0xff]
    %v6044 = vld [vmem:[#allocation2 + $0x330] sm:$0xff]
    %v6045 = vld [vmem:[#allocation2 + $0x338] sm:$0xff]
    %v6046 = vld [vmem:[#allocation2 + $0x340] sm:$0xff]
    %v6047 = vld [vmem:[#allocation2 + $0x348] sm:$0xff]
    %v6048 = vld [vmem:[#allocation2 + $0x350] sm:$0xff]
    %v6049 = vld [vmem:[#allocation2 + $0x358] sm:$0xff]
    %v6050 = vld [vmem:[#allocation2 + $0x360] sm:$0xff]
    %v6051 = vld [vmem:[#allocation2 + $0x368] sm:$0xff]
    %v6052 = vld [vmem:[#allocation2 + $0x370] sm:$0xff]
    %v6053 = vld [vmem:[#allocation2 + $0x378] sm:$0xff]
    %6054 = vmatprep.subr.mxu0 0.0
    %6055 = vmatpush1.msra.mxu0 0.0
    %6056 = vmatprep.subr.mxu0 0.0
    %6057 = vmatpush1.msra.mxu0 0.0
    %6058 = vmatprep.subr.mxu0 %v6047
    %6059 = vmatpush1.msra.mxu0 %v6046
    %6060 = vmatprep.subr.mxu0 %v6039
    %6061 = vmatpush1.msra.mxu0 %v6038
    %6062 = vmatprep.subr.mxu0 %v6031
    %6063 = vmatpush1.msra.mxu0 %v6030
    %6064 = vmatprep.subr.mxu0 %v6023
    %6065 = vmatpush1.msra.mxu0 %v6022
    %6066 = vmatprep.subr.mxu0 %v6015
    %6067 = vmatpush1.msra.mxu0 %v6014
    %6068 = vmatprep.subr.mxu0 %v6007
    %6069 = vmatpush1.msra.mxu0 %v6006
    %6070 = vmatprep.subr.mxu0 %v5999
    %6071 = vmatpush1.msra.mxu0 %v5998
    %6072 = vmatprep.subr.mxu0 %v5991
    %6073 = vmatpush1.msra.mxu0 %v5990
    %6074 = vmatprep.subr.mxu0 %v5983
    %6075 = vmatpush1.msra.mxu0 %v5982
    %6076 = vmatprep.subr.mxu0 %v5975
    %6077 = vmatpush1.msra.mxu0 %v5974
    %6078 = vmatprep.subr.mxu0 %v5967
    %6079 = vmatpush1.msra.mxu0 %v5966
    %6080 = vmatprep.subr.mxu0 %v5959
    %6081 = vmatpush1.msra.mxu0 %v5958
    %6082 = vmatprep.subr.mxu0 %v5951
    %6083 = vmatpush1.msra.mxu0 %v5950
    %6084 = vmatprep.subr.mxu0 %v5943
    %6085 = vmatpush1.msra.mxu0 %v5942
    %6086 = vmatprep.subr.mxu0 0.0
    %6087 = vmatpush2.msra.mxu0 0.0
    %6088 = vmatprep.subr.mxu0 0.0
    %6089 = vmatpush2.msra.mxu0 0.0
    %6090 = vmatprep.subr.mxu0 0.0
    %6091 = vmatpush2.msra.mxu0 0.0
    %6092 = vmatprep.subr.mxu0 0.0
    %6093 = vmatpush2.msra.mxu0 0.0
    %6094 = vmatprep.subr.mxu0 0.0
    %6095 = vmatpush2.msra.mxu0 0.0
    %6096 = vmatprep.subr.mxu0 0.0
    %6097 = vmatpush2.msra.mxu0 0.0
    %6098 = vmatprep.subr.mxu0 0.0
    %6099 = vmatpush2.msra.mxu0 0.0
    %6100 = vmatprep.subr.mxu0 0.0
    %6101 = vmatpush2.msra.mxu0 0.0
    %6102 = vmatprep.subr.mxu0 0.0
    %6103 = vmatpush2.msra.mxu0 0.0
    %6104 = vmatprep.subr.mxu0 0.0
    %6105 = vmatpush2.msra.mxu0 0.0
    %6106 = vmatprep.subr.mxu0 0.0
    %6107 = vmatpush2.msra.mxu0 0.0
    %6108 = vmatprep.subr.mxu0 0.0
    %6109 = vmatpush2.msra.mxu0 0.0
    %6110 = vmatprep.subr.mxu0 0.0
    %6111 = vmatpush2.msra.mxu0 0.0
    %6112 = vmatprep.subr.mxu0 0.0
    %6113 = vmatpush2.msra.mxu0 0.0
    %6114 = vmatprep.subr.mxu0 0.0
    %6115 = vmatpush2.msra.mxu0 0.0
    %6116 = vmatprep.subr.mxu0 0.0
    %6117 = vmatpush2.msra.mxu0 0.0
    %6118 = vmatprep.mubr.f32.mxu0 0.0
    %6119 = vmatmul.mubr.f32.gmra.mxu0 %v2887
    %v6120 = vpop.f32.mrf.mxu0
    %v6121 = vadd.f32 0.0, %v6120
    %v6122 = vpop.f32.mrf.mxu0
    %v6123 = vadd.f32 0.0, %v6122
    %6124 = vdwg.mxu0
    %6125 = vmatprep.subr.mxu0 0.0
    %6126 = vmatpush1.msra.mxu0 0.0
    %6127 = vmatprep.subr.mxu0 0.0
    %6128 = vmatpush1.msra.mxu0 0.0
    %6129 = vmatprep.subr.mxu0 %v6049
    %6130 = vmatpush1.msra.mxu0 %v6048
    %6131 = vmatprep.subr.mxu0 %v6041
    %6132 = vmatpush1.msra.mxu0 %v6040
    %6133 = vmatprep.subr.mxu0 %v6033
    %6134 = vmatpush1.msra.mxu0 %v6032
    %6135 = vmatprep.subr.mxu0 %v6025
    %6136 = vmatpush1.msra.mxu0 %v6024
    %6137 = vmatprep.subr.mxu0 %v6017
    %6138 = vmatpush1.msra.mxu0 %v6016
    %6139 = vmatprep.subr.mxu0 %v6009
    %6140 = vmatpush1.msra.mxu0 %v6008
    %6141 = vmatprep.subr.mxu0 %v6001
    %6142 = vmatpush1.msra.mxu0 %v6000
    %6143 = vmatprep.subr.mxu0 %v5993
    %6144 = vmatpush1.msra.mxu0 %v5992
    %6145 = vmatprep.subr.mxu0 %v5985
    %6146 = vmatpush1.msra.mxu0 %v5984
    %6147 = vmatprep.subr.mxu0 %v5977
    %6148 = vmatpush1.msra.mxu0 %v5976
    %6149 = vmatprep.subr.mxu0 %v5969
    %6150 = vmatpush1.msra.mxu0 %v5968
    %6151 = vmatprep.subr.mxu0 %v5961
    %6152 = vmatpush1.msra.mxu0 %v5960
    %6153 = vmatprep.subr.mxu0 %v5953
    %6154 = vmatpush1.msra.mxu0 %v5952
    %6155 = vmatprep.subr.mxu0 %v5945
    %6156 = vmatpush1.msra.mxu0 %v5944
    %6157 = vmatprep.subr.mxu0 0.0
    %6158 = vmatpush2.msra.mxu0 0.0
    %6159 = vmatprep.subr.mxu0 0.0
    %6160 = vmatpush2.msra.mxu0 0.0
    %6161 = vmatprep.subr.mxu0 0.0
    %6162 = vmatpush2.msra.mxu0 0.0
    %6163 = vmatprep.subr.mxu0 0.0
    %6164 = vmatpush2.msra.mxu0 0.0
    %6165 = vmatprep.subr.mxu0 0.0
    %6166 = vmatpush2.msra.mxu0 0.0
    %6167 = vmatprep.subr.mxu0 0.0
    %6168 = vmatpush2.msra.mxu0 0.0
    %6169 = vmatprep.subr.mxu0 0.0
    %6170 = vmatpush2.msra.mxu0 0.0
    %6171 = vmatprep.subr.mxu0 0.0
    %6172 = vmatpush2.msra.mxu0 0.0
    %6173 = vmatprep.subr.mxu0 0.0
    %6174 = vmatpush2.msra.mxu0 0.0
    %6175 = vmatprep.subr.mxu0 0.0
    %6176 = vmatpush2.msra.mxu0 0.0
    %6177 = vmatprep.subr.mxu0 0.0
    %6178 = vmatpush2.msra.mxu0 0.0
    %6179 = vmatprep.subr.mxu0 0.0
    %6180 = vmatpush2.msra.mxu0 0.0
    %6181 = vmatprep.subr.mxu0 0.0
    %6182 = vmatpush2.msra.mxu0 0.0
    %6183 = vmatprep.subr.mxu0 0.0
    %6184 = vmatpush2.msra.mxu0 0.0
    %6185 = vmatprep.subr.mxu0 0.0
    %6186 = vmatpush2.msra.mxu0 0.0
    %6187 = vmatprep.subr.mxu0 0.0
    %6188 = vmatpush2.msra.mxu0 0.0
    %6189 = vmatprep.mubr.f32.mxu0 0.0
    %6190 = vmatmul.mubr.f32.gmra.mxu0 %v2887
    %v6191 = vpop.f32.mrf.mxu0
    %v6192 = vadd.f32 0.0, %v6191
    %v6193 = vpop.f32.mrf.mxu0
    %v6194 = vadd.f32 0.0, %v6193
    %6195 = vdwg.mxu0
    %6196 = vmatprep.subr.mxu0 0.0
    %6197 = vmatpush1.msra.mxu0 0.0
    %6198 = vmatprep.subr.mxu0 0.0
    %6199 = vmatpush1.msra.mxu0 0.0
    %6200 = vmatprep.subr.mxu0 %v6051
    %6201 = vmatpush1.msra.mxu0 %v6050
    %6202 = vmatprep.subr.mxu0 %v6043
    %6203 = vmatpush1.msra.mxu0 %v6042
    %6204 = vmatprep.subr.mxu0 %v6035
    %6205 = vmatpush1.msra.mxu0 %v6034
    %6206 = vmatprep.subr.mxu0 %v6027
    %6207 = vmatpush1.msra.mxu0 %v6026
    %6208 = vmatprep.subr.mxu0 %v6019
    %6209 = vmatpush1.msra.mxu0 %v6018
    %6210 = vmatprep.subr.mxu0 %v6011
    %6211 = vmatpush1.msra.mxu0 %v6010
    %6212 = vmatprep.subr.mxu0 %v6003
    %6213 = vmatpush1.msra.mxu0 %v6002
    %6214 = vmatprep.subr.mxu0 %v5995
    %6215 = vmatpush1.msra.mxu0 %v5994
    %6216 = vmatprep.subr.mxu0 %v5987
    %6217 = vmatpush1.msra.mxu0 %v5986
    %6218 = vmatprep.subr.mxu0 %v5979
    %6219 = vmatpush1.msra.mxu0 %v5978
    %6220 = vmatprep.subr.mxu0 %v5971
    %6221 = vmatpush1.msra.mxu0 %v5970
    %6222 = vmatprep.subr.mxu0 %v5963
    %6223 = vmatpush1.msra.mxu0 %v5962
    %6224 = vmatprep.subr.mxu0 %v5955
    %6225 = vmatpush1.msra.mxu0 %v5954
    %6226 = vmatprep.subr.mxu0 %v5947
    %6227 = vmatpush1.msra.mxu0 %v5946
    %6228 = vmatprep.subr.mxu0 0.0
    %6229 = vmatpush2.msra.mxu0 0.0
    %6230 = vmatprep.subr.mxu0 0.0
    %6231 = vmatpush2.msra.mxu0 0.0
    %6232 = vmatprep.subr.mxu0 0.0
    %6233 = vmatpush2.msra.mxu0 0.0
    %6234 = vmatprep.subr.mxu0 0.0
    %6235 = vmatpush2.msra.mxu0 0.0
    %6236 = vmatprep.subr.mxu0 0.0
    %6237 = vmatpush2.msra.mxu0 0.0
    %6238 = vmatprep.subr.mxu0 0.0
    %6239 = vmatpush2.msra.mxu0 0.0
    %6240 = vmatprep.subr.mxu0 0.0
    %6241 = vmatpush2.msra.mxu0 0.0
    %6242 = vmatprep.subr.mxu0 0.0
    %6243 = vmatpush2.msra.mxu0 0.0
    %6244 = vmatprep.subr.mxu0 0.0
    %6245 = vmatpush2.msra.mxu0 0.0
    %6246 = vmatprep.subr.mxu0 0.0
    %6247 = vmatpush2.msra.mxu0 0.0
    %6248 = vmatprep.subr.mxu0 0.0
    %6249 = vmatpush2.msra.mxu0 0.0
    %6250 = vmatprep.subr.mxu0 0.0
    %6251 = vmatpush2.msra.mxu0 0.0
    %6252 = vmatprep.subr.mxu0 0.0
    %6253 = vmatpush2.msra.mxu0 0.0
    %6254 = vmatprep.subr.mxu0 0.0
    %6255 = vmatpush2.msra.mxu0 0.0
    %6256 = vmatprep.subr.mxu0 0.0
    %6257 = vmatpush2.msra.mxu0 0.0
    %6258 = vmatprep.subr.mxu0 0.0
    %6259 = vmatpush2.msra.mxu0 0.0
    %6260 = vmatprep.mubr.f32.mxu0 0.0
    %6261 = vmatmul.mubr.f32.gmra.mxu0 %v2887
    %v6262 = vpop.f32.mrf.mxu0
    %v6263 = vadd.f32 0.0, %v6262
    %v6264 = vpop.f32.mrf.mxu0
    %v6265 = vadd.f32 0.0, %v6264
    %6266 = vdwg.mxu0
    %6267 = vmatprep.subr.mxu0 0.0
    %6268 = vmatpush1.msra.mxu0 0.0
    %6269 = vmatprep.subr.mxu0 0.0
    %6270 = vmatpush1.msra.mxu0 0.0
    %6271 = vmatprep.subr.mxu0 %v6053
    %6272 = vmatpush1.msra.mxu0 %v6052
    %6273 = vmatprep.subr.mxu0 %v6045
    %6274 = vmatpush1.msra.mxu0 %v6044
    %6275 = vmatprep.subr.mxu0 %v6037
    %6276 = vmatpush1.msra.mxu0 %v6036
    %6277 = vmatprep.subr.mxu0 %v6029
    %6278 = vmatpush1.msra.mxu0 %v6028
    %6279 = vmatprep.subr.mxu0 %v6021
    %6280 = vmatpush1.msra.mxu0 %v6020
    %6281 = vmatprep.subr.mxu0 %v6013
    %6282 = vmatpush1.msra.mxu0 %v6012
    %6283 = vmatprep.subr.mxu0 %v6005
    %6284 = vmatpush1.msra.mxu0 %v6004
    %6285 = vmatprep.subr.mxu0 %v5997
    %6286 = vmatpush1.msra.mxu0 %v5996
    %6287 = vmatprep.subr.mxu0 %v5989
    %6288 = vmatpush1.msra.mxu0 %v5988
    %6289 = vmatprep.subr.mxu0 %v5981
    %6290 = vmatpush1.msra.mxu0 %v5980
    %6291 = vmatprep.subr.mxu0 %v5973
    %6292 = vmatpush1.msra.mxu0 %v5972
    %6293 = vmatprep.subr.mxu0 %v5965
    %6294 = vmatpush1.msra.mxu0 %v5964
    %6295 = vmatprep.subr.mxu0 %v5957
    %6296 = vmatpush1.msra.mxu0 %v5956
    %6297 = vmatprep.subr.mxu0 %v5949
    %6298 = vmatpush1.msra.mxu0 %v5948
    %6299 = vmatprep.subr.mxu0 0.0
    %6300 = vmatpush2.msra.mxu0 0.0
    %6301 = vmatprep.subr.mxu0 0.0
    %6302 = vmatpush2.msra.mxu0 0.0
    %6303 = vmatprep.subr.mxu0 0.0
    %6304 = vmatpush2.msra.mxu0 0.0
    %6305 = vmatprep.subr.mxu0 0.0
    %6306 = vmatpush2.msra.mxu0 0.0
    %6307 = vmatprep.subr.mxu0 0.0
    %6308 = vmatpush2.msra.mxu0 0.0
    %6309 = vmatprep.subr.mxu0 0.0
    %6310 = vmatpush2.msra.mxu0 0.0
    %6311 = vmatprep.subr.mxu0 0.0
    %6312 = vmatpush2.msra.mxu0 0.0
    %6313 = vmatprep.subr.mxu0 0.0
    %6314 = vmatpush2.msra.mxu0 0.0
    %6315 = vmatprep.subr.mxu0 0.0
    %6316 = vmatpush2.msra.mxu0 0.0
    %6317 = vmatprep.subr.mxu0 0.0
    %6318 = vmatpush2.msra.mxu0 0.0
    %6319 = vmatprep.subr.mxu0 0.0
    %6320 = vmatpush2.msra.mxu0 0.0
    %6321 = vmatprep.subr.mxu0 0.0
    %6322 = vmatpush2.msra.mxu0 0.0
    %6323 = vmatprep.subr.mxu0 0.0
    %6324 = vmatpush2.msra.mxu0 0.0
    %6325 = vmatprep.subr.mxu0 0.0
    %6326 = vmatpush2.msra.mxu0 0.0
    %6327 = vmatprep.subr.mxu0 0.0
    %6328 = vmatpush2.msra.mxu0 0.0
    %6329 = vmatprep.subr.mxu0 0.0
    %6330 = vmatpush2.msra.mxu0 0.0
    %6331 = vmatprep.mubr.f32.mxu0 0.0
    %6332 = vmatmul.mubr.f32.gmra.mxu0 %v2887
    %v6333 = vpop.f32.mrf.mxu0
    %v6334 = vadd.f32 0.0, %v6333
    %v6335 = vpop.f32.mrf.mxu0
    %v6336 = vadd.f32 0.0, %v6335
    %6337 = vdwg.mxu0
    %v6338 = vsel %vm170, %v6121, 0.0
    %v6339 = vsel %vm170, %v6123, 0.0
    %v6340 = vadd.f32 %v6338, %v6339
    %v6341 = vsel %vm170, %v6192, 0.0
    %v6342 = vadd.f32 %v6340, %v6341
    %v6343 = vsel %vm170, %v6194, 0.0
    %v6344 = vadd.f32 %v6342, %v6343
    %v6345 = vsel %vm170, %v6263, 0.0
    %v6346 = vadd.f32 %v6344, %v6345
    %v6347 = vsel %vm170, %v6265, 0.0
    %v6348 = vadd.f32 %v6346, %v6347
    %v6349 = vsel %vm170, %v6334, 0.0
    %v6350 = vadd.f32 %v6348, %v6349
    %v6351 = vsel %vm170, %v6336, 0.0
    %v6352 = vadd.f32 %v6350, %v6351
    %6353 = vadd.xlane.f32.xlu0 %v6352
    %v6354 = vpop.xlane.xlu0 %6353
    %v6355 = vmul.f32 %v6121, %v6121
    %v6356 = vmul.f32 %v6123, %v6123
    %v6357 = vmul.f32 %v6192, %v6192
    %v6358 = vmul.f32 %v6194, %v6194
    %v6359 = vmul.f32 %v6263, %v6263
    %v6360 = vmul.f32 %v6265, %v6265
    %v6361 = vmul.f32 %v6334, %v6334
    %v6362 = vmul.f32 %v6336, %v6336
    %v6363 = vsel %vm170, %v6355, 0.0
    %v6364 = vsel %vm170, %v6356, 0.0
    %v6365 = vadd.f32 %v6363, %v6364
    %v6366 = vsel %vm170, %v6357, 0.0
    %v6367 = vadd.f32 %v6365, %v6366
    %v6368 = vsel %vm170, %v6358, 0.0
    %v6369 = vadd.f32 %v6367, %v6368
    %v6370 = vsel %vm170, %v6359, 0.0
    %v6371 = vadd.f32 %v6369, %v6370
    %v6372 = vsel %vm170, %v6360, 0.0
    %v6373 = vadd.f32 %v6371, %v6372
    %v6374 = vsel %vm170, %v6361, 0.0
    %v6375 = vadd.f32 %v6373, %v6374
    %v6376 = vsel %vm170, %v6362, 0.0
    %v6377 = vadd.f32 %v6375, %v6376
    %6378 = vadd.xlane.f32.xlu0 %v6377
    %v6379 = vpop.xlane.xlu0 %6378
    %v6380 = vmul.f32 %v6354, 0.0009765625
    %v6381 = vmul.f32 %v6379, 0.0009765625
    %v6382 = vmul.f32 %v6380, %v6380
    %v6383 = vsub.f32 %v6381, %v6382
    %v6384 = vadd.f32 %v6383, 1e-05
    %v6385 = vrsqrt.pop %v6384
    %v6386 = vmul.f32 %v52, %v6385
    %v6387 = vmul.f32 %v6380, %v6386
    %v6388 = vsub.f32 %v53, %v6387
    %6390 = vset.pattern.permute.xlu0 0
    %6391 = vperm.xlu0 %6390, %v6386
    %v6392 = vpop.permute.xlu0 %6391
    %v6394 = vmul.f32 %v6121, %v6392
    %v6395 = vmul.f32 %v6123, %v6392
    %v6396 = vmul.f32 %v6192, %v6392
    %v6397 = vmul.f32 %v6194, %v6392
    %v6398 = vmul.f32 %v6263, %v6392
    %v6399 = vmul.f32 %v6265, %v6392
    %v6400 = vmul.f32 %v6334, %v6392
    %v6401 = vmul.f32 %v6336, %v6392
    %6403 = vset.pattern.permute.xlu0 0
    %6404 = vperm.xlu0 %6403, %v6388
    %v6405 = vpop.permute.xlu0 %6404
    %v6407 = vadd.f32 %v6394, %v6405
    %v6408 = vadd.f32 %v6395, %v6405
    %v6409 = vadd.f32 %v6396, %v6405
    %v6410 = vadd.f32 %v6397, %v6405
    %v6411 = vadd.f32 %v6398, %v6405
    %v6412 = vadd.f32 %v6399, %v6405
    %v6413 = vadd.f32 %v6400, %v6405
    %v6414 = vadd.f32 %v6401, %v6405
    %v6415 = vmax.f32 %v6407, 0.0
    %v6416 = vmax.f32 %v6408, 0.0
    %v6417 = vmax.f32 %v6409, 0.0
    %v6418 = vmax.f32 %v6410, 0.0
    %v6419 = vmax.f32 %v6411, 0.0
    %v6420 = vmax.f32 %v6412, 0.0
    %v6421 = vmax.f32 %v6413, 0.0
    %v6422 = vmax.f32 %v6414, 0.0
    %v6423 = vmul.f32 %v3250, %v6415
    %v6424 = vmul.f32 %v3251, %v6416
    %v6425 = vmul.f32 %v3252, %v6417
    %v6426 = vmul.f32 %v3253, %v6418
    %v6427 = vmul.f32 %v3254, %v6419
    %v6428 = vmul.f32 %v3255, %v6420
    %v6429 = vmul.f32 %v3256, %v6421
    %v6430 = vmul.f32 %v3257, %v6422
    %v6431 = vadd.f32 %v6423, %v47
    %v6432 = vadd.f32 %v6424, %v56
    %v6433 = vadd.f32 %v6425, %v48
    %v6434 = vadd.f32 %v6426, %v57
    %v6435 = vadd.f32 %v6427, %v49
    %v6436 = vadd.f32 %v6428, %v1427
    %v6437 = vadd.f32 %v6429, %v50
    %v6438 = vadd.f32 %v6430, %v1428
    %v6447 = vcombine.low %v6431, %v6432
    %v6448 = vcombine.low %v6433, %v6434
    %v6449 = vcombine.low %v6435, %v6436
    %v6450 = vcombine.low %v6437, %v6438
    %6455 = vst [vmem:[#allocation8] sm:$0xff] %v6447
    %6456 = vst [vmem:[#allocation8 + $0x8] sm:$0xff] %v6448
    %6457 = vst [vmem:[#allocation8 + $0x10] sm:$0xff] %v6449
    %6458 = vst [vmem:[#allocation8 + $0x18] sm:$0xff] %v6450
    // Predicated region
    $region30: #{tpu_custom_call.1} parent=1 // pred_check
      _
    $region31: #{tpu_custom_call.1} parent=1 // pred_check_branch
      %6460 = sbr.rel (0) target = $region33
    $region32: #{tpu_custom_call.1} parent=1 // pred_region
      %s6462 = ssub.s32 512, 512
      %6463 = vsyncadd [#allocation5], %s6462
      %s6465 = sshll.u32 [#allocation8], 4
      %s6466 = int_to_ptr.vmem [resolvable:$true] %s6465
      %6468 = dma.vmem_to_hbm [thread:$0]  %s6466, 512, %s5, [#allocation5]
    $region33: #{tpu_custom_call.1} parent=1 // pred_fallthru
      _
    // Predicated region
    $region34: #{tpu_custom_call.1} parent=1 // pred_check
      _
    $region35: #{tpu_custom_call.1} parent=1 // pred_check_branch
      %6470 = sbr.rel (0) target = $region37
    $region36: #{tpu_custom_call.1} parent=1 // pred_region
      %6471 = dma.done [#allocation5], 512
    $region37: #{tpu_custom_call.1} parent=1 // pred_fallthru
      _
    %6472 = vsyncpa [#allocation4], 1
    %6473 = vsyncpa [#allocation7], 1
    %6474 = vsyncpa [#allocation5], 1

</llo_original>
